<compile_context>
chip_gen: v5e
topology: v5e:2x2
jax: 0.10.0
libtpu: 0.0.40
codegen_flags: <defaults>
</compile_context>

<pallas_src>
import functools

import jax
import jax.numpy as jnp
import numpy as np
from jax.experimental import pallas as pl
from jax.experimental.pallas import tpu as pltpu


def _mha_kernel(bias_ref, q_ref, k_ref, v_ref,
                wq_ref, wk_ref, wv_ref, wo_ref,
                o_ref, qp_ref, kp_ref, vp_ref, cp_ref,
                *, head_size, d):
    qi = pl.program_id(1)

    # K/V projections for ALL heads in one lane-dense matmul each; cached in
    # VMEM scratch across the query-tile axis (only recomputed when the batch
    # block changes, i.e. qi == 0). Full-H contraction -> good MXU shape.
    @pl.when(qi == 0)
    def _():
        kp_ref[...] = jnp.dot(k_ref[0], wk_ref[...],
                              preferred_element_type=jnp.float32
                              ).astype(jnp.bfloat16)
        vp_ref[...] = jnp.dot(v_ref[0], wv_ref[...],
                              preferred_element_type=jnp.float32
                              ).astype(jnp.bfloat16)

    # Q projection for this query tile (1/sqrt(d) already folded into Wq).
    qp_ref[...] = jnp.dot(q_ref[0], wq_ref[...],
                          preferred_element_type=jnp.float32
                          ).astype(jnp.bfloat16)

    bias = bias_ref[0]                                   # (1, S) f32, -1e9 pads

    # Per-head attention (statically unrolled). Contexts are packed back into
    # a lane-dense (TQ, H) buffer so the output projection is a single
    # full-width, full-contraction matmul.
    for h in range(head_size):
        lo, hi = h * d, (h + 1) * d
        q_h = qp_ref[:, lo:hi]                           # (TQ, d) bf16
        k_h = kp_ref[:, lo:hi]                           # (S,  d) bf16
        v_h = vp_ref[:, lo:hi]                           # (S,  d) bf16

        s = jnp.einsum("qd,kd->qk", q_h, k_h,
                       preferred_element_type=jnp.float32)   # (TQ, S) f32
        s = s + bias                                         # masked_fill(-1e9)

        # fp32 softmax; denominator reciprocal on the EUP; normalization is
        # applied after the PV matmul ((TQ, d) multiply instead of (TQ, S)).
        m = jnp.max(s, axis=-1, keepdims=True)
        e = jnp.exp(s - m)
        r = pl.reciprocal(jnp.sum(e, axis=-1, keepdims=True), approx=True)
        # TODO(synk): att_dropout omitted — eval-mode identity.

        ctx = jnp.dot(e.astype(jnp.bfloat16), v_h,
                      preferred_element_type=jnp.float32)    # (TQ, d) f32
        cp_ref[:, lo:hi] = (ctx * r).astype(jnp.bfloat16)

    # Output projection: one lane-dense (TQ, H) @ (H, H) matmul, f32 result,
    # single unmasked lane-dense store of the output block.
    o_ref[0] = jnp.dot(cp_ref[...], wo_ref[...],
                       preferred_element_type=jnp.float32)


def _pick_q_tile(S):
    """Largest multiple of 128 dividing S whose f32 score tile stays <= ~2 MiB
    (budget sized for v7x's 64 MiB VMEM; v5e/v6e have more headroom)."""
    if S <= 128 or S % 128 != 0:
        return S
    budget = 2 * 1024 * 1024
    best = 128
    for t in range(128, S + 1, 128):
        if S % t == 0 and t * S * 4 <= budget:
            best = t
    return best


def multi_head_attention(q, k, v, mask, wq_t, wk_t, wv_t, wo_t,
                         *, head_size, q_tile=None):
    B, S, H = q.shape
    assert H % head_size == 0
    d = H // head_size
    scale = float(d) ** (-0.5)

    if q_tile is None:
        q_tile = _pick_q_tile(S)
    if S % q_tile != 0:
        q_tile = S
    nq = S // q_tile

    # bf16 activations / weights for the MXU; fp32 accumulation in-kernel.
    qb = q.astype(jnp.bfloat16)
    kb = k.astype(jnp.bfloat16)
    vb = v.astype(jnp.bfloat16)

    # Fold the 1/sqrt(d) softmax scale into Wq (in f32, before the bf16 cast).
    wq_b = (wq_t * scale).astype(jnp.bfloat16)
    wk_b = wk_t.astype(jnp.bfloat16)
    wv_b = wv_t.astype(jnp.bfloat16)
    wo_b = wo_t.astype(jnp.bfloat16)

    # Additive key-padding bias, matching masked_fill_(mask, -1e9).
    bias = jnp.where(mask, jnp.float32(-1e9), jnp.float32(0.0)).reshape(B, 1, S)

    kernel = functools.partial(_mha_kernel, head_size=head_size, d=d)

    return pl.pallas_call(
        kernel,
        out_shape=jax.ShapeDtypeStruct((B, S, H), jnp.float32),
        grid=(B, nq),
        in_specs=[
            pl.BlockSpec((1, 1, S), lambda b, qi: (b, 0, 0)),        # bias
            pl.BlockSpec((1, q_tile, H), lambda b, qi: (b, qi, 0)),  # q
            pl.BlockSpec((1, S, H), lambda b, qi: (b, 0, 0)),        # k
            pl.BlockSpec((1, S, H), lambda b, qi: (b, 0, 0)),        # v
            # Full weights, constant block index -> DMA'd once, VMEM-resident.
            pl.BlockSpec((H, H), lambda b, qi: (0, 0)),              # Wq*scale
            pl.BlockSpec((H, H), lambda b, qi: (0, 0)),              # Wk
            pl.BlockSpec((H, H), lambda b, qi: (0, 0)),              # Wv
            pl.BlockSpec((H, H), lambda b, qi: (0, 0)),              # Wo
        ],
        out_specs=pl.BlockSpec((1, q_tile, H), lambda b, qi: (b, qi, 0)),
        scratch_shapes=[
            pltpu.VMEM((q_tile, H), jnp.bfloat16),   # projected Q (this tile)
            pltpu.VMEM((S, H), jnp.bfloat16),        # projected K (cached over qi)
            pltpu.VMEM((S, H), jnp.bfloat16),        # projected V (cached over qi)
            pltpu.VMEM((q_tile, H), jnp.bfloat16),   # packed per-head contexts
        ],
        compiler_params=pltpu.CompilerParams(
            # qi must stay "arbitrary" because the K/V projection cache is
            # carried across query tiles of the same batch.
            dimension_semantics=("parallel", "arbitrary"),
            vmem_limit_bytes=32 * 1024 * 1024),
    )(bias, qb, kb, vb, wq_b, wk_b, wv_b, wo_b)


def _xavier_uniform(key, out_dim, in_dim):
    # nn.init.xavier_uniform_ on a [out, in] Linear weight.
    bound = np.sqrt(6.0 / (in_dim + out_dim))
    return jax.random.uniform(key, (out_dim, in_dim), jnp.float32, -bound, bound)


def _reference(q, k, v, mask, wq_t, wk_t, wv_t, wo_t, head_size):
    B, S, H = q.shape
    d = H // head_size
    scale = float(d) ** (-0.5)
    qp = (q @ wq_t).reshape(B, S, head_size, d).transpose(0, 2, 1, 3) * scale
    kp = (k @ wk_t).reshape(B, S, head_size, d).transpose(0, 2, 1, 3)
    vp = (v @ wv_t).reshape(B, S, head_size, d).transpose(0, 2, 1, 3)
    s = jnp.einsum("bhqd,bhkd->bhqk", qp, kp)
    s = jnp.where(mask[:, None, None, :], -1e9, s)
    p = jax.nn.softmax(s, axis=-1)
    ctx = jnp.einsum("bhqk,bhkd->bhqd", p, vp)
    ctx = ctx.transpose(0, 2, 1, 3).reshape(B, S, H)
    return ctx @ wo_t


if __name__ == "__main__":
    B, S, H = 2, 128, 256
    head_size = 8

    key = jax.random.PRNGKey(0)
    k_q, k_k, k_v, k_wq, k_wk, k_wv, k_wo = jax.random.split(key, 7)

    q = jax.random.normal(k_q, (B, S, H), jnp.float32)
    k = jax.random.normal(k_k, (B, S, H), jnp.float32)
    v = jax.random.normal(k_v, (B, S, H), jnp.float32)

    # Padding mask over key positions: True == padded (masked out).
    lens = jnp.array([S, 100])
    mask = jnp.arange(S)[None, :] >= lens[:, None]          # (B, S) bool

    # PyTorch Linear weights are [out, in]; kernel wants transposed [in, out].
    wq_t = _xavier_uniform(k_wq, H, H).T
    wk_t = _xavier_uniform(k_wk, H, H).T
    wv_t = _xavier_uniform(k_wv, H, H).T
    wo_t = _xavier_uniform(k_wo, H, H).T

    out = multi_head_attention(q, k, v, mask, wq_t, wk_t, wv_t, wo_t,
                               head_size=head_size)
    out = jax.block_until_ready(out)

    ref = _reference(q, k, v, mask, wq_t, wk_t, wv_t, wo_t, head_size)
    np.testing.assert_allclose(np.asarray(out), np.asarray(ref),
                               rtol=5e-2, atol=5e-2)
    print("KERNEL_OK")
</pallas_src>

<mosaic_0001>
module attributes {stable_mosaic.version = 11 : i64} {
  func.func @_mha_kernel(%arg0: i32, %arg1: i32, %arg2: memref<1x1x128xf32, #tpu.memory_space<vmem>>, %arg3: memref<1x128x256xbf16, #tpu.memory_space<vmem>>, %arg4: memref<1x128x256xbf16, #tpu.memory_space<vmem>>, %arg5: memref<1x128x256xbf16, #tpu.memory_space<vmem>>, %arg6: memref<256x256xbf16, #tpu.memory_space<vmem>>, %arg7: memref<256x256xbf16, #tpu.memory_space<vmem>>, %arg8: memref<256x256xbf16, #tpu.memory_space<vmem>>, %arg9: memref<256x256xbf16, #tpu.memory_space<vmem>>, %arg10: memref<1x128x256xf32, #tpu.memory_space<vmem>>, %arg11: memref<128x256xbf16, #tpu.memory_space<vmem>>, %arg12: memref<128x256xbf16, #tpu.memory_space<vmem>>, %arg13: memref<128x256xbf16, #tpu.memory_space<vmem>>, %arg14: memref<128x256xbf16, #tpu.memory_space<vmem>>) attributes {dimension_semantics = [#tpu.dimension_semantics<parallel>, #tpu.dimension_semantics<arbitrary>], iteration_bounds = array<i64: 2, 1>, scalar_prefetch = 0 : i64, scratch_operands = 4 : i64, tpu.core_type = #tpu.core_type<tc>, window_params = [{transform_indices = @transform_0, window_bounds = array<i64: 1, 1, 128>}, {transform_indices = @transform_1, window_bounds = array<i64: 1, 128, 256>}, {transform_indices = @transform_2, window_bounds = array<i64: 1, 128, 256>}, {transform_indices = @transform_3, window_bounds = array<i64: 1, 128, 256>}, {pipeline_mode = #tpu.pipeline_mode<synchronous>, transform_indices = @transform_4, window_bounds = array<i64: 256, 256>}, {pipeline_mode = #tpu.pipeline_mode<synchronous>, transform_indices = @transform_5, window_bounds = array<i64: 256, 256>}, {pipeline_mode = #tpu.pipeline_mode<synchronous>, transform_indices = @transform_6, window_bounds = array<i64: 256, 256>}, {pipeline_mode = #tpu.pipeline_mode<synchronous>, transform_indices = @transform_7, window_bounds = array<i64: 256, 256>}, {transform_indices = @transform_8, window_bounds = array<i64: 1, 128, 256>}]} {
    %c0_i32 = arith.constant 0 : i32
    %0 = arith.cmpi eq, %arg1, %c0_i32 : i32
    %1 = arith.extui %0 : i1 to i32
    %c0_i32_0 = arith.constant 0 : i32
    %2 = arith.cmpi ne, %1, %c0_i32_0 : i32
    scf.if %2 {
      %c0_107 = arith.constant 0 : index
      %c0_108 = arith.constant 0 : index
      %c0_109 = arith.constant 0 : index
      %177 = vector.load %arg4[%c0_107, %c0_108, %c0_109] : memref<1x128x256xbf16, #tpu.memory_space<vmem>>, vector<1x128x256xbf16>
      %178 = vector.shape_cast %177 : vector<1x128x256xbf16> to vector<128x256xbf16>
      %c0_110 = arith.constant 0 : index
      %c0_111 = arith.constant 0 : index
      %179 = vector.load %arg7[%c0_110, %c0_111] : memref<256x256xbf16, #tpu.memory_space<vmem>>, vector<256x256xbf16>
      %cst_112 = arith.constant dense<0.000000e+00> : vector<128x256xf32>
      %180 = tpu.matmul %178, %179, %cst_112 {dimension_numbers = #tpu.dot_dimension_numbers<[1], [0], [0], [1], [0, 0, 1, 1], [], []>} : vector<128x256xbf16>, vector<256x256xbf16>, vector<128x256xf32> -> vector<128x256xf32>
      %181 = arith.truncf %180 : vector<128x256xf32> to vector<128x256xbf16>
      %c0_113 = arith.constant 0 : index
      %c0_114 = arith.constant 0 : index
      %182 = vector.load %arg12[%c0_113, %c0_114] : memref<128x256xbf16, #tpu.memory_space<vmem>>, vector<128x256xbf16>
      tpu.vector_store %arg12[%c0_113, %c0_114], %181 {strides = array<i32>} : memref<128x256xbf16, #tpu.memory_space<vmem>>, vector<128x256xbf16>,
      %c0_115 = arith.constant 0 : index
      %c0_116 = arith.constant 0 : index
      %c0_117 = arith.constant 0 : index
      %183 = vector.load %arg5[%c0_115, %c0_116, %c0_117] : memref<1x128x256xbf16, #tpu.memory_space<vmem>>, vector<1x128x256xbf16>
      %184 = vector.shape_cast %183 : vector<1x128x256xbf16> to vector<128x256xbf16>
      %c0_118 = arith.constant 0 : index
      %c0_119 = arith.constant 0 : index
      %185 = vector.load %arg8[%c0_118, %c0_119] : memref<256x256xbf16, #tpu.memory_space<vmem>>, vector<256x256xbf16>
      %cst_120 = arith.constant dense<0.000000e+00> : vector<128x256xf32>
      %186 = tpu.matmul %184, %185, %cst_120 {dimension_numbers = #tpu.dot_dimension_numbers<[1], [0], [0], [1], [0, 0, 1, 1], [], []>} : vector<128x256xbf16>, vector<256x256xbf16>, vector<128x256xf32> -> vector<128x256xf32>
      %187 = arith.truncf %186 : vector<128x256xf32> to vector<128x256xbf16>
      %c0_121 = arith.constant 0 : index
      %c0_122 = arith.constant 0 : index
      %188 = vector.load %arg13[%c0_121, %c0_122] : memref<128x256xbf16, #tpu.memory_space<vmem>>, vector<128x256xbf16>
      tpu.vector_store %arg13[%c0_121, %c0_122], %187 {strides = array<i32>} : memref<128x256xbf16, #tpu.memory_space<vmem>>, vector<128x256xbf16>,
    } else {
    }
    %c0 = arith.constant 0 : index
    %c0_1 = arith.constant 0 : index
    %c0_2 = arith.constant 0 : index
    %3 = vector.load %arg3[%c0, %c0_1, %c0_2] : memref<1x128x256xbf16, #tpu.memory_space<vmem>>, vector<1x128x256xbf16>
    %4 = vector.shape_cast %3 : vector<1x128x256xbf16> to vector<128x256xbf16>
    %c0_3 = arith.constant 0 : index
    %c0_4 = arith.constant 0 : index
    %5 = vector.load %arg6[%c0_3, %c0_4] : memref<256x256xbf16, #tpu.memory_space<vmem>>, vector<256x256xbf16>
    %cst = arith.constant dense<0.000000e+00> : vector<128x256xf32>
    %6 = tpu.matmul %4, %5, %cst {dimension_numbers = #tpu.dot_dimension_numbers<[1], [0], [0], [1], [0, 0, 1, 1], [], []>} : vector<128x256xbf16>, vector<256x256xbf16>, vector<128x256xf32> -> vector<128x256xf32>
    %7 = arith.truncf %6 : vector<128x256xf32> to vector<128x256xbf16>
    %c0_5 = arith.constant 0 : index
    %c0_6 = arith.constant 0 : index
    %8 = vector.load %arg11[%c0_5, %c0_6] : memref<128x256xbf16, #tpu.memory_space<vmem>>, vector<128x256xbf16>
    tpu.vector_store %arg11[%c0_5, %c0_6], %7 {strides = array<i32>} : memref<128x256xbf16, #tpu.memory_space<vmem>>, vector<128x256xbf16>,
    %c0_7 = arith.constant 0 : index
    %c0_8 = arith.constant 0 : index
    %c0_9 = arith.constant 0 : index
    %9 = vector.load %arg2[%c0_7, %c0_8, %c0_9] : memref<1x1x128xf32, #tpu.memory_space<vmem>>, vector<1x1x128xf32>
    %10 = vector.shape_cast %9 : vector<1x1x128xf32> to vector<1x128xf32>
    %c0_10 = arith.constant 0 : index
    %c0_11 = arith.constant 0 : index
    %11 = vector.load %arg11[%c0_10, %c0_11] : memref<128x256xbf16, #tpu.memory_space<vmem>>, vector<128x32xbf16>
    %c0_12 = arith.constant 0 : index
    %c0_13 = arith.constant 0 : index
    %12 = vector.load %arg12[%c0_12, %c0_13] : memref<128x256xbf16, #tpu.memory_space<vmem>>, vector<128x32xbf16>
    %c0_14 = arith.constant 0 : index
    %c0_15 = arith.constant 0 : index
    %13 = vector.load %arg13[%c0_14, %c0_15] : memref<128x256xbf16, #tpu.memory_space<vmem>>, vector<128x32xbf16>
    "tpu.trace_start"() <{level = 10 : i32, message = "qd,kd->qk"}> : () -> ()
    %cst_16 = arith.constant dense<0.000000e+00> : vector<128x128xf32>
    %14 = tpu.matmul %11, %12, %cst_16 {dimension_numbers = #tpu.dot_dimension_numbers<[1], [1], [0], [0], [0, 0, 1, 0], [], []>} : vector<128x32xbf16>, vector<128x32xbf16>, vector<128x128xf32> -> vector<128x128xf32>
    "tpu.trace_stop"() : () -> ()
    %15 = vector.broadcast %10 : vector<1x128xf32> to vector<128x128xf32>
    %16 = arith.addf %14, %15 : vector<128x128xf32>
    %cst_17 = arith.constant dense<0xFF800000> : vector<128xf32>
    %17 = vector.multi_reduction <maximumf>, %16, %cst_17 [1] : vector<128x128xf32> to vector<128xf32>
    %18 = vector.shape_cast %17 : vector<128xf32> to vector<128x1xf32>
    %19 = vector.broadcast %18 : vector<128x1xf32> to vector<128x128xf32>
    %20 = arith.subf %16, %19 : vector<128x128xf32>
    %21 = math.exp %20 : vector<128x128xf32>
    %cst_18 = arith.constant dense<0.000000e+00> : vector<128xf32>
    %22 = vector.multi_reduction <add>, %21, %cst_18 [1] : vector<128x128xf32> to vector<128xf32>
    %23 = vector.shape_cast %22 : vector<128xf32> to vector<128x1xf32>
    %24 = tpu.reciprocal %23 {approx = true} : vector<128x1xf32> -> vector<128x1xf32>
    %25 = arith.truncf %21 : vector<128x128xf32> to vector<128x128xbf16>
    %cst_19 = arith.constant dense<0.000000e+00> : vector<128x32xf32>
    %26 = tpu.matmul %25, %13, %cst_19 {dimension_numbers = #tpu.dot_dimension_numbers<[1], [0], [0], [1], [0, 0, 1, 1], [], []>} : vector<128x128xbf16>, vector<128x32xbf16>, vector<128x32xf32> -> vector<128x32xf32>
    %27 = vector.broadcast %24 : vector<128x1xf32> to vector<128x32xf32>
    %28 = arith.mulf %26, %27 : vector<128x32xf32>
    %29 = arith.truncf %28 : vector<128x32xf32> to vector<128x32xbf16>
    %c0_20 = arith.constant 0 : index
    %c0_21 = arith.constant 0 : index
    %30 = vector.load %arg14[%c0_20, %c0_21] : memref<128x256xbf16, #tpu.memory_space<vmem>>, vector<128x32xbf16>
    tpu.vector_store %arg14[%c0_20, %c0_21], %29 {strides = array<i32>} : memref<128x256xbf16, #tpu.memory_space<vmem>>, vector<128x32xbf16>,
    %c0_22 = arith.constant 0 : index
    %c32 = arith.constant 32 : index
    %31 = vector.load %arg11[%c0_22, %c32] : memref<128x256xbf16, #tpu.memory_space<vmem>>, vector<128x32xbf16>
    %c0_23 = arith.constant 0 : index
    %c32_24 = arith.constant 32 : index
    %32 = vector.load %arg12[%c0_23, %c32_24] : memref<128x256xbf16, #tpu.memory_space<vmem>>, vector<128x32xbf16>
    %c0_25 = arith.constant 0 : index
    %c32_26 = arith.constant 32 : index
    %33 = vector.load %arg13[%c0_25, %c32_26] : memref<128x256xbf16, #tpu.memory_space<vmem>>, vector<128x32xbf16>
    "tpu.trace_start"() <{level = 10 : i32, message = "qd,kd->qk"}> : () -> ()
    %cst_27 = arith.constant dense<0.000000e+00> : vector<128x128xf32>
    %34 = tpu.matmul %31, %32, %cst_27 {dimension_numbers = #tpu.dot_dimension_numbers<[1], [1], [0], [0], [0, 0, 1, 0], [], []>} : vector<128x32xbf16>, vector<128x32xbf16>, vector<128x128xf32> -> vector<128x128xf32>
    "tpu.trace_stop"() : () -> ()
    %35 = vector.broadcast %10 : vector<1x128xf32> to vector<128x128xf32>
    %36 = arith.addf %34, %35 : vector<128x128xf32>
    %cst_28 = arith.constant dense<0xFF800000> : vector<128xf32>
    %37 = vector.multi_reduction <maximumf>, %36, %cst_28 [1] : vector<128x128xf32> to vector<128xf32>
    %38 = vector.shape_cast %37 : vector<128xf32> to vector<128x1xf32>
    %39 = vector.broadcast %38 : vector<128x1xf32> to vector<128x128xf32>
    %40 = arith.subf %36, %39 : vector<128x128xf32>
    %41 = math.exp %40 : vector<128x128xf32>
    %cst_29 = arith.constant dense<0.000000e+00> : vector<128xf32>
    %42 = vector.multi_reduction <add>, %41, %cst_29 [1] : vector<128x128xf32> to vector<128xf32>
    %43 = vector.shape_cast %42 : vector<128xf32> to vector<128x1xf32>
    %44 = tpu.reciprocal %43 {approx = true} : vector<128x1xf32> -> vector<128x1xf32>
    %45 = arith.truncf %41 : vector<128x128xf32> to vector<128x128xbf16>
    %cst_30 = arith.constant dense<0.000000e+00> : vector<128x32xf32>
    %46 = tpu.matmul %45, %33, %cst_30 {dimension_numbers = #tpu.dot_dimension_numbers<[1], [0], [0], [1], [0, 0, 1, 1], [], []>} : vector<128x128xbf16>, vector<128x32xbf16>, vector<128x32xf32> -> vector<128x32xf32>
    %47 = vector.broadcast %44 : vector<128x1xf32> to vector<128x32xf32>
    %48 = arith.mulf %46, %47 : vector<128x32xf32>
    %49 = arith.truncf %48 : vector<128x32xf32> to vector<128x32xbf16>
    %c0_31 = arith.constant 0 : index
    %c32_32 = arith.constant 32 : index
    %50 = vector.load %arg14[%c0_31, %c32_32] : memref<128x256xbf16, #tpu.memory_space<vmem>>, vector<128x32xbf16>
    tpu.vector_store %arg14[%c0_31, %c32_32], %49 {strides = array<i32>} : memref<128x256xbf16, #tpu.memory_space<vmem>>, vector<128x32xbf16>,
    %c0_33 = arith.constant 0 : index
    %c64 = arith.constant 64 : index
    %51 = vector.load %arg11[%c0_33, %c64] : memref<128x256xbf16, #tpu.memory_space<vmem>>, vector<128x32xbf16>
    %c0_34 = arith.constant 0 : index
    %c64_35 = arith.constant 64 : index
    %52 = vector.load %arg12[%c0_34, %c64_35] : memref<128x256xbf16, #tpu.memory_space<vmem>>, vector<128x32xbf16>
    %c0_36 = arith.constant 0 : index
    %c64_37 = arith.constant 64 : index
    %53 = vector.load %arg13[%c0_36, %c64_37] : memref<128x256xbf16, #tpu.memory_space<vmem>>, vector<128x32xbf16>
    "tpu.trace_start"() <{level = 10 : i32, message = "qd,kd->qk"}> : () -> ()
    %cst_38 = arith.constant dense<0.000000e+00> : vector<128x128xf32>
    %54 = tpu.matmul %51, %52, %cst_38 {dimension_numbers = #tpu.dot_dimension_numbers<[1], [1], [0], [0], [0, 0, 1, 0], [], []>} : vector<128x32xbf16>, vector<128x32xbf16>, vector<128x128xf32> -> vector<128x128xf32>
    "tpu.trace_stop"() : () -> ()
    %55 = vector.broadcast %10 : vector<1x128xf32> to vector<128x128xf32>
    %56 = arith.addf %54, %55 : vector<128x128xf32>
    %cst_39 = arith.constant dense<0xFF800000> : vector<128xf32>
    %57 = vector.multi_reduction <maximumf>, %56, %cst_39 [1] : vector<128x128xf32> to vector<128xf32>
    %58 = vector.shape_cast %57 : vector<128xf32> to vector<128x1xf32>
    %59 = vector.broadcast %58 : vector<128x1xf32> to vector<128x128xf32>
    %60 = arith.subf %56, %59 : vector<128x128xf32>
    %61 = math.exp %60 : vector<128x128xf32>
    %cst_40 = arith.constant dense<0.000000e+00> : vector<128xf32>
    %62 = vector.multi_reduction <add>, %61, %cst_40 [1] : vector<128x128xf32> to vector<128xf32>
    %63 = vector.shape_cast %62 : vector<128xf32> to vector<128x1xf32>
    %64 = tpu.reciprocal %63 {approx = true} : vector<128x1xf32> -> vector<128x1xf32>
    %65 = arith.truncf %61 : vector<128x128xf32> to vector<128x128xbf16>
    %cst_41 = arith.constant dense<0.000000e+00> : vector<128x32xf32>
    %66 = tpu.matmul %65, %53, %cst_41 {dimension_numbers = #tpu.dot_dimension_numbers<[1], [0], [0], [1], [0, 0, 1, 1], [], []>} : vector<128x128xbf16>, vector<128x32xbf16>, vector<128x32xf32> -> vector<128x32xf32>
    %67 = vector.broadcast %64 : vector<128x1xf32> to vector<128x32xf32>
    %68 = arith.mulf %66, %67 : vector<128x32xf32>
    %69 = arith.truncf %68 : vector<128x32xf32> to vector<128x32xbf16>
    %c0_42 = arith.constant 0 : index
    %c64_43 = arith.constant 64 : index
    %70 = vector.load %arg14[%c0_42, %c64_43] : memref<128x256xbf16, #tpu.memory_space<vmem>>, vector<128x32xbf16>
    tpu.vector_store %arg14[%c0_42, %c64_43], %69 {strides = array<i32>} : memref<128x256xbf16, #tpu.memory_space<vmem>>, vector<128x32xbf16>,
    %c0_44 = arith.constant 0 : index
    %c96 = arith.constant 96 : index
    %71 = vector.load %arg11[%c0_44, %c96] : memref<128x256xbf16, #tpu.memory_space<vmem>>, vector<128x32xbf16>
    %c0_45 = arith.constant 0 : index
    %c96_46 = arith.constant 96 : index
    %72 = vector.load %arg12[%c0_45, %c96_46] : memref<128x256xbf16, #tpu.memory_space<vmem>>, vector<128x32xbf16>
    %c0_47 = arith.constant 0 : index
    %c96_48 = arith.constant 96 : index
    %73 = vector.load %arg13[%c0_47, %c96_48] : memref<128x256xbf16, #tpu.memory_space<vmem>>, vector<128x32xbf16>
    "tpu.trace_start"() <{level = 10 : i32, message = "qd,kd->qk"}> : () -> ()
    %cst_49 = arith.constant dense<0.000000e+00> : vector<128x128xf32>
    %74 = tpu.matmul %71, %72, %cst_49 {dimension_numbers = #tpu.dot_dimension_numbers<[1], [1], [0], [0], [0, 0, 1, 0], [], []>} : vector<128x32xbf16>, vector<128x32xbf16>, vector<128x128xf32> -> vector<128x128xf32>
    "tpu.trace_stop"() : () -> ()
    %75 = vector.broadcast %10 : vector<1x128xf32> to vector<128x128xf32>
    %76 = arith.addf %74, %75 : vector<128x128xf32>
    %cst_50 = arith.constant dense<0xFF800000> : vector<128xf32>
    %77 = vector.multi_reduction <maximumf>, %76, %cst_50 [1] : vector<128x128xf32> to vector<128xf32>
    %78 = vector.shape_cast %77 : vector<128xf32> to vector<128x1xf32>
    %79 = vector.broadcast %78 : vector<128x1xf32> to vector<128x128xf32>
    %80 = arith.subf %76, %79 : vector<128x128xf32>
    %81 = math.exp %80 : vector<128x128xf32>
    %cst_51 = arith.constant dense<0.000000e+00> : vector<128xf32>
    %82 = vector.multi_reduction <add>, %81, %cst_51 [1] : vector<128x128xf32> to vector<128xf32>
    %83 = vector.shape_cast %82 : vector<128xf32> to vector<128x1xf32>
    %84 = tpu.reciprocal %83 {approx = true} : vector<128x1xf32> -> vector<128x1xf32>
    %85 = arith.truncf %81 : vector<128x128xf32> to vector<128x128xbf16>
    %cst_52 = arith.constant dense<0.000000e+00> : vector<128x32xf32>
    %86 = tpu.matmul %85, %73, %cst_52 {dimension_numbers = #tpu.dot_dimension_numbers<[1], [0], [0], [1], [0, 0, 1, 1], [], []>} : vector<128x128xbf16>, vector<128x32xbf16>, vector<128x32xf32> -> vector<128x32xf32>
    %87 = vector.broadcast %84 : vector<128x1xf32> to vector<128x32xf32>
    %88 = arith.mulf %86, %87 : vector<128x32xf32>
    %89 = arith.truncf %88 : vector<128x32xf32> to vector<128x32xbf16>
    %c0_53 = arith.constant 0 : index
    %c96_54 = arith.constant 96 : index
    %90 = vector.load %arg14[%c0_53, %c96_54] : memref<128x256xbf16, #tpu.memory_space<vmem>>, vector<128x32xbf16>
    tpu.vector_store %arg14[%c0_53, %c96_54], %89 {strides = array<i32>} : memref<128x256xbf16, #tpu.memory_space<vmem>>, vector<128x32xbf16>,
    %c0_55 = arith.constant 0 : index
    %c128 = arith.constant 128 : index
    %91 = vector.load %arg11[%c0_55, %c128] : memref<128x256xbf16, #tpu.memory_space<vmem>>, vector<128x32xbf16>
    %c0_56 = arith.constant 0 : index
    %c128_57 = arith.constant 128 : index
    %92 = vector.load %arg12[%c0_56, %c128_57] : memref<128x256xbf16, #tpu.memory_space<vmem>>, vector<128x32xbf16>
    %c0_58 = arith.constant 0 : index
    %c128_59 = arith.constant 128 : index
    %93 = vector.load %arg13[%c0_58, %c128_59] : memref<128x256xbf16, #tpu.memory_space<vmem>>, vector<128x32xbf16>
    "tpu.trace_start"() <{level = 10 : i32, message = "qd,kd->qk"}> : () -> ()
    %cst_60 = arith.constant dense<0.000000e+00> : vector<128x128xf32>
    %94 = tpu.matmul %91, %92, %cst_60 {dimension_numbers = #tpu.dot_dimension_numbers<[1], [1], [0], [0], [0, 0, 1, 0], [], []>} : vector<128x32xbf16>, vector<128x32xbf16>, vector<128x128xf32> -> vector<128x128xf32>
    "tpu.trace_stop"() : () -> ()
    %95 = vector.broadcast %10 : vector<1x128xf32> to vector<128x128xf32>
    %96 = arith.addf %94, %95 : vector<128x128xf32>
    %cst_61 = arith.constant dense<0xFF800000> : vector<128xf32>
    %97 = vector.multi_reduction <maximumf>, %96, %cst_61 [1] : vector<128x128xf32> to vector<128xf32>
    %98 = vector.shape_cast %97 : vector<128xf32> to vector<128x1xf32>
    %99 = vector.broadcast %98 : vector<128x1xf32> to vector<128x128xf32>
    %100 = arith.subf %96, %99 : vector<128x128xf32>
    %101 = math.exp %100 : vector<128x128xf32>
    %cst_62 = arith.constant dense<0.000000e+00> : vector<128xf32>
    %102 = vector.multi_reduction <add>, %101, %cst_62 [1] : vector<128x128xf32> to vector<128xf32>
    %103 = vector.shape_cast %102 : vector<128xf32> to vector<128x1xf32>
    %104 = tpu.reciprocal %103 {approx = true} : vector<128x1xf32> -> vector<128x1xf32>
    %105 = arith.truncf %101 : vector<128x128xf32> to vector<128x128xbf16>
    %cst_63 = arith.constant dense<0.000000e+00> : vector<128x32xf32>
    %106 = tpu.matmul %105, %93, %cst_63 {dimension_numbers = #tpu.dot_dimension_numbers<[1], [0], [0], [1], [0, 0, 1, 1], [], []>} : vector<128x128xbf16>, vector<128x32xbf16>, vector<128x32xf32> -> vector<128x32xf32>
    %107 = vector.broadcast %104 : vector<128x1xf32> to vector<128x32xf32>
    %108 = arith.mulf %106, %107 : vector<128x32xf32>
    %109 = arith.truncf %108 : vector<128x32xf32> to vector<128x32xbf16>
    %c0_64 = arith.constant 0 : index
    %c128_65 = arith.constant 128 : index
    %110 = vector.load %arg14[%c0_64, %c128_65] : memref<128x256xbf16, #tpu.memory_space<vmem>>, vector<128x32xbf16>
    tpu.vector_store %arg14[%c0_64, %c128_65], %109 {strides = array<i32>} : memref<128x256xbf16, #tpu.memory_space<vmem>>, vector<128x32xbf16>,
    %c0_66 = arith.constant 0 : index
    %c160 = arith.constant 160 : index
    %111 = vector.load %arg11[%c0_66, %c160] : memref<128x256xbf16, #tpu.memory_space<vmem>>, vector<128x32xbf16>
    %c0_67 = arith.constant 0 : index
    %c160_68 = arith.constant 160 : index
    %112 = vector.load %arg12[%c0_67, %c160_68] : memref<128x256xbf16, #tpu.memory_space<vmem>>, vector<128x32xbf16>
    %c0_69 = arith.constant 0 : index
    %c160_70 = arith.constant 160 : index
    %113 = vector.load %arg13[%c0_69, %c160_70] : memref<128x256xbf16, #tpu.memory_space<vmem>>, vector<128x32xbf16>
    "tpu.trace_start"() <{level = 10 : i32, message = "qd,kd->qk"}> : () -> ()
    %cst_71 = arith.constant dense<0.000000e+00> : vector<128x128xf32>
    %114 = tpu.matmul %111, %112, %cst_71 {dimension_numbers = #tpu.dot_dimension_numbers<[1], [1], [0], [0], [0, 0, 1, 0], [], []>} : vector<128x32xbf16>, vector<128x32xbf16>, vector<128x128xf32> -> vector<128x128xf32>
    "tpu.trace_stop"() : () -> ()
    %115 = vector.broadcast %10 : vector<1x128xf32> to vector<128x128xf32>
    %116 = arith.addf %114, %115 : vector<128x128xf32>
    %cst_72 = arith.constant dense<0xFF800000> : vector<128xf32>
    %117 = vector.multi_reduction <maximumf>, %116, %cst_72 [1] : vector<128x128xf32> to vector<128xf32>
    %118 = vector.shape_cast %117 : vector<128xf32> to vector<128x1xf32>
    %119 = vector.broadcast %118 : vector<128x1xf32> to vector<128x128xf32>
    %120 = arith.subf %116, %119 : vector<128x128xf32>
    %121 = math.exp %120 : vector<128x128xf32>
    %cst_73 = arith.constant dense<0.000000e+00> : vector<128xf32>
    %122 = vector.multi_reduction <add>, %121, %cst_73 [1] : vector<128x128xf32> to vector<128xf32>
    %123 = vector.shape_cast %122 : vector<128xf32> to vector<128x1xf32>
    %124 = tpu.reciprocal %123 {approx = true} : vector<128x1xf32> -> vector<128x1xf32>
    %125 = arith.truncf %121 : vector<128x128xf32> to vector<128x128xbf16>
    %cst_74 = arith.constant dense<0.000000e+00> : vector<128x32xf32>
    %126 = tpu.matmul %125, %113, %cst_74 {dimension_numbers = #tpu.dot_dimension_numbers<[1], [0], [0], [1], [0, 0, 1, 1], [], []>} : vector<128x128xbf16>, vector<128x32xbf16>, vector<128x32xf32> -> vector<128x32xf32>
    %127 = vector.broadcast %124 : vector<128x1xf32> to vector<128x32xf32>
    %128 = arith.mulf %126, %127 : vector<128x32xf32>
    %129 = arith.truncf %128 : vector<128x32xf32> to vector<128x32xbf16>
    %c0_75 = arith.constant 0 : index
    %c160_76 = arith.constant 160 : index
    %130 = vector.load %arg14[%c0_75, %c160_76] : memref<128x256xbf16, #tpu.memory_space<vmem>>, vector<128x32xbf16>
    tpu.vector_store %arg14[%c0_75, %c160_76], %129 {strides = array<i32>} : memref<128x256xbf16, #tpu.memory_space<vmem>>, vector<128x32xbf16>,
    %c0_77 = arith.constant 0 : index
    %c192 = arith.constant 192 : index
    %131 = vector.load %arg11[%c0_77, %c192] : memref<128x256xbf16, #tpu.memory_space<vmem>>, vector<128x32xbf16>
    %c0_78 = arith.constant 0 : index
    %c192_79 = arith.constant 192 : index
    %132 = vector.load %arg12[%c0_78, %c192_79] : memref<128x256xbf16, #tpu.memory_space<vmem>>, vector<128x32xbf16>
    %c0_80 = arith.constant 0 : index
    %c192_81 = arith.constant 192 : index
    %133 = vector.load %arg13[%c0_80, %c192_81] : memref<128x256xbf16, #tpu.memory_space<vmem>>, vector<128x32xbf16>
    "tpu.trace_start"() <{level = 10 : i32, message = "qd,kd->qk"}> : () -> ()
    %cst_82 = arith.constant dense<0.000000e+00> : vector<128x128xf32>
    %134 = tpu.matmul %131, %132, %cst_82 {dimension_numbers = #tpu.dot_dimension_numbers<[1], [1], [0], [0], [0, 0, 1, 0], [], []>} : vector<128x32xbf16>, vector<128x32xbf16>, vector<128x128xf32> -> vector<128x128xf32>
    "tpu.trace_stop"() : () -> ()
    %135 = vector.broadcast %10 : vector<1x128xf32> to vector<128x128xf32>
    %136 = arith.addf %134, %135 : vector<128x128xf32>
    %cst_83 = arith.constant dense<0xFF800000> : vector<128xf32>
    %137 = vector.multi_reduction <maximumf>, %136, %cst_83 [1] : vector<128x128xf32> to vector<128xf32>
    %138 = vector.shape_cast %137 : vector<128xf32> to vector<128x1xf32>
    %139 = vector.broadcast %138 : vector<128x1xf32> to vector<128x128xf32>
    %140 = arith.subf %136, %139 : vector<128x128xf32>
    %141 = math.exp %140 : vector<128x128xf32>
    %cst_84 = arith.constant dense<0.000000e+00> : vector<128xf32>
    %142 = vector.multi_reduction <add>, %141, %cst_84 [1] : vector<128x128xf32> to vector<128xf32>
    %143 = vector.shape_cast %142 : vector<128xf32> to vector<128x1xf32>
    %144 = tpu.reciprocal %143 {approx = true} : vector<128x1xf32> -> vector<128x1xf32>
    %145 = arith.truncf %141 : vector<128x128xf32> to vector<128x128xbf16>
    %cst_85 = arith.constant dense<0.000000e+00> : vector<128x32xf32>
    %146 = tpu.matmul %145, %133, %cst_85 {dimension_numbers = #tpu.dot_dimension_numbers<[1], [0], [0], [1], [0, 0, 1, 1], [], []>} : vector<128x128xbf16>, vector<128x32xbf16>, vector<128x32xf32> -> vector<128x32xf32>
    %147 = vector.broadcast %144 : vector<128x1xf32> to vector<128x32xf32>
    %148 = arith.mulf %146, %147 : vector<128x32xf32>
    %149 = arith.truncf %148 : vector<128x32xf32> to vector<128x32xbf16>
    %c0_86 = arith.constant 0 : index
    %c192_87 = arith.constant 192 : index
    %150 = vector.load %arg14[%c0_86, %c192_87] : memref<128x256xbf16, #tpu.memory_space<vmem>>, vector<128x32xbf16>
    tpu.vector_store %arg14[%c0_86, %c192_87], %149 {strides = array<i32>} : memref<128x256xbf16, #tpu.memory_space<vmem>>, vector<128x32xbf16>,
    %c0_88 = arith.constant 0 : index
    %c224 = arith.constant 224 : index
    %151 = vector.load %arg11[%c0_88, %c224] : memref<128x256xbf16, #tpu.memory_space<vmem>>, vector<128x32xbf16>
    %c0_89 = arith.constant 0 : index
    %c224_90 = arith.constant 224 : index
    %152 = vector.load %arg12[%c0_89, %c224_90] : memref<128x256xbf16, #tpu.memory_space<vmem>>, vector<128x32xbf16>
    %c0_91 = arith.constant 0 : index
    %c224_92 = arith.constant 224 : index
    %153 = vector.load %arg13[%c0_91, %c224_92] : memref<128x256xbf16, #tpu.memory_space<vmem>>, vector<128x32xbf16>
    "tpu.trace_start"() <{level = 10 : i32, message = "qd,kd->qk"}> : () -> ()
    %cst_93 = arith.constant dense<0.000000e+00> : vector<128x128xf32>
    %154 = tpu.matmul %151, %152, %cst_93 {dimension_numbers = #tpu.dot_dimension_numbers<[1], [1], [0], [0], [0, 0, 1, 0], [], []>} : vector<128x32xbf16>, vector<128x32xbf16>, vector<128x128xf32> -> vector<128x128xf32>
    "tpu.trace_stop"() : () -> ()
    %155 = vector.broadcast %10 : vector<1x128xf32> to vector<128x128xf32>
    %156 = arith.addf %154, %155 : vector<128x128xf32>
    %cst_94 = arith.constant dense<0xFF800000> : vector<128xf32>
    %157 = vector.multi_reduction <maximumf>, %156, %cst_94 [1] : vector<128x128xf32> to vector<128xf32>
    %158 = vector.shape_cast %157 : vector<128xf32> to vector<128x1xf32>
    %159 = vector.broadcast %158 : vector<128x1xf32> to vector<128x128xf32>
    %160 = arith.subf %156, %159 : vector<128x128xf32>
    %161 = math.exp %160 : vector<128x128xf32>
    %cst_95 = arith.constant dense<0.000000e+00> : vector<128xf32>
    %162 = vector.multi_reduction <add>, %161, %cst_95 [1] : vector<128x128xf32> to vector<128xf32>
    %163 = vector.shape_cast %162 : vector<128xf32> to vector<128x1xf32>
    %164 = tpu.reciprocal %163 {approx = true} : vector<128x1xf32> -> vector<128x1xf32>
    %165 = arith.truncf %161 : vector<128x128xf32> to vector<128x128xbf16>
    %cst_96 = arith.constant dense<0.000000e+00> : vector<128x32xf32>
    %166 = tpu.matmul %165, %153, %cst_96 {dimension_numbers = #tpu.dot_dimension_numbers<[1], [0], [0], [1], [0, 0, 1, 1], [], []>} : vector<128x128xbf16>, vector<128x32xbf16>, vector<128x32xf32> -> vector<128x32xf32>
    %167 = vector.broadcast %164 : vector<128x1xf32> to vector<128x32xf32>
    %168 = arith.mulf %166, %167 : vector<128x32xf32>
    %169 = arith.truncf %168 : vector<128x32xf32> to vector<128x32xbf16>
    %c0_97 = arith.constant 0 : index
    %c224_98 = arith.constant 224 : index
    %170 = vector.load %arg14[%c0_97, %c224_98] : memref<128x256xbf16, #tpu.memory_space<vmem>>, vector<128x32xbf16>
    tpu.vector_store %arg14[%c0_97, %c224_98], %169 {strides = array<i32>} : memref<128x256xbf16, #tpu.memory_space<vmem>>, vector<128x32xbf16>,
    %c0_99 = arith.constant 0 : index
    %c0_100 = arith.constant 0 : index
    %171 = vector.load %arg14[%c0_99, %c0_100] : memref<128x256xbf16, #tpu.memory_space<vmem>>, vector<128x256xbf16>
    %c0_101 = arith.constant 0 : index
    %c0_102 = arith.constant 0 : index
    %172 = vector.load %arg9[%c0_101, %c0_102] : memref<256x256xbf16, #tpu.memory_space<vmem>>, vector<256x256xbf16>
    %cst_103 = arith.constant dense<0.000000e+00> : vector<128x256xf32>
    %173 = tpu.matmul %171, %172, %cst_103 {dimension_numbers = #tpu.dot_dimension_numbers<[1], [0], [0], [1], [0, 0, 1, 1], [], []>} : vector<128x256xbf16>, vector<256x256xbf16>, vector<128x256xf32> -> vector<128x256xf32>
    %c0_104 = arith.constant 0 : index
    %c0_105 = arith.constant 0 : index
    %c0_106 = arith.constant 0 : index
    %174 = vector.load %arg10[%c0_104, %c0_105, %c0_106] : memref<1x128x256xf32, #tpu.memory_space<vmem>>, vector<1x128x256xf32>
    %175 = vector.shape_cast %174 : vector<1x128x256xf32> to vector<128x256xf32>
    %176 = vector.shape_cast %173 : vector<128x256xf32> to vector<1x128x256xf32>
    tpu.vector_store %arg10[%c0_104, %c0_105, %c0_106], %176 {strides = array<i32>} : memref<1x128x256xf32, #tpu.memory_space<vmem>>, vector<1x128x256xf32>,
    return
  }
  func.func @transform_0(%arg0: i32, %arg1: i32) -> (i32, i32, i32) {
    %c0_i32 = arith.constant 0 : i32
    %c0_i32_0 = arith.constant 0 : i32
    %c0_i32_1 = arith.constant 0 : i32
    return %arg0, %c0_i32, %c0_i32_0 : i32, i32, i32
  }
  func.func @transform_1(%arg0: i32, %arg1: i32) -> (i32, i32, i32) {
    %c0_i32 = arith.constant 0 : i32
    %c0_i32_0 = arith.constant 0 : i32
    return %arg0, %arg1, %c0_i32 : i32, i32, i32
  }
  func.func @transform_2(%arg0: i32, %arg1: i32) -> (i32, i32, i32) {
    %c0_i32 = arith.constant 0 : i32
    %c0_i32_0 = arith.constant 0 : i32
    %c0_i32_1 = arith.constant 0 : i32
    return %arg0, %c0_i32, %c0_i32_0 : i32, i32, i32
  }
  func.func @transform_3(%arg0: i32, %arg1: i32) -> (i32, i32, i32) {
    %c0_i32 = arith.constant 0 : i32
    %c0_i32_0 = arith.constant 0 : i32
    %c0_i32_1 = arith.constant 0 : i32
    return %arg0, %c0_i32, %c0_i32_0 : i32, i32, i32
  }
  func.func @transform_4(%arg0: i32, %arg1: i32) -> (i32, i32) {
    %c0_i32 = arith.constant 0 : i32
    %c0_i32_0 = arith.constant 0 : i32
    %c0_i32_1 = arith.constant 0 : i32
    return %c0_i32, %c0_i32_0 : i32, i32
  }
  func.func @transform_5(%arg0: i32, %arg1: i32) -> (i32, i32) {
    %c0_i32 = arith.constant 0 : i32
    %c0_i32_0 = arith.constant 0 : i32
    %c0_i32_1 = arith.constant 0 : i32
    return %c0_i32, %c0_i32_0 : i32, i32
  }
  func.func @transform_6(%arg0: i32, %arg1: i32) -> (i32, i32) {
    %c0_i32 = arith.constant 0 : i32
    %c0_i32_0 = arith.constant 0 : i32
    %c0_i32_1 = arith.constant 0 : i32
    return %c0_i32, %c0_i32_0 : i32, i32
  }
  func.func @transform_7(%arg0: i32, %arg1: i32) -> (i32, i32) {
    %c0_i32 = arith.constant 0 : i32
    %c0_i32_0 = arith.constant 0 : i32
    %c0_i32_1 = arith.constant 0 : i32
    return %c0_i32, %c0_i32_0 : i32, i32
  }
  func.func @transform_8(%arg0: i32, %arg1: i32) -> (i32, i32, i32) {
    %c0_i32 = arith.constant 0 : i32
    %c0_i32_0 = arith.constant 0 : i32
    return %arg0, %arg1, %c0_i32 : i32, i32, i32
  }
}

</mosaic_0001>

<llo_original>
// kernel: tpu_custom_call.1
$region0: #{tpu_custom_call.1}
  #allocation0 [shape = 'u32[]', space=smem, size = 0x4, offset = 0x4, fixed_abs, tag = 'smem constant byte address 0x4 - core index']
  #allocation1 [shape = 'u32[72,128]{1,0:T(1,128)}', space=vmem, size = 0x9000, scoped, tag = 'internal scratch']
  #allocation2 [shape = 'bf16[128,256]{1,0:T(8,128)(2,1)}', space=vmem, size = 0x10000, scoped, tag = 'scratch operand']
  #allocation3 [shape = 'bf16[128,256]{1,0:T(8,128)(2,1)}', space=vmem, size = 0x10000, scoped, tag = 'scratch operand']
  #allocation4 [shape = 'bf16[128,256]{1,0:T(8,128)(2,1)}', space=vmem, size = 0x10000, scoped, tag = 'scratch operand']
  #allocation5 [shape = 'bf16[128,256]{1,0:T(8,128)(2,1)}', space=vmem, size = 0x10000, scoped, tag = 'scratch operand']
  %s0 = inlined_call_operand.hbm [shape: f32[2,1,128], index: 0, kind: input, shape index: {}]
  %s1 = inlined_call_operand.hbm [shape: bf16[2,128,256], index: 1, kind: input, shape index: {}]
  %s2 = inlined_call_operand.hbm [shape: bf16[2,128,256], index: 2, kind: input, shape index: {}]
  %s3 = inlined_call_operand.hbm [shape: bf16[2,128,256], index: 3, kind: input, shape index: {}]
  %s4 = inlined_call_operand.hbm [shape: bf16[256,256], index: 4, kind: input, shape index: {}]
  %s5 = inlined_call_operand.hbm [shape: bf16[256,256], index: 5, kind: input, shape index: {}]
  %s6 = inlined_call_operand.hbm [shape: bf16[256,256], index: 6, kind: input, shape index: {}]
  %s7 = inlined_call_operand.hbm [shape: bf16[256,256], index: 7, kind: input, shape index: {}]
  %s8 = inlined_call_operand.hbm [shape: f32[2,128,256], index: 8, kind: output, shape index: {}]
  %s9 = sld [smem:[#allocation0]]
  $region101: #{tpu_custom_call.1} parent=0
    _
  %s11 = ssub.s32 1, %s9
  %s12 = scalar_select 0, %s11, %s9
  $region1: #{tpu_custom_call.1} parent=0
    #allocation6 [shape = 'u8[1024]{0}', space=vmem, size = 0x400, scoped, tag = 'input window, operand 0']
    #allocation7 [shape = 's32[2]{0}', space=sflag, size = 0x8, scoped, tag = 'scoped memory for tpu_custom_call.1']
    #allocation8 [shape = 's32[2]{0}', space=sflag, size = 0x8, scoped, tag = 'scoped memory for tpu_custom_call.1']
    #allocation9 [shape = 'u8[131072]{0}', space=vmem, size = 0x20000, scoped, tag = 'input window, operand 1']
    #allocation10 [shape = 's32[2]{0}', space=sflag, size = 0x8, scoped, tag = 'scoped memory for tpu_custom_call.1']
    #allocation11 [shape = 'u8[131072]{0}', space=vmem, size = 0x20000, scoped, tag = 'input window, operand 2']
    #allocation12 [shape = 'u8[131072]{0}', space=vmem, size = 0x20000, scoped, tag = 'input window, operand 3']
    #allocation13 [shape = 's32[2]{0}', space=sflag, size = 0x8, scoped, tag = 'scoped memory for tpu_custom_call.1']
    #allocation14 [shape = 'u8[131072]{0}', space=vmem, size = 0x20000, scoped, tag = 'input window, operand 4, single buffered']
    #allocation15 [shape = 'u8[131072]{0}', space=vmem, size = 0x20000, scoped, tag = 'input window, operand 5, single buffered']
    #allocation16 [shape = 's32[1]{0}', space=sflag, size = 0x4, scoped, tag = 'scoped memory for tpu_custom_call.1']
    #allocation17 [shape = 'u8[131072]{0}', space=vmem, size = 0x20000, scoped, tag = 'input window, operand 6, single buffered']
    #allocation18 [shape = 'u8[131072]{0}', space=vmem, size = 0x20000, scoped, tag = 'input window, operand 7, single buffered']
    #allocation19 [shape = 's32[1]{0}', space=sflag, size = 0x4, scoped, tag = 'scoped memory for tpu_custom_call.1']
    #allocation20 [shape = 'u8[262144]{0}', space=vmem, size = 0x40000, scoped, tag = 'output window, operand 0']
    %13 = vsyncpa [#allocation7], 0
    %s14 = scalar_lea.sflag [#allocation7], 1
    %15 = vsyncpa %s14, 0
    %16 = vsyncpa [#allocation10], 0
    %s17 = scalar_lea.sflag [#allocation10], 1
    %18 = vsyncpa %s17, 0
    %19 = vsyncpa [#allocation13], 0
    %s20 = scalar_lea.sflag [#allocation13], 1
    %21 = vsyncpa %s20, 0
    %22 = vsyncpa [#allocation16], 0
    %23 = vsyncpa [#allocation19], 0
    %24 = vsyncpa [#allocation8], 0
    %s25 = scalar_lea.sflag [#allocation8], 1
    %26 = vsyncpa %s25, 0
    loop: start=0, step=1, limit=4
    $region2: #{tpu_custom_call.1} parent=1 // loop_pre_header
      _
    $region3: #{tpu_custom_call.1} parent=1 // loop_header
      %s28 = sphi 0, %s32
      %p29 = scmp.ge.s32.totalorder %s28, 4
      %s35 = sphi 0, %s47
      %s36 = sphi 0, %s43
      %s37 = sphi 0, %s35
      %s38 = sphi 0, %s36
      %s39 = sphi 0, %s37
      %s40 = sphi 0, %s38
      %s50 = sphi 0, %s52
      %s53 = sphi 0, %s50
      %s54 = sphi 0, %s53
      %s70 = sphi 0, %s54
      %s78 = sphi 0, %s80
      %s81 = sphi 0, %s78
      %s82 = sphi 0, %s81
      %s98 = sphi 0, %s82
      %s104 = sphi 0, %s106
      %s107 = sphi 0, %s104
      %s108 = sphi 0, %s107
      %s124 = sphi 0, %s108
      %s130 = sphi 0, %s132
      %s133 = sphi 0, %s130
      %s134 = sphi 0, %s133
      %s150 = sphi 0, %s134
      %s154 = sphi 0, %s154
      %s156 = sphi 0, %s154
      %s157 = sphi 0, %s156
      %s171 = sphi 0, %s157
      %s175 = sphi 0, %s175
      %s177 = sphi 0, %s175
      %s178 = sphi 0, %s177
      %s192 = sphi 0, %s178
      %s196 = sphi 0, %s196
      %s198 = sphi 0, %s196
      %s199 = sphi 0, %s198
      %s213 = sphi 0, %s199
      %s217 = sphi 0, %s217
      %s219 = sphi 0, %s217
      %s220 = sphi 0, %s219
      %s234 = sphi 0, %s220
      %s242 = sphi 0, %s244
      %s245 = sphi 0, %s242
      %s246 = sphi 0, %s245
      %s262 = sphi 0, %s246
    $region4: #{tpu_custom_call.1} parent=1 // loop_header_branch
      %31 = sbr.rel (%p29) target = $region8
    $region5: #{tpu_custom_call.1} parent=1 // loop_body
      %s33 = ssub.s32 %s28, 1
      %s34 = ssub.s32 %s28, 2
      %s41 = sadd.s32 1, %s36
      %p42 = scmp.ge.s32.totalorder %s41, 1
      %s43 = scalar_select %p42, 0, %s41
      %s44 = sadd.s32 1, %s35
      %s45 = scalar_select %p42, %s44, %s35
      %p46 = scmp.ge.s32.totalorder %s45, 2
      %s47 = scalar_select %p46, 0, %s45
      %s48 = ssub.s32 %s35, %s47
      %p49 = scmp.eq.s32.totalorder %s48, 0
      %s51 = sadd.s32 %s50, 1
      %s52 = scalar_select %p49, %s50, %s51
      %p55 = pneg %p49
      %p56 = scmp.eq.s32.totalorder %s28, 1
      %p57 = por %p55, %p56
      %p58 = scmp.ne.s32.totalorder %s50, %s53
      %p59 = scmp.eq.s32.totalorder %s28, 0
      %p60 = por %p58, %p59
      %p61 = scmp.ne.s32.totalorder %s50, %s53
      %p62 = scmp.eq.s32.totalorder %s33, 1
      %p63 = por %p61, %p62
      %p64 = scmp.ne.s32.totalorder %s53, %s54
      %p65 = scmp.eq.s32.totalorder %s33, 0
      %p66 = por %p64, %p65
      %p67 = scmp.ne.s32.totalorder %s53, %s54
      %p68 = scmp.eq.s32.totalorder %s34, 1
      %p69 = por %p67, %p68
      %p71 = scmp.ne.s32.totalorder %s54, %s70
      %p72 = scmp.eq.s32.totalorder %s34, 0
      %p73 = por %p71, %p72
      %s74 = ssub.s32 %s35, %s47
      %s75 = ssub.s32 %s36, %s43
      %s76 = sor.u32 %s74, %s75
      %p77 = scmp.eq.s32.totalorder %s76, 0
      %s79 = sadd.s32 %s78, 1
      %s80 = scalar_select %p77, %s78, %s79
      %p83 = pneg %p77
      %p84 = scmp.eq.s32.totalorder %s28, 1
      %p85 = por %p83, %p84
      %p86 = scmp.ne.s32.totalorder %s78, %s81
      %p87 = scmp.eq.s32.totalorder %s28, 0
      %p88 = por %p86, %p87
      %p89 = scmp.ne.s32.totalorder %s78, %s81
      %p90 = scmp.eq.s32.totalorder %s33, 1
      %p91 = por %p89, %p90
      %p92 = scmp.ne.s32.totalorder %s81, %s82
      %p93 = scmp.eq.s32.totalorder %s33, 0
      %p94 = por %p92, %p93
      %p95 = scmp.ne.s32.totalorder %s81, %s82
      %p96 = scmp.eq.s32.totalorder %s34, 1
      %p97 = por %p95, %p96
      %p99 = scmp.ne.s32.totalorder %s82, %s98
      %p100 = scmp.eq.s32.totalorder %s34, 0
      %p101 = por %p99, %p100
      %s102 = ssub.s32 %s35, %s47
      %p103 = scmp.eq.s32.totalorder %s102, 0
      %s105 = sadd.s32 %s104, 1
      %s106 = scalar_select %p103, %s104, %s105
      %p109 = pneg %p103
      %p110 = scmp.eq.s32.totalorder %s28, 1
      %p111 = por %p109, %p110
      %p112 = scmp.ne.s32.totalorder %s104, %s107
      %p113 = scmp.eq.s32.totalorder %s28, 0
      %p114 = por %p112, %p113
      %p115 = scmp.ne.s32.totalorder %s104, %s107
      %p116 = scmp.eq.s32.totalorder %s33, 1
      %p117 = por %p115, %p116
      %p118 = scmp.ne.s32.totalorder %s107, %s108
      %p119 = scmp.eq.s32.totalorder %s33, 0
      %p120 = por %p118, %p119
      %p121 = scmp.ne.s32.totalorder %s107, %s108
      %p122 = scmp.eq.s32.totalorder %s34, 1
      %p123 = por %p121, %p122
      %p125 = scmp.ne.s32.totalorder %s108, %s124
      %p126 = scmp.eq.s32.totalorder %s34, 0
      %p127 = por %p125, %p126
      %s128 = ssub.s32 %s35, %s47
      %p129 = scmp.eq.s32.totalorder %s128, 0
      %s131 = sadd.s32 %s130, 1
      %s132 = scalar_select %p129, %s130, %s131
      %p135 = pneg %p129
      %p136 = scmp.eq.s32.totalorder %s28, 1
      %p137 = por %p135, %p136
      %p138 = scmp.ne.s32.totalorder %s130, %s133
      %p139 = scmp.eq.s32.totalorder %s28, 0
      %p140 = por %p138, %p139
      %p141 = scmp.ne.s32.totalorder %s130, %s133
      %p142 = scmp.eq.s32.totalorder %s33, 1
      %p143 = por %p141, %p142
      %p144 = scmp.ne.s32.totalorder %s133, %s134
      %p145 = scmp.eq.s32.totalorder %s33, 0
      %p146 = por %p144, %p145
      %p147 = scmp.ne.s32.totalorder %s133, %s134
      %p148 = scmp.eq.s32.totalorder %s34, 1
      %p149 = por %p147, %p148
      %p151 = scmp.ne.s32.totalorder %s134, %s150
      %p152 = scmp.eq.s32.totalorder %s34, 0
      %p153 = por %p151, %p152
      %s155 = sadd.s32 %s154, 1
      %p158 = scmp.eq.s32.totalorder %s28, 1
      %p159 = scmp.ne.s32.totalorder %s154, %s156
      %p160 = scmp.eq.s32.totalorder %s28, 0
      %p161 = por %p159, %p160
      %p162 = scmp.ne.s32.totalorder %s154, %s156
      %p163 = scmp.eq.s32.totalorder %s33, 1
      %p164 = por %p162, %p163
      %p165 = scmp.ne.s32.totalorder %s156, %s157
      %p166 = scmp.eq.s32.totalorder %s33, 0
      %p167 = por %p165, %p166
      %p168 = scmp.ne.s32.totalorder %s156, %s157
      %p169 = scmp.eq.s32.totalorder %s34, 1
      %p170 = por %p168, %p169
      %p172 = scmp.ne.s32.totalorder %s157, %s171
      %p173 = scmp.eq.s32.totalorder %s34, 0
      %p174 = por %p172, %p173
      %s176 = sadd.s32 %s175, 1
      %p179 = scmp.eq.s32.totalorder %s28, 1
      %p180 = scmp.ne.s32.totalorder %s175, %s177
      %p181 = scmp.eq.s32.totalorder %s28, 0
      %p182 = por %p180, %p181
      %p183 = scmp.ne.s32.totalorder %s175, %s177
      %p184 = scmp.eq.s32.totalorder %s33, 1
      %p185 = por %p183, %p184
      %p186 = scmp.ne.s32.totalorder %s177, %s178
      %p187 = scmp.eq.s32.totalorder %s33, 0
      %p188 = por %p186, %p187
      %p189 = scmp.ne.s32.totalorder %s177, %s178
      %p190 = scmp.eq.s32.totalorder %s34, 1
      %p191 = por %p189, %p190
      %p193 = scmp.ne.s32.totalorder %s178, %s192
      %p194 = scmp.eq.s32.totalorder %s34, 0
      %p195 = por %p193, %p194
      %s197 = sadd.s32 %s196, 1
      %p200 = scmp.eq.s32.totalorder %s28, 1
      %p201 = scmp.ne.s32.totalorder %s196, %s198
      %p202 = scmp.eq.s32.totalorder %s28, 0
      %p203 = por %p201, %p202
      %p204 = scmp.ne.s32.totalorder %s196, %s198
      %p205 = scmp.eq.s32.totalorder %s33, 1
      %p206 = por %p204, %p205
      %p207 = scmp.ne.s32.totalorder %s198, %s199
      %p208 = scmp.eq.s32.totalorder %s33, 0
      %p209 = por %p207, %p208
      %p210 = scmp.ne.s32.totalorder %s198, %s199
      %p211 = scmp.eq.s32.totalorder %s34, 1
      %p212 = por %p210, %p211
      %p214 = scmp.ne.s32.totalorder %s199, %s213
      %p215 = scmp.eq.s32.totalorder %s34, 0
      %p216 = por %p214, %p215
      %s218 = sadd.s32 %s217, 1
      %p221 = scmp.eq.s32.totalorder %s28, 1
      %p222 = scmp.ne.s32.totalorder %s217, %s219
      %p223 = scmp.eq.s32.totalorder %s28, 0
      %p224 = por %p222, %p223
      %p225 = scmp.ne.s32.totalorder %s217, %s219
      %p226 = scmp.eq.s32.totalorder %s33, 1
      %p227 = por %p225, %p226
      %p228 = scmp.ne.s32.totalorder %s219, %s220
      %p229 = scmp.eq.s32.totalorder %s33, 0
      %p230 = por %p228, %p229
      %p231 = scmp.ne.s32.totalorder %s219, %s220
      %p232 = scmp.eq.s32.totalorder %s34, 1
      %p233 = por %p231, %p232
      %p235 = scmp.ne.s32.totalorder %s220, %s234
      %p236 = scmp.eq.s32.totalorder %s34, 0
      %p237 = por %p235, %p236
      %s238 = ssub.s32 %s35, %s47
      %s239 = ssub.s32 %s36, %s43
      %s240 = sor.u32 %s238, %s239
      %p241 = scmp.eq.s32.totalorder %s240, 0
      %s243 = sadd.s32 %s242, 1
      %s244 = scalar_select %p241, %s242, %s243
      %p247 = pneg %p241
      %p248 = scmp.eq.s32.totalorder %s28, 1
      %p249 = por %p247, %p248
      %p250 = scmp.ne.s32.totalorder %s242, %s245
      %p251 = scmp.eq.s32.totalorder %s28, 0
      %p252 = por %p250, %p251
      %p253 = scmp.ne.s32.totalorder %s242, %s245
      %p254 = scmp.eq.s32.totalorder %s33, 1
      %p255 = por %p253, %p254
      %p256 = scmp.ne.s32.totalorder %s245, %s246
      %p257 = scmp.eq.s32.totalorder %s33, 0
      %p258 = por %p256, %p257
      %p259 = scmp.ne.s32.totalorder %s245, %s246
      %p260 = scmp.eq.s32.totalorder %s34, 1
      %p261 = por %p259, %p260
      %p263 = scmp.ne.s32.totalorder %s246, %s262
      %p264 = scmp.eq.s32.totalorder %s34, 0
      %p265 = por %p263, %p264
      %p266 = scmp.le.s32.totalorder 1, %s28
      %p267 = scmp.lt.s32.totalorder %s28, 3
      %p268 = pnand %p266, %p267
      %p269 = pneg %p268
      // Predicated region
      $region9: #{tpu_custom_call.1} parent=5 // pred_check
        _
      $region10: #{tpu_custom_call.1} parent=5 // pred_check_branch
        %271 = sbr.rel (%p268) target = $region12
      $region11: #{tpu_custom_call.1} parent=5 // pred_region
        %s272 = ssub.s32 %s28, 1
        // Predicated region
        $region13: #{tpu_custom_call.1} parent=11 // pred_check
          %p273 = pneg %p167
        $region14: #{tpu_custom_call.1} parent=11 // pred_check_branch
          %275 = sbr.rel (%p273) target = $region16
        $region15: #{tpu_custom_call.1} parent=11 // pred_region
          %277 = vsyncadd [#allocation13], 0
          %s278 = sshll.u32 %s4, 4
          %s279 = int_to_ptr.hbm [resolvable:$true] %s278
          %s280 = sshll.u32 [#allocation14], 4
          %s281 = int_to_ptr.vmem [resolvable:$true] %s280
          %286 = dma.hbm_to_vmem [thread:$0]  %s279, 4096, %s281, [#allocation13], 128, 128, 8
        $region16: #{tpu_custom_call.1} parent=11 // pred_fallthru
          _
        // Predicated region
        $region17: #{tpu_custom_call.1} parent=11 // pred_check
          %p287 = pneg %p188
        $region18: #{tpu_custom_call.1} parent=11 // pred_check_branch
          %289 = sbr.rel (%p287) target = $region20
        $region19: #{tpu_custom_call.1} parent=11 // pred_region
          %291 = vsyncadd [#allocation16], 0
          %s292 = sshll.u32 %s5, 4
          %s293 = int_to_ptr.hbm [resolvable:$true] %s292
          %s294 = sshll.u32 [#allocation15], 4
          %s295 = int_to_ptr.vmem [resolvable:$true] %s294
          %300 = dma.hbm_to_vmem [thread:$0]  %s293, 4096, %s295, [#allocation16], 128, 128, 8
        $region20: #{tpu_custom_call.1} parent=11 // pred_fallthru
          _
        // Predicated region
        $region21: #{tpu_custom_call.1} parent=11 // pred_check
          %p301 = pneg %p209
        $region22: #{tpu_custom_call.1} parent=11 // pred_check_branch
          %303 = sbr.rel (%p301) target = $region24
        $region23: #{tpu_custom_call.1} parent=11 // pred_region
          %305 = vsyncadd [#allocation16], 0
          %s306 = sshll.u32 %s6, 4
          %s307 = int_to_ptr.hbm [resolvable:$true] %s306
          %s308 = sshll.u32 [#allocation17], 4
          %s309 = int_to_ptr.vmem [resolvable:$true] %s308
          %314 = dma.hbm_to_vmem [thread:$0]  %s307, 4096, %s309, [#allocation16], 128, 128, 8
        $region24: #{tpu_custom_call.1} parent=11 // pred_fallthru
          _
        // Predicated region
        $region25: #{tpu_custom_call.1} parent=11 // pred_check
          %p315 = pneg %p230
        $region26: #{tpu_custom_call.1} parent=11 // pred_check_branch
          %317 = sbr.rel (%p315) target = $region28
        $region27: #{tpu_custom_call.1} parent=11 // pred_region
          %319 = vsyncadd [#allocation19], 0
          %s320 = sshll.u32 %s7, 4
          %s321 = int_to_ptr.hbm [resolvable:$true] %s320
          %s322 = sshll.u32 [#allocation18], 4
          %s323 = int_to_ptr.vmem [resolvable:$true] %s322
          %328 = dma.hbm_to_vmem [thread:$0]  %s321, 4096, %s323, [#allocation19], 128, 128, 8
        $region28: #{tpu_custom_call.1} parent=11 // pred_fallthru
          _
      $region12: #{tpu_custom_call.1} parent=5 // pred_fallthru
        _
      %p329 = scmp.lt.s32.totalorder %s28, 2
      // Predicated region
      $region29: #{tpu_custom_call.1} parent=5 // pred_check
        %p330 = pneg %p329
      $region30: #{tpu_custom_call.1} parent=5 // pred_check_branch
        %332 = sbr.rel (%p330) target = $region32
      $region31: #{tpu_custom_call.1} parent=5 // pred_region
        // Predicated region
        $region33: #{tpu_custom_call.1} parent=31 // pred_check
          %p333 = pneg %p60
        $region34: #{tpu_custom_call.1} parent=31 // pred_check_branch
          %335 = sbr.rel (%p333) target = $region36
        $region35: #{tpu_custom_call.1} parent=31 // pred_region
          %s336 = sand.u32 %s50, 1
          %s337 = scalar_lea.sflag [#allocation7], %s336
          %s338 = sand.u32 %s50, 1
          %s339 = scalar_lea.vmem [#allocation6], %s338
          %341 = vsyncadd %s337, 0
          %s342 = scalar_lea.hbm %s0, %s35
          %s344 = sshll.u32 %s342, 4
          %s345 = int_to_ptr.hbm [resolvable:$true] %s344
          %s346 = sshll.u32 %s339, 4
          %s347 = int_to_ptr.vmem [resolvable:$true] %s346
          %349 = dma.hbm_to_vmem [thread:$0]  %s345, 16, %s347, %s337
        $region36: #{tpu_custom_call.1} parent=31 // pred_fallthru
          _
        // Predicated region
        $region37: #{tpu_custom_call.1} parent=31 // pred_check
          %p350 = pneg %p88
        $region38: #{tpu_custom_call.1} parent=31 // pred_check_branch
          %352 = sbr.rel (%p350) target = $region40
        $region39: #{tpu_custom_call.1} parent=31 // pred_region
          %s353 = sand.u32 %s28, 1
          %s354 = scalar_lea.sflag [#allocation10], %s353
          %s355 = sand.u32 %s78, 1
          %s356 = smul.addr %s355, 128
          %s357 = scalar_lea.vmem [#allocation9], %s356
          %s358 = smul.u32 16, %s36
          %360 = vsyncadd %s354, 0
          %s361 = smul.addr %s358, 2
          %s362 = smul.addr %s35, 32
          %s363 = sadd.s32 %s361, %s362
          %s364 = smul.addr %s363, 4
          %s365 = scalar_lea.hbm %s1, %s364
          %s366 = sshll.u32 %s365, 4
          %s367 = int_to_ptr.hbm [resolvable:$true] %s366
          %s368 = sshll.u32 %s357, 4
          %s369 = int_to_ptr.vmem [resolvable:$true] %s368
          %374 = dma.hbm_to_vmem [thread:$0]  %s367, 2048, %s369, %s354, 128, 128, 8
        $region40: #{tpu_custom_call.1} parent=31 // pred_fallthru
          _
        // Predicated region
        $region41: #{tpu_custom_call.1} parent=31 // pred_check
          %p375 = pneg %p114
        $region42: #{tpu_custom_call.1} parent=31 // pred_check_branch
          %377 = sbr.rel (%p375) target = $region44
        $region43: #{tpu_custom_call.1} parent=31 // pred_region
          %s378 = sand.u32 %s28, 1
          %s379 = scalar_lea.sflag [#allocation10], %s378
          %s380 = sand.u32 %s104, 1
          %s381 = smul.addr %s380, 128
          %s382 = scalar_lea.vmem [#allocation11], %s381
          %384 = vsyncadd %s379, 0
          %s385 = smul.addr %s35, 32
          %s386 = smul.addr %s385, 4
          %s387 = scalar_lea.hbm %s2, %s386
          %s388 = sshll.u32 %s387, 4
          %s389 = int_to_ptr.hbm [resolvable:$true] %s388
          %s390 = sshll.u32 %s382, 4
          %s391 = int_to_ptr.vmem [resolvable:$true] %s390
          %396 = dma.hbm_to_vmem [thread:$0]  %s389, 2048, %s391, %s379, 128, 128, 8
        $region44: #{tpu_custom_call.1} parent=31 // pred_fallthru
          _
        // Predicated region
        $region45: #{tpu_custom_call.1} parent=31 // pred_check
          %p397 = pneg %p140
        $region46: #{tpu_custom_call.1} parent=31 // pred_check_branch
          %399 = sbr.rel (%p397) target = $region48
        $region47: #{tpu_custom_call.1} parent=31 // pred_region
          %s400 = sand.u32 %s28, 1
          %s401 = scalar_lea.sflag [#allocation13], %s400
          %s402 = sand.u32 %s130, 1
          %s403 = smul.addr %s402, 128
          %s404 = scalar_lea.vmem [#allocation12], %s403
          %406 = vsyncadd %s401, 0
          %s407 = smul.addr %s35, 32
          %s408 = smul.addr %s407, 4
          %s409 = scalar_lea.hbm %s3, %s408
          %s410 = sshll.u32 %s409, 4
          %s411 = int_to_ptr.hbm [resolvable:$true] %s410
          %s412 = sshll.u32 %s404, 4
          %s413 = int_to_ptr.vmem [resolvable:$true] %s412
          %418 = dma.hbm_to_vmem [thread:$0]  %s411, 2048, %s413, %s401, 128, 128, 8
        $region48: #{tpu_custom_call.1} parent=31 // pred_fallthru
          _
      $region32: #{tpu_custom_call.1} parent=5 // pred_fallthru
        _
      %p419 = scmp.le.s32.totalorder 1, %s28
      %p420 = scmp.lt.s32.totalorder %s28, 3
      %p421 = pnand %p419, %p420
      %p422 = pneg %p421
      // Predicated region
      $region49: #{tpu_custom_call.1} parent=5 // pred_check
        _
      $region50: #{tpu_custom_call.1} parent=5 // pred_check_branch
        %424 = sbr.rel (%p421) target = $region52
      $region51: #{tpu_custom_call.1} parent=5 // pred_region
        %s425 = ssub.s32 %s28, 1
        %s426 = sand.u32 %s53, 1
        %s427 = scalar_lea.sflag [#allocation7], %s426
        %s428 = sand.u32 %s53, 1
        %s429 = scalar_lea.vmem [#allocation6], %s428
        // Predicated region
        $region53: #{tpu_custom_call.1} parent=51 // pred_check
          %p430 = pneg %p66
        $region54: #{tpu_custom_call.1} parent=51 // pred_check_branch
          %432 = sbr.rel (%p430) target = $region56
        $region55: #{tpu_custom_call.1} parent=51 // pred_region
          %434 = dma.done %s427, 16
        $region56: #{tpu_custom_call.1} parent=51 // pred_fallthru
          _
        %s435 = sand.u32 %s33, 1
        %s436 = scalar_lea.sflag [#allocation10], %s435
        %s437 = sand.u32 %s81, 1
        %s438 = smul.addr %s437, 128
        %s439 = scalar_lea.vmem [#allocation9], %s438
        // Predicated region
        $region57: #{tpu_custom_call.1} parent=51 // pred_check
          %p440 = pneg %p94
        $region58: #{tpu_custom_call.1} parent=51 // pred_check_branch
          %442 = sbr.rel (%p440) target = $region60
        $region59: #{tpu_custom_call.1} parent=51 // pred_region
          %444 = dma.done %s436, 2048
        $region60: #{tpu_custom_call.1} parent=51 // pred_fallthru
          _
        %s445 = sand.u32 %s33, 1
        %s446 = scalar_lea.sflag [#allocation10], %s445
        %s447 = sand.u32 %s107, 1
        %s448 = smul.addr %s447, 128
        %s449 = scalar_lea.vmem [#allocation11], %s448
        // Predicated region
        $region61: #{tpu_custom_call.1} parent=51 // pred_check
          %p450 = pneg %p120
        $region62: #{tpu_custom_call.1} parent=51 // pred_check_branch
          %452 = sbr.rel (%p450) target = $region64
        $region63: #{tpu_custom_call.1} parent=51 // pred_region
          %454 = dma.done %s446, 2048
        $region64: #{tpu_custom_call.1} parent=51 // pred_fallthru
          _
        %s455 = sand.u32 %s33, 1
        %s456 = scalar_lea.sflag [#allocation13], %s455
        %s457 = sand.u32 %s133, 1
        %s458 = smul.addr %s457, 128
        %s459 = scalar_lea.vmem [#allocation12], %s458
        // Predicated region
        $region65: #{tpu_custom_call.1} parent=51 // pred_check
          %p460 = pneg %p146
        $region66: #{tpu_custom_call.1} parent=51 // pred_check_branch
          %462 = sbr.rel (%p460) target = $region68
        $region67: #{tpu_custom_call.1} parent=51 // pred_region
          %464 = dma.done %s456, 2048
        $region68: #{tpu_custom_call.1} parent=51 // pred_fallthru
          _
        // Predicated region
        $region69: #{tpu_custom_call.1} parent=51 // pred_check
          %p465 = pneg %p167
        $region70: #{tpu_custom_call.1} parent=51 // pred_check_branch
          %467 = sbr.rel (%p465) target = $region72
        $region71: #{tpu_custom_call.1} parent=51 // pred_region
          %469 = dma.done [#allocation13], 4096
        $region72: #{tpu_custom_call.1} parent=51 // pred_fallthru
          _
        // Predicated region
        $region73: #{tpu_custom_call.1} parent=51 // pred_check
          %p470 = pneg %p188
        $region74: #{tpu_custom_call.1} parent=51 // pred_check_branch
          %472 = sbr.rel (%p470) target = $region76
        $region75: #{tpu_custom_call.1} parent=51 // pred_region
          %474 = dma.done [#allocation16], 4096
        $region76: #{tpu_custom_call.1} parent=51 // pred_fallthru
          _
        // Predicated region
        $region77: #{tpu_custom_call.1} parent=51 // pred_check
          %p475 = pneg %p209
        $region78: #{tpu_custom_call.1} parent=51 // pred_check_branch
          %477 = sbr.rel (%p475) target = $region80
        $region79: #{tpu_custom_call.1} parent=51 // pred_region
          %479 = dma.done [#allocation16], 4096
        $region80: #{tpu_custom_call.1} parent=51 // pred_fallthru
          _
        // Predicated region
        $region81: #{tpu_custom_call.1} parent=51 // pred_check
          %p480 = pneg %p230
        $region82: #{tpu_custom_call.1} parent=51 // pred_check_branch
          %482 = sbr.rel (%p480) target = $region84
        $region83: #{tpu_custom_call.1} parent=51 // pred_region
          %484 = dma.done [#allocation19], 4096
        $region84: #{tpu_custom_call.1} parent=51 // pred_fallthru
          _
        %s485 = sand.u32 %s53, 1
        %s486 = scalar_lea.sflag [#allocation7], %s485
        %s487 = sand.u32 %s53, 1
        %s488 = scalar_lea.vmem [#allocation6], %s487
        %p489 = pneg %p66
        %p490 = pneg %p63
        %s491 = sand.u32 %s33, 1
        %s492 = scalar_lea.sflag [#allocation10], %s491
        %s493 = sand.u32 %s81, 1
        %s494 = smul.addr %s493, 128
        %s495 = scalar_lea.vmem [#allocation9], %s494
        %p496 = pneg %p94
        %p497 = pneg %p91
        %s498 = sand.u32 %s33, 1
        %s499 = scalar_lea.sflag [#allocation10], %s498
        %s500 = sand.u32 %s107, 1
        %s501 = smul.addr %s500, 128
        %s502 = scalar_lea.vmem [#allocation11], %s501
        %p503 = pneg %p120
        %p504 = pneg %p117
        %s505 = sand.u32 %s33, 1
        %s506 = scalar_lea.sflag [#allocation13], %s505
        %s507 = sand.u32 %s133, 1
        %s508 = smul.addr %s507, 128
        %s509 = scalar_lea.vmem [#allocation12], %s508
        %p510 = pneg %p146
        %p511 = pneg %p143
        %p512 = pneg %p167
        %p513 = pneg %p164
        %p514 = pneg %p188
        %p515 = pneg %p185
        %p516 = pneg %p209
        %p517 = pneg %p206
        %p518 = pneg %p230
        %p519 = pneg %p227
        %p520 = pneg %p258
        %p521 = pneg %p255
        %s522 = sand.u32 %s245, 1
        %s523 = scalar_lea.sflag [#allocation8], %s522
        %s524 = sand.u32 %s245, 1
        %s525 = smul.addr %s524, 256
        %s526 = scalar_lea.vmem [#allocation20], %s525
        %s527 = smul.u32 16, %s38
        %s528 = smul.u32 16, %s38
        %p529 = scmp.eq.s32.totalorder %s38, 0
        // Predicated region
        $region85: #{tpu_custom_call.1} parent=51 // pred_check
          %p530 = pneg %p529
        $region86: #{tpu_custom_call.1} parent=51 // pred_check_branch
          %532 = sbr.rel (%p530) target = $region88
        $region87: #{tpu_custom_call.1} parent=51 // pred_region
          %v533 = vld [vmem:[%s449] sm:$0xff]
          %v534 = vld [vmem:[%s449 + $0x8] sm:$0xff]
          %v535 = vld [vmem:[%s449 + $0x10] sm:$0xff]
          %v536 = vld [vmem:[%s449 + $0x18] sm:$0xff]
          %v537 = vld [vmem:[%s449 + $0x20] sm:$0xff]
          %v538 = vld [vmem:[%s449 + $0x28] sm:$0xff]
          %v539 = vld [vmem:[%s449 + $0x30] sm:$0xff]
          %v540 = vld [vmem:[%s449 + $0x38] sm:$0xff]
          %v541 = vld [vmem:[%s449 + $0x40] sm:$0xff]
          %v542 = vld [vmem:[%s449 + $0x48] sm:$0xff]
          %v543 = vld [vmem:[%s449 + $0x50] sm:$0xff]
          %v544 = vld [vmem:[%s449 + $0x58] sm:$0xff]
          %v545 = vld [vmem:[%s449 + $0x60] sm:$0xff]
          %v546 = vld [vmem:[%s449 + $0x68] sm:$0xff]
          %v547 = vld [vmem:[%s449 + $0x70] sm:$0xff]
          %v548 = vld [vmem:[%s449 + $0x78] sm:$0xff]
          %v549 = vld [vmem:[#allocation15] sm:$0xff]
          %v550 = vld [vmem:[#allocation15 + $0x8] sm:$0xff]
          %v551 = vld [vmem:[#allocation15 + $0x10] sm:$0xff]
          %v552 = vld [vmem:[#allocation15 + $0x18] sm:$0xff]
          %v553 = vld [vmem:[#allocation15 + $0x20] sm:$0xff]
          %v554 = vld [vmem:[#allocation15 + $0x28] sm:$0xff]
          %v555 = vld [vmem:[#allocation15 + $0x30] sm:$0xff]
          %v556 = vld [vmem:[#allocation15 + $0x38] sm:$0xff]
          %v557 = vld [vmem:[#allocation15 + $0x40] sm:$0xff]
          %v558 = vld [vmem:[#allocation15 + $0x48] sm:$0xff]
          %v559 = vld [vmem:[#allocation15 + $0x50] sm:$0xff]
          %v560 = vld [vmem:[#allocation15 + $0x58] sm:$0xff]
          %v561 = vld [vmem:[#allocation15 + $0x60] sm:$0xff]
          %v562 = vld [vmem:[#allocation15 + $0x68] sm:$0xff]
          %v563 = vld [vmem:[#allocation15 + $0x70] sm:$0xff]
          %v564 = vld [vmem:[#allocation15 + $0x78] sm:$0xff]
          %v565 = vld [vmem:[#allocation15 + $0x80] sm:$0xff]
          %v566 = vld [vmem:[#allocation15 + $0x88] sm:$0xff]
          %v567 = vld [vmem:[#allocation15 + $0x90] sm:$0xff]
          %v568 = vld [vmem:[#allocation15 + $0x98] sm:$0xff]
          %v569 = vld [vmem:[#allocation15 + $0xa0] sm:$0xff]
          %v570 = vld [vmem:[#allocation15 + $0xa8] sm:$0xff]
          %v571 = vld [vmem:[#allocation15 + $0xb0] sm:$0xff]
          %v572 = vld [vmem:[#allocation15 + $0xb8] sm:$0xff]
          %v573 = vld [vmem:[#allocation15 + $0xc0] sm:$0xff]
          %v574 = vld [vmem:[#allocation15 + $0xc8] sm:$0xff]
          %v575 = vld [vmem:[#allocation15 + $0xd0] sm:$0xff]
          %v576 = vld [vmem:[#allocation15 + $0xd8] sm:$0xff]
          %v577 = vld [vmem:[#allocation15 + $0xe0] sm:$0xff]
          %v578 = vld [vmem:[#allocation15 + $0xe8] sm:$0xff]
          %v579 = vld [vmem:[#allocation15 + $0xf0] sm:$0xff]
          %v580 = vld [vmem:[#allocation15 + $0xf8] sm:$0xff]
          %v597 = vunpack.c.l.b16 %v533
          %v598 = vunpack.c.h.b16 %v533
          %v599 = vunpack.c.l.b16 %v534
          %v600 = vunpack.c.h.b16 %v534
          %v601 = vunpack.c.l.b16 %v535
          %v602 = vunpack.c.h.b16 %v535
          %v603 = vunpack.c.l.b16 %v536
          %v604 = vunpack.c.h.b16 %v536
          %v605 = vunpack.c.l.b16 %v537
          %v606 = vunpack.c.h.b16 %v537
          %v607 = vunpack.c.l.b16 %v538
          %v608 = vunpack.c.h.b16 %v538
          %v609 = vunpack.c.l.b16 %v539
          %v610 = vunpack.c.h.b16 %v539
          %v611 = vunpack.c.l.b16 %v540
          %v612 = vunpack.c.h.b16 %v540
          %v613 = vunpack.c.l.b16 %v541
          %v614 = vunpack.c.h.b16 %v541
          %v615 = vunpack.c.l.b16 %v542
          %v616 = vunpack.c.h.b16 %v542
          %v617 = vunpack.c.l.b16 %v543
          %v618 = vunpack.c.h.b16 %v543
          %v619 = vunpack.c.l.b16 %v544
          %v620 = vunpack.c.h.b16 %v544
          %v621 = vunpack.c.l.b16 %v545
          %v622 = vunpack.c.h.b16 %v545
          %v623 = vunpack.c.l.b16 %v546
          %v624 = vunpack.c.h.b16 %v546
          %v625 = vunpack.c.l.b16 %v547
          %v626 = vunpack.c.h.b16 %v547
          %v627 = vunpack.c.l.b16 %v548
          %v628 = vunpack.c.h.b16 %v548
          %v629 = vpack.c.b16 %v599, %v597
          %v630 = vpack.c.b16 %v600, %v598
          %v631 = vpack.c.b16 %v603, %v601
          %v632 = vpack.c.b16 %v604, %v602
          %v633 = vpack.c.b16 %v607, %v605
          %v634 = vpack.c.b16 %v608, %v606
          %v635 = vpack.c.b16 %v611, %v609
          %v636 = vpack.c.b16 %v612, %v610
          %v637 = vpack.c.b16 %v615, %v613
          %v638 = vpack.c.b16 %v616, %v614
          %v639 = vpack.c.b16 %v619, %v617
          %v640 = vpack.c.b16 %v620, %v618
          %v641 = vpack.c.b16 %v623, %v621
          %v642 = vpack.c.b16 %v624, %v622
          %v643 = vpack.c.b16 %v627, %v625
          %v644 = vpack.c.b16 %v628, %v626
          %v693 = vunpack.c.l.b16 %v549
          %v694 = vunpack.c.h.b16 %v549
          %v695 = vunpack.c.l.b16 %v550
          %v696 = vunpack.c.h.b16 %v550
          %v697 = vunpack.c.l.b16 %v551
          %v698 = vunpack.c.h.b16 %v551
          %v699 = vunpack.c.l.b16 %v552
          %v700 = vunpack.c.h.b16 %v552
          %v701 = vunpack.c.l.b16 %v553
          %v702 = vunpack.c.h.b16 %v553
          %v703 = vunpack.c.l.b16 %v554
          %v704 = vunpack.c.h.b16 %v554
          %v705 = vunpack.c.l.b16 %v555
          %v706 = vunpack.c.h.b16 %v555
          %v707 = vunpack.c.l.b16 %v556
          %v708 = vunpack.c.h.b16 %v556
          %v709 = vunpack.c.l.b16 %v557
          %v710 = vunpack.c.h.b16 %v557
          %v711 = vunpack.c.l.b16 %v558
          %v712 = vunpack.c.h.b16 %v558
          %v713 = vunpack.c.l.b16 %v559
          %v714 = vunpack.c.h.b16 %v559
          %v715 = vunpack.c.l.b16 %v560
          %v716 = vunpack.c.h.b16 %v560
          %v717 = vunpack.c.l.b16 %v561
          %v718 = vunpack.c.h.b16 %v561
          %v719 = vunpack.c.l.b16 %v562
          %v720 = vunpack.c.h.b16 %v562
          %v721 = vunpack.c.l.b16 %v563
          %v722 = vunpack.c.h.b16 %v563
          %v723 = vunpack.c.l.b16 %v564
          %v724 = vunpack.c.h.b16 %v564
          %v725 = vunpack.c.l.b16 %v565
          %v726 = vunpack.c.h.b16 %v565
          %v727 = vunpack.c.l.b16 %v566
          %v728 = vunpack.c.h.b16 %v566
          %v729 = vunpack.c.l.b16 %v567
          %v730 = vunpack.c.h.b16 %v567
          %v731 = vunpack.c.l.b16 %v568
          %v732 = vunpack.c.h.b16 %v568
          %v733 = vunpack.c.l.b16 %v569
          %v734 = vunpack.c.h.b16 %v569
          %v735 = vunpack.c.l.b16 %v570
          %v736 = vunpack.c.h.b16 %v570
          %v737 = vunpack.c.l.b16 %v571
          %v738 = vunpack.c.h.b16 %v571
          %v739 = vunpack.c.l.b16 %v572
          %v740 = vunpack.c.h.b16 %v572
          %v741 = vunpack.c.l.b16 %v573
          %v742 = vunpack.c.h.b16 %v573
          %v743 = vunpack.c.l.b16 %v574
          %v744 = vunpack.c.h.b16 %v574
          %v745 = vunpack.c.l.b16 %v575
          %v746 = vunpack.c.h.b16 %v575
          %v747 = vunpack.c.l.b16 %v576
          %v748 = vunpack.c.h.b16 %v576
          %v749 = vunpack.c.l.b16 %v577
          %v750 = vunpack.c.h.b16 %v577
          %v751 = vunpack.c.l.b16 %v578
          %v752 = vunpack.c.h.b16 %v578
          %v753 = vunpack.c.l.b16 %v579
          %v754 = vunpack.c.h.b16 %v579
          %v755 = vunpack.c.l.b16 %v580
          %v756 = vunpack.c.h.b16 %v580
          %v757 = vpack.c.b16 %v695, %v693
          %v758 = vpack.c.b16 %v696, %v694
          %v759 = vpack.c.b16 %v699, %v697
          %v760 = vpack.c.b16 %v700, %v698
          %v761 = vpack.c.b16 %v703, %v701
          %v762 = vpack.c.b16 %v704, %v702
          %v763 = vpack.c.b16 %v707, %v705
          %v764 = vpack.c.b16 %v708, %v706
          %v765 = vpack.c.b16 %v711, %v709
          %v766 = vpack.c.b16 %v712, %v710
          %v767 = vpack.c.b16 %v715, %v713
          %v768 = vpack.c.b16 %v716, %v714
          %v769 = vpack.c.b16 %v719, %v717
          %v770 = vpack.c.b16 %v720, %v718
          %v771 = vpack.c.b16 %v723, %v721
          %v772 = vpack.c.b16 %v724, %v722
          %v773 = vpack.c.b16 %v727, %v725
          %v774 = vpack.c.b16 %v728, %v726
          %v775 = vpack.c.b16 %v731, %v729
          %v776 = vpack.c.b16 %v732, %v730
          %v777 = vpack.c.b16 %v735, %v733
          %v778 = vpack.c.b16 %v736, %v734
          %v779 = vpack.c.b16 %v739, %v737
          %v780 = vpack.c.b16 %v740, %v738
          %v781 = vpack.c.b16 %v743, %v741
          %v782 = vpack.c.b16 %v744, %v742
          %v783 = vpack.c.b16 %v747, %v745
          %v784 = vpack.c.b16 %v748, %v746
          %v785 = vpack.c.b16 %v751, %v749
          %v786 = vpack.c.b16 %v752, %v750
          %v787 = vpack.c.b16 %v755, %v753
          %v788 = vpack.c.b16 %v756, %v754
          %821 = vmatpush.bf16.msra.mxu0 %v771
          %822 = vmatpush.bf16.msra.mxu0 %v769
          %823 = vmatpush.bf16.msra.mxu0 %v767
          %824 = vmatpush.bf16.msra.mxu0 %v765
          %825 = vmatpush.bf16.msra.mxu0 %v763
          %826 = vmatpush.bf16.msra.mxu0 %v761
          %827 = vmatpush.bf16.msra.mxu0 %v759
          %828 = vmatpush.bf16.msra.mxu0 %v757
          %829 = vmatmul.bf16.gmra.mxu0 %v629
          %v830 = vpop.f32.mrf.mxu0
          %v831 = vadd.f32 0.0, %v830
          %v832 = vpop.f32.mrf.mxu0
          %v833 = vadd.f32 0.0, %v832
          %834 = vmatmul.bf16.gmra.mxu0 %v631
          %v835 = vpop.f32.mrf.mxu0
          %v836 = vadd.f32 0.0, %v835
          %v837 = vpop.f32.mrf.mxu0
          %v838 = vadd.f32 0.0, %v837
          %839 = vmatmul.bf16.gmra.mxu0 %v633
          %v840 = vpop.f32.mrf.mxu0
          %v841 = vadd.f32 0.0, %v840
          %v842 = vpop.f32.mrf.mxu0
          %v843 = vadd.f32 0.0, %v842
          %844 = vmatmul.bf16.gmra.mxu0 %v635
          %v845 = vpop.f32.mrf.mxu0
          %v846 = vadd.f32 0.0, %v845
          %v847 = vpop.f32.mrf.mxu0
          %v848 = vadd.f32 0.0, %v847
          %849 = vmatmul.bf16.gmra.mxu0 %v637
          %v850 = vpop.f32.mrf.mxu0
          %v851 = vadd.f32 0.0, %v850
          %v852 = vpop.f32.mrf.mxu0
          %v853 = vadd.f32 0.0, %v852
          %854 = vmatmul.bf16.gmra.mxu0 %v639
          %v855 = vpop.f32.mrf.mxu0
          %v856 = vadd.f32 0.0, %v855
          %v857 = vpop.f32.mrf.mxu0
          %v858 = vadd.f32 0.0, %v857
          %859 = vmatmul.bf16.gmra.mxu0 %v641
          %v860 = vpop.f32.mrf.mxu0
          %v861 = vadd.f32 0.0, %v860
          %v862 = vpop.f32.mrf.mxu0
          %v863 = vadd.f32 0.0, %v862
          %864 = vmatmul.bf16.gmra.mxu0 %v643
          %v865 = vpop.f32.mrf.mxu0
          %v866 = vadd.f32 0.0, %v865
          %v867 = vpop.f32.mrf.mxu0
          %v868 = vadd.f32 0.0, %v867
          %869 = vdwg.mxu0
          %870 = vmatpush.bf16.msra.mxu0 %v787
          %871 = vmatpush.bf16.msra.mxu0 %v785
          %872 = vmatpush.bf16.msra.mxu0 %v783
          %873 = vmatpush.bf16.msra.mxu0 %v781
          %874 = vmatpush.bf16.msra.mxu0 %v779
          %875 = vmatpush.bf16.msra.mxu0 %v777
          %876 = vmatpush.bf16.msra.mxu0 %v775
          %877 = vmatpush.bf16.msra.mxu0 %v773
          %878 = vmatmul.bf16.gmra.mxu0 %v630
          %v879 = vpop.f32.mrf.mxu0
          %v880 = vadd.f32 %v831, %v879
          %v881 = vpop.f32.mrf.mxu0
          %v882 = vadd.f32 %v833, %v881
          %883 = vmatmul.bf16.gmra.mxu0 %v632
          %v884 = vpop.f32.mrf.mxu0
          %v885 = vadd.f32 %v836, %v884
          %v886 = vpop.f32.mrf.mxu0
          %v887 = vadd.f32 %v838, %v886
          %888 = vmatmul.bf16.gmra.mxu0 %v634
          %v889 = vpop.f32.mrf.mxu0
          %v890 = vadd.f32 %v841, %v889
          %v891 = vpop.f32.mrf.mxu0
          %v892 = vadd.f32 %v843, %v891
          %893 = vmatmul.bf16.gmra.mxu0 %v636
          %v894 = vpop.f32.mrf.mxu0
          %v895 = vadd.f32 %v846, %v894
          %v896 = vpop.f32.mrf.mxu0
          %v897 = vadd.f32 %v848, %v896
          %898 = vmatmul.bf16.gmra.mxu0 %v638
          %v899 = vpop.f32.mrf.mxu0
          %v900 = vadd.f32 %v851, %v899
          %v901 = vpop.f32.mrf.mxu0
          %v902 = vadd.f32 %v853, %v901
          %903 = vmatmul.bf16.gmra.mxu0 %v640
          %v904 = vpop.f32.mrf.mxu0
          %v905 = vadd.f32 %v856, %v904
          %v906 = vpop.f32.mrf.mxu0
          %v907 = vadd.f32 %v858, %v906
          %908 = vmatmul.bf16.gmra.mxu0 %v642
          %v909 = vpop.f32.mrf.mxu0
          %v910 = vadd.f32 %v861, %v909
          %v911 = vpop.f32.mrf.mxu0
          %v912 = vadd.f32 %v863, %v911
          %913 = vmatmul.bf16.gmra.mxu0 %v644
          %v914 = vpop.f32.mrf.mxu0
          %v915 = vadd.f32 %v866, %v914
          %v916 = vpop.f32.mrf.mxu0
          %v917 = vadd.f32 %v868, %v916
          %918 = vdwg.mxu0
          %919 = vmatpush.bf16.msra.mxu0 %v772
          %920 = vmatpush.bf16.msra.mxu0 %v770
          %921 = vmatpush.bf16.msra.mxu0 %v768
          %922 = vmatpush.bf16.msra.mxu0 %v766
          %923 = vmatpush.bf16.msra.mxu0 %v764
          %924 = vmatpush.bf16.msra.mxu0 %v762
          %925 = vmatpush.bf16.msra.mxu0 %v760
          %926 = vmatpush.bf16.msra.mxu0 %v758
          %927 = vmatmul.bf16.gmra.mxu0 %v629
          %v928 = vpop.f32.mrf.mxu0
          %v929 = vadd.f32 0.0, %v928
          %v930 = vpop.f32.mrf.mxu0
          %v931 = vadd.f32 0.0, %v930
          %932 = vmatmul.bf16.gmra.mxu0 %v631
          %v933 = vpop.f32.mrf.mxu0
          %v934 = vadd.f32 0.0, %v933
          %v935 = vpop.f32.mrf.mxu0
          %v936 = vadd.f32 0.0, %v935
          %937 = vmatmul.bf16.gmra.mxu0 %v633
          %v938 = vpop.f32.mrf.mxu0
          %v939 = vadd.f32 0.0, %v938
          %v940 = vpop.f32.mrf.mxu0
          %v941 = vadd.f32 0.0, %v940
          %942 = vmatmul.bf16.gmra.mxu0 %v635
          %v943 = vpop.f32.mrf.mxu0
          %v944 = vadd.f32 0.0, %v943
          %v945 = vpop.f32.mrf.mxu0
          %v946 = vadd.f32 0.0, %v945
          %947 = vmatmul.bf16.gmra.mxu0 %v637
          %v948 = vpop.f32.mrf.mxu0
          %v949 = vadd.f32 0.0, %v948
          %v950 = vpop.f32.mrf.mxu0
          %v951 = vadd.f32 0.0, %v950
          %952 = vmatmul.bf16.gmra.mxu0 %v639
          %v953 = vpop.f32.mrf.mxu0
          %v954 = vadd.f32 0.0, %v953
          %v955 = vpop.f32.mrf.mxu0
          %v956 = vadd.f32 0.0, %v955
          %957 = vmatmul.bf16.gmra.mxu0 %v641
          %v958 = vpop.f32.mrf.mxu0
          %v959 = vadd.f32 0.0, %v958
          %v960 = vpop.f32.mrf.mxu0
          %v961 = vadd.f32 0.0, %v960
          %962 = vmatmul.bf16.gmra.mxu0 %v643
          %v963 = vpop.f32.mrf.mxu0
          %v964 = vadd.f32 0.0, %v963
          %v965 = vpop.f32.mrf.mxu0
          %v966 = vadd.f32 0.0, %v965
          %967 = vdwg.mxu0
          %968 = vmatpush.bf16.msra.mxu0 %v788
          %969 = vmatpush.bf16.msra.mxu0 %v786
          %970 = vmatpush.bf16.msra.mxu0 %v784
          %971 = vmatpush.bf16.msra.mxu0 %v782
          %972 = vmatpush.bf16.msra.mxu0 %v780
          %973 = vmatpush.bf16.msra.mxu0 %v778
          %974 = vmatpush.bf16.msra.mxu0 %v776
          %975 = vmatpush.bf16.msra.mxu0 %v774
          %976 = vmatmul.bf16.gmra.mxu0 %v630
          %v977 = vpop.f32.mrf.mxu0
          %v978 = vadd.f32 %v929, %v977
          %v979 = vpop.f32.mrf.mxu0
          %v980 = vadd.f32 %v931, %v979
          %981 = vmatmul.bf16.gmra.mxu0 %v632
          %v982 = vpop.f32.mrf.mxu0
          %v983 = vadd.f32 %v934, %v982
          %v984 = vpop.f32.mrf.mxu0
          %v985 = vadd.f32 %v936, %v984
          %986 = vmatmul.bf16.gmra.mxu0 %v634
          %v987 = vpop.f32.mrf.mxu0
          %v988 = vadd.f32 %v939, %v987
          %v989 = vpop.f32.mrf.mxu0
          %v990 = vadd.f32 %v941, %v989
          %991 = vmatmul.bf16.gmra.mxu0 %v636
          %v992 = vpop.f32.mrf.mxu0
          %v993 = vadd.f32 %v944, %v992
          %v994 = vpop.f32.mrf.mxu0
          %v995 = vadd.f32 %v946, %v994
          %996 = vmatmul.bf16.gmra.mxu0 %v638
          %v997 = vpop.f32.mrf.mxu0
          %v998 = vadd.f32 %v949, %v997
          %v999 = vpop.f32.mrf.mxu0
          %v1000 = vadd.f32 %v951, %v999
          %1001 = vmatmul.bf16.gmra.mxu0 %v640
          %v1002 = vpop.f32.mrf.mxu0
          %v1003 = vadd.f32 %v954, %v1002
          %v1004 = vpop.f32.mrf.mxu0
          %v1005 = vadd.f32 %v956, %v1004
          %1006 = vmatmul.bf16.gmra.mxu0 %v642
          %v1007 = vpop.f32.mrf.mxu0
          %v1008 = vadd.f32 %v959, %v1007
          %v1009 = vpop.f32.mrf.mxu0
          %v1010 = vadd.f32 %v961, %v1009
          %1011 = vmatmul.bf16.gmra.mxu0 %v644
          %v1012 = vpop.f32.mrf.mxu0
          %v1013 = vadd.f32 %v964, %v1012
          %v1014 = vpop.f32.mrf.mxu0
          %v1015 = vadd.f32 %v966, %v1014
          %1016 = vdwg.mxu0
          %v1017 = vpack.c.bf16 %v978, %v880
          %v1018 = vpack.c.bf16 %v980, %v882
          %v1019 = vpack.c.bf16 %v983, %v885
          %v1020 = vpack.c.bf16 %v985, %v887
          %v1021 = vpack.c.bf16 %v988, %v890
          %v1022 = vpack.c.bf16 %v990, %v892
          %v1023 = vpack.c.bf16 %v993, %v895
          %v1024 = vpack.c.bf16 %v995, %v897
          %v1025 = vpack.c.bf16 %v998, %v900
          %v1026 = vpack.c.bf16 %v1000, %v902
          %v1027 = vpack.c.bf16 %v1003, %v905
          %v1028 = vpack.c.bf16 %v1005, %v907
          %v1029 = vpack.c.bf16 %v1008, %v910
          %v1030 = vpack.c.bf16 %v1010, %v912
          %v1031 = vpack.c.bf16 %v1013, %v915
          %v1032 = vpack.c.bf16 %v1015, %v917
          %1033 = vst [vmem:[#allocation3] sm:$0xff] %v1017
          %1034 = vst [vmem:[#allocation3 + $0x8] sm:$0xff] %v1018
          %1035 = vst [vmem:[#allocation3 + $0x10] sm:$0xff] %v1019
          %1036 = vst [vmem:[#allocation3 + $0x18] sm:$0xff] %v1020
          %1037 = vst [vmem:[#allocation3 + $0x20] sm:$0xff] %v1021
          %1038 = vst [vmem:[#allocation3 + $0x28] sm:$0xff] %v1022
          %1039 = vst [vmem:[#allocation3 + $0x30] sm:$0xff] %v1023
          %1040 = vst [vmem:[#allocation3 + $0x38] sm:$0xff] %v1024
          %1041 = vst [vmem:[#allocation3 + $0x40] sm:$0xff] %v1025
          %1042 = vst [vmem:[#allocation3 + $0x48] sm:$0xff] %v1026
          %1043 = vst [vmem:[#allocation3 + $0x50] sm:$0xff] %v1027
          %1044 = vst [vmem:[#allocation3 + $0x58] sm:$0xff] %v1028
          %1045 = vst [vmem:[#allocation3 + $0x60] sm:$0xff] %v1029
          %1046 = vst [vmem:[#allocation3 + $0x68] sm:$0xff] %v1030
          %1047 = vst [vmem:[#allocation3 + $0x70] sm:$0xff] %v1031
          %1048 = vst [vmem:[#allocation3 + $0x78] sm:$0xff] %v1032
          %v1049 = vld [vmem:[%s459] sm:$0xff]
          %v1050 = vld [vmem:[%s459 + $0x8] sm:$0xff]
          %v1051 = vld [vmem:[%s459 + $0x10] sm:$0xff]
          %v1052 = vld [vmem:[%s459 + $0x18] sm:$0xff]
          %v1053 = vld [vmem:[%s459 + $0x20] sm:$0xff]
          %v1054 = vld [vmem:[%s459 + $0x28] sm:$0xff]
          %v1055 = vld [vmem:[%s459 + $0x30] sm:$0xff]
          %v1056 = vld [vmem:[%s459 + $0x38] sm:$0xff]
          %v1057 = vld [vmem:[%s459 + $0x40] sm:$0xff]
          %v1058 = vld [vmem:[%s459 + $0x48] sm:$0xff]
          %v1059 = vld [vmem:[%s459 + $0x50] sm:$0xff]
          %v1060 = vld [vmem:[%s459 + $0x58] sm:$0xff]
          %v1061 = vld [vmem:[%s459 + $0x60] sm:$0xff]
          %v1062 = vld [vmem:[%s459 + $0x68] sm:$0xff]
          %v1063 = vld [vmem:[%s459 + $0x70] sm:$0xff]
          %v1064 = vld [vmem:[%s459 + $0x78] sm:$0xff]
          %v1065 = vld [vmem:[#allocation17] sm:$0xff]
          %v1066 = vld [vmem:[#allocation17 + $0x8] sm:$0xff]
          %v1067 = vld [vmem:[#allocation17 + $0x10] sm:$0xff]
          %v1068 = vld [vmem:[#allocation17 + $0x18] sm:$0xff]
          %v1069 = vld [vmem:[#allocation17 + $0x20] sm:$0xff]
          %v1070 = vld [vmem:[#allocation17 + $0x28] sm:$0xff]
          %v1071 = vld [vmem:[#allocation17 + $0x30] sm:$0xff]
          %v1072 = vld [vmem:[#allocation17 + $0x38] sm:$0xff]
          %v1073 = vld [vmem:[#allocation17 + $0x40] sm:$0xff]
          %v1074 = vld [vmem:[#allocation17 + $0x48] sm:$0xff]
          %v1075 = vld [vmem:[#allocation17 + $0x50] sm:$0xff]
          %v1076 = vld [vmem:[#allocation17 + $0x58] sm:$0xff]
          %v1077 = vld [vmem:[#allocation17 + $0x60] sm:$0xff]
          %v1078 = vld [vmem:[#allocation17 + $0x68] sm:$0xff]
          %v1079 = vld [vmem:[#allocation17 + $0x70] sm:$0xff]
          %v1080 = vld [vmem:[#allocation17 + $0x78] sm:$0xff]
          %v1081 = vld [vmem:[#allocation17 + $0x80] sm:$0xff]
          %v1082 = vld [vmem:[#allocation17 + $0x88] sm:$0xff]
          %v1083 = vld [vmem:[#allocation17 + $0x90] sm:$0xff]
          %v1084 = vld [vmem:[#allocation17 + $0x98] sm:$0xff]
          %v1085 = vld [vmem:[#allocation17 + $0xa0] sm:$0xff]
          %v1086 = vld [vmem:[#allocation17 + $0xa8] sm:$0xff]
          %v1087 = vld [vmem:[#allocation17 + $0xb0] sm:$0xff]
          %v1088 = vld [vmem:[#allocation17 + $0xb8] sm:$0xff]
          %v1089 = vld [vmem:[#allocation17 + $0xc0] sm:$0xff]
          %v1090 = vld [vmem:[#allocation17 + $0xc8] sm:$0xff]
          %v1091 = vld [vmem:[#allocation17 + $0xd0] sm:$0xff]
          %v1092 = vld [vmem:[#allocation17 + $0xd8] sm:$0xff]
          %v1093 = vld [vmem:[#allocation17 + $0xe0] sm:$0xff]
          %v1094 = vld [vmem:[#allocation17 + $0xe8] sm:$0xff]
          %v1095 = vld [vmem:[#allocation17 + $0xf0] sm:$0xff]
          %v1096 = vld [vmem:[#allocation17 + $0xf8] sm:$0xff]
          %v1113 = vunpack.c.l.b16 %v1049
          %v1114 = vunpack.c.h.b16 %v1049
          %v1115 = vunpack.c.l.b16 %v1050
          %v1116 = vunpack.c.h.b16 %v1050
          %v1117 = vunpack.c.l.b16 %v1051
          %v1118 = vunpack.c.h.b16 %v1051
          %v1119 = vunpack.c.l.b16 %v1052
          %v1120 = vunpack.c.h.b16 %v1052
          %v1121 = vunpack.c.l.b16 %v1053
          %v1122 = vunpack.c.h.b16 %v1053
          %v1123 = vunpack.c.l.b16 %v1054
          %v1124 = vunpack.c.h.b16 %v1054
          %v1125 = vunpack.c.l.b16 %v1055
          %v1126 = vunpack.c.h.b16 %v1055
          %v1127 = vunpack.c.l.b16 %v1056
          %v1128 = vunpack.c.h.b16 %v1056
          %v1129 = vunpack.c.l.b16 %v1057
          %v1130 = vunpack.c.h.b16 %v1057
          %v1131 = vunpack.c.l.b16 %v1058
          %v1132 = vunpack.c.h.b16 %v1058
          %v1133 = vunpack.c.l.b16 %v1059
          %v1134 = vunpack.c.h.b16 %v1059
          %v1135 = vunpack.c.l.b16 %v1060
          %v1136 = vunpack.c.h.b16 %v1060
          %v1137 = vunpack.c.l.b16 %v1061
          %v1138 = vunpack.c.h.b16 %v1061
          %v1139 = vunpack.c.l.b16 %v1062
          %v1140 = vunpack.c.h.b16 %v1062
          %v1141 = vunpack.c.l.b16 %v1063
          %v1142 = vunpack.c.h.b16 %v1063
          %v1143 = vunpack.c.l.b16 %v1064
          %v1144 = vunpack.c.h.b16 %v1064
          %v1145 = vpack.c.b16 %v1115, %v1113
          %v1146 = vpack.c.b16 %v1116, %v1114
          %v1147 = vpack.c.b16 %v1119, %v1117
          %v1148 = vpack.c.b16 %v1120, %v1118
          %v1149 = vpack.c.b16 %v1123, %v1121
          %v1150 = vpack.c.b16 %v1124, %v1122
          %v1151 = vpack.c.b16 %v1127, %v1125
          %v1152 = vpack.c.b16 %v1128, %v1126
          %v1153 = vpack.c.b16 %v1131, %v1129
          %v1154 = vpack.c.b16 %v1132, %v1130
          %v1155 = vpack.c.b16 %v1135, %v1133
          %v1156 = vpack.c.b16 %v1136, %v1134
          %v1157 = vpack.c.b16 %v1139, %v1137
          %v1158 = vpack.c.b16 %v1140, %v1138
          %v1159 = vpack.c.b16 %v1143, %v1141
          %v1160 = vpack.c.b16 %v1144, %v1142
          %v1209 = vunpack.c.l.b16 %v1065
          %v1210 = vunpack.c.h.b16 %v1065
          %v1211 = vunpack.c.l.b16 %v1066
          %v1212 = vunpack.c.h.b16 %v1066
          %v1213 = vunpack.c.l.b16 %v1067
          %v1214 = vunpack.c.h.b16 %v1067
          %v1215 = vunpack.c.l.b16 %v1068
          %v1216 = vunpack.c.h.b16 %v1068
          %v1217 = vunpack.c.l.b16 %v1069
          %v1218 = vunpack.c.h.b16 %v1069
          %v1219 = vunpack.c.l.b16 %v1070
          %v1220 = vunpack.c.h.b16 %v1070
          %v1221 = vunpack.c.l.b16 %v1071
          %v1222 = vunpack.c.h.b16 %v1071
          %v1223 = vunpack.c.l.b16 %v1072
          %v1224 = vunpack.c.h.b16 %v1072
          %v1225 = vunpack.c.l.b16 %v1073
          %v1226 = vunpack.c.h.b16 %v1073
          %v1227 = vunpack.c.l.b16 %v1074
          %v1228 = vunpack.c.h.b16 %v1074
          %v1229 = vunpack.c.l.b16 %v1075
          %v1230 = vunpack.c.h.b16 %v1075
          %v1231 = vunpack.c.l.b16 %v1076
          %v1232 = vunpack.c.h.b16 %v1076
          %v1233 = vunpack.c.l.b16 %v1077
          %v1234 = vunpack.c.h.b16 %v1077
          %v1235 = vunpack.c.l.b16 %v1078
          %v1236 = vunpack.c.h.b16 %v1078
          %v1237 = vunpack.c.l.b16 %v1079
          %v1238 = vunpack.c.h.b16 %v1079
          %v1239 = vunpack.c.l.b16 %v1080
          %v1240 = vunpack.c.h.b16 %v1080
          %v1241 = vunpack.c.l.b16 %v1081
          %v1242 = vunpack.c.h.b16 %v1081
          %v1243 = vunpack.c.l.b16 %v1082
          %v1244 = vunpack.c.h.b16 %v1082
          %v1245 = vunpack.c.l.b16 %v1083
          %v1246 = vunpack.c.h.b16 %v1083
          %v1247 = vunpack.c.l.b16 %v1084
          %v1248 = vunpack.c.h.b16 %v1084
          %v1249 = vunpack.c.l.b16 %v1085
          %v1250 = vunpack.c.h.b16 %v1085
          %v1251 = vunpack.c.l.b16 %v1086
          %v1252 = vunpack.c.h.b16 %v1086
          %v1253 = vunpack.c.l.b16 %v1087
          %v1254 = vunpack.c.h.b16 %v1087
          %v1255 = vunpack.c.l.b16 %v1088
          %v1256 = vunpack.c.h.b16 %v1088
          %v1257 = vunpack.c.l.b16 %v1089
          %v1258 = vunpack.c.h.b16 %v1089
          %v1259 = vunpack.c.l.b16 %v1090
          %v1260 = vunpack.c.h.b16 %v1090
          %v1261 = vunpack.c.l.b16 %v1091
          %v1262 = vunpack.c.h.b16 %v1091
          %v1263 = vunpack.c.l.b16 %v1092
          %v1264 = vunpack.c.h.b16 %v1092
          %v1265 = vunpack.c.l.b16 %v1093
          %v1266 = vunpack.c.h.b16 %v1093
          %v1267 = vunpack.c.l.b16 %v1094
          %v1268 = vunpack.c.h.b16 %v1094
          %v1269 = vunpack.c.l.b16 %v1095
          %v1270 = vunpack.c.h.b16 %v1095
          %v1271 = vunpack.c.l.b16 %v1096
          %v1272 = vunpack.c.h.b16 %v1096
          %v1273 = vpack.c.b16 %v1211, %v1209
          %v1274 = vpack.c.b16 %v1212, %v1210
          %v1275 = vpack.c.b16 %v1215, %v1213
          %v1276 = vpack.c.b16 %v1216, %v1214
          %v1277 = vpack.c.b16 %v1219, %v1217
          %v1278 = vpack.c.b16 %v1220, %v1218
          %v1279 = vpack.c.b16 %v1223, %v1221
          %v1280 = vpack.c.b16 %v1224, %v1222
          %v1281 = vpack.c.b16 %v1227, %v1225
          %v1282 = vpack.c.b16 %v1228, %v1226
          %v1283 = vpack.c.b16 %v1231, %v1229
          %v1284 = vpack.c.b16 %v1232, %v1230
          %v1285 = vpack.c.b16 %v1235, %v1233
          %v1286 = vpack.c.b16 %v1236, %v1234
          %v1287 = vpack.c.b16 %v1239, %v1237
          %v1288 = vpack.c.b16 %v1240, %v1238
          %v1289 = vpack.c.b16 %v1243, %v1241
          %v1290 = vpack.c.b16 %v1244, %v1242
          %v1291 = vpack.c.b16 %v1247, %v1245
          %v1292 = vpack.c.b16 %v1248, %v1246
          %v1293 = vpack.c.b16 %v1251, %v1249
          %v1294 = vpack.c.b16 %v1252, %v1250
          %v1295 = vpack.c.b16 %v1255, %v1253
          %v1296 = vpack.c.b16 %v1256, %v1254
          %v1297 = vpack.c.b16 %v1259, %v1257
          %v1298 = vpack.c.b16 %v1260, %v1258
          %v1299 = vpack.c.b16 %v1263, %v1261
          %v1300 = vpack.c.b16 %v1264, %v1262
          %v1301 = vpack.c.b16 %v1267, %v1265
          %v1302 = vpack.c.b16 %v1268, %v1266
          %v1303 = vpack.c.b16 %v1271, %v1269
          %v1304 = vpack.c.b16 %v1272, %v1270
          %1337 = vmatpush.bf16.msra.mxu0 %v1287
          %1338 = vmatpush.bf16.msra.mxu0 %v1285
          %1339 = vmatpush.bf16.msra.mxu0 %v1283
          %1340 = vmatpush.bf16.msra.mxu0 %v1281
          %1341 = vmatpush.bf16.msra.mxu0 %v1279
          %1342 = vmatpush.bf16.msra.mxu0 %v1277
          %1343 = vmatpush.bf16.msra.mxu0 %v1275
          %1344 = vmatpush.bf16.msra.mxu0 %v1273
          %1345 = vmatmul.bf16.gmra.mxu0 %v1145
          %v1346 = vpop.f32.mrf.mxu0
          %v1347 = vadd.f32 0.0, %v1346
          %v1348 = vpop.f32.mrf.mxu0
          %v1349 = vadd.f32 0.0, %v1348
          %1350 = vmatmul.bf16.gmra.mxu0 %v1147
          %v1351 = vpop.f32.mrf.mxu0
          %v1352 = vadd.f32 0.0, %v1351
          %v1353 = vpop.f32.mrf.mxu0
          %v1354 = vadd.f32 0.0, %v1353
          %1355 = vmatmul.bf16.gmra.mxu0 %v1149
          %v1356 = vpop.f32.mrf.mxu0
          %v1357 = vadd.f32 0.0, %v1356
          %v1358 = vpop.f32.mrf.mxu0
          %v1359 = vadd.f32 0.0, %v1358
          %1360 = vmatmul.bf16.gmra.mxu0 %v1151
          %v1361 = vpop.f32.mrf.mxu0
          %v1362 = vadd.f32 0.0, %v1361
          %v1363 = vpop.f32.mrf.mxu0
          %v1364 = vadd.f32 0.0, %v1363
          %1365 = vmatmul.bf16.gmra.mxu0 %v1153
          %v1366 = vpop.f32.mrf.mxu0
          %v1367 = vadd.f32 0.0, %v1366
          %v1368 = vpop.f32.mrf.mxu0
          %v1369 = vadd.f32 0.0, %v1368
          %1370 = vmatmul.bf16.gmra.mxu0 %v1155
          %v1371 = vpop.f32.mrf.mxu0
          %v1372 = vadd.f32 0.0, %v1371
          %v1373 = vpop.f32.mrf.mxu0
          %v1374 = vadd.f32 0.0, %v1373
          %1375 = vmatmul.bf16.gmra.mxu0 %v1157
          %v1376 = vpop.f32.mrf.mxu0
          %v1377 = vadd.f32 0.0, %v1376
          %v1378 = vpop.f32.mrf.mxu0
          %v1379 = vadd.f32 0.0, %v1378
          %1380 = vmatmul.bf16.gmra.mxu0 %v1159
          %v1381 = vpop.f32.mrf.mxu0
          %v1382 = vadd.f32 0.0, %v1381
          %v1383 = vpop.f32.mrf.mxu0
          %v1384 = vadd.f32 0.0, %v1383
          %1385 = vdwg.mxu0
          %1386 = vmatpush.bf16.msra.mxu0 %v1303
          %1387 = vmatpush.bf16.msra.mxu0 %v1301
          %1388 = vmatpush.bf16.msra.mxu0 %v1299
          %1389 = vmatpush.bf16.msra.mxu0 %v1297
          %1390 = vmatpush.bf16.msra.mxu0 %v1295
          %1391 = vmatpush.bf16.msra.mxu0 %v1293
          %1392 = vmatpush.bf16.msra.mxu0 %v1291
          %1393 = vmatpush.bf16.msra.mxu0 %v1289
          %1394 = vmatmul.bf16.gmra.mxu0 %v1146
          %v1395 = vpop.f32.mrf.mxu0
          %v1396 = vadd.f32 %v1347, %v1395
          %v1397 = vpop.f32.mrf.mxu0
          %v1398 = vadd.f32 %v1349, %v1397
          %1399 = vmatmul.bf16.gmra.mxu0 %v1148
          %v1400 = vpop.f32.mrf.mxu0
          %v1401 = vadd.f32 %v1352, %v1400
          %v1402 = vpop.f32.mrf.mxu0
          %v1403 = vadd.f32 %v1354, %v1402
          %1404 = vmatmul.bf16.gmra.mxu0 %v1150
          %v1405 = vpop.f32.mrf.mxu0
          %v1406 = vadd.f32 %v1357, %v1405
          %v1407 = vpop.f32.mrf.mxu0
          %v1408 = vadd.f32 %v1359, %v1407
          %1409 = vmatmul.bf16.gmra.mxu0 %v1152
          %v1410 = vpop.f32.mrf.mxu0
          %v1411 = vadd.f32 %v1362, %v1410
          %v1412 = vpop.f32.mrf.mxu0
          %v1413 = vadd.f32 %v1364, %v1412
          %1414 = vmatmul.bf16.gmra.mxu0 %v1154
          %v1415 = vpop.f32.mrf.mxu0
          %v1416 = vadd.f32 %v1367, %v1415
          %v1417 = vpop.f32.mrf.mxu0
          %v1418 = vadd.f32 %v1369, %v1417
          %1419 = vmatmul.bf16.gmra.mxu0 %v1156
          %v1420 = vpop.f32.mrf.mxu0
          %v1421 = vadd.f32 %v1372, %v1420
          %v1422 = vpop.f32.mrf.mxu0
          %v1423 = vadd.f32 %v1374, %v1422
          %1424 = vmatmul.bf16.gmra.mxu0 %v1158
          %v1425 = vpop.f32.mrf.mxu0
          %v1426 = vadd.f32 %v1377, %v1425
          %v1427 = vpop.f32.mrf.mxu0
          %v1428 = vadd.f32 %v1379, %v1427
          %1429 = vmatmul.bf16.gmra.mxu0 %v1160
          %v1430 = vpop.f32.mrf.mxu0
          %v1431 = vadd.f32 %v1382, %v1430
          %v1432 = vpop.f32.mrf.mxu0
          %v1433 = vadd.f32 %v1384, %v1432
          %1434 = vdwg.mxu0
          %1435 = vmatpush.bf16.msra.mxu0 %v1288
          %1436 = vmatpush.bf16.msra.mxu0 %v1286
          %1437 = vmatpush.bf16.msra.mxu0 %v1284
          %1438 = vmatpush.bf16.msra.mxu0 %v1282
          %1439 = vmatpush.bf16.msra.mxu0 %v1280
          %1440 = vmatpush.bf16.msra.mxu0 %v1278
          %1441 = vmatpush.bf16.msra.mxu0 %v1276
          %1442 = vmatpush.bf16.msra.mxu0 %v1274
          %1443 = vmatmul.bf16.gmra.mxu0 %v1145
          %v1444 = vpop.f32.mrf.mxu0
          %v1445 = vadd.f32 0.0, %v1444
          %v1446 = vpop.f32.mrf.mxu0
          %v1447 = vadd.f32 0.0, %v1446
          %1448 = vmatmul.bf16.gmra.mxu0 %v1147
          %v1449 = vpop.f32.mrf.mxu0
          %v1450 = vadd.f32 0.0, %v1449
          %v1451 = vpop.f32.mrf.mxu0
          %v1452 = vadd.f32 0.0, %v1451
          %1453 = vmatmul.bf16.gmra.mxu0 %v1149
          %v1454 = vpop.f32.mrf.mxu0
          %v1455 = vadd.f32 0.0, %v1454
          %v1456 = vpop.f32.mrf.mxu0
          %v1457 = vadd.f32 0.0, %v1456
          %1458 = vmatmul.bf16.gmra.mxu0 %v1151
          %v1459 = vpop.f32.mrf.mxu0
          %v1460 = vadd.f32 0.0, %v1459
          %v1461 = vpop.f32.mrf.mxu0
          %v1462 = vadd.f32 0.0, %v1461
          %1463 = vmatmul.bf16.gmra.mxu0 %v1153
          %v1464 = vpop.f32.mrf.mxu0
          %v1465 = vadd.f32 0.0, %v1464
          %v1466 = vpop.f32.mrf.mxu0
          %v1467 = vadd.f32 0.0, %v1466
          %1468 = vmatmul.bf16.gmra.mxu0 %v1155
          %v1469 = vpop.f32.mrf.mxu0
          %v1470 = vadd.f32 0.0, %v1469
          %v1471 = vpop.f32.mrf.mxu0
          %v1472 = vadd.f32 0.0, %v1471
          %1473 = vmatmul.bf16.gmra.mxu0 %v1157
          %v1474 = vpop.f32.mrf.mxu0
          %v1475 = vadd.f32 0.0, %v1474
          %v1476 = vpop.f32.mrf.mxu0
          %v1477 = vadd.f32 0.0, %v1476
          %1478 = vmatmul.bf16.gmra.mxu0 %v1159
          %v1479 = vpop.f32.mrf.mxu0
          %v1480 = vadd.f32 0.0, %v1479
          %v1481 = vpop.f32.mrf.mxu0
          %v1482 = vadd.f32 0.0, %v1481
          %1483 = vdwg.mxu0
          %1484 = vmatpush.bf16.msra.mxu0 %v1304
          %1485 = vmatpush.bf16.msra.mxu0 %v1302
          %1486 = vmatpush.bf16.msra.mxu0 %v1300
          %1487 = vmatpush.bf16.msra.mxu0 %v1298
          %1488 = vmatpush.bf16.msra.mxu0 %v1296
          %1489 = vmatpush.bf16.msra.mxu0 %v1294
          %1490 = vmatpush.bf16.msra.mxu0 %v1292
          %1491 = vmatpush.bf16.msra.mxu0 %v1290
          %1492 = vmatmul.bf16.gmra.mxu0 %v1146
          %v1493 = vpop.f32.mrf.mxu0
          %v1494 = vadd.f32 %v1445, %v1493
          %v1495 = vpop.f32.mrf.mxu0
          %v1496 = vadd.f32 %v1447, %v1495
          %1497 = vmatmul.bf16.gmra.mxu0 %v1148
          %v1498 = vpop.f32.mrf.mxu0
          %v1499 = vadd.f32 %v1450, %v1498
          %v1500 = vpop.f32.mrf.mxu0
          %v1501 = vadd.f32 %v1452, %v1500
          %1502 = vmatmul.bf16.gmra.mxu0 %v1150
          %v1503 = vpop.f32.mrf.mxu0
          %v1504 = vadd.f32 %v1455, %v1503
          %v1505 = vpop.f32.mrf.mxu0
          %v1506 = vadd.f32 %v1457, %v1505
          %1507 = vmatmul.bf16.gmra.mxu0 %v1152
          %v1508 = vpop.f32.mrf.mxu0
          %v1509 = vadd.f32 %v1460, %v1508
          %v1510 = vpop.f32.mrf.mxu0
          %v1511 = vadd.f32 %v1462, %v1510
          %1512 = vmatmul.bf16.gmra.mxu0 %v1154
          %v1513 = vpop.f32.mrf.mxu0
          %v1514 = vadd.f32 %v1465, %v1513
          %v1515 = vpop.f32.mrf.mxu0
          %v1516 = vadd.f32 %v1467, %v1515
          %1517 = vmatmul.bf16.gmra.mxu0 %v1156
          %v1518 = vpop.f32.mrf.mxu0
          %v1519 = vadd.f32 %v1470, %v1518
          %v1520 = vpop.f32.mrf.mxu0
          %v1521 = vadd.f32 %v1472, %v1520
          %1522 = vmatmul.bf16.gmra.mxu0 %v1158
          %v1523 = vpop.f32.mrf.mxu0
          %v1524 = vadd.f32 %v1475, %v1523
          %v1525 = vpop.f32.mrf.mxu0
          %v1526 = vadd.f32 %v1477, %v1525
          %1527 = vmatmul.bf16.gmra.mxu0 %v1160
          %v1528 = vpop.f32.mrf.mxu0
          %v1529 = vadd.f32 %v1480, %v1528
          %v1530 = vpop.f32.mrf.mxu0
          %v1531 = vadd.f32 %v1482, %v1530
          %1532 = vdwg.mxu0
          %v1533 = vpack.c.bf16 %v1494, %v1396
          %v1534 = vpack.c.bf16 %v1496, %v1398
          %v1535 = vpack.c.bf16 %v1499, %v1401
          %v1536 = vpack.c.bf16 %v1501, %v1403
          %v1537 = vpack.c.bf16 %v1504, %v1406
          %v1538 = vpack.c.bf16 %v1506, %v1408
          %v1539 = vpack.c.bf16 %v1509, %v1411
          %v1540 = vpack.c.bf16 %v1511, %v1413
          %v1541 = vpack.c.bf16 %v1514, %v1416
          %v1542 = vpack.c.bf16 %v1516, %v1418
          %v1543 = vpack.c.bf16 %v1519, %v1421
          %v1544 = vpack.c.bf16 %v1521, %v1423
          %v1545 = vpack.c.bf16 %v1524, %v1426
          %v1546 = vpack.c.bf16 %v1526, %v1428
          %v1547 = vpack.c.bf16 %v1529, %v1431
          %v1548 = vpack.c.bf16 %v1531, %v1433
          %1549 = vst [vmem:[#allocation4] sm:$0xff] %v1533
          %1550 = vst [vmem:[#allocation4 + $0x8] sm:$0xff] %v1534
          %1551 = vst [vmem:[#allocation4 + $0x10] sm:$0xff] %v1535
          %1552 = vst [vmem:[#allocation4 + $0x18] sm:$0xff] %v1536
          %1553 = vst [vmem:[#allocation4 + $0x20] sm:$0xff] %v1537
          %1554 = vst [vmem:[#allocation4 + $0x28] sm:$0xff] %v1538
          %1555 = vst [vmem:[#allocation4 + $0x30] sm:$0xff] %v1539
          %1556 = vst [vmem:[#allocation4 + $0x38] sm:$0xff] %v1540
          %1557 = vst [vmem:[#allocation4 + $0x40] sm:$0xff] %v1541
          %1558 = vst [vmem:[#allocation4 + $0x48] sm:$0xff] %v1542
          %1559 = vst [vmem:[#allocation4 + $0x50] sm:$0xff] %v1543
          %1560 = vst [vmem:[#allocation4 + $0x58] sm:$0xff] %v1544
          %1561 = vst [vmem:[#allocation4 + $0x60] sm:$0xff] %v1545
          %1562 = vst [vmem:[#allocation4 + $0x68] sm:$0xff] %v1546
          %1563 = vst [vmem:[#allocation4 + $0x70] sm:$0xff] %v1547
          %1564 = vst [vmem:[#allocation4 + $0x78] sm:$0xff] %v1548
        $region88: #{tpu_custom_call.1} parent=51 // pred_fallthru
          _
        %v1565 = vld [vmem:[%s439] sm:$0xff]
        %v1566 = vld [vmem:[%s439 + $0x8] sm:$0xff]
        %v1567 = vld [vmem:[%s439 + $0x10] sm:$0xff]
        %v1568 = vld [vmem:[%s439 + $0x18] sm:$0xff]
        %v1569 = vld [vmem:[%s439 + $0x20] sm:$0xff]
        %v1570 = vld [vmem:[%s439 + $0x28] sm:$0xff]
        %v1571 = vld [vmem:[%s439 + $0x30] sm:$0xff]
        %v1572 = vld [vmem:[%s439 + $0x38] sm:$0xff]
        %v1573 = vld [vmem:[%s439 + $0x40] sm:$0xff]
        %v1574 = vld [vmem:[%s439 + $0x48] sm:$0xff]
        %v1575 = vld [vmem:[%s439 + $0x50] sm:$0xff]
        %v1576 = vld [vmem:[%s439 + $0x58] sm:$0xff]
        %v1577 = vld [vmem:[%s439 + $0x60] sm:$0xff]
        %v1578 = vld [vmem:[%s439 + $0x68] sm:$0xff]
        %v1579 = vld [vmem:[%s439 + $0x70] sm:$0xff]
        %v1580 = vld [vmem:[%s439 + $0x78] sm:$0xff]
        %v1581 = vld [vmem:[#allocation14] sm:$0xff]
        %v1582 = vld [vmem:[#allocation14 + $0x8] sm:$0xff]
        %v1583 = vld [vmem:[#allocation14 + $0x10] sm:$0xff]
        %v1584 = vld [vmem:[#allocation14 + $0x18] sm:$0xff]
        %v1585 = vld [vmem:[#allocation14 + $0x20] sm:$0xff]
        %v1586 = vld [vmem:[#allocation14 + $0x28] sm:$0xff]
        %v1587 = vld [vmem:[#allocation14 + $0x30] sm:$0xff]
        %v1588 = vld [vmem:[#allocation14 + $0x38] sm:$0xff]
        %v1589 = vld [vmem:[#allocation14 + $0x40] sm:$0xff]
        %v1590 = vld [vmem:[#allocation14 + $0x48] sm:$0xff]
        %v1591 = vld [vmem:[#allocation14 + $0x50] sm:$0xff]
        %v1592 = vld [vmem:[#allocation14 + $0x58] sm:$0xff]
        %v1593 = vld [vmem:[#allocation14 + $0x60] sm:$0xff]
        %v1594 = vld [vmem:[#allocation14 + $0x68] sm:$0xff]
        %v1595 = vld [vmem:[#allocation14 + $0x70] sm:$0xff]
        %v1596 = vld [vmem:[#allocation14 + $0x78] sm:$0xff]
        %v1597 = vld [vmem:[#allocation14 + $0x80] sm:$0xff]
        %v1598 = vld [vmem:[#allocation14 + $0x88] sm:$0xff]
        %v1599 = vld [vmem:[#allocation14 + $0x90] sm:$0xff]
        %v1600 = vld [vmem:[#allocation14 + $0x98] sm:$0xff]
        %v1601 = vld [vmem:[#allocation14 + $0xa0] sm:$0xff]
        %v1602 = vld [vmem:[#allocation14 + $0xa8] sm:$0xff]
        %v1603 = vld [vmem:[#allocation14 + $0xb0] sm:$0xff]
        %v1604 = vld [vmem:[#allocation14 + $0xb8] sm:$0xff]
        %v1605 = vld [vmem:[#allocation14 + $0xc0] sm:$0xff]
        %v1606 = vld [vmem:[#allocation14 + $0xc8] sm:$0xff]
        %v1607 = vld [vmem:[#allocation14 + $0xd0] sm:$0xff]
        %v1608 = vld [vmem:[#allocation14 + $0xd8] sm:$0xff]
        %v1609 = vld [vmem:[#allocation14 + $0xe0] sm:$0xff]
        %v1610 = vld [vmem:[#allocation14 + $0xe8] sm:$0xff]
        %v1611 = vld [vmem:[#allocation14 + $0xf0] sm:$0xff]
        %v1612 = vld [vmem:[#allocation14 + $0xf8] sm:$0xff]
        %v1629 = vunpack.c.l.b16 %v1565
        %v1630 = vunpack.c.h.b16 %v1565
        %v1631 = vunpack.c.l.b16 %v1566
        %v1632 = vunpack.c.h.b16 %v1566
        %v1633 = vunpack.c.l.b16 %v1567
        %v1634 = vunpack.c.h.b16 %v1567
        %v1635 = vunpack.c.l.b16 %v1568
        %v1636 = vunpack.c.h.b16 %v1568
        %v1637 = vunpack.c.l.b16 %v1569
        %v1638 = vunpack.c.h.b16 %v1569
        %v1639 = vunpack.c.l.b16 %v1570
        %v1640 = vunpack.c.h.b16 %v1570
        %v1641 = vunpack.c.l.b16 %v1571
        %v1642 = vunpack.c.h.b16 %v1571
        %v1643 = vunpack.c.l.b16 %v1572
        %v1644 = vunpack.c.h.b16 %v1572
        %v1645 = vunpack.c.l.b16 %v1573
        %v1646 = vunpack.c.h.b16 %v1573
        %v1647 = vunpack.c.l.b16 %v1574
        %v1648 = vunpack.c.h.b16 %v1574
        %v1649 = vunpack.c.l.b16 %v1575
        %v1650 = vunpack.c.h.b16 %v1575
        %v1651 = vunpack.c.l.b16 %v1576
        %v1652 = vunpack.c.h.b16 %v1576
        %v1653 = vunpack.c.l.b16 %v1577
        %v1654 = vunpack.c.h.b16 %v1577
        %v1655 = vunpack.c.l.b16 %v1578
        %v1656 = vunpack.c.h.b16 %v1578
        %v1657 = vunpack.c.l.b16 %v1579
        %v1658 = vunpack.c.h.b16 %v1579
        %v1659 = vunpack.c.l.b16 %v1580
        %v1660 = vunpack.c.h.b16 %v1580
        %v1661 = vpack.c.b16 %v1631, %v1629
        %v1662 = vpack.c.b16 %v1632, %v1630
        %v1663 = vpack.c.b16 %v1635, %v1633
        %v1664 = vpack.c.b16 %v1636, %v1634
        %v1665 = vpack.c.b16 %v1639, %v1637
        %v1666 = vpack.c.b16 %v1640, %v1638
        %v1667 = vpack.c.b16 %v1643, %v1641
        %v1668 = vpack.c.b16 %v1644, %v1642
        %v1669 = vpack.c.b16 %v1647, %v1645
        %v1670 = vpack.c.b16 %v1648, %v1646
        %v1671 = vpack.c.b16 %v1651, %v1649
        %v1672 = vpack.c.b16 %v1652, %v1650
        %v1673 = vpack.c.b16 %v1655, %v1653
        %v1674 = vpack.c.b16 %v1656, %v1654
        %v1675 = vpack.c.b16 %v1659, %v1657
        %v1676 = vpack.c.b16 %v1660, %v1658
        %v1725 = vunpack.c.l.b16 %v1581
        %v1726 = vunpack.c.h.b16 %v1581
        %v1727 = vunpack.c.l.b16 %v1582
        %v1728 = vunpack.c.h.b16 %v1582
        %v1729 = vunpack.c.l.b16 %v1583
        %v1730 = vunpack.c.h.b16 %v1583
        %v1731 = vunpack.c.l.b16 %v1584
        %v1732 = vunpack.c.h.b16 %v1584
        %v1733 = vunpack.c.l.b16 %v1585
        %v1734 = vunpack.c.h.b16 %v1585
        %v1735 = vunpack.c.l.b16 %v1586
        %v1736 = vunpack.c.h.b16 %v1586
        %v1737 = vunpack.c.l.b16 %v1587
        %v1738 = vunpack.c.h.b16 %v1587
        %v1739 = vunpack.c.l.b16 %v1588
        %v1740 = vunpack.c.h.b16 %v1588
        %v1741 = vunpack.c.l.b16 %v1589
        %v1742 = vunpack.c.h.b16 %v1589
        %v1743 = vunpack.c.l.b16 %v1590
        %v1744 = vunpack.c.h.b16 %v1590
        %v1745 = vunpack.c.l.b16 %v1591
        %v1746 = vunpack.c.h.b16 %v1591
        %v1747 = vunpack.c.l.b16 %v1592
        %v1748 = vunpack.c.h.b16 %v1592
        %v1749 = vunpack.c.l.b16 %v1593
        %v1750 = vunpack.c.h.b16 %v1593
        %v1751 = vunpack.c.l.b16 %v1594
        %v1752 = vunpack.c.h.b16 %v1594
        %v1753 = vunpack.c.l.b16 %v1595
        %v1754 = vunpack.c.h.b16 %v1595
        %v1755 = vunpack.c.l.b16 %v1596
        %v1756 = vunpack.c.h.b16 %v1596
        %v1757 = vunpack.c.l.b16 %v1597
        %v1758 = vunpack.c.h.b16 %v1597
        %v1759 = vunpack.c.l.b16 %v1598
        %v1760 = vunpack.c.h.b16 %v1598
        %v1761 = vunpack.c.l.b16 %v1599
        %v1762 = vunpack.c.h.b16 %v1599
        %v1763 = vunpack.c.l.b16 %v1600
        %v1764 = vunpack.c.h.b16 %v1600
        %v1765 = vunpack.c.l.b16 %v1601
        %v1766 = vunpack.c.h.b16 %v1601
        %v1767 = vunpack.c.l.b16 %v1602
        %v1768 = vunpack.c.h.b16 %v1602
        %v1769 = vunpack.c.l.b16 %v1603
        %v1770 = vunpack.c.h.b16 %v1603
        %v1771 = vunpack.c.l.b16 %v1604
        %v1772 = vunpack.c.h.b16 %v1604
        %v1773 = vunpack.c.l.b16 %v1605
        %v1774 = vunpack.c.h.b16 %v1605
        %v1775 = vunpack.c.l.b16 %v1606
        %v1776 = vunpack.c.h.b16 %v1606
        %v1777 = vunpack.c.l.b16 %v1607
        %v1778 = vunpack.c.h.b16 %v1607
        %v1779 = vunpack.c.l.b16 %v1608
        %v1780 = vunpack.c.h.b16 %v1608
        %v1781 = vunpack.c.l.b16 %v1609
        %v1782 = vunpack.c.h.b16 %v1609
        %v1783 = vunpack.c.l.b16 %v1610
        %v1784 = vunpack.c.h.b16 %v1610
        %v1785 = vunpack.c.l.b16 %v1611
        %v1786 = vunpack.c.h.b16 %v1611
        %v1787 = vunpack.c.l.b16 %v1612
        %v1788 = vunpack.c.h.b16 %v1612
        %v1789 = vpack.c.b16 %v1727, %v1725
        %v1790 = vpack.c.b16 %v1728, %v1726
        %v1791 = vpack.c.b16 %v1731, %v1729
        %v1792 = vpack.c.b16 %v1732, %v1730
        %v1793 = vpack.c.b16 %v1735, %v1733
        %v1794 = vpack.c.b16 %v1736, %v1734
        %v1795 = vpack.c.b16 %v1739, %v1737
        %v1796 = vpack.c.b16 %v1740, %v1738
        %v1797 = vpack.c.b16 %v1743, %v1741
        %v1798 = vpack.c.b16 %v1744, %v1742
        %v1799 = vpack.c.b16 %v1747, %v1745
        %v1800 = vpack.c.b16 %v1748, %v1746
        %v1801 = vpack.c.b16 %v1751, %v1749
        %v1802 = vpack.c.b16 %v1752, %v1750
        %v1803 = vpack.c.b16 %v1755, %v1753
        %v1804 = vpack.c.b16 %v1756, %v1754
        %v1805 = vpack.c.b16 %v1759, %v1757
        %v1806 = vpack.c.b16 %v1760, %v1758
        %v1807 = vpack.c.b16 %v1763, %v1761
        %v1808 = vpack.c.b16 %v1764, %v1762
        %v1809 = vpack.c.b16 %v1767, %v1765
        %v1810 = vpack.c.b16 %v1768, %v1766
        %v1811 = vpack.c.b16 %v1771, %v1769
        %v1812 = vpack.c.b16 %v1772, %v1770
        %v1813 = vpack.c.b16 %v1775, %v1773
        %v1814 = vpack.c.b16 %v1776, %v1774
        %v1815 = vpack.c.b16 %v1779, %v1777
        %v1816 = vpack.c.b16 %v1780, %v1778
        %v1817 = vpack.c.b16 %v1783, %v1781
        %v1818 = vpack.c.b16 %v1784, %v1782
        %v1819 = vpack.c.b16 %v1787, %v1785
        %v1820 = vpack.c.b16 %v1788, %v1786
        %1853 = vmatpush.bf16.msra.mxu0 %v1803
        %1854 = vmatpush.bf16.msra.mxu0 %v1801
        %1855 = vmatpush.bf16.msra.mxu0 %v1799
        %1856 = vmatpush.bf16.msra.mxu0 %v1797
        %1857 = vmatpush.bf16.msra.mxu0 %v1795
        %1858 = vmatpush.bf16.msra.mxu0 %v1793
        %1859 = vmatpush.bf16.msra.mxu0 %v1791
        %1860 = vmatpush.bf16.msra.mxu0 %v1789
        %1861 = vmatmul.bf16.gmra.mxu0 %v1661
        %v1862 = vpop.f32.mrf.mxu0
        %v1863 = vadd.f32 0.0, %v1862
        %v1864 = vpop.f32.mrf.mxu0
        %v1865 = vadd.f32 0.0, %v1864
        %1866 = vmatmul.bf16.gmra.mxu0 %v1663
        %v1867 = vpop.f32.mrf.mxu0
        %v1868 = vadd.f32 0.0, %v1867
        %v1869 = vpop.f32.mrf.mxu0
        %v1870 = vadd.f32 0.0, %v1869
        %1871 = vmatmul.bf16.gmra.mxu0 %v1665
        %v1872 = vpop.f32.mrf.mxu0
        %v1873 = vadd.f32 0.0, %v1872
        %v1874 = vpop.f32.mrf.mxu0
        %v1875 = vadd.f32 0.0, %v1874
        %1876 = vmatmul.bf16.gmra.mxu0 %v1667
        %v1877 = vpop.f32.mrf.mxu0
        %v1878 = vadd.f32 0.0, %v1877
        %v1879 = vpop.f32.mrf.mxu0
        %v1880 = vadd.f32 0.0, %v1879
        %1881 = vmatmul.bf16.gmra.mxu0 %v1669
        %v1882 = vpop.f32.mrf.mxu0
        %v1883 = vadd.f32 0.0, %v1882
        %v1884 = vpop.f32.mrf.mxu0
        %v1885 = vadd.f32 0.0, %v1884
        %1886 = vmatmul.bf16.gmra.mxu0 %v1671
        %v1887 = vpop.f32.mrf.mxu0
        %v1888 = vadd.f32 0.0, %v1887
        %v1889 = vpop.f32.mrf.mxu0
        %v1890 = vadd.f32 0.0, %v1889
        %1891 = vmatmul.bf16.gmra.mxu0 %v1673
        %v1892 = vpop.f32.mrf.mxu0
        %v1893 = vadd.f32 0.0, %v1892
        %v1894 = vpop.f32.mrf.mxu0
        %v1895 = vadd.f32 0.0, %v1894
        %1896 = vmatmul.bf16.gmra.mxu0 %v1675
        %v1897 = vpop.f32.mrf.mxu0
        %v1898 = vadd.f32 0.0, %v1897
        %v1899 = vpop.f32.mrf.mxu0
        %v1900 = vadd.f32 0.0, %v1899
        %1901 = vdwg.mxu0
        %1902 = vmatpush.bf16.msra.mxu0 %v1819
        %1903 = vmatpush.bf16.msra.mxu0 %v1817
        %1904 = vmatpush.bf16.msra.mxu0 %v1815
        %1905 = vmatpush.bf16.msra.mxu0 %v1813
        %1906 = vmatpush.bf16.msra.mxu0 %v1811
        %1907 = vmatpush.bf16.msra.mxu0 %v1809
        %1908 = vmatpush.bf16.msra.mxu0 %v1807
        %1909 = vmatpush.bf16.msra.mxu0 %v1805
        %1910 = vmatmul.bf16.gmra.mxu0 %v1662
        %v1911 = vpop.f32.mrf.mxu0
        %v1912 = vadd.f32 %v1863, %v1911
        %v1913 = vpop.f32.mrf.mxu0
        %v1914 = vadd.f32 %v1865, %v1913
        %1915 = vmatmul.bf16.gmra.mxu0 %v1664
        %v1916 = vpop.f32.mrf.mxu0
        %v1917 = vadd.f32 %v1868, %v1916
        %v1918 = vpop.f32.mrf.mxu0
        %v1919 = vadd.f32 %v1870, %v1918
        %1920 = vmatmul.bf16.gmra.mxu0 %v1666
        %v1921 = vpop.f32.mrf.mxu0
        %v1922 = vadd.f32 %v1873, %v1921
        %v1923 = vpop.f32.mrf.mxu0
        %v1924 = vadd.f32 %v1875, %v1923
        %1925 = vmatmul.bf16.gmra.mxu0 %v1668
        %v1926 = vpop.f32.mrf.mxu0
        %v1927 = vadd.f32 %v1878, %v1926
        %v1928 = vpop.f32.mrf.mxu0
        %v1929 = vadd.f32 %v1880, %v1928
        %1930 = vmatmul.bf16.gmra.mxu0 %v1670
        %v1931 = vpop.f32.mrf.mxu0
        %v1932 = vadd.f32 %v1883, %v1931
        %v1933 = vpop.f32.mrf.mxu0
        %v1934 = vadd.f32 %v1885, %v1933
        %1935 = vmatmul.bf16.gmra.mxu0 %v1672
        %v1936 = vpop.f32.mrf.mxu0
        %v1937 = vadd.f32 %v1888, %v1936
        %v1938 = vpop.f32.mrf.mxu0
        %v1939 = vadd.f32 %v1890, %v1938
        %1940 = vmatmul.bf16.gmra.mxu0 %v1674
        %v1941 = vpop.f32.mrf.mxu0
        %v1942 = vadd.f32 %v1893, %v1941
        %v1943 = vpop.f32.mrf.mxu0
        %v1944 = vadd.f32 %v1895, %v1943
        %1945 = vmatmul.bf16.gmra.mxu0 %v1676
        %v1946 = vpop.f32.mrf.mxu0
        %v1947 = vadd.f32 %v1898, %v1946
        %v1948 = vpop.f32.mrf.mxu0
        %v1949 = vadd.f32 %v1900, %v1948
        %1950 = vdwg.mxu0
        %1951 = vmatpush.bf16.msra.mxu0 %v1804
        %1952 = vmatpush.bf16.msra.mxu0 %v1802
        %1953 = vmatpush.bf16.msra.mxu0 %v1800
        %1954 = vmatpush.bf16.msra.mxu0 %v1798
        %1955 = vmatpush.bf16.msra.mxu0 %v1796
        %1956 = vmatpush.bf16.msra.mxu0 %v1794
        %1957 = vmatpush.bf16.msra.mxu0 %v1792
        %1958 = vmatpush.bf16.msra.mxu0 %v1790
        %1959 = vmatmul.bf16.gmra.mxu0 %v1661
        %v1960 = vpop.f32.mrf.mxu0
        %v1961 = vadd.f32 0.0, %v1960
        %v1962 = vpop.f32.mrf.mxu0
        %v1963 = vadd.f32 0.0, %v1962
        %1964 = vmatmul.bf16.gmra.mxu0 %v1663
        %v1965 = vpop.f32.mrf.mxu0
        %v1966 = vadd.f32 0.0, %v1965
        %v1967 = vpop.f32.mrf.mxu0
        %v1968 = vadd.f32 0.0, %v1967
        %1969 = vmatmul.bf16.gmra.mxu0 %v1665
        %v1970 = vpop.f32.mrf.mxu0
        %v1971 = vadd.f32 0.0, %v1970
        %v1972 = vpop.f32.mrf.mxu0
        %v1973 = vadd.f32 0.0, %v1972
        %1974 = vmatmul.bf16.gmra.mxu0 %v1667
        %v1975 = vpop.f32.mrf.mxu0
        %v1976 = vadd.f32 0.0, %v1975
        %v1977 = vpop.f32.mrf.mxu0
        %v1978 = vadd.f32 0.0, %v1977
        %1979 = vmatmul.bf16.gmra.mxu0 %v1669
        %v1980 = vpop.f32.mrf.mxu0
        %v1981 = vadd.f32 0.0, %v1980
        %v1982 = vpop.f32.mrf.mxu0
        %v1983 = vadd.f32 0.0, %v1982
        %1984 = vmatmul.bf16.gmra.mxu0 %v1671
        %v1985 = vpop.f32.mrf.mxu0
        %v1986 = vadd.f32 0.0, %v1985
        %v1987 = vpop.f32.mrf.mxu0
        %v1988 = vadd.f32 0.0, %v1987
        %1989 = vmatmul.bf16.gmra.mxu0 %v1673
        %v1990 = vpop.f32.mrf.mxu0
        %v1991 = vadd.f32 0.0, %v1990
        %v1992 = vpop.f32.mrf.mxu0
        %v1993 = vadd.f32 0.0, %v1992
        %1994 = vmatmul.bf16.gmra.mxu0 %v1675
        %v1995 = vpop.f32.mrf.mxu0
        %v1996 = vadd.f32 0.0, %v1995
        %v1997 = vpop.f32.mrf.mxu0
        %v1998 = vadd.f32 0.0, %v1997
        %1999 = vdwg.mxu0
        %2000 = vmatpush.bf16.msra.mxu0 %v1820
        %2001 = vmatpush.bf16.msra.mxu0 %v1818
        %2002 = vmatpush.bf16.msra.mxu0 %v1816
        %2003 = vmatpush.bf16.msra.mxu0 %v1814
        %2004 = vmatpush.bf16.msra.mxu0 %v1812
        %2005 = vmatpush.bf16.msra.mxu0 %v1810
        %2006 = vmatpush.bf16.msra.mxu0 %v1808
        %2007 = vmatpush.bf16.msra.mxu0 %v1806
        %2008 = vmatmul.bf16.gmra.mxu0 %v1662
        %v2009 = vpop.f32.mrf.mxu0
        %v2010 = vadd.f32 %v1961, %v2009
        %v2011 = vpop.f32.mrf.mxu0
        %v2012 = vadd.f32 %v1963, %v2011
        %2013 = vmatmul.bf16.gmra.mxu0 %v1664
        %v2014 = vpop.f32.mrf.mxu0
        %v2015 = vadd.f32 %v1966, %v2014
        %v2016 = vpop.f32.mrf.mxu0
        %v2017 = vadd.f32 %v1968, %v2016
        %2018 = vmatmul.bf16.gmra.mxu0 %v1666
        %v2019 = vpop.f32.mrf.mxu0
        %v2020 = vadd.f32 %v1971, %v2019
        %v2021 = vpop.f32.mrf.mxu0
        %v2022 = vadd.f32 %v1973, %v2021
        %2023 = vmatmul.bf16.gmra.mxu0 %v1668
        %v2024 = vpop.f32.mrf.mxu0
        %v2025 = vadd.f32 %v1976, %v2024
        %v2026 = vpop.f32.mrf.mxu0
        %v2027 = vadd.f32 %v1978, %v2026
        %2028 = vmatmul.bf16.gmra.mxu0 %v1670
        %v2029 = vpop.f32.mrf.mxu0
        %v2030 = vadd.f32 %v1981, %v2029
        %v2031 = vpop.f32.mrf.mxu0
        %v2032 = vadd.f32 %v1983, %v2031
        %2033 = vmatmul.bf16.gmra.mxu0 %v1672
        %v2034 = vpop.f32.mrf.mxu0
        %v2035 = vadd.f32 %v1986, %v2034
        %v2036 = vpop.f32.mrf.mxu0
        %v2037 = vadd.f32 %v1988, %v2036
        %2038 = vmatmul.bf16.gmra.mxu0 %v1674
        %v2039 = vpop.f32.mrf.mxu0
        %v2040 = vadd.f32 %v1991, %v2039
        %v2041 = vpop.f32.mrf.mxu0
        %v2042 = vadd.f32 %v1993, %v2041
        %2043 = vmatmul.bf16.gmra.mxu0 %v1676
        %v2044 = vpop.f32.mrf.mxu0
        %v2045 = vadd.f32 %v1996, %v2044
        %v2046 = vpop.f32.mrf.mxu0
        %v2047 = vadd.f32 %v1998, %v2046
        %2048 = vdwg.mxu0
        %v2049 = vpack.c.bf16 %v2010, %v1912
        %v2050 = vpack.c.bf16 %v2012, %v1914
        %v2051 = vpack.c.bf16 %v2015, %v1917
        %v2052 = vpack.c.bf16 %v2017, %v1919
        %v2053 = vpack.c.bf16 %v2020, %v1922
        %v2054 = vpack.c.bf16 %v2022, %v1924
        %v2055 = vpack.c.bf16 %v2025, %v1927
        %v2056 = vpack.c.bf16 %v2027, %v1929
        %v2057 = vpack.c.bf16 %v2030, %v1932
        %v2058 = vpack.c.bf16 %v2032, %v1934
        %v2059 = vpack.c.bf16 %v2035, %v1937
        %v2060 = vpack.c.bf16 %v2037, %v1939
        %v2061 = vpack.c.bf16 %v2040, %v1942
        %v2062 = vpack.c.bf16 %v2042, %v1944
        %v2063 = vpack.c.bf16 %v2045, %v1947
        %v2064 = vpack.c.bf16 %v2047, %v1949
        %2065 = vst [vmem:[#allocation2] sm:$0xff] %v2049
        %2066 = vst [vmem:[#allocation2 + $0x8] sm:$0xff] %v2050
        %2067 = vst [vmem:[#allocation2 + $0x10] sm:$0xff] %v2051
        %2068 = vst [vmem:[#allocation2 + $0x18] sm:$0xff] %v2052
        %2069 = vst [vmem:[#allocation2 + $0x20] sm:$0xff] %v2053
        %2070 = vst [vmem:[#allocation2 + $0x28] sm:$0xff] %v2054
        %2071 = vst [vmem:[#allocation2 + $0x30] sm:$0xff] %v2055
        %2072 = vst [vmem:[#allocation2 + $0x38] sm:$0xff] %v2056
        %2073 = vst [vmem:[#allocation2 + $0x40] sm:$0xff] %v2057
        %2074 = vst [vmem:[#allocation2 + $0x48] sm:$0xff] %v2058
        %2075 = vst [vmem:[#allocation2 + $0x50] sm:$0xff] %v2059
        %2076 = vst [vmem:[#allocation2 + $0x58] sm:$0xff] %v2060
        %2077 = vst [vmem:[#allocation2 + $0x60] sm:$0xff] %v2061
        %2078 = vst [vmem:[#allocation2 + $0x68] sm:$0xff] %v2062
        %2079 = vst [vmem:[#allocation2 + $0x70] sm:$0xff] %v2063
        %2080 = vst [vmem:[#allocation2 + $0x78] sm:$0xff] %v2064
        %v2081 = vld [vmem:[%s429] sm:$0x1]
        %v2082 = vld [vmem:[#allocation2] sm:$0xf]
        %v2083 = vld [vmem:[#allocation2 + $0x8] sm:$0xf]
        %v2084 = vld [vmem:[#allocation2 + $0x10] sm:$0xf]
        %v2085 = vld [vmem:[#allocation2 + $0x18] sm:$0xf]
        %v2086 = vld [vmem:[#allocation2 + $0x20] sm:$0xf]
        %v2087 = vld [vmem:[#allocation2 + $0x28] sm:$0xf]
        %v2088 = vld [vmem:[#allocation2 + $0x30] sm:$0xf]
        %v2089 = vld [vmem:[#allocation2 + $0x38] sm:$0xf]
        %v2090 = vld [vmem:[#allocation2 + $0x40] sm:$0xf]
        %v2091 = vld [vmem:[#allocation2 + $0x48] sm:$0xf]
        %v2092 = vld [vmem:[#allocation2 + $0x50] sm:$0xf]
        %v2093 = vld [vmem:[#allocation2 + $0x58] sm:$0xf]
        %v2094 = vld [vmem:[#allocation2 + $0x60] sm:$0xf]
        %v2095 = vld [vmem:[#allocation2 + $0x68] sm:$0xf]
        %v2096 = vld [vmem:[#allocation2 + $0x70] sm:$0xf]
        %v2097 = vld [vmem:[#allocation2 + $0x78] sm:$0xf]
        %v2098 = vld [vmem:[#allocation3] sm:$0xf]
        %v2099 = vld [vmem:[#allocation3 + $0x8] sm:$0xf]
        %v2100 = vld [vmem:[#allocation3 + $0x10] sm:$0xf]
        %v2101 = vld [vmem:[#allocation3 + $0x18] sm:$0xf]
        %v2102 = vld [vmem:[#allocation3 + $0x20] sm:$0xf]
        %v2103 = vld [vmem:[#allocation3 + $0x28] sm:$0xf]
        %v2104 = vld [vmem:[#allocation3 + $0x30] sm:$0xf]
        %v2105 = vld [vmem:[#allocation3 + $0x38] sm:$0xf]
        %v2106 = vld [vmem:[#allocation3 + $0x40] sm:$0xf]
        %v2107 = vld [vmem:[#allocation3 + $0x48] sm:$0xf]
        %v2108 = vld [vmem:[#allocation3 + $0x50] sm:$0xf]
        %v2109 = vld [vmem:[#allocation3 + $0x58] sm:$0xf]
        %v2110 = vld [vmem:[#allocation3 + $0x60] sm:$0xf]
        %v2111 = vld [vmem:[#allocation3 + $0x68] sm:$0xf]
        %v2112 = vld [vmem:[#allocation3 + $0x70] sm:$0xf]
        %v2113 = vld [vmem:[#allocation3 + $0x78] sm:$0xf]
        %v2114 = vld [vmem:[#allocation4] sm:$0xf]
        %v2115 = vld [vmem:[#allocation4 + $0x8] sm:$0xf]
        %v2116 = vld [vmem:[#allocation4 + $0x10] sm:$0xf]
        %v2117 = vld [vmem:[#allocation4 + $0x18] sm:$0xf]
        %v2118 = vld [vmem:[#allocation4 + $0x20] sm:$0xf]
        %v2119 = vld [vmem:[#allocation4 + $0x28] sm:$0xf]
        %v2120 = vld [vmem:[#allocation4 + $0x30] sm:$0xf]
        %v2121 = vld [vmem:[#allocation4 + $0x38] sm:$0xf]
        %v2122 = vld [vmem:[#allocation4 + $0x40] sm:$0xf]
        %v2123 = vld [vmem:[#allocation4 + $0x48] sm:$0xf]
        %v2124 = vld [vmem:[#allocation4 + $0x50] sm:$0xf]
        %v2125 = vld [vmem:[#allocation4 + $0x58] sm:$0xf]
        %v2126 = vld [vmem:[#allocation4 + $0x60] sm:$0xf]
        %v2127 = vld [vmem:[#allocation4 + $0x68] sm:$0xf]
        %v2128 = vld [vmem:[#allocation4 + $0x70] sm:$0xf]
        %v2129 = vld [vmem:[#allocation4 + $0x78] sm:$0xf]
        %v2131 = vperm.slane %v2081, 0
        %v2149 = vunpack.c.l.b16 %v2082
        %v2150 = vunpack.c.l.b16 %v2083
        %v2151 = vunpack.c.l.b16 %v2084
        %v2152 = vunpack.c.l.b16 %v2085
        %v2153 = vunpack.c.l.b16 %v2086
        %v2154 = vunpack.c.l.b16 %v2087
        %v2155 = vunpack.c.l.b16 %v2088
        %v2156 = vunpack.c.l.b16 %v2089
        %v2157 = vunpack.c.l.b16 %v2090
        %v2158 = vunpack.c.l.b16 %v2091
        %v2159 = vunpack.c.l.b16 %v2092
        %v2160 = vunpack.c.l.b16 %v2093
        %v2161 = vunpack.c.l.b16 %v2094
        %v2162 = vunpack.c.l.b16 %v2095
        %v2163 = vunpack.c.l.b16 %v2096
        %v2164 = vunpack.c.l.b16 %v2097
        %v2165 = vpack.c.b16 %v2150, %v2149
        %v2166 = vpack.c.b16 %v2152, %v2151
        %v2167 = vpack.c.b16 %v2154, %v2153
        %v2168 = vpack.c.b16 %v2156, %v2155
        %v2169 = vpack.c.b16 %v2158, %v2157
        %v2170 = vpack.c.b16 %v2160, %v2159
        %v2171 = vpack.c.b16 %v2162, %v2161
        %v2172 = vpack.c.b16 %v2164, %v2163
        %v2189 = vunpack.c.l.b16 %v2098
        %v2190 = vunpack.c.l.b16 %v2099
        %v2191 = vunpack.c.l.b16 %v2100
        %v2192 = vunpack.c.l.b16 %v2101
        %v2193 = vunpack.c.l.b16 %v2102
        %v2194 = vunpack.c.l.b16 %v2103
        %v2195 = vunpack.c.l.b16 %v2104
        %v2196 = vunpack.c.l.b16 %v2105
        %v2197 = vunpack.c.l.b16 %v2106
        %v2198 = vunpack.c.l.b16 %v2107
        %v2199 = vunpack.c.l.b16 %v2108
        %v2200 = vunpack.c.l.b16 %v2109
        %v2201 = vunpack.c.l.b16 %v2110
        %v2202 = vunpack.c.l.b16 %v2111
        %v2203 = vunpack.c.l.b16 %v2112
        %v2204 = vunpack.c.l.b16 %v2113
        %v2205 = vpack.c.b16 %v2190, %v2189
        %v2206 = vpack.c.b16 %v2192, %v2191
        %v2207 = vpack.c.b16 %v2194, %v2193
        %v2208 = vpack.c.b16 %v2196, %v2195
        %v2209 = vpack.c.b16 %v2198, %v2197
        %v2210 = vpack.c.b16 %v2200, %v2199
        %v2211 = vpack.c.b16 %v2202, %v2201
        %v2212 = vpack.c.b16 %v2204, %v2203
        %vm2213 = vcmask 261120
        %v2215 = vsel %vm2213, %v2165, 0
        %v2218 = vsel %vm2213, %v2166, 0
        %v2221 = vsel %vm2213, %v2167, 0
        %v2224 = vsel %vm2213, %v2168, 0
        %v2227 = vsel %vm2213, %v2169, 0
        %v2230 = vsel %vm2213, %v2170, 0
        %v2233 = vsel %vm2213, %v2171, 0
        %v2236 = vsel %vm2213, %v2172, 0
        %v2239 = vsel %vm2213, %v2205, 0
        %v2242 = vsel %vm2213, %v2206, 0
        %v2245 = vsel %vm2213, %v2207, 0
        %v2248 = vsel %vm2213, %v2208, 0
        %v2251 = vsel %vm2213, %v2209, 0
        %v2254 = vsel %vm2213, %v2210, 0
        %v2257 = vsel %vm2213, %v2211, 0
        %v2260 = vsel %vm2213, %v2212, 0
        %2262 = vmatpush.bf16.xpose.msra.mxu0 %v2260
        %2263 = vmatpush.bf16.xpose.msra.mxu0 %v2257
        %2264 = vmatpush.bf16.xpose.msra.mxu0 %v2254
        %2265 = vmatpush.bf16.xpose.msra.mxu0 %v2251
        %2266 = vmatpush.bf16.xpose.msra.mxu0 %v2248
        %2267 = vmatpush.bf16.xpose.msra.mxu0 %v2245
        %2268 = vmatpush.bf16.xpose.msra.mxu0 %v2242
        %2269 = vmatpush.bf16.xpose.msra.mxu0 %v2239
        %2270 = vmatmul.bf16.gmra.mxu0 %v2215
        %v2271 = vpop.f32.mrf.mxu0
        %v2272 = vadd.f32 %v2131, %v2271
        %v2273 = vpop.f32.mrf.mxu0
        %v2274 = vadd.f32 %v2131, %v2273
        %2275 = vmatmul.bf16.gmra.mxu0 %v2218
        %v2276 = vpop.f32.mrf.mxu0
        %v2277 = vadd.f32 %v2131, %v2276
        %v2278 = vpop.f32.mrf.mxu0
        %v2279 = vadd.f32 %v2131, %v2278
        %2280 = vmatmul.bf16.gmra.mxu0 %v2221
        %v2281 = vpop.f32.mrf.mxu0
        %v2282 = vadd.f32 %v2131, %v2281
        %v2283 = vpop.f32.mrf.mxu0
        %v2284 = vadd.f32 %v2131, %v2283
        %2285 = vmatmul.bf16.gmra.mxu0 %v2224
        %v2286 = vpop.f32.mrf.mxu0
        %v2287 = vadd.f32 %v2131, %v2286
        %v2288 = vpop.f32.mrf.mxu0
        %v2289 = vadd.f32 %v2131, %v2288
        %2290 = vmatmul.bf16.gmra.mxu0 %v2227
        %v2291 = vpop.f32.mrf.mxu0
        %v2292 = vadd.f32 %v2131, %v2291
        %v2293 = vpop.f32.mrf.mxu0
        %v2294 = vadd.f32 %v2131, %v2293
        %2295 = vmatmul.bf16.gmra.mxu0 %v2230
        %v2296 = vpop.f32.mrf.mxu0
        %v2297 = vadd.f32 %v2131, %v2296
        %v2298 = vpop.f32.mrf.mxu0
        %v2299 = vadd.f32 %v2131, %v2298
        %2300 = vmatmul.bf16.gmra.mxu0 %v2233
        %v2301 = vpop.f32.mrf.mxu0
        %v2302 = vadd.f32 %v2131, %v2301
        %v2303 = vpop.f32.mrf.mxu0
        %v2304 = vadd.f32 %v2131, %v2303
        %2305 = vmatmul.bf16.gmra.mxu0 %v2236
        %v2306 = vpop.f32.mrf.mxu0
        %v2307 = vadd.f32 %v2131, %v2306
        %v2308 = vpop.f32.mrf.mxu0
        %v2309 = vadd.f32 %v2131, %v2308
        %2310 = vdwg.mxu0
        %2311 = vmax.xlane.f32.xlu0 %v2272
        %v2312 = vpop.xlane.xlu0 %2311
        %2313 = vmax.xlane.f32.xlu0 %v2274
        %v2314 = vpop.xlane.xlu0 %2313
        %2315 = vmax.xlane.f32.xlu0 %v2277
        %v2316 = vpop.xlane.xlu0 %2315
        %2317 = vmax.xlane.f32.xlu0 %v2279
        %v2318 = vpop.xlane.xlu0 %2317
        %2319 = vmax.xlane.f32.xlu0 %v2282
        %v2320 = vpop.xlane.xlu0 %2319
        %2321 = vmax.xlane.f32.xlu0 %v2284
        %v2322 = vpop.xlane.xlu0 %2321
        %2323 = vmax.xlane.f32.xlu0 %v2287
        %v2324 = vpop.xlane.xlu0 %2323
        %2325 = vmax.xlane.f32.xlu0 %v2289
        %v2326 = vpop.xlane.xlu0 %2325
        %2327 = vmax.xlane.f32.xlu0 %v2292
        %v2328 = vpop.xlane.xlu0 %2327
        %2329 = vmax.xlane.f32.xlu0 %v2294
        %v2330 = vpop.xlane.xlu0 %2329
        %2331 = vmax.xlane.f32.xlu0 %v2297
        %v2332 = vpop.xlane.xlu0 %2331
        %2333 = vmax.xlane.f32.xlu0 %v2299
        %v2334 = vpop.xlane.xlu0 %2333
        %2335 = vmax.xlane.f32.xlu0 %v2302
        %v2336 = vpop.xlane.xlu0 %2335
        %2337 = vmax.xlane.f32.xlu0 %v2304
        %v2338 = vpop.xlane.xlu0 %2337
        %2339 = vmax.xlane.f32.xlu0 %v2307
        %v2340 = vpop.xlane.xlu0 %2339
        %2341 = vmax.xlane.f32.xlu0 %v2309
        %v2342 = vpop.xlane.xlu0 %2341
        %v2343 = vsub.f32 %v2272, %v2312
        %v2344 = vsub.f32 %v2274, %v2314
        %v2345 = vsub.f32 %v2277, %v2316
        %v2346 = vsub.f32 %v2279, %v2318
        %v2347 = vsub.f32 %v2282, %v2320
        %v2348 = vsub.f32 %v2284, %v2322
        %v2349 = vsub.f32 %v2287, %v2324
        %v2350 = vsub.f32 %v2289, %v2326
        %v2351 = vsub.f32 %v2292, %v2328
        %v2352 = vsub.f32 %v2294, %v2330
        %v2353 = vsub.f32 %v2297, %v2332
        %v2354 = vsub.f32 %v2299, %v2334
        %v2355 = vsub.f32 %v2302, %v2336
        %v2356 = vsub.f32 %v2304, %v2338
        %v2357 = vsub.f32 %v2307, %v2340
        %v2358 = vsub.f32 %v2309, %v2342
        %v2359 = vmul.f32 %v2343, 1.442695
        %v2360 = vpow.pop %v2359
        %v2361 = vmul.f32 %v2344, 1.442695
        %v2362 = vpow.pop %v2361
        %v2363 = vmul.f32 %v2345, 1.442695
        %v2364 = vpow.pop %v2363
        %v2365 = vmul.f32 %v2346, 1.442695
        %v2366 = vpow.pop %v2365
        %v2367 = vmul.f32 %v2347, 1.442695
        %v2368 = vpow.pop %v2367
        %v2369 = vmul.f32 %v2348, 1.442695
        %v2370 = vpow.pop %v2369
        %v2371 = vmul.f32 %v2349, 1.442695
        %v2372 = vpow.pop %v2371
        %v2373 = vmul.f32 %v2350, 1.442695
        %v2374 = vpow.pop %v2373
        %v2375 = vmul.f32 %v2351, 1.442695
        %v2376 = vpow.pop %v2375
        %v2377 = vmul.f32 %v2352, 1.442695
        %v2378 = vpow.pop %v2377
        %v2379 = vmul.f32 %v2353, 1.442695
        %v2380 = vpow.pop %v2379
        %v2381 = vmul.f32 %v2354, 1.442695
        %v2382 = vpow.pop %v2381
        %v2383 = vmul.f32 %v2355, 1.442695
        %v2384 = vpow.pop %v2383
        %v2385 = vmul.f32 %v2356, 1.442695
        %v2386 = vpow.pop %v2385
        %v2387 = vmul.f32 %v2357, 1.442695
        %v2388 = vpow.pop %v2387
        %v2389 = vmul.f32 %v2358, 1.442695
        %v2390 = vpow.pop %v2389
        %2391 = vadd.xlane.f32.xlu0 %v2360
        %v2392 = vpop.xlane.xlu0 %2391
        %2393 = vadd.xlane.f32.xlu0 %v2362
        %v2394 = vpop.xlane.xlu0 %2393
        %2395 = vadd.xlane.f32.xlu0 %v2364
        %v2396 = vpop.xlane.xlu0 %2395
        %2397 = vadd.xlane.f32.xlu0 %v2366
        %v2398 = vpop.xlane.xlu0 %2397
        %2399 = vadd.xlane.f32.xlu0 %v2368
        %v2400 = vpop.xlane.xlu0 %2399
        %2401 = vadd.xlane.f32.xlu0 %v2370
        %v2402 = vpop.xlane.xlu0 %2401
        %2403 = vadd.xlane.f32.xlu0 %v2372
        %v2404 = vpop.xlane.xlu0 %2403
        %2405 = vadd.xlane.f32.xlu0 %v2374
        %v2406 = vpop.xlane.xlu0 %2405
        %2407 = vadd.xlane.f32.xlu0 %v2376
        %v2408 = vpop.xlane.xlu0 %2407
        %2409 = vadd.xlane.f32.xlu0 %v2378
        %v2410 = vpop.xlane.xlu0 %2409
        %2411 = vadd.xlane.f32.xlu0 %v2380
        %v2412 = vpop.xlane.xlu0 %2411
        %2413 = vadd.xlane.f32.xlu0 %v2382
        %v2414 = vpop.xlane.xlu0 %2413
        %2415 = vadd.xlane.f32.xlu0 %v2384
        %v2416 = vpop.xlane.xlu0 %2415
        %2417 = vadd.xlane.f32.xlu0 %v2386
        %v2418 = vpop.xlane.xlu0 %2417
        %2419 = vadd.xlane.f32.xlu0 %v2388
        %v2420 = vpop.xlane.xlu0 %2419
        %2421 = vadd.xlane.f32.xlu0 %v2390
        %v2422 = vpop.xlane.xlu0 %2421
        %v2423 = vrcp.pop %v2392
        %v2424 = vrcp.pop %v2394
        %v2425 = vrcp.pop %v2396
        %v2426 = vrcp.pop %v2398
        %v2427 = vrcp.pop %v2400
        %v2428 = vrcp.pop %v2402
        %v2429 = vrcp.pop %v2404
        %v2430 = vrcp.pop %v2406
        %v2431 = vrcp.pop %v2408
        %v2432 = vrcp.pop %v2410
        %v2433 = vrcp.pop %v2412
        %v2434 = vrcp.pop %v2414
        %v2435 = vrcp.pop %v2416
        %v2436 = vrcp.pop %v2418
        %v2437 = vrcp.pop %v2420
        %v2438 = vrcp.pop %v2422
        %v2439 = vpack.c.bf16 %v2362, %v2360
        %v2440 = vpack.c.bf16 %v2366, %v2364
        %v2441 = vpack.c.bf16 %v2370, %v2368
        %v2442 = vpack.c.bf16 %v2374, %v2372
        %v2443 = vpack.c.bf16 %v2378, %v2376
        %v2444 = vpack.c.bf16 %v2382, %v2380
        %v2445 = vpack.c.bf16 %v2386, %v2384
        %v2446 = vpack.c.bf16 %v2390, %v2388
        %v2463 = vunpack.c.l.b16 %v2114
        %v2464 = vunpack.c.l.b16 %v2115
        %v2465 = vunpack.c.l.b16 %v2116
        %v2466 = vunpack.c.l.b16 %v2117
        %v2467 = vunpack.c.l.b16 %v2118
        %v2468 = vunpack.c.l.b16 %v2119
        %v2469 = vunpack.c.l.b16 %v2120
        %v2470 = vunpack.c.l.b16 %v2121
        %v2471 = vunpack.c.l.b16 %v2122
        %v2472 = vunpack.c.l.b16 %v2123
        %v2473 = vunpack.c.l.b16 %v2124
        %v2474 = vunpack.c.l.b16 %v2125
        %v2475 = vunpack.c.l.b16 %v2126
        %v2476 = vunpack.c.l.b16 %v2127
        %v2477 = vunpack.c.l.b16 %v2128
        %v2478 = vunpack.c.l.b16 %v2129
        %v2479 = vpack.c.b16 %v2464, %v2463
        %v2480 = vpack.c.b16 %v2466, %v2465
        %v2481 = vpack.c.b16 %v2468, %v2467
        %v2482 = vpack.c.b16 %v2470, %v2469
        %v2483 = vpack.c.b16 %v2472, %v2471
        %v2484 = vpack.c.b16 %v2474, %v2473
        %v2485 = vpack.c.b16 %v2476, %v2475
        %v2486 = vpack.c.b16 %v2478, %v2477
        %2495 = vmatpush.bf16.msra.mxu0 %v2486
        %2496 = vmatpush.bf16.msra.mxu0 %v2485
        %2497 = vmatpush.bf16.msra.mxu0 %v2484
        %2498 = vmatpush.bf16.msra.mxu0 %v2483
        %2499 = vmatpush.bf16.msra.mxu0 %v2482
        %2500 = vmatpush.bf16.msra.mxu0 %v2481
        %2501 = vmatpush.bf16.msra.mxu0 %v2480
        %2502 = vmatpush.bf16.msra.mxu0 %v2479
        %2503 = vmatmul.bf16.gmra.mxu0 %v2439
        %v2504 = vpop.f32.mrf.mxu0
        %v2505 = vadd.f32 0.0, %v2504
        %v2506 = vpop.f32.mrf.mxu0
        %v2507 = vadd.f32 0.0, %v2506
        %2508 = vmatmul.bf16.gmra.mxu0 %v2440
        %v2509 = vpop.f32.mrf.mxu0
        %v2510 = vadd.f32 0.0, %v2509
        %v2511 = vpop.f32.mrf.mxu0
        %v2512 = vadd.f32 0.0, %v2511
        %2513 = vmatmul.bf16.gmra.mxu0 %v2441
        %v2514 = vpop.f32.mrf.mxu0
        %v2515 = vadd.f32 0.0, %v2514
        %v2516 = vpop.f32.mrf.mxu0
        %v2517 = vadd.f32 0.0, %v2516
        %2518 = vmatmul.bf16.gmra.mxu0 %v2442
        %v2519 = vpop.f32.mrf.mxu0
        %v2520 = vadd.f32 0.0, %v2519
        %v2521 = vpop.f32.mrf.mxu0
        %v2522 = vadd.f32 0.0, %v2521
        %2523 = vmatmul.bf16.gmra.mxu0 %v2443
        %v2524 = vpop.f32.mrf.mxu0
        %v2525 = vadd.f32 0.0, %v2524
        %v2526 = vpop.f32.mrf.mxu0
        %v2527 = vadd.f32 0.0, %v2526
        %2528 = vmatmul.bf16.gmra.mxu0 %v2444
        %v2529 = vpop.f32.mrf.mxu0
        %v2530 = vadd.f32 0.0, %v2529
        %v2531 = vpop.f32.mrf.mxu0
        %v2532 = vadd.f32 0.0, %v2531
        %2533 = vmatmul.bf16.gmra.mxu0 %v2445
        %v2534 = vpop.f32.mrf.mxu0
        %v2535 = vadd.f32 0.0, %v2534
        %v2536 = vpop.f32.mrf.mxu0
        %v2537 = vadd.f32 0.0, %v2536
        %2538 = vmatmul.bf16.gmra.mxu0 %v2446
        %v2539 = vpop.f32.mrf.mxu0
        %v2540 = vadd.f32 0.0, %v2539
        %v2541 = vpop.f32.mrf.mxu0
        %v2542 = vadd.f32 0.0, %v2541
        %2543 = vdwg.mxu0
        %v2544 = vmul.f32 %v2505, %v2423
        %v2545 = vmul.f32 %v2507, %v2424
        %v2546 = vmul.f32 %v2510, %v2425
        %v2547 = vmul.f32 %v2512, %v2426
        %v2548 = vmul.f32 %v2515, %v2427
        %v2549 = vmul.f32 %v2517, %v2428
        %v2550 = vmul.f32 %v2520, %v2429
        %v2551 = vmul.f32 %v2522, %v2430
        %v2552 = vmul.f32 %v2525, %v2431
        %v2553 = vmul.f32 %v2527, %v2432
        %v2554 = vmul.f32 %v2530, %v2433
        %v2555 = vmul.f32 %v2532, %v2434
        %v2556 = vmul.f32 %v2535, %v2435
        %v2557 = vmul.f32 %v2537, %v2436
        %v2558 = vmul.f32 %v2540, %v2437
        %v2559 = vmul.f32 %v2542, %v2438
        %v2560 = vpack.c.bf16 %v2544, %v2544
        %v2561 = vpack.c.bf16 %v2545, %v2545
        %v2562 = vpack.c.bf16 %v2546, %v2546
        %v2563 = vpack.c.bf16 %v2547, %v2547
        %v2564 = vpack.c.bf16 %v2548, %v2548
        %v2565 = vpack.c.bf16 %v2549, %v2549
        %v2566 = vpack.c.bf16 %v2550, %v2550
        %v2567 = vpack.c.bf16 %v2551, %v2551
        %v2568 = vpack.c.bf16 %v2552, %v2552
        %v2569 = vpack.c.bf16 %v2553, %v2553
        %v2570 = vpack.c.bf16 %v2554, %v2554
        %v2571 = vpack.c.bf16 %v2555, %v2555
        %v2572 = vpack.c.bf16 %v2556, %v2556
        %v2573 = vpack.c.bf16 %v2557, %v2557
        %v2574 = vpack.c.bf16 %v2558, %v2558
        %v2575 = vpack.c.bf16 %v2559, %v2559
        %vm2576 = vcmask 257024
        %2577 = vst.msk [vmem:[#allocation5] sm:$0xf] %vm2576, %v2560
        %2578 = vst.msk [vmem:[#allocation5 + $0x8] sm:$0xf] %vm2576, %v2561
        %2579 = vst.msk [vmem:[#allocation5 + $0x10] sm:$0xf] %vm2576, %v2562
        %2580 = vst.msk [vmem:[#allocation5 + $0x18] sm:$0xf] %vm2576, %v2563
        %2581 = vst.msk [vmem:[#allocation5 + $0x20] sm:$0xf] %vm2576, %v2564
        %2582 = vst.msk [vmem:[#allocation5 + $0x28] sm:$0xf] %vm2576, %v2565
        %2583 = vst.msk [vmem:[#allocation5 + $0x30] sm:$0xf] %vm2576, %v2566
        %2584 = vst.msk [vmem:[#allocation5 + $0x38] sm:$0xf] %vm2576, %v2567
        %2585 = vst.msk [vmem:[#allocation5 + $0x40] sm:$0xf] %vm2576, %v2568
        %2586 = vst.msk [vmem:[#allocation5 + $0x48] sm:$0xf] %vm2576, %v2569
        %2587 = vst.msk [vmem:[#allocation5 + $0x50] sm:$0xf] %vm2576, %v2570
        %2588 = vst.msk [vmem:[#allocation5 + $0x58] sm:$0xf] %vm2576, %v2571
        %2589 = vst.msk [vmem:[#allocation5 + $0x60] sm:$0xf] %vm2576, %v2572
        %2590 = vst.msk [vmem:[#allocation5 + $0x68] sm:$0xf] %vm2576, %v2573
        %2591 = vst.msk [vmem:[#allocation5 + $0x70] sm:$0xf] %vm2576, %v2574
        %2592 = vst.msk [vmem:[#allocation5 + $0x78] sm:$0xf] %vm2576, %v2575
        %v2593 = vld [vmem:[#allocation2] sm:$0xf]
        %v2594 = vld [vmem:[#allocation2 + $0x8] sm:$0xf]
        %v2595 = vld [vmem:[#allocation2 + $0x10] sm:$0xf]
        %v2596 = vld [vmem:[#allocation2 + $0x18] sm:$0xf]
        %v2597 = vld [vmem:[#allocation2 + $0x20] sm:$0xf]
        %v2598 = vld [vmem:[#allocation2 + $0x28] sm:$0xf]
        %v2599 = vld [vmem:[#allocation2 + $0x30] sm:$0xf]
        %v2600 = vld [vmem:[#allocation2 + $0x38] sm:$0xf]
        %v2601 = vld [vmem:[#allocation2 + $0x40] sm:$0xf]
        %v2602 = vld [vmem:[#allocation2 + $0x48] sm:$0xf]
        %v2603 = vld [vmem:[#allocation2 + $0x50] sm:$0xf]
        %v2604 = vld [vmem:[#allocation2 + $0x58] sm:$0xf]
        %v2605 = vld [vmem:[#allocation2 + $0x60] sm:$0xf]
        %v2606 = vld [vmem:[#allocation2 + $0x68] sm:$0xf]
        %v2607 = vld [vmem:[#allocation2 + $0x70] sm:$0xf]
        %v2608 = vld [vmem:[#allocation2 + $0x78] sm:$0xf]
        %v2609 = vld [vmem:[#allocation3] sm:$0xf]
        %v2610 = vld [vmem:[#allocation3 + $0x8] sm:$0xf]
        %v2611 = vld [vmem:[#allocation3 + $0x10] sm:$0xf]
        %v2612 = vld [vmem:[#allocation3 + $0x18] sm:$0xf]
        %v2613 = vld [vmem:[#allocation3 + $0x20] sm:$0xf]
        %v2614 = vld [vmem:[#allocation3 + $0x28] sm:$0xf]
        %v2615 = vld [vmem:[#allocation3 + $0x30] sm:$0xf]
        %v2616 = vld [vmem:[#allocation3 + $0x38] sm:$0xf]
        %v2617 = vld [vmem:[#allocation3 + $0x40] sm:$0xf]
        %v2618 = vld [vmem:[#allocation3 + $0x48] sm:$0xf]
        %v2619 = vld [vmem:[#allocation3 + $0x50] sm:$0xf]
        %v2620 = vld [vmem:[#allocation3 + $0x58] sm:$0xf]
        %v2621 = vld [vmem:[#allocation3 + $0x60] sm:$0xf]
        %v2622 = vld [vmem:[#allocation3 + $0x68] sm:$0xf]
        %v2623 = vld [vmem:[#allocation3 + $0x70] sm:$0xf]
        %v2624 = vld [vmem:[#allocation3 + $0x78] sm:$0xf]
        %v2625 = vld [vmem:[#allocation4] sm:$0xf]
        %v2626 = vld [vmem:[#allocation4 + $0x8] sm:$0xf]
        %v2627 = vld [vmem:[#allocation4 + $0x10] sm:$0xf]
        %v2628 = vld [vmem:[#allocation4 + $0x18] sm:$0xf]
        %v2629 = vld [vmem:[#allocation4 + $0x20] sm:$0xf]
        %v2630 = vld [vmem:[#allocation4 + $0x28] sm:$0xf]
        %v2631 = vld [vmem:[#allocation4 + $0x30] sm:$0xf]
        %v2632 = vld [vmem:[#allocation4 + $0x38] sm:$0xf]
        %v2633 = vld [vmem:[#allocation4 + $0x40] sm:$0xf]
        %v2634 = vld [vmem:[#allocation4 + $0x48] sm:$0xf]
        %v2635 = vld [vmem:[#allocation4 + $0x50] sm:$0xf]
        %v2636 = vld [vmem:[#allocation4 + $0x58] sm:$0xf]
        %v2637 = vld [vmem:[#allocation4 + $0x60] sm:$0xf]
        %v2638 = vld [vmem:[#allocation4 + $0x68] sm:$0xf]
        %v2639 = vld [vmem:[#allocation4 + $0x70] sm:$0xf]
        %v2640 = vld [vmem:[#allocation4 + $0x78] sm:$0xf]
        %v2657 = vunpack.c.l.b16 %v2593
        %v2658 = vunpack.c.l.b16 %v2594
        %v2659 = vunpack.c.l.b16 %v2595
        %v2660 = vunpack.c.l.b16 %v2596
        %v2661 = vunpack.c.l.b16 %v2597
        %v2662 = vunpack.c.l.b16 %v2598
        %v2663 = vunpack.c.l.b16 %v2599
        %v2664 = vunpack.c.l.b16 %v2600
        %v2665 = vunpack.c.l.b16 %v2601
        %v2666 = vunpack.c.l.b16 %v2602
        %v2667 = vunpack.c.l.b16 %v2603
        %v2668 = vunpack.c.l.b16 %v2604
        %v2669 = vunpack.c.l.b16 %v2605
        %v2670 = vunpack.c.l.b16 %v2606
        %v2671 = vunpack.c.l.b16 %v2607
        %v2672 = vunpack.c.l.b16 %v2608
        %v2673 = vpack.c.b16 %v2658, %v2657
        %v2674 = vpack.c.b16 %v2660, %v2659
        %v2675 = vpack.c.b16 %v2662, %v2661
        %v2676 = vpack.c.b16 %v2664, %v2663
        %v2677 = vpack.c.b16 %v2666, %v2665
        %v2678 = vpack.c.b16 %v2668, %v2667
        %v2679 = vpack.c.b16 %v2670, %v2669
        %v2680 = vpack.c.b16 %v2672, %v2671
        %2681 = vrot.lane.b32.xlu0 %v2673, 96
        %v2682 = vpop.permute.xlu0 %2681
        %2683 = vrot.lane.b32.xlu0 %v2674, 96
        %v2684 = vpop.permute.xlu0 %2683
        %2685 = vrot.lane.b32.xlu0 %v2675, 96
        %v2686 = vpop.permute.xlu0 %2685
        %2687 = vrot.lane.b32.xlu0 %v2676, 96
        %v2688 = vpop.permute.xlu0 %2687
        %2689 = vrot.lane.b32.xlu0 %v2677, 96
        %v2690 = vpop.permute.xlu0 %2689
        %2691 = vrot.lane.b32.xlu0 %v2678, 96
        %v2692 = vpop.permute.xlu0 %2691
        %2693 = vrot.lane.b32.xlu0 %v2679, 96
        %v2694 = vpop.permute.xlu0 %2693
        %2695 = vrot.lane.b32.xlu0 %v2680, 96
        %v2696 = vpop.permute.xlu0 %2695
        %v2713 = vunpack.c.l.b16 %v2609
        %v2714 = vunpack.c.l.b16 %v2610
        %v2715 = vunpack.c.l.b16 %v2611
        %v2716 = vunpack.c.l.b16 %v2612
        %v2717 = vunpack.c.l.b16 %v2613
        %v2718 = vunpack.c.l.b16 %v2614
        %v2719 = vunpack.c.l.b16 %v2615
        %v2720 = vunpack.c.l.b16 %v2616
        %v2721 = vunpack.c.l.b16 %v2617
        %v2722 = vunpack.c.l.b16 %v2618
        %v2723 = vunpack.c.l.b16 %v2619
        %v2724 = vunpack.c.l.b16 %v2620
        %v2725 = vunpack.c.l.b16 %v2621
        %v2726 = vunpack.c.l.b16 %v2622
        %v2727 = vunpack.c.l.b16 %v2623
        %v2728 = vunpack.c.l.b16 %v2624
        %v2729 = vpack.c.b16 %v2714, %v2713
        %v2730 = vpack.c.b16 %v2716, %v2715
        %v2731 = vpack.c.b16 %v2718, %v2717
        %v2732 = vpack.c.b16 %v2720, %v2719
        %v2733 = vpack.c.b16 %v2722, %v2721
        %v2734 = vpack.c.b16 %v2724, %v2723
        %v2735 = vpack.c.b16 %v2726, %v2725
        %v2736 = vpack.c.b16 %v2728, %v2727
        %2737 = vrot.lane.b32.xlu0 %v2729, 96
        %v2738 = vpop.permute.xlu0 %2737
        %2739 = vrot.lane.b32.xlu0 %v2730, 96
        %v2740 = vpop.permute.xlu0 %2739
        %2741 = vrot.lane.b32.xlu0 %v2731, 96
        %v2742 = vpop.permute.xlu0 %2741
        %2743 = vrot.lane.b32.xlu0 %v2732, 96
        %v2744 = vpop.permute.xlu0 %2743
        %2745 = vrot.lane.b32.xlu0 %v2733, 96
        %v2746 = vpop.permute.xlu0 %2745
        %2747 = vrot.lane.b32.xlu0 %v2734, 96
        %v2748 = vpop.permute.xlu0 %2747
        %2749 = vrot.lane.b32.xlu0 %v2735, 96
        %v2750 = vpop.permute.xlu0 %2749
        %2751 = vrot.lane.b32.xlu0 %v2736, 96
        %v2752 = vpop.permute.xlu0 %2751
        %v2754 = vsel %vm2213, %v2682, 0
        %v2757 = vsel %vm2213, %v2684, 0
        %v2760 = vsel %vm2213, %v2686, 0
        %v2763 = vsel %vm2213, %v2688, 0
        %v2766 = vsel %vm2213, %v2690, 0
        %v2769 = vsel %vm2213, %v2692, 0
        %v2772 = vsel %vm2213, %v2694, 0
        %v2775 = vsel %vm2213, %v2696, 0
        %v2778 = vsel %vm2213, %v2738, 0
        %v2781 = vsel %vm2213, %v2740, 0
        %v2784 = vsel %vm2213, %v2742, 0
        %v2787 = vsel %vm2213, %v2744, 0
        %v2790 = vsel %vm2213, %v2746, 0
        %v2793 = vsel %vm2213, %v2748, 0
        %v2796 = vsel %vm2213, %v2750, 0
        %v2799 = vsel %vm2213, %v2752, 0
        %2801 = vmatpush.bf16.xpose.msra.mxu0 %v2799
        %2802 = vmatpush.bf16.xpose.msra.mxu0 %v2796
        %2803 = vmatpush.bf16.xpose.msra.mxu0 %v2793
        %2804 = vmatpush.bf16.xpose.msra.mxu0 %v2790
        %2805 = vmatpush.bf16.xpose.msra.mxu0 %v2787
        %2806 = vmatpush.bf16.xpose.msra.mxu0 %v2784
        %2807 = vmatpush.bf16.xpose.msra.mxu0 %v2781
        %2808 = vmatpush.bf16.xpose.msra.mxu0 %v2778
        %2809 = vmatmul.bf16.gmra.mxu0 %v2754
        %v2810 = vpop.f32.mrf.mxu0
        %v2811 = vadd.f32 %v2131, %v2810
        %v2812 = vpop.f32.mrf.mxu0
        %v2813 = vadd.f32 %v2131, %v2812
        %2814 = vmatmul.bf16.gmra.mxu0 %v2757
        %v2815 = vpop.f32.mrf.mxu0
        %v2816 = vadd.f32 %v2131, %v2815
        %v2817 = vpop.f32.mrf.mxu0
        %v2818 = vadd.f32 %v2131, %v2817
        %2819 = vmatmul.bf16.gmra.mxu0 %v2760
        %v2820 = vpop.f32.mrf.mxu0
        %v2821 = vadd.f32 %v2131, %v2820
        %v2822 = vpop.f32.mrf.mxu0
        %v2823 = vadd.f32 %v2131, %v2822
        %2824 = vmatmul.bf16.gmra.mxu0 %v2763
        %v2825 = vpop.f32.mrf.mxu0
        %v2826 = vadd.f32 %v2131, %v2825
        %v2827 = vpop.f32.mrf.mxu0
        %v2828 = vadd.f32 %v2131, %v2827
        %2829 = vmatmul.bf16.gmra.mxu0 %v2766
        %v2830 = vpop.f32.mrf.mxu0
        %v2831 = vadd.f32 %v2131, %v2830
        %v2832 = vpop.f32.mrf.mxu0
        %v2833 = vadd.f32 %v2131, %v2832
        %2834 = vmatmul.bf16.gmra.mxu0 %v2769
        %v2835 = vpop.f32.mrf.mxu0
        %v2836 = vadd.f32 %v2131, %v2835
        %v2837 = vpop.f32.mrf.mxu0
        %v2838 = vadd.f32 %v2131, %v2837
        %2839 = vmatmul.bf16.gmra.mxu0 %v2772
        %v2840 = vpop.f32.mrf.mxu0
        %v2841 = vadd.f32 %v2131, %v2840
        %v2842 = vpop.f32.mrf.mxu0
        %v2843 = vadd.f32 %v2131, %v2842
        %2844 = vmatmul.bf16.gmra.mxu0 %v2775
        %v2845 = vpop.f32.mrf.mxu0
        %v2846 = vadd.f32 %v2131, %v2845
        %v2847 = vpop.f32.mrf.mxu0
        %v2848 = vadd.f32 %v2131, %v2847
        %2849 = vdwg.mxu0
        %2850 = vmax.xlane.f32.xlu0 %v2811
        %v2851 = vpop.xlane.xlu0 %2850
        %2852 = vmax.xlane.f32.xlu0 %v2813
        %v2853 = vpop.xlane.xlu0 %2852
        %2854 = vmax.xlane.f32.xlu0 %v2816
        %v2855 = vpop.xlane.xlu0 %2854
        %2856 = vmax.xlane.f32.xlu0 %v2818
        %v2857 = vpop.xlane.xlu0 %2856
        %2858 = vmax.xlane.f32.xlu0 %v2821
        %v2859 = vpop.xlane.xlu0 %2858
        %2860 = vmax.xlane.f32.xlu0 %v2823
        %v2861 = vpop.xlane.xlu0 %2860
        %2862 = vmax.xlane.f32.xlu0 %v2826
        %v2863 = vpop.xlane.xlu0 %2862
        %2864 = vmax.xlane.f32.xlu0 %v2828
        %v2865 = vpop.xlane.xlu0 %2864
        %2866 = vmax.xlane.f32.xlu0 %v2831
        %v2867 = vpop.xlane.xlu0 %2866
        %2868 = vmax.xlane.f32.xlu0 %v2833
        %v2869 = vpop.xlane.xlu0 %2868
        %2870 = vmax.xlane.f32.xlu0 %v2836
        %v2871 = vpop.xlane.xlu0 %2870
        %2872 = vmax.xlane.f32.xlu0 %v2838
        %v2873 = vpop.xlane.xlu0 %2872
        %2874 = vmax.xlane.f32.xlu0 %v2841
        %v2875 = vpop.xlane.xlu0 %2874
        %2876 = vmax.xlane.f32.xlu0 %v2843
        %v2877 = vpop.xlane.xlu0 %2876
        %2878 = vmax.xlane.f32.xlu0 %v2846
        %v2879 = vpop.xlane.xlu0 %2878
        %2880 = vmax.xlane.f32.xlu0 %v2848
        %v2881 = vpop.xlane.xlu0 %2880
        %v2882 = vsub.f32 %v2811, %v2851
        %v2883 = vsub.f32 %v2813, %v2853
        %v2884 = vsub.f32 %v2816, %v2855
        %v2885 = vsub.f32 %v2818, %v2857
        %v2886 = vsub.f32 %v2821, %v2859
        %v2887 = vsub.f32 %v2823, %v2861
        %v2888 = vsub.f32 %v2826, %v2863
        %v2889 = vsub.f32 %v2828, %v2865
        %v2890 = vsub.f32 %v2831, %v2867
        %v2891 = vsub.f32 %v2833, %v2869
        %v2892 = vsub.f32 %v2836, %v2871
        %v2893 = vsub.f32 %v2838, %v2873
        %v2894 = vsub.f32 %v2841, %v2875
        %v2895 = vsub.f32 %v2843, %v2877
        %v2896 = vsub.f32 %v2846, %v2879
        %v2897 = vsub.f32 %v2848, %v2881
        %v2898 = vmul.f32 %v2882, 1.442695
        %v2899 = vpow.pop %v2898
        %v2900 = vmul.f32 %v2883, 1.442695
        %v2901 = vpow.pop %v2900
        %v2902 = vmul.f32 %v2884, 1.442695
        %v2903 = vpow.pop %v2902
        %v2904 = vmul.f32 %v2885, 1.442695
        %v2905 = vpow.pop %v2904
        %v2906 = vmul.f32 %v2886, 1.442695
        %v2907 = vpow.pop %v2906
        %v2908 = vmul.f32 %v2887, 1.442695
        %v2909 = vpow.pop %v2908
        %v2910 = vmul.f32 %v2888, 1.442695
        %v2911 = vpow.pop %v2910
        %v2912 = vmul.f32 %v2889, 1.442695
        %v2913 = vpow.pop %v2912
        %v2914 = vmul.f32 %v2890, 1.442695
        %v2915 = vpow.pop %v2914
        %v2916 = vmul.f32 %v2891, 1.442695
        %v2917 = vpow.pop %v2916
        %v2918 = vmul.f32 %v2892, 1.442695
        %v2919 = vpow.pop %v2918
        %v2920 = vmul.f32 %v2893, 1.442695
        %v2921 = vpow.pop %v2920
        %v2922 = vmul.f32 %v2894, 1.442695
        %v2923 = vpow.pop %v2922
        %v2924 = vmul.f32 %v2895, 1.442695
        %v2925 = vpow.pop %v2924
        %v2926 = vmul.f32 %v2896, 1.442695
        %v2927 = vpow.pop %v2926
        %v2928 = vmul.f32 %v2897, 1.442695
        %v2929 = vpow.pop %v2928
        %2930 = vadd.xlane.f32.xlu0 %v2899
        %v2931 = vpop.xlane.xlu0 %2930
        %2932 = vadd.xlane.f32.xlu0 %v2901
        %v2933 = vpop.xlane.xlu0 %2932
        %2934 = vadd.xlane.f32.xlu0 %v2903
        %v2935 = vpop.xlane.xlu0 %2934
        %2936 = vadd.xlane.f32.xlu0 %v2905
        %v2937 = vpop.xlane.xlu0 %2936
        %2938 = vadd.xlane.f32.xlu0 %v2907
        %v2939 = vpop.xlane.xlu0 %2938
        %2940 = vadd.xlane.f32.xlu0 %v2909
        %v2941 = vpop.xlane.xlu0 %2940
        %2942 = vadd.xlane.f32.xlu0 %v2911
        %v2943 = vpop.xlane.xlu0 %2942
        %2944 = vadd.xlane.f32.xlu0 %v2913
        %v2945 = vpop.xlane.xlu0 %2944
        %2946 = vadd.xlane.f32.xlu0 %v2915
        %v2947 = vpop.xlane.xlu0 %2946
        %2948 = vadd.xlane.f32.xlu0 %v2917
        %v2949 = vpop.xlane.xlu0 %2948
        %2950 = vadd.xlane.f32.xlu0 %v2919
        %v2951 = vpop.xlane.xlu0 %2950
        %2952 = vadd.xlane.f32.xlu0 %v2921
        %v2953 = vpop.xlane.xlu0 %2952
        %2954 = vadd.xlane.f32.xlu0 %v2923
        %v2955 = vpop.xlane.xlu0 %2954
        %2956 = vadd.xlane.f32.xlu0 %v2925
        %v2957 = vpop.xlane.xlu0 %2956
        %2958 = vadd.xlane.f32.xlu0 %v2927
        %v2959 = vpop.xlane.xlu0 %2958
        %2960 = vadd.xlane.f32.xlu0 %v2929
        %v2961 = vpop.xlane.xlu0 %2960
        %v2962 = vrcp.pop %v2931
        %v2963 = vrcp.pop %v2933
        %v2964 = vrcp.pop %v2935
        %v2965 = vrcp.pop %v2937
        %v2966 = vrcp.pop %v2939
        %v2967 = vrcp.pop %v2941
        %v2968 = vrcp.pop %v2943
        %v2969 = vrcp.pop %v2945
        %v2970 = vrcp.pop %v2947
        %v2971 = vrcp.pop %v2949
        %v2972 = vrcp.pop %v2951
        %v2973 = vrcp.pop %v2953
        %v2974 = vrcp.pop %v2955
        %v2975 = vrcp.pop %v2957
        %v2976 = vrcp.pop %v2959
        %v2977 = vrcp.pop %v2961
        %v2978 = vpack.c.bf16 %v2901, %v2899
        %v2979 = vpack.c.bf16 %v2905, %v2903
        %v2980 = vpack.c.bf16 %v2909, %v2907
        %v2981 = vpack.c.bf16 %v2913, %v2911
        %v2982 = vpack.c.bf16 %v2917, %v2915
        %v2983 = vpack.c.bf16 %v2921, %v2919
        %v2984 = vpack.c.bf16 %v2925, %v2923
        %v2985 = vpack.c.bf16 %v2929, %v2927
        %v3002 = vunpack.c.l.b16 %v2625
        %v3003 = vunpack.c.l.b16 %v2626
        %v3004 = vunpack.c.l.b16 %v2627
        %v3005 = vunpack.c.l.b16 %v2628
        %v3006 = vunpack.c.l.b16 %v2629
        %v3007 = vunpack.c.l.b16 %v2630
        %v3008 = vunpack.c.l.b16 %v2631
        %v3009 = vunpack.c.l.b16 %v2632
        %v3010 = vunpack.c.l.b16 %v2633
        %v3011 = vunpack.c.l.b16 %v2634
        %v3012 = vunpack.c.l.b16 %v2635
        %v3013 = vunpack.c.l.b16 %v2636
        %v3014 = vunpack.c.l.b16 %v2637
        %v3015 = vunpack.c.l.b16 %v2638
        %v3016 = vunpack.c.l.b16 %v2639
        %v3017 = vunpack.c.l.b16 %v2640
        %v3018 = vpack.c.b16 %v3003, %v3002
        %v3019 = vpack.c.b16 %v3005, %v3004
        %v3020 = vpack.c.b16 %v3007, %v3006
        %v3021 = vpack.c.b16 %v3009, %v3008
        %v3022 = vpack.c.b16 %v3011, %v3010
        %v3023 = vpack.c.b16 %v3013, %v3012
        %v3024 = vpack.c.b16 %v3015, %v3014
        %v3025 = vpack.c.b16 %v3017, %v3016
        %3026 = vrot.lane.b32.xlu0 %v3018, 96
        %v3027 = vpop.permute.xlu0 %3026
        %3028 = vrot.lane.b32.xlu0 %v3019, 96
        %v3029 = vpop.permute.xlu0 %3028
        %3030 = vrot.lane.b32.xlu0 %v3020, 96
        %v3031 = vpop.permute.xlu0 %3030
        %3032 = vrot.lane.b32.xlu0 %v3021, 96
        %v3033 = vpop.permute.xlu0 %3032
        %3034 = vrot.lane.b32.xlu0 %v3022, 96
        %v3035 = vpop.permute.xlu0 %3034
        %3036 = vrot.lane.b32.xlu0 %v3023, 96
        %v3037 = vpop.permute.xlu0 %3036
        %3038 = vrot.lane.b32.xlu0 %v3024, 96
        %v3039 = vpop.permute.xlu0 %3038
        %3040 = vrot.lane.b32.xlu0 %v3025, 96
        %v3041 = vpop.permute.xlu0 %3040
        %3050 = vmatpush.bf16.msra.mxu0 %v3041
        %3051 = vmatpush.bf16.msra.mxu0 %v3039
        %3052 = vmatpush.bf16.msra.mxu0 %v3037
        %3053 = vmatpush.bf16.msra.mxu0 %v3035
        %3054 = vmatpush.bf16.msra.mxu0 %v3033
        %3055 = vmatpush.bf16.msra.mxu0 %v3031
        %3056 = vmatpush.bf16.msra.mxu0 %v3029
        %3057 = vmatpush.bf16.msra.mxu0 %v3027
        %3058 = vmatmul.bf16.gmra.mxu0 %v2978
        %v3059 = vpop.f32.mrf.mxu0
        %v3060 = vadd.f32 0.0, %v3059
        %v3061 = vpop.f32.mrf.mxu0
        %v3062 = vadd.f32 0.0, %v3061
        %3063 = vmatmul.bf16.gmra.mxu0 %v2979
        %v3064 = vpop.f32.mrf.mxu0
        %v3065 = vadd.f32 0.0, %v3064
        %v3066 = vpop.f32.mrf.mxu0
        %v3067 = vadd.f32 0.0, %v3066
        %3068 = vmatmul.bf16.gmra.mxu0 %v2980
        %v3069 = vpop.f32.mrf.mxu0
        %v3070 = vadd.f32 0.0, %v3069
        %v3071 = vpop.f32.mrf.mxu0
        %v3072 = vadd.f32 0.0, %v3071
        %3073 = vmatmul.bf16.gmra.mxu0 %v2981
        %v3074 = vpop.f32.mrf.mxu0
        %v3075 = vadd.f32 0.0, %v3074
        %v3076 = vpop.f32.mrf.mxu0
        %v3077 = vadd.f32 0.0, %v3076
        %3078 = vmatmul.bf16.gmra.mxu0 %v2982
        %v3079 = vpop.f32.mrf.mxu0
        %v3080 = vadd.f32 0.0, %v3079
        %v3081 = vpop.f32.mrf.mxu0
        %v3082 = vadd.f32 0.0, %v3081
        %3083 = vmatmul.bf16.gmra.mxu0 %v2983
        %v3084 = vpop.f32.mrf.mxu0
        %v3085 = vadd.f32 0.0, %v3084
        %v3086 = vpop.f32.mrf.mxu0
        %v3087 = vadd.f32 0.0, %v3086
        %3088 = vmatmul.bf16.gmra.mxu0 %v2984
        %v3089 = vpop.f32.mrf.mxu0
        %v3090 = vadd.f32 0.0, %v3089
        %v3091 = vpop.f32.mrf.mxu0
        %v3092 = vadd.f32 0.0, %v3091
        %3093 = vmatmul.bf16.gmra.mxu0 %v2985
        %v3094 = vpop.f32.mrf.mxu0
        %v3095 = vadd.f32 0.0, %v3094
        %v3096 = vpop.f32.mrf.mxu0
        %v3097 = vadd.f32 0.0, %v3096
        %3098 = vdwg.mxu0
        %v3099 = vmul.f32 %v3060, %v2962
        %v3100 = vmul.f32 %v3062, %v2963
        %v3101 = vmul.f32 %v3065, %v2964
        %v3102 = vmul.f32 %v3067, %v2965
        %v3103 = vmul.f32 %v3070, %v2966
        %v3104 = vmul.f32 %v3072, %v2967
        %v3105 = vmul.f32 %v3075, %v2968
        %v3106 = vmul.f32 %v3077, %v2969
        %v3107 = vmul.f32 %v3080, %v2970
        %v3108 = vmul.f32 %v3082, %v2971
        %v3109 = vmul.f32 %v3085, %v2972
        %v3110 = vmul.f32 %v3087, %v2973
        %v3111 = vmul.f32 %v3090, %v2974
        %v3112 = vmul.f32 %v3092, %v2975
        %v3113 = vmul.f32 %v3095, %v2976
        %v3114 = vmul.f32 %v3097, %v2977
        %v3115 = vpack.c.bf16 %v3099, %v3099
        %v3116 = vpack.c.bf16 %v3100, %v3100
        %v3117 = vpack.c.bf16 %v3101, %v3101
        %v3118 = vpack.c.bf16 %v3102, %v3102
        %v3119 = vpack.c.bf16 %v3103, %v3103
        %v3120 = vpack.c.bf16 %v3104, %v3104
        %v3121 = vpack.c.bf16 %v3105, %v3105
        %v3122 = vpack.c.bf16 %v3106, %v3106
        %v3123 = vpack.c.bf16 %v3107, %v3107
        %v3124 = vpack.c.bf16 %v3108, %v3108
        %v3125 = vpack.c.bf16 %v3109, %v3109
        %v3126 = vpack.c.bf16 %v3110, %v3110
        %v3127 = vpack.c.bf16 %v3111, %v3111
        %v3128 = vpack.c.bf16 %v3112, %v3112
        %v3129 = vpack.c.bf16 %v3113, %v3113
        %v3130 = vpack.c.bf16 %v3114, %v3114
        %3147 = vrot.lane.b32.xlu0 %v3115, 32
        %v3148 = vpop.permute.xlu0 %3147
        %3149 = vrot.lane.b32.xlu0 %v3116, 32
        %v3150 = vpop.permute.xlu0 %3149
        %3151 = vrot.lane.b32.xlu0 %v3117, 32
        %v3152 = vpop.permute.xlu0 %3151
        %3153 = vrot.lane.b32.xlu0 %v3118, 32
        %v3154 = vpop.permute.xlu0 %3153
        %3155 = vrot.lane.b32.xlu0 %v3119, 32
        %v3156 = vpop.permute.xlu0 %3155
        %3157 = vrot.lane.b32.xlu0 %v3120, 32
        %v3158 = vpop.permute.xlu0 %3157
        %3159 = vrot.lane.b32.xlu0 %v3121, 32
        %v3160 = vpop.permute.xlu0 %3159
        %3161 = vrot.lane.b32.xlu0 %v3122, 32
        %v3162 = vpop.permute.xlu0 %3161
        %3163 = vrot.lane.b32.xlu0 %v3123, 32
        %v3164 = vpop.permute.xlu0 %3163
        %3165 = vrot.lane.b32.xlu0 %v3124, 32
        %v3166 = vpop.permute.xlu0 %3165
        %3167 = vrot.lane.b32.xlu0 %v3125, 32
        %v3168 = vpop.permute.xlu0 %3167
        %3169 = vrot.lane.b32.xlu0 %v3126, 32
        %v3170 = vpop.permute.xlu0 %3169
        %3171 = vrot.lane.b32.xlu0 %v3127, 32
        %v3172 = vpop.permute.xlu0 %3171
        %3173 = vrot.lane.b32.xlu0 %v3128, 32
        %v3174 = vpop.permute.xlu0 %3173
        %3175 = vrot.lane.b32.xlu0 %v3129, 32
        %v3176 = vpop.permute.xlu0 %3175
        %3177 = vrot.lane.b32.xlu0 %v3130, 32
        %v3178 = vpop.permute.xlu0 %3177
        %vm3195 = vcmask 519424
        %3196 = vst.msk [vmem:[#allocation5] sm:$0xf] %vm3195, %v3148
        %3197 = vst.msk [vmem:[#allocation5 + $0x8] sm:$0xf] %vm3195, %v3150
        %3198 = vst.msk [vmem:[#allocation5 + $0x10] sm:$0xf] %vm3195, %v3152
        %3199 = vst.msk [vmem:[#allocation5 + $0x18] sm:$0xf] %vm3195, %v3154
        %3200 = vst.msk [vmem:[#allocation5 + $0x20] sm:$0xf] %vm3195, %v3156
        %3201 = vst.msk [vmem:[#allocation5 + $0x28] sm:$0xf] %vm3195, %v3158
        %3202 = vst.msk [vmem:[#allocation5 + $0x30] sm:$0xf] %vm3195, %v3160
        %3203 = vst.msk [vmem:[#allocation5 + $0x38] sm:$0xf] %vm3195, %v3162
        %3204 = vst.msk [vmem:[#allocation5 + $0x40] sm:$0xf] %vm3195, %v3164
        %3205 = vst.msk [vmem:[#allocation5 + $0x48] sm:$0xf] %vm3195, %v3166
        %3206 = vst.msk [vmem:[#allocation5 + $0x50] sm:$0xf] %vm3195, %v3168
        %3207 = vst.msk [vmem:[#allocation5 + $0x58] sm:$0xf] %vm3195, %v3170
        %3208 = vst.msk [vmem:[#allocation5 + $0x60] sm:$0xf] %vm3195, %v3172
        %3209 = vst.msk [vmem:[#allocation5 + $0x68] sm:$0xf] %vm3195, %v3174
        %3210 = vst.msk [vmem:[#allocation5 + $0x70] sm:$0xf] %vm3195, %v3176
        %3211 = vst.msk [vmem:[#allocation5 + $0x78] sm:$0xf] %vm3195, %v3178
        %v3212 = vld [vmem:[#allocation2] sm:$0xf]
        %v3213 = vld [vmem:[#allocation2 + $0x8] sm:$0xf]
        %v3214 = vld [vmem:[#allocation2 + $0x10] sm:$0xf]
        %v3215 = vld [vmem:[#allocation2 + $0x18] sm:$0xf]
        %v3216 = vld [vmem:[#allocation2 + $0x20] sm:$0xf]
        %v3217 = vld [vmem:[#allocation2 + $0x28] sm:$0xf]
        %v3218 = vld [vmem:[#allocation2 + $0x30] sm:$0xf]
        %v3219 = vld [vmem:[#allocation2 + $0x38] sm:$0xf]
        %v3220 = vld [vmem:[#allocation2 + $0x40] sm:$0xf]
        %v3221 = vld [vmem:[#allocation2 + $0x48] sm:$0xf]
        %v3222 = vld [vmem:[#allocation2 + $0x50] sm:$0xf]
        %v3223 = vld [vmem:[#allocation2 + $0x58] sm:$0xf]
        %v3224 = vld [vmem:[#allocation2 + $0x60] sm:$0xf]
        %v3225 = vld [vmem:[#allocation2 + $0x68] sm:$0xf]
        %v3226 = vld [vmem:[#allocation2 + $0x70] sm:$0xf]
        %v3227 = vld [vmem:[#allocation2 + $0x78] sm:$0xf]
        %v3228 = vld [vmem:[#allocation3] sm:$0xf]
        %v3229 = vld [vmem:[#allocation3 + $0x8] sm:$0xf]
        %v3230 = vld [vmem:[#allocation3 + $0x10] sm:$0xf]
        %v3231 = vld [vmem:[#allocation3 + $0x18] sm:$0xf]
        %v3232 = vld [vmem:[#allocation3 + $0x20] sm:$0xf]
        %v3233 = vld [vmem:[#allocation3 + $0x28] sm:$0xf]
        %v3234 = vld [vmem:[#allocation3 + $0x30] sm:$0xf]
        %v3235 = vld [vmem:[#allocation3 + $0x38] sm:$0xf]
        %v3236 = vld [vmem:[#allocation3 + $0x40] sm:$0xf]
        %v3237 = vld [vmem:[#allocation3 + $0x48] sm:$0xf]
        %v3238 = vld [vmem:[#allocation3 + $0x50] sm:$0xf]
        %v3239 = vld [vmem:[#allocation3 + $0x58] sm:$0xf]
        %v3240 = vld [vmem:[#allocation3 + $0x60] sm:$0xf]
        %v3241 = vld [vmem:[#allocation3 + $0x68] sm:$0xf]
        %v3242 = vld [vmem:[#allocation3 + $0x70] sm:$0xf]
        %v3243 = vld [vmem:[#allocation3 + $0x78] sm:$0xf]
        %v3244 = vld [vmem:[#allocation4] sm:$0xf]
        %v3245 = vld [vmem:[#allocation4 + $0x8] sm:$0xf]
        %v3246 = vld [vmem:[#allocation4 + $0x10] sm:$0xf]
        %v3247 = vld [vmem:[#allocation4 + $0x18] sm:$0xf]
        %v3248 = vld [vmem:[#allocation4 + $0x20] sm:$0xf]
        %v3249 = vld [vmem:[#allocation4 + $0x28] sm:$0xf]
        %v3250 = vld [vmem:[#allocation4 + $0x30] sm:$0xf]
        %v3251 = vld [vmem:[#allocation4 + $0x38] sm:$0xf]
        %v3252 = vld [vmem:[#allocation4 + $0x40] sm:$0xf]
        %v3253 = vld [vmem:[#allocation4 + $0x48] sm:$0xf]
        %v3254 = vld [vmem:[#allocation4 + $0x50] sm:$0xf]
        %v3255 = vld [vmem:[#allocation4 + $0x58] sm:$0xf]
        %v3256 = vld [vmem:[#allocation4 + $0x60] sm:$0xf]
        %v3257 = vld [vmem:[#allocation4 + $0x68] sm:$0xf]
        %v3258 = vld [vmem:[#allocation4 + $0x70] sm:$0xf]
        %v3259 = vld [vmem:[#allocation4 + $0x78] sm:$0xf]
        %v3276 = vunpack.c.l.b16 %v3212
        %v3277 = vunpack.c.l.b16 %v3213
        %v3278 = vunpack.c.l.b16 %v3214
        %v3279 = vunpack.c.l.b16 %v3215
        %v3280 = vunpack.c.l.b16 %v3216
        %v3281 = vunpack.c.l.b16 %v3217
        %v3282 = vunpack.c.l.b16 %v3218
        %v3283 = vunpack.c.l.b16 %v3219
        %v3284 = vunpack.c.l.b16 %v3220
        %v3285 = vunpack.c.l.b16 %v3221
        %v3286 = vunpack.c.l.b16 %v3222
        %v3287 = vunpack.c.l.b16 %v3223
        %v3288 = vunpack.c.l.b16 %v3224
        %v3289 = vunpack.c.l.b16 %v3225
        %v3290 = vunpack.c.l.b16 %v3226
        %v3291 = vunpack.c.l.b16 %v3227
        %v3292 = vpack.c.b16 %v3277, %v3276
        %v3293 = vpack.c.b16 %v3279, %v3278
        %v3294 = vpack.c.b16 %v3281, %v3280
        %v3295 = vpack.c.b16 %v3283, %v3282
        %v3296 = vpack.c.b16 %v3285, %v3284
        %v3297 = vpack.c.b16 %v3287, %v3286
        %v3298 = vpack.c.b16 %v3289, %v3288
        %v3299 = vpack.c.b16 %v3291, %v3290
        %3300 = vrot.lane.b32.xlu0 %v3292, 64
        %v3301 = vpop.permute.xlu0 %3300
        %3302 = vrot.lane.b32.xlu0 %v3293, 64
        %v3303 = vpop.permute.xlu0 %3302
        %3304 = vrot.lane.b32.xlu0 %v3294, 64
        %v3305 = vpop.permute.xlu0 %3304
        %3306 = vrot.lane.b32.xlu0 %v3295, 64
        %v3307 = vpop.permute.xlu0 %3306
        %3308 = vrot.lane.b32.xlu0 %v3296, 64
        %v3309 = vpop.permute.xlu0 %3308
        %3310 = vrot.lane.b32.xlu0 %v3297, 64
        %v3311 = vpop.permute.xlu0 %3310
        %3312 = vrot.lane.b32.xlu0 %v3298, 64
        %v3313 = vpop.permute.xlu0 %3312
        %3314 = vrot.lane.b32.xlu0 %v3299, 64
        %v3315 = vpop.permute.xlu0 %3314
        %v3332 = vunpack.c.l.b16 %v3228
        %v3333 = vunpack.c.l.b16 %v3229
        %v3334 = vunpack.c.l.b16 %v3230
        %v3335 = vunpack.c.l.b16 %v3231
        %v3336 = vunpack.c.l.b16 %v3232
        %v3337 = vunpack.c.l.b16 %v3233
        %v3338 = vunpack.c.l.b16 %v3234
        %v3339 = vunpack.c.l.b16 %v3235
        %v3340 = vunpack.c.l.b16 %v3236
        %v3341 = vunpack.c.l.b16 %v3237
        %v3342 = vunpack.c.l.b16 %v3238
        %v3343 = vunpack.c.l.b16 %v3239
        %v3344 = vunpack.c.l.b16 %v3240
        %v3345 = vunpack.c.l.b16 %v3241
        %v3346 = vunpack.c.l.b16 %v3242
        %v3347 = vunpack.c.l.b16 %v3243
        %v3348 = vpack.c.b16 %v3333, %v3332
        %v3349 = vpack.c.b16 %v3335, %v3334
        %v3350 = vpack.c.b16 %v3337, %v3336
        %v3351 = vpack.c.b16 %v3339, %v3338
        %v3352 = vpack.c.b16 %v3341, %v3340
        %v3353 = vpack.c.b16 %v3343, %v3342
        %v3354 = vpack.c.b16 %v3345, %v3344
        %v3355 = vpack.c.b16 %v3347, %v3346
        %3356 = vrot.lane.b32.xlu0 %v3348, 64
        %v3357 = vpop.permute.xlu0 %3356
        %3358 = vrot.lane.b32.xlu0 %v3349, 64
        %v3359 = vpop.permute.xlu0 %3358
        %3360 = vrot.lane.b32.xlu0 %v3350, 64
        %v3361 = vpop.permute.xlu0 %3360
        %3362 = vrot.lane.b32.xlu0 %v3351, 64
        %v3363 = vpop.permute.xlu0 %3362
        %3364 = vrot.lane.b32.xlu0 %v3352, 64
        %v3365 = vpop.permute.xlu0 %3364
        %3366 = vrot.lane.b32.xlu0 %v3353, 64
        %v3367 = vpop.permute.xlu0 %3366
        %3368 = vrot.lane.b32.xlu0 %v3354, 64
        %v3369 = vpop.permute.xlu0 %3368
        %3370 = vrot.lane.b32.xlu0 %v3355, 64
        %v3371 = vpop.permute.xlu0 %3370
        %v3373 = vsel %vm2213, %v3301, 0
        %v3376 = vsel %vm2213, %v3303, 0
        %v3379 = vsel %vm2213, %v3305, 0
        %v3382 = vsel %vm2213, %v3307, 0
        %v3385 = vsel %vm2213, %v3309, 0
        %v3388 = vsel %vm2213, %v3311, 0
        %v3391 = vsel %vm2213, %v3313, 0
        %v3394 = vsel %vm2213, %v3315, 0
        %v3397 = vsel %vm2213, %v3357, 0
        %v3400 = vsel %vm2213, %v3359, 0
        %v3403 = vsel %vm2213, %v3361, 0
        %v3406 = vsel %vm2213, %v3363, 0
        %v3409 = vsel %vm2213, %v3365, 0
        %v3412 = vsel %vm2213, %v3367, 0
        %v3415 = vsel %vm2213, %v3369, 0
        %v3418 = vsel %vm2213, %v3371, 0
        %3420 = vmatpush.bf16.xpose.msra.mxu0 %v3418
        %3421 = vmatpush.bf16.xpose.msra.mxu0 %v3415
        %3422 = vmatpush.bf16.xpose.msra.mxu0 %v3412
        %3423 = vmatpush.bf16.xpose.msra.mxu0 %v3409
        %3424 = vmatpush.bf16.xpose.msra.mxu0 %v3406
        %3425 = vmatpush.bf16.xpose.msra.mxu0 %v3403
        %3426 = vmatpush.bf16.xpose.msra.mxu0 %v3400
        %3427 = vmatpush.bf16.xpose.msra.mxu0 %v3397
        %3428 = vmatmul.bf16.gmra.mxu0 %v3373
        %v3429 = vpop.f32.mrf.mxu0
        %v3430 = vadd.f32 %v2131, %v3429
        %v3431 = vpop.f32.mrf.mxu0
        %v3432 = vadd.f32 %v2131, %v3431
        %3433 = vmatmul.bf16.gmra.mxu0 %v3376
        %v3434 = vpop.f32.mrf.mxu0
        %v3435 = vadd.f32 %v2131, %v3434
        %v3436 = vpop.f32.mrf.mxu0
        %v3437 = vadd.f32 %v2131, %v3436
        %3438 = vmatmul.bf16.gmra.mxu0 %v3379
        %v3439 = vpop.f32.mrf.mxu0
        %v3440 = vadd.f32 %v2131, %v3439
        %v3441 = vpop.f32.mrf.mxu0
        %v3442 = vadd.f32 %v2131, %v3441
        %3443 = vmatmul.bf16.gmra.mxu0 %v3382
        %v3444 = vpop.f32.mrf.mxu0
        %v3445 = vadd.f32 %v2131, %v3444
        %v3446 = vpop.f32.mrf.mxu0
        %v3447 = vadd.f32 %v2131, %v3446
        %3448 = vmatmul.bf16.gmra.mxu0 %v3385
        %v3449 = vpop.f32.mrf.mxu0
        %v3450 = vadd.f32 %v2131, %v3449
        %v3451 = vpop.f32.mrf.mxu0
        %v3452 = vadd.f32 %v2131, %v3451
        %3453 = vmatmul.bf16.gmra.mxu0 %v3388
        %v3454 = vpop.f32.mrf.mxu0
        %v3455 = vadd.f32 %v2131, %v3454
        %v3456 = vpop.f32.mrf.mxu0
        %v3457 = vadd.f32 %v2131, %v3456
        %3458 = vmatmul.bf16.gmra.mxu0 %v3391
        %v3459 = vpop.f32.mrf.mxu0
        %v3460 = vadd.f32 %v2131, %v3459
        %v3461 = vpop.f32.mrf.mxu0
        %v3462 = vadd.f32 %v2131, %v3461
        %3463 = vmatmul.bf16.gmra.mxu0 %v3394
        %v3464 = vpop.f32.mrf.mxu0
        %v3465 = vadd.f32 %v2131, %v3464
        %v3466 = vpop.f32.mrf.mxu0
        %v3467 = vadd.f32 %v2131, %v3466
        %3468 = vdwg.mxu0
        %3469 = vmax.xlane.f32.xlu0 %v3430
        %v3470 = vpop.xlane.xlu0 %3469
        %3471 = vmax.xlane.f32.xlu0 %v3432
        %v3472 = vpop.xlane.xlu0 %3471
        %3473 = vmax.xlane.f32.xlu0 %v3435
        %v3474 = vpop.xlane.xlu0 %3473
        %3475 = vmax.xlane.f32.xlu0 %v3437
        %v3476 = vpop.xlane.xlu0 %3475
        %3477 = vmax.xlane.f32.xlu0 %v3440
        %v3478 = vpop.xlane.xlu0 %3477
        %3479 = vmax.xlane.f32.xlu0 %v3442
        %v3480 = vpop.xlane.xlu0 %3479
        %3481 = vmax.xlane.f32.xlu0 %v3445
        %v3482 = vpop.xlane.xlu0 %3481
        %3483 = vmax.xlane.f32.xlu0 %v3447
        %v3484 = vpop.xlane.xlu0 %3483
        %3485 = vmax.xlane.f32.xlu0 %v3450
        %v3486 = vpop.xlane.xlu0 %3485
        %3487 = vmax.xlane.f32.xlu0 %v3452
        %v3488 = vpop.xlane.xlu0 %3487
        %3489 = vmax.xlane.f32.xlu0 %v3455
        %v3490 = vpop.xlane.xlu0 %3489
        %3491 = vmax.xlane.f32.xlu0 %v3457
        %v3492 = vpop.xlane.xlu0 %3491
        %3493 = vmax.xlane.f32.xlu0 %v3460
        %v3494 = vpop.xlane.xlu0 %3493
        %3495 = vmax.xlane.f32.xlu0 %v3462
        %v3496 = vpop.xlane.xlu0 %3495
        %3497 = vmax.xlane.f32.xlu0 %v3465
        %v3498 = vpop.xlane.xlu0 %3497
        %3499 = vmax.xlane.f32.xlu0 %v3467
        %v3500 = vpop.xlane.xlu0 %3499
        %v3501 = vsub.f32 %v3430, %v3470
        %v3502 = vsub.f32 %v3432, %v3472
        %v3503 = vsub.f32 %v3435, %v3474
        %v3504 = vsub.f32 %v3437, %v3476
        %v3505 = vsub.f32 %v3440, %v3478
        %v3506 = vsub.f32 %v3442, %v3480
        %v3507 = vsub.f32 %v3445, %v3482
        %v3508 = vsub.f32 %v3447, %v3484
        %v3509 = vsub.f32 %v3450, %v3486
        %v3510 = vsub.f32 %v3452, %v3488
        %v3511 = vsub.f32 %v3455, %v3490
        %v3512 = vsub.f32 %v3457, %v3492
        %v3513 = vsub.f32 %v3460, %v3494
        %v3514 = vsub.f32 %v3462, %v3496
        %v3515 = vsub.f32 %v3465, %v3498
        %v3516 = vsub.f32 %v3467, %v3500
        %v3517 = vmul.f32 %v3501, 1.442695
        %v3518 = vpow.pop %v3517
        %v3519 = vmul.f32 %v3502, 1.442695
        %v3520 = vpow.pop %v3519
        %v3521 = vmul.f32 %v3503, 1.442695
        %v3522 = vpow.pop %v3521
        %v3523 = vmul.f32 %v3504, 1.442695
        %v3524 = vpow.pop %v3523
        %v3525 = vmul.f32 %v3505, 1.442695
        %v3526 = vpow.pop %v3525
        %v3527 = vmul.f32 %v3506, 1.442695
        %v3528 = vpow.pop %v3527
        %v3529 = vmul.f32 %v3507, 1.442695
        %v3530 = vpow.pop %v3529
        %v3531 = vmul.f32 %v3508, 1.442695
        %v3532 = vpow.pop %v3531
        %v3533 = vmul.f32 %v3509, 1.442695
        %v3534 = vpow.pop %v3533
        %v3535 = vmul.f32 %v3510, 1.442695
        %v3536 = vpow.pop %v3535
        %v3537 = vmul.f32 %v3511, 1.442695
        %v3538 = vpow.pop %v3537
        %v3539 = vmul.f32 %v3512, 1.442695
        %v3540 = vpow.pop %v3539
        %v3541 = vmul.f32 %v3513, 1.442695
        %v3542 = vpow.pop %v3541
        %v3543 = vmul.f32 %v3514, 1.442695
        %v3544 = vpow.pop %v3543
        %v3545 = vmul.f32 %v3515, 1.442695
        %v3546 = vpow.pop %v3545
        %v3547 = vmul.f32 %v3516, 1.442695
        %v3548 = vpow.pop %v3547
        %3549 = vadd.xlane.f32.xlu0 %v3518
        %v3550 = vpop.xlane.xlu0 %3549
        %3551 = vadd.xlane.f32.xlu0 %v3520
        %v3552 = vpop.xlane.xlu0 %3551
        %3553 = vadd.xlane.f32.xlu0 %v3522
        %v3554 = vpop.xlane.xlu0 %3553
        %3555 = vadd.xlane.f32.xlu0 %v3524
        %v3556 = vpop.xlane.xlu0 %3555
        %3557 = vadd.xlane.f32.xlu0 %v3526
        %v3558 = vpop.xlane.xlu0 %3557
        %3559 = vadd.xlane.f32.xlu0 %v3528
        %v3560 = vpop.xlane.xlu0 %3559
        %3561 = vadd.xlane.f32.xlu0 %v3530
        %v3562 = vpop.xlane.xlu0 %3561
        %3563 = vadd.xlane.f32.xlu0 %v3532
        %v3564 = vpop.xlane.xlu0 %3563
        %3565 = vadd.xlane.f32.xlu0 %v3534
        %v3566 = vpop.xlane.xlu0 %3565
        %3567 = vadd.xlane.f32.xlu0 %v3536
        %v3568 = vpop.xlane.xlu0 %3567
        %3569 = vadd.xlane.f32.xlu0 %v3538
        %v3570 = vpop.xlane.xlu0 %3569
        %3571 = vadd.xlane.f32.xlu0 %v3540
        %v3572 = vpop.xlane.xlu0 %3571
        %3573 = vadd.xlane.f32.xlu0 %v3542
        %v3574 = vpop.xlane.xlu0 %3573
        %3575 = vadd.xlane.f32.xlu0 %v3544
        %v3576 = vpop.xlane.xlu0 %3575
        %3577 = vadd.xlane.f32.xlu0 %v3546
        %v3578 = vpop.xlane.xlu0 %3577
        %3579 = vadd.xlane.f32.xlu0 %v3548
        %v3580 = vpop.xlane.xlu0 %3579
        %v3581 = vrcp.pop %v3550
        %v3582 = vrcp.pop %v3552
        %v3583 = vrcp.pop %v3554
        %v3584 = vrcp.pop %v3556
        %v3585 = vrcp.pop %v3558
        %v3586 = vrcp.pop %v3560
        %v3587 = vrcp.pop %v3562
        %v3588 = vrcp.pop %v3564
        %v3589 = vrcp.pop %v3566
        %v3590 = vrcp.pop %v3568
        %v3591 = vrcp.pop %v3570
        %v3592 = vrcp.pop %v3572
        %v3593 = vrcp.pop %v3574
        %v3594 = vrcp.pop %v3576
        %v3595 = vrcp.pop %v3578
        %v3596 = vrcp.pop %v3580
        %v3597 = vpack.c.bf16 %v3520, %v3518
        %v3598 = vpack.c.bf16 %v3524, %v3522
        %v3599 = vpack.c.bf16 %v3528, %v3526
        %v3600 = vpack.c.bf16 %v3532, %v3530
        %v3601 = vpack.c.bf16 %v3536, %v3534
        %v3602 = vpack.c.bf16 %v3540, %v3538
        %v3603 = vpack.c.bf16 %v3544, %v3542
        %v3604 = vpack.c.bf16 %v3548, %v3546
        %v3621 = vunpack.c.l.b16 %v3244
        %v3622 = vunpack.c.l.b16 %v3245
        %v3623 = vunpack.c.l.b16 %v3246
        %v3624 = vunpack.c.l.b16 %v3247
        %v3625 = vunpack.c.l.b16 %v3248
        %v3626 = vunpack.c.l.b16 %v3249
        %v3627 = vunpack.c.l.b16 %v3250
        %v3628 = vunpack.c.l.b16 %v3251
        %v3629 = vunpack.c.l.b16 %v3252
        %v3630 = vunpack.c.l.b16 %v3253
        %v3631 = vunpack.c.l.b16 %v3254
        %v3632 = vunpack.c.l.b16 %v3255
        %v3633 = vunpack.c.l.b16 %v3256
        %v3634 = vunpack.c.l.b16 %v3257
        %v3635 = vunpack.c.l.b16 %v3258
        %v3636 = vunpack.c.l.b16 %v3259
        %v3637 = vpack.c.b16 %v3622, %v3621
        %v3638 = vpack.c.b16 %v3624, %v3623
        %v3639 = vpack.c.b16 %v3626, %v3625
        %v3640 = vpack.c.b16 %v3628, %v3627
        %v3641 = vpack.c.b16 %v3630, %v3629
        %v3642 = vpack.c.b16 %v3632, %v3631
        %v3643 = vpack.c.b16 %v3634, %v3633
        %v3644 = vpack.c.b16 %v3636, %v3635
        %3645 = vrot.lane.b32.xlu0 %v3637, 64
        %v3646 = vpop.permute.xlu0 %3645
        %3647 = vrot.lane.b32.xlu0 %v3638, 64
        %v3648 = vpop.permute.xlu0 %3647
        %3649 = vrot.lane.b32.xlu0 %v3639, 64
        %v3650 = vpop.permute.xlu0 %3649
        %3651 = vrot.lane.b32.xlu0 %v3640, 64
        %v3652 = vpop.permute.xlu0 %3651
        %3653 = vrot.lane.b32.xlu0 %v3641, 64
        %v3654 = vpop.permute.xlu0 %3653
        %3655 = vrot.lane.b32.xlu0 %v3642, 64
        %v3656 = vpop.permute.xlu0 %3655
        %3657 = vrot.lane.b32.xlu0 %v3643, 64
        %v3658 = vpop.permute.xlu0 %3657
        %3659 = vrot.lane.b32.xlu0 %v3644, 64
        %v3660 = vpop.permute.xlu0 %3659
        %3669 = vmatpush.bf16.msra.mxu0 %v3660
        %3670 = vmatpush.bf16.msra.mxu0 %v3658
        %3671 = vmatpush.bf16.msra.mxu0 %v3656
        %3672 = vmatpush.bf16.msra.mxu0 %v3654
        %3673 = vmatpush.bf16.msra.mxu0 %v3652
        %3674 = vmatpush.bf16.msra.mxu0 %v3650
        %3675 = vmatpush.bf16.msra.mxu0 %v3648
        %3676 = vmatpush.bf16.msra.mxu0 %v3646
        %3677 = vmatmul.bf16.gmra.mxu0 %v3597
        %v3678 = vpop.f32.mrf.mxu0
        %v3679 = vadd.f32 0.0, %v3678
        %v3680 = vpop.f32.mrf.mxu0
        %v3681 = vadd.f32 0.0, %v3680
        %3682 = vmatmul.bf16.gmra.mxu0 %v3598
        %v3683 = vpop.f32.mrf.mxu0
        %v3684 = vadd.f32 0.0, %v3683
        %v3685 = vpop.f32.mrf.mxu0
        %v3686 = vadd.f32 0.0, %v3685
        %3687 = vmatmul.bf16.gmra.mxu0 %v3599
        %v3688 = vpop.f32.mrf.mxu0
        %v3689 = vadd.f32 0.0, %v3688
        %v3690 = vpop.f32.mrf.mxu0
        %v3691 = vadd.f32 0.0, %v3690
        %3692 = vmatmul.bf16.gmra.mxu0 %v3600
        %v3693 = vpop.f32.mrf.mxu0
        %v3694 = vadd.f32 0.0, %v3693
        %v3695 = vpop.f32.mrf.mxu0
        %v3696 = vadd.f32 0.0, %v3695
        %3697 = vmatmul.bf16.gmra.mxu0 %v3601
        %v3698 = vpop.f32.mrf.mxu0
        %v3699 = vadd.f32 0.0, %v3698
        %v3700 = vpop.f32.mrf.mxu0
        %v3701 = vadd.f32 0.0, %v3700
        %3702 = vmatmul.bf16.gmra.mxu0 %v3602
        %v3703 = vpop.f32.mrf.mxu0
        %v3704 = vadd.f32 0.0, %v3703
        %v3705 = vpop.f32.mrf.mxu0
        %v3706 = vadd.f32 0.0, %v3705
        %3707 = vmatmul.bf16.gmra.mxu0 %v3603
        %v3708 = vpop.f32.mrf.mxu0
        %v3709 = vadd.f32 0.0, %v3708
        %v3710 = vpop.f32.mrf.mxu0
        %v3711 = vadd.f32 0.0, %v3710
        %3712 = vmatmul.bf16.gmra.mxu0 %v3604
        %v3713 = vpop.f32.mrf.mxu0
        %v3714 = vadd.f32 0.0, %v3713
        %v3715 = vpop.f32.mrf.mxu0
        %v3716 = vadd.f32 0.0, %v3715
        %3717 = vdwg.mxu0
        %v3718 = vmul.f32 %v3679, %v3581
        %v3719 = vmul.f32 %v3681, %v3582
        %v3720 = vmul.f32 %v3684, %v3583
        %v3721 = vmul.f32 %v3686, %v3584
        %v3722 = vmul.f32 %v3689, %v3585
        %v3723 = vmul.f32 %v3691, %v3586
        %v3724 = vmul.f32 %v3694, %v3587
        %v3725 = vmul.f32 %v3696, %v3588
        %v3726 = vmul.f32 %v3699, %v3589
        %v3727 = vmul.f32 %v3701, %v3590
        %v3728 = vmul.f32 %v3704, %v3591
        %v3729 = vmul.f32 %v3706, %v3592
        %v3730 = vmul.f32 %v3709, %v3593
        %v3731 = vmul.f32 %v3711, %v3594
        %v3732 = vmul.f32 %v3714, %v3595
        %v3733 = vmul.f32 %v3716, %v3596
        %v3734 = vpack.c.bf16 %v3718, %v3718
        %v3735 = vpack.c.bf16 %v3719, %v3719
        %v3736 = vpack.c.bf16 %v3720, %v3720
        %v3737 = vpack.c.bf16 %v3721, %v3721
        %v3738 = vpack.c.bf16 %v3722, %v3722
        %v3739 = vpack.c.bf16 %v3723, %v3723
        %v3740 = vpack.c.bf16 %v3724, %v3724
        %v3741 = vpack.c.bf16 %v3725, %v3725
        %v3742 = vpack.c.bf16 %v3726, %v3726
        %v3743 = vpack.c.bf16 %v3727, %v3727
        %v3744 = vpack.c.bf16 %v3728, %v3728
        %v3745 = vpack.c.bf16 %v3729, %v3729
        %v3746 = vpack.c.bf16 %v3730, %v3730
        %v3747 = vpack.c.bf16 %v3731, %v3731
        %v3748 = vpack.c.bf16 %v3732, %v3732
        %v3749 = vpack.c.bf16 %v3733, %v3733
        %3766 = vrot.lane.b32.xlu0 %v3734, 64
        %v3767 = vpop.permute.xlu0 %3766
        %3768 = vrot.lane.b32.xlu0 %v3735, 64
        %v3769 = vpop.permute.xlu0 %3768
        %3770 = vrot.lane.b32.xlu0 %v3736, 64
        %v3771 = vpop.permute.xlu0 %3770
        %3772 = vrot.lane.b32.xlu0 %v3737, 64
        %v3773 = vpop.permute.xlu0 %3772
        %3774 = vrot.lane.b32.xlu0 %v3738, 64
        %v3775 = vpop.permute.xlu0 %3774
        %3776 = vrot.lane.b32.xlu0 %v3739, 64
        %v3777 = vpop.permute.xlu0 %3776
        %3778 = vrot.lane.b32.xlu0 %v3740, 64
        %v3779 = vpop.permute.xlu0 %3778
        %3780 = vrot.lane.b32.xlu0 %v3741, 64
        %v3781 = vpop.permute.xlu0 %3780
        %3782 = vrot.lane.b32.xlu0 %v3742, 64
        %v3783 = vpop.permute.xlu0 %3782
        %3784 = vrot.lane.b32.xlu0 %v3743, 64
        %v3785 = vpop.permute.xlu0 %3784
        %3786 = vrot.lane.b32.xlu0 %v3744, 64
        %v3787 = vpop.permute.xlu0 %3786
        %3788 = vrot.lane.b32.xlu0 %v3745, 64
        %v3789 = vpop.permute.xlu0 %3788
        %3790 = vrot.lane.b32.xlu0 %v3746, 64
        %v3791 = vpop.permute.xlu0 %3790
        %3792 = vrot.lane.b32.xlu0 %v3747, 64
        %v3793 = vpop.permute.xlu0 %3792
        %3794 = vrot.lane.b32.xlu0 %v3748, 64
        %v3795 = vpop.permute.xlu0 %3794
        %3796 = vrot.lane.b32.xlu0 %v3749, 64
        %v3797 = vpop.permute.xlu0 %3796
        %vm3814 = vcmask 781824
        %3815 = vst.msk [vmem:[#allocation5] sm:$0xf] %vm3814, %v3767
        %3816 = vst.msk [vmem:[#allocation5 + $0x8] sm:$0xf] %vm3814, %v3769
        %3817 = vst.msk [vmem:[#allocation5 + $0x10] sm:$0xf] %vm3814, %v3771
        %3818 = vst.msk [vmem:[#allocation5 + $0x18] sm:$0xf] %vm3814, %v3773
        %3819 = vst.msk [vmem:[#allocation5 + $0x20] sm:$0xf] %vm3814, %v3775
        %3820 = vst.msk [vmem:[#allocation5 + $0x28] sm:$0xf] %vm3814, %v3777
        %3821 = vst.msk [vmem:[#allocation5 + $0x30] sm:$0xf] %vm3814, %v3779
        %3822 = vst.msk [vmem:[#allocation5 + $0x38] sm:$0xf] %vm3814, %v3781
        %3823 = vst.msk [vmem:[#allocation5 + $0x40] sm:$0xf] %vm3814, %v3783
        %3824 = vst.msk [vmem:[#allocation5 + $0x48] sm:$0xf] %vm3814, %v3785
        %3825 = vst.msk [vmem:[#allocation5 + $0x50] sm:$0xf] %vm3814, %v3787
        %3826 = vst.msk [vmem:[#allocation5 + $0x58] sm:$0xf] %vm3814, %v3789
        %3827 = vst.msk [vmem:[#allocation5 + $0x60] sm:$0xf] %vm3814, %v3791
        %3828 = vst.msk [vmem:[#allocation5 + $0x68] sm:$0xf] %vm3814, %v3793
        %3829 = vst.msk [vmem:[#allocation5 + $0x70] sm:$0xf] %vm3814, %v3795
        %3830 = vst.msk [vmem:[#allocation5 + $0x78] sm:$0xf] %vm3814, %v3797
        %v3831 = vld [vmem:[#allocation2] sm:$0xf]
        %v3832 = vld [vmem:[#allocation2 + $0x8] sm:$0xf]
        %v3833 = vld [vmem:[#allocation2 + $0x10] sm:$0xf]
        %v3834 = vld [vmem:[#allocation2 + $0x18] sm:$0xf]
        %v3835 = vld [vmem:[#allocation2 + $0x20] sm:$0xf]
        %v3836 = vld [vmem:[#allocation2 + $0x28] sm:$0xf]
        %v3837 = vld [vmem:[#allocation2 + $0x30] sm:$0xf]
        %v3838 = vld [vmem:[#allocation2 + $0x38] sm:$0xf]
        %v3839 = vld [vmem:[#allocation2 + $0x40] sm:$0xf]
        %v3840 = vld [vmem:[#allocation2 + $0x48] sm:$0xf]
        %v3841 = vld [vmem:[#allocation2 + $0x50] sm:$0xf]
        %v3842 = vld [vmem:[#allocation2 + $0x58] sm:$0xf]
        %v3843 = vld [vmem:[#allocation2 + $0x60] sm:$0xf]
        %v3844 = vld [vmem:[#allocation2 + $0x68] sm:$0xf]
        %v3845 = vld [vmem:[#allocation2 + $0x70] sm:$0xf]
        %v3846 = vld [vmem:[#allocation2 + $0x78] sm:$0xf]
        %v3847 = vld [vmem:[#allocation3] sm:$0xf]
        %v3848 = vld [vmem:[#allocation3 + $0x8] sm:$0xf]
        %v3849 = vld [vmem:[#allocation3 + $0x10] sm:$0xf]
        %v3850 = vld [vmem:[#allocation3 + $0x18] sm:$0xf]
        %v3851 = vld [vmem:[#allocation3 + $0x20] sm:$0xf]
        %v3852 = vld [vmem:[#allocation3 + $0x28] sm:$0xf]
        %v3853 = vld [vmem:[#allocation3 + $0x30] sm:$0xf]
        %v3854 = vld [vmem:[#allocation3 + $0x38] sm:$0xf]
        %v3855 = vld [vmem:[#allocation3 + $0x40] sm:$0xf]
        %v3856 = vld [vmem:[#allocation3 + $0x48] sm:$0xf]
        %v3857 = vld [vmem:[#allocation3 + $0x50] sm:$0xf]
        %v3858 = vld [vmem:[#allocation3 + $0x58] sm:$0xf]
        %v3859 = vld [vmem:[#allocation3 + $0x60] sm:$0xf]
        %v3860 = vld [vmem:[#allocation3 + $0x68] sm:$0xf]
        %v3861 = vld [vmem:[#allocation3 + $0x70] sm:$0xf]
        %v3862 = vld [vmem:[#allocation3 + $0x78] sm:$0xf]
        %v3863 = vld [vmem:[#allocation4] sm:$0xf]
        %v3864 = vld [vmem:[#allocation4 + $0x8] sm:$0xf]
        %v3865 = vld [vmem:[#allocation4 + $0x10] sm:$0xf]
        %v3866 = vld [vmem:[#allocation4 + $0x18] sm:$0xf]
        %v3867 = vld [vmem:[#allocation4 + $0x20] sm:$0xf]
        %v3868 = vld [vmem:[#allocation4 + $0x28] sm:$0xf]
        %v3869 = vld [vmem:[#allocation4 + $0x30] sm:$0xf]
        %v3870 = vld [vmem:[#allocation4 + $0x38] sm:$0xf]
        %v3871 = vld [vmem:[#allocation4 + $0x40] sm:$0xf]
        %v3872 = vld [vmem:[#allocation4 + $0x48] sm:$0xf]
        %v3873 = vld [vmem:[#allocation4 + $0x50] sm:$0xf]
        %v3874 = vld [vmem:[#allocation4 + $0x58] sm:$0xf]
        %v3875 = vld [vmem:[#allocation4 + $0x60] sm:$0xf]
        %v3876 = vld [vmem:[#allocation4 + $0x68] sm:$0xf]
        %v3877 = vld [vmem:[#allocation4 + $0x70] sm:$0xf]
        %v3878 = vld [vmem:[#allocation4 + $0x78] sm:$0xf]
        %v3895 = vunpack.c.l.b16 %v3831
        %v3896 = vunpack.c.l.b16 %v3832
        %v3897 = vunpack.c.l.b16 %v3833
        %v3898 = vunpack.c.l.b16 %v3834
        %v3899 = vunpack.c.l.b16 %v3835
        %v3900 = vunpack.c.l.b16 %v3836
        %v3901 = vunpack.c.l.b16 %v3837
        %v3902 = vunpack.c.l.b16 %v3838
        %v3903 = vunpack.c.l.b16 %v3839
        %v3904 = vunpack.c.l.b16 %v3840
        %v3905 = vunpack.c.l.b16 %v3841
        %v3906 = vunpack.c.l.b16 %v3842
        %v3907 = vunpack.c.l.b16 %v3843
        %v3908 = vunpack.c.l.b16 %v3844
        %v3909 = vunpack.c.l.b16 %v3845
        %v3910 = vunpack.c.l.b16 %v3846
        %v3911 = vpack.c.b16 %v3896, %v3895
        %v3912 = vpack.c.b16 %v3898, %v3897
        %v3913 = vpack.c.b16 %v3900, %v3899
        %v3914 = vpack.c.b16 %v3902, %v3901
        %v3915 = vpack.c.b16 %v3904, %v3903
        %v3916 = vpack.c.b16 %v3906, %v3905
        %v3917 = vpack.c.b16 %v3908, %v3907
        %v3918 = vpack.c.b16 %v3910, %v3909
        %3919 = vrot.lane.b32.xlu0 %v3911, 32
        %v3920 = vpop.permute.xlu0 %3919
        %3921 = vrot.lane.b32.xlu0 %v3912, 32
        %v3922 = vpop.permute.xlu0 %3921
        %3923 = vrot.lane.b32.xlu0 %v3913, 32
        %v3924 = vpop.permute.xlu0 %3923
        %3925 = vrot.lane.b32.xlu0 %v3914, 32
        %v3926 = vpop.permute.xlu0 %3925
        %3927 = vrot.lane.b32.xlu0 %v3915, 32
        %v3928 = vpop.permute.xlu0 %3927
        %3929 = vrot.lane.b32.xlu0 %v3916, 32
        %v3930 = vpop.permute.xlu0 %3929
        %3931 = vrot.lane.b32.xlu0 %v3917, 32
        %v3932 = vpop.permute.xlu0 %3931
        %3933 = vrot.lane.b32.xlu0 %v3918, 32
        %v3934 = vpop.permute.xlu0 %3933
        %v3951 = vunpack.c.l.b16 %v3847
        %v3952 = vunpack.c.l.b16 %v3848
        %v3953 = vunpack.c.l.b16 %v3849
        %v3954 = vunpack.c.l.b16 %v3850
        %v3955 = vunpack.c.l.b16 %v3851
        %v3956 = vunpack.c.l.b16 %v3852
        %v3957 = vunpack.c.l.b16 %v3853
        %v3958 = vunpack.c.l.b16 %v3854
        %v3959 = vunpack.c.l.b16 %v3855
        %v3960 = vunpack.c.l.b16 %v3856
        %v3961 = vunpack.c.l.b16 %v3857
        %v3962 = vunpack.c.l.b16 %v3858
        %v3963 = vunpack.c.l.b16 %v3859
        %v3964 = vunpack.c.l.b16 %v3860
        %v3965 = vunpack.c.l.b16 %v3861
        %v3966 = vunpack.c.l.b16 %v3862
        %v3967 = vpack.c.b16 %v3952, %v3951
        %v3968 = vpack.c.b16 %v3954, %v3953
        %v3969 = vpack.c.b16 %v3956, %v3955
        %v3970 = vpack.c.b16 %v3958, %v3957
        %v3971 = vpack.c.b16 %v3960, %v3959
        %v3972 = vpack.c.b16 %v3962, %v3961
        %v3973 = vpack.c.b16 %v3964, %v3963
        %v3974 = vpack.c.b16 %v3966, %v3965
        %3975 = vrot.lane.b32.xlu0 %v3967, 32
        %v3976 = vpop.permute.xlu0 %3975
        %3977 = vrot.lane.b32.xlu0 %v3968, 32
        %v3978 = vpop.permute.xlu0 %3977
        %3979 = vrot.lane.b32.xlu0 %v3969, 32
        %v3980 = vpop.permute.xlu0 %3979
        %3981 = vrot.lane.b32.xlu0 %v3970, 32
        %v3982 = vpop.permute.xlu0 %3981
        %3983 = vrot.lane.b32.xlu0 %v3971, 32
        %v3984 = vpop.permute.xlu0 %3983
        %3985 = vrot.lane.b32.xlu0 %v3972, 32
        %v3986 = vpop.permute.xlu0 %3985
        %3987 = vrot.lane.b32.xlu0 %v3973, 32
        %v3988 = vpop.permute.xlu0 %3987
        %3989 = vrot.lane.b32.xlu0 %v3974, 32
        %v3990 = vpop.permute.xlu0 %3989
        %v3992 = vsel %vm2213, %v3920, 0
        %v3995 = vsel %vm2213, %v3922, 0
        %v3998 = vsel %vm2213, %v3924, 0
        %v4001 = vsel %vm2213, %v3926, 0
        %v4004 = vsel %vm2213, %v3928, 0
        %v4007 = vsel %vm2213, %v3930, 0
        %v4010 = vsel %vm2213, %v3932, 0
        %v4013 = vsel %vm2213, %v3934, 0
        %v4016 = vsel %vm2213, %v3976, 0
        %v4019 = vsel %vm2213, %v3978, 0
        %v4022 = vsel %vm2213, %v3980, 0
        %v4025 = vsel %vm2213, %v3982, 0
        %v4028 = vsel %vm2213, %v3984, 0
        %v4031 = vsel %vm2213, %v3986, 0
        %v4034 = vsel %vm2213, %v3988, 0
        %v4037 = vsel %vm2213, %v3990, 0
        %4039 = vmatpush.bf16.xpose.msra.mxu0 %v4037
        %4040 = vmatpush.bf16.xpose.msra.mxu0 %v4034
        %4041 = vmatpush.bf16.xpose.msra.mxu0 %v4031
        %4042 = vmatpush.bf16.xpose.msra.mxu0 %v4028
        %4043 = vmatpush.bf16.xpose.msra.mxu0 %v4025
        %4044 = vmatpush.bf16.xpose.msra.mxu0 %v4022
        %4045 = vmatpush.bf16.xpose.msra.mxu0 %v4019
        %4046 = vmatpush.bf16.xpose.msra.mxu0 %v4016
        %4047 = vmatmul.bf16.gmra.mxu0 %v3992
        %v4048 = vpop.f32.mrf.mxu0
        %v4049 = vadd.f32 %v2131, %v4048
        %v4050 = vpop.f32.mrf.mxu0
        %v4051 = vadd.f32 %v2131, %v4050
        %4052 = vmatmul.bf16.gmra.mxu0 %v3995
        %v4053 = vpop.f32.mrf.mxu0
        %v4054 = vadd.f32 %v2131, %v4053
        %v4055 = vpop.f32.mrf.mxu0
        %v4056 = vadd.f32 %v2131, %v4055
        %4057 = vmatmul.bf16.gmra.mxu0 %v3998
        %v4058 = vpop.f32.mrf.mxu0
        %v4059 = vadd.f32 %v2131, %v4058
        %v4060 = vpop.f32.mrf.mxu0
        %v4061 = vadd.f32 %v2131, %v4060
        %4062 = vmatmul.bf16.gmra.mxu0 %v4001
        %v4063 = vpop.f32.mrf.mxu0
        %v4064 = vadd.f32 %v2131, %v4063
        %v4065 = vpop.f32.mrf.mxu0
        %v4066 = vadd.f32 %v2131, %v4065
        %4067 = vmatmul.bf16.gmra.mxu0 %v4004
        %v4068 = vpop.f32.mrf.mxu0
        %v4069 = vadd.f32 %v2131, %v4068
        %v4070 = vpop.f32.mrf.mxu0
        %v4071 = vadd.f32 %v2131, %v4070
        %4072 = vmatmul.bf16.gmra.mxu0 %v4007
        %v4073 = vpop.f32.mrf.mxu0
        %v4074 = vadd.f32 %v2131, %v4073
        %v4075 = vpop.f32.mrf.mxu0
        %v4076 = vadd.f32 %v2131, %v4075
        %4077 = vmatmul.bf16.gmra.mxu0 %v4010
        %v4078 = vpop.f32.mrf.mxu0
        %v4079 = vadd.f32 %v2131, %v4078
        %v4080 = vpop.f32.mrf.mxu0
        %v4081 = vadd.f32 %v2131, %v4080
        %4082 = vmatmul.bf16.gmra.mxu0 %v4013
        %v4083 = vpop.f32.mrf.mxu0
        %v4084 = vadd.f32 %v2131, %v4083
        %v4085 = vpop.f32.mrf.mxu0
        %v4086 = vadd.f32 %v2131, %v4085
        %4087 = vdwg.mxu0
        %4088 = vmax.xlane.f32.xlu0 %v4049
        %v4089 = vpop.xlane.xlu0 %4088
        %4090 = vmax.xlane.f32.xlu0 %v4051
        %v4091 = vpop.xlane.xlu0 %4090
        %4092 = vmax.xlane.f32.xlu0 %v4054
        %v4093 = vpop.xlane.xlu0 %4092
        %4094 = vmax.xlane.f32.xlu0 %v4056
        %v4095 = vpop.xlane.xlu0 %4094
        %4096 = vmax.xlane.f32.xlu0 %v4059
        %v4097 = vpop.xlane.xlu0 %4096
        %4098 = vmax.xlane.f32.xlu0 %v4061
        %v4099 = vpop.xlane.xlu0 %4098
        %4100 = vmax.xlane.f32.xlu0 %v4064
        %v4101 = vpop.xlane.xlu0 %4100
        %4102 = vmax.xlane.f32.xlu0 %v4066
        %v4103 = vpop.xlane.xlu0 %4102
        %4104 = vmax.xlane.f32.xlu0 %v4069
        %v4105 = vpop.xlane.xlu0 %4104
        %4106 = vmax.xlane.f32.xlu0 %v4071
        %v4107 = vpop.xlane.xlu0 %4106
        %4108 = vmax.xlane.f32.xlu0 %v4074
        %v4109 = vpop.xlane.xlu0 %4108
        %4110 = vmax.xlane.f32.xlu0 %v4076
        %v4111 = vpop.xlane.xlu0 %4110
        %4112 = vmax.xlane.f32.xlu0 %v4079
        %v4113 = vpop.xlane.xlu0 %4112
        %4114 = vmax.xlane.f32.xlu0 %v4081
        %v4115 = vpop.xlane.xlu0 %4114
        %4116 = vmax.xlane.f32.xlu0 %v4084
        %v4117 = vpop.xlane.xlu0 %4116
        %4118 = vmax.xlane.f32.xlu0 %v4086
        %v4119 = vpop.xlane.xlu0 %4118
        %v4120 = vsub.f32 %v4049, %v4089
        %v4121 = vsub.f32 %v4051, %v4091
        %v4122 = vsub.f32 %v4054, %v4093
        %v4123 = vsub.f32 %v4056, %v4095
        %v4124 = vsub.f32 %v4059, %v4097
        %v4125 = vsub.f32 %v4061, %v4099
        %v4126 = vsub.f32 %v4064, %v4101
        %v4127 = vsub.f32 %v4066, %v4103
        %v4128 = vsub.f32 %v4069, %v4105
        %v4129 = vsub.f32 %v4071, %v4107
        %v4130 = vsub.f32 %v4074, %v4109
        %v4131 = vsub.f32 %v4076, %v4111
        %v4132 = vsub.f32 %v4079, %v4113
        %v4133 = vsub.f32 %v4081, %v4115
        %v4134 = vsub.f32 %v4084, %v4117
        %v4135 = vsub.f32 %v4086, %v4119
        %v4136 = vmul.f32 %v4120, 1.442695
        %v4137 = vpow.pop %v4136
        %v4138 = vmul.f32 %v4121, 1.442695
        %v4139 = vpow.pop %v4138
        %v4140 = vmul.f32 %v4122, 1.442695
        %v4141 = vpow.pop %v4140
        %v4142 = vmul.f32 %v4123, 1.442695
        %v4143 = vpow.pop %v4142
        %v4144 = vmul.f32 %v4124, 1.442695
        %v4145 = vpow.pop %v4144
        %v4146 = vmul.f32 %v4125, 1.442695
        %v4147 = vpow.pop %v4146
        %v4148 = vmul.f32 %v4126, 1.442695
        %v4149 = vpow.pop %v4148
        %v4150 = vmul.f32 %v4127, 1.442695
        %v4151 = vpow.pop %v4150
        %v4152 = vmul.f32 %v4128, 1.442695
        %v4153 = vpow.pop %v4152
        %v4154 = vmul.f32 %v4129, 1.442695
        %v4155 = vpow.pop %v4154
        %v4156 = vmul.f32 %v4130, 1.442695
        %v4157 = vpow.pop %v4156
        %v4158 = vmul.f32 %v4131, 1.442695
        %v4159 = vpow.pop %v4158
        %v4160 = vmul.f32 %v4132, 1.442695
        %v4161 = vpow.pop %v4160
        %v4162 = vmul.f32 %v4133, 1.442695
        %v4163 = vpow.pop %v4162
        %v4164 = vmul.f32 %v4134, 1.442695
        %v4165 = vpow.pop %v4164
        %v4166 = vmul.f32 %v4135, 1.442695
        %v4167 = vpow.pop %v4166
        %4168 = vadd.xlane.f32.xlu0 %v4137
        %v4169 = vpop.xlane.xlu0 %4168
        %4170 = vadd.xlane.f32.xlu0 %v4139
        %v4171 = vpop.xlane.xlu0 %4170
        %4172 = vadd.xlane.f32.xlu0 %v4141
        %v4173 = vpop.xlane.xlu0 %4172
        %4174 = vadd.xlane.f32.xlu0 %v4143
        %v4175 = vpop.xlane.xlu0 %4174
        %4176 = vadd.xlane.f32.xlu0 %v4145
        %v4177 = vpop.xlane.xlu0 %4176
        %4178 = vadd.xlane.f32.xlu0 %v4147
        %v4179 = vpop.xlane.xlu0 %4178
        %4180 = vadd.xlane.f32.xlu0 %v4149
        %v4181 = vpop.xlane.xlu0 %4180
        %4182 = vadd.xlane.f32.xlu0 %v4151
        %v4183 = vpop.xlane.xlu0 %4182
        %4184 = vadd.xlane.f32.xlu0 %v4153
        %v4185 = vpop.xlane.xlu0 %4184
        %4186 = vadd.xlane.f32.xlu0 %v4155
        %v4187 = vpop.xlane.xlu0 %4186
        %4188 = vadd.xlane.f32.xlu0 %v4157
        %v4189 = vpop.xlane.xlu0 %4188
        %4190 = vadd.xlane.f32.xlu0 %v4159
        %v4191 = vpop.xlane.xlu0 %4190
        %4192 = vadd.xlane.f32.xlu0 %v4161
        %v4193 = vpop.xlane.xlu0 %4192
        %4194 = vadd.xlane.f32.xlu0 %v4163
        %v4195 = vpop.xlane.xlu0 %4194
        %4196 = vadd.xlane.f32.xlu0 %v4165
        %v4197 = vpop.xlane.xlu0 %4196
        %4198 = vadd.xlane.f32.xlu0 %v4167
        %v4199 = vpop.xlane.xlu0 %4198
        %v4200 = vrcp.pop %v4169
        %v4201 = vrcp.pop %v4171
        %v4202 = vrcp.pop %v4173
        %v4203 = vrcp.pop %v4175
        %v4204 = vrcp.pop %v4177
        %v4205 = vrcp.pop %v4179
        %v4206 = vrcp.pop %v4181
        %v4207 = vrcp.pop %v4183
        %v4208 = vrcp.pop %v4185
        %v4209 = vrcp.pop %v4187
        %v4210 = vrcp.pop %v4189
        %v4211 = vrcp.pop %v4191
        %v4212 = vrcp.pop %v4193
        %v4213 = vrcp.pop %v4195
        %v4214 = vrcp.pop %v4197
        %v4215 = vrcp.pop %v4199
        %v4216 = vpack.c.bf16 %v4139, %v4137
        %v4217 = vpack.c.bf16 %v4143, %v4141
        %v4218 = vpack.c.bf16 %v4147, %v4145
        %v4219 = vpack.c.bf16 %v4151, %v4149
        %v4220 = vpack.c.bf16 %v4155, %v4153
        %v4221 = vpack.c.bf16 %v4159, %v4157
        %v4222 = vpack.c.bf16 %v4163, %v4161
        %v4223 = vpack.c.bf16 %v4167, %v4165
        %v4240 = vunpack.c.l.b16 %v3863
        %v4241 = vunpack.c.l.b16 %v3864
        %v4242 = vunpack.c.l.b16 %v3865
        %v4243 = vunpack.c.l.b16 %v3866
        %v4244 = vunpack.c.l.b16 %v3867
        %v4245 = vunpack.c.l.b16 %v3868
        %v4246 = vunpack.c.l.b16 %v3869
        %v4247 = vunpack.c.l.b16 %v3870
        %v4248 = vunpack.c.l.b16 %v3871
        %v4249 = vunpack.c.l.b16 %v3872
        %v4250 = vunpack.c.l.b16 %v3873
        %v4251 = vunpack.c.l.b16 %v3874
        %v4252 = vunpack.c.l.b16 %v3875
        %v4253 = vunpack.c.l.b16 %v3876
        %v4254 = vunpack.c.l.b16 %v3877
        %v4255 = vunpack.c.l.b16 %v3878
        %v4256 = vpack.c.b16 %v4241, %v4240
        %v4257 = vpack.c.b16 %v4243, %v4242
        %v4258 = vpack.c.b16 %v4245, %v4244
        %v4259 = vpack.c.b16 %v4247, %v4246
        %v4260 = vpack.c.b16 %v4249, %v4248
        %v4261 = vpack.c.b16 %v4251, %v4250
        %v4262 = vpack.c.b16 %v4253, %v4252
        %v4263 = vpack.c.b16 %v4255, %v4254
        %4264 = vrot.lane.b32.xlu0 %v4256, 32
        %v4265 = vpop.permute.xlu0 %4264
        %4266 = vrot.lane.b32.xlu0 %v4257, 32
        %v4267 = vpop.permute.xlu0 %4266
        %4268 = vrot.lane.b32.xlu0 %v4258, 32
        %v4269 = vpop.permute.xlu0 %4268
        %4270 = vrot.lane.b32.xlu0 %v4259, 32
        %v4271 = vpop.permute.xlu0 %4270
        %4272 = vrot.lane.b32.xlu0 %v4260, 32
        %v4273 = vpop.permute.xlu0 %4272
        %4274 = vrot.lane.b32.xlu0 %v4261, 32
        %v4275 = vpop.permute.xlu0 %4274
        %4276 = vrot.lane.b32.xlu0 %v4262, 32
        %v4277 = vpop.permute.xlu0 %4276
        %4278 = vrot.lane.b32.xlu0 %v4263, 32
        %v4279 = vpop.permute.xlu0 %4278
        %4288 = vmatpush.bf16.msra.mxu0 %v4279
        %4289 = vmatpush.bf16.msra.mxu0 %v4277
        %4290 = vmatpush.bf16.msra.mxu0 %v4275
        %4291 = vmatpush.bf16.msra.mxu0 %v4273
        %4292 = vmatpush.bf16.msra.mxu0 %v4271
        %4293 = vmatpush.bf16.msra.mxu0 %v4269
        %4294 = vmatpush.bf16.msra.mxu0 %v4267
        %4295 = vmatpush.bf16.msra.mxu0 %v4265
        %4296 = vmatmul.bf16.gmra.mxu0 %v4216
        %v4297 = vpop.f32.mrf.mxu0
        %v4298 = vadd.f32 0.0, %v4297
        %v4299 = vpop.f32.mrf.mxu0
        %v4300 = vadd.f32 0.0, %v4299
        %4301 = vmatmul.bf16.gmra.mxu0 %v4217
        %v4302 = vpop.f32.mrf.mxu0
        %v4303 = vadd.f32 0.0, %v4302
        %v4304 = vpop.f32.mrf.mxu0
        %v4305 = vadd.f32 0.0, %v4304
        %4306 = vmatmul.bf16.gmra.mxu0 %v4218
        %v4307 = vpop.f32.mrf.mxu0
        %v4308 = vadd.f32 0.0, %v4307
        %v4309 = vpop.f32.mrf.mxu0
        %v4310 = vadd.f32 0.0, %v4309
        %4311 = vmatmul.bf16.gmra.mxu0 %v4219
        %v4312 = vpop.f32.mrf.mxu0
        %v4313 = vadd.f32 0.0, %v4312
        %v4314 = vpop.f32.mrf.mxu0
        %v4315 = vadd.f32 0.0, %v4314
        %4316 = vmatmul.bf16.gmra.mxu0 %v4220
        %v4317 = vpop.f32.mrf.mxu0
        %v4318 = vadd.f32 0.0, %v4317
        %v4319 = vpop.f32.mrf.mxu0
        %v4320 = vadd.f32 0.0, %v4319
        %4321 = vmatmul.bf16.gmra.mxu0 %v4221
        %v4322 = vpop.f32.mrf.mxu0
        %v4323 = vadd.f32 0.0, %v4322
        %v4324 = vpop.f32.mrf.mxu0
        %v4325 = vadd.f32 0.0, %v4324
        %4326 = vmatmul.bf16.gmra.mxu0 %v4222
        %v4327 = vpop.f32.mrf.mxu0
        %v4328 = vadd.f32 0.0, %v4327
        %v4329 = vpop.f32.mrf.mxu0
        %v4330 = vadd.f32 0.0, %v4329
        %4331 = vmatmul.bf16.gmra.mxu0 %v4223
        %v4332 = vpop.f32.mrf.mxu0
        %v4333 = vadd.f32 0.0, %v4332
        %v4334 = vpop.f32.mrf.mxu0
        %v4335 = vadd.f32 0.0, %v4334
        %4336 = vdwg.mxu0
        %v4337 = vmul.f32 %v4298, %v4200
        %v4338 = vmul.f32 %v4300, %v4201
        %v4339 = vmul.f32 %v4303, %v4202
        %v4340 = vmul.f32 %v4305, %v4203
        %v4341 = vmul.f32 %v4308, %v4204
        %v4342 = vmul.f32 %v4310, %v4205
        %v4343 = vmul.f32 %v4313, %v4206
        %v4344 = vmul.f32 %v4315, %v4207
        %v4345 = vmul.f32 %v4318, %v4208
        %v4346 = vmul.f32 %v4320, %v4209
        %v4347 = vmul.f32 %v4323, %v4210
        %v4348 = vmul.f32 %v4325, %v4211
        %v4349 = vmul.f32 %v4328, %v4212
        %v4350 = vmul.f32 %v4330, %v4213
        %v4351 = vmul.f32 %v4333, %v4214
        %v4352 = vmul.f32 %v4335, %v4215
        %v4353 = vpack.c.bf16 %v4337, %v4337
        %v4354 = vpack.c.bf16 %v4338, %v4338
        %v4355 = vpack.c.bf16 %v4339, %v4339
        %v4356 = vpack.c.bf16 %v4340, %v4340
        %v4357 = vpack.c.bf16 %v4341, %v4341
        %v4358 = vpack.c.bf16 %v4342, %v4342
        %v4359 = vpack.c.bf16 %v4343, %v4343
        %v4360 = vpack.c.bf16 %v4344, %v4344
        %v4361 = vpack.c.bf16 %v4345, %v4345
        %v4362 = vpack.c.bf16 %v4346, %v4346
        %v4363 = vpack.c.bf16 %v4347, %v4347
        %v4364 = vpack.c.bf16 %v4348, %v4348
        %v4365 = vpack.c.bf16 %v4349, %v4349
        %v4366 = vpack.c.bf16 %v4350, %v4350
        %v4367 = vpack.c.bf16 %v4351, %v4351
        %v4368 = vpack.c.bf16 %v4352, %v4352
        %4385 = vrot.lane.b32.xlu0 %v4353, 96
        %v4386 = vpop.permute.xlu0 %4385
        %4387 = vrot.lane.b32.xlu0 %v4354, 96
        %v4388 = vpop.permute.xlu0 %4387
        %4389 = vrot.lane.b32.xlu0 %v4355, 96
        %v4390 = vpop.permute.xlu0 %4389
        %4391 = vrot.lane.b32.xlu0 %v4356, 96
        %v4392 = vpop.permute.xlu0 %4391
        %4393 = vrot.lane.b32.xlu0 %v4357, 96
        %v4394 = vpop.permute.xlu0 %4393
        %4395 = vrot.lane.b32.xlu0 %v4358, 96
        %v4396 = vpop.permute.xlu0 %4395
        %4397 = vrot.lane.b32.xlu0 %v4359, 96
        %v4398 = vpop.permute.xlu0 %4397
        %4399 = vrot.lane.b32.xlu0 %v4360, 96
        %v4400 = vpop.permute.xlu0 %4399
        %4401 = vrot.lane.b32.xlu0 %v4361, 96
        %v4402 = vpop.permute.xlu0 %4401
        %4403 = vrot.lane.b32.xlu0 %v4362, 96
        %v4404 = vpop.permute.xlu0 %4403
        %4405 = vrot.lane.b32.xlu0 %v4363, 96
        %v4406 = vpop.permute.xlu0 %4405
        %4407 = vrot.lane.b32.xlu0 %v4364, 96
        %v4408 = vpop.permute.xlu0 %4407
        %4409 = vrot.lane.b32.xlu0 %v4365, 96
        %v4410 = vpop.permute.xlu0 %4409
        %4411 = vrot.lane.b32.xlu0 %v4366, 96
        %v4412 = vpop.permute.xlu0 %4411
        %4413 = vrot.lane.b32.xlu0 %v4367, 96
        %v4414 = vpop.permute.xlu0 %4413
        %4415 = vrot.lane.b32.xlu0 %v4368, 96
        %v4416 = vpop.permute.xlu0 %4415
        %vm4433 = vcmask 1044224
        %4434 = vst.msk [vmem:[#allocation5] sm:$0xf] %vm4433, %v4386
        %4435 = vst.msk [vmem:[#allocation5 + $0x8] sm:$0xf] %vm4433, %v4388
        %4436 = vst.msk [vmem:[#allocation5 + $0x10] sm:$0xf] %vm4433, %v4390
        %4437 = vst.msk [vmem:[#allocation5 + $0x18] sm:$0xf] %vm4433, %v4392
        %4438 = vst.msk [vmem:[#allocation5 + $0x20] sm:$0xf] %vm4433, %v4394
        %4439 = vst.msk [vmem:[#allocation5 + $0x28] sm:$0xf] %vm4433, %v4396
        %4440 = vst.msk [vmem:[#allocation5 + $0x30] sm:$0xf] %vm4433, %v4398
        %4441 = vst.msk [vmem:[#allocation5 + $0x38] sm:$0xf] %vm4433, %v4400
        %4442 = vst.msk [vmem:[#allocation5 + $0x40] sm:$0xf] %vm4433, %v4402
        %4443 = vst.msk [vmem:[#allocation5 + $0x48] sm:$0xf] %vm4433, %v4404
        %4444 = vst.msk [vmem:[#allocation5 + $0x50] sm:$0xf] %vm4433, %v4406
        %4445 = vst.msk [vmem:[#allocation5 + $0x58] sm:$0xf] %vm4433, %v4408
        %4446 = vst.msk [vmem:[#allocation5 + $0x60] sm:$0xf] %vm4433, %v4410
        %4447 = vst.msk [vmem:[#allocation5 + $0x68] sm:$0xf] %vm4433, %v4412
        %4448 = vst.msk [vmem:[#allocation5 + $0x70] sm:$0xf] %vm4433, %v4414
        %4449 = vst.msk [vmem:[#allocation5 + $0x78] sm:$0xf] %vm4433, %v4416
        %v4450 = vld [vmem:[#allocation2 + $0x4] sm:$0xf]
        %v4451 = vld [vmem:[#allocation2 + $0xc] sm:$0xf]
        %v4452 = vld [vmem:[#allocation2 + $0x14] sm:$0xf]
        %v4453 = vld [vmem:[#allocation2 + $0x1c] sm:$0xf]
        %v4454 = vld [vmem:[#allocation2 + $0x24] sm:$0xf]
        %v4455 = vld [vmem:[#allocation2 + $0x2c] sm:$0xf]
        %v4456 = vld [vmem:[#allocation2 + $0x34] sm:$0xf]
        %v4457 = vld [vmem:[#allocation2 + $0x3c] sm:$0xf]
        %v4458 = vld [vmem:[#allocation2 + $0x44] sm:$0xf]
        %v4459 = vld [vmem:[#allocation2 + $0x4c] sm:$0xf]
        %v4460 = vld [vmem:[#allocation2 + $0x54] sm:$0xf]
        %v4461 = vld [vmem:[#allocation2 + $0x5c] sm:$0xf]
        %v4462 = vld [vmem:[#allocation2 + $0x64] sm:$0xf]
        %v4463 = vld [vmem:[#allocation2 + $0x6c] sm:$0xf]
        %v4464 = vld [vmem:[#allocation2 + $0x74] sm:$0xf]
        %v4465 = vld [vmem:[#allocation2 + $0x7c] sm:$0xf]
        %v4466 = vld [vmem:[#allocation3 + $0x4] sm:$0xf]
        %v4467 = vld [vmem:[#allocation3 + $0xc] sm:$0xf]
        %v4468 = vld [vmem:[#allocation3 + $0x14] sm:$0xf]
        %v4469 = vld [vmem:[#allocation3 + $0x1c] sm:$0xf]
        %v4470 = vld [vmem:[#allocation3 + $0x24] sm:$0xf]
        %v4471 = vld [vmem:[#allocation3 + $0x2c] sm:$0xf]
        %v4472 = vld [vmem:[#allocation3 + $0x34] sm:$0xf]
        %v4473 = vld [vmem:[#allocation3 + $0x3c] sm:$0xf]
        %v4474 = vld [vmem:[#allocation3 + $0x44] sm:$0xf]
        %v4475 = vld [vmem:[#allocation3 + $0x4c] sm:$0xf]
        %v4476 = vld [vmem:[#allocation3 + $0x54] sm:$0xf]
        %v4477 = vld [vmem:[#allocation3 + $0x5c] sm:$0xf]
        %v4478 = vld [vmem:[#allocation3 + $0x64] sm:$0xf]
        %v4479 = vld [vmem:[#allocation3 + $0x6c] sm:$0xf]
        %v4480 = vld [vmem:[#allocation3 + $0x74] sm:$0xf]
        %v4481 = vld [vmem:[#allocation3 + $0x7c] sm:$0xf]
        %v4482 = vld [vmem:[#allocation4 + $0x4] sm:$0xf]
        %v4483 = vld [vmem:[#allocation4 + $0xc] sm:$0xf]
        %v4484 = vld [vmem:[#allocation4 + $0x14] sm:$0xf]
        %v4485 = vld [vmem:[#allocation4 + $0x1c] sm:$0xf]
        %v4486 = vld [vmem:[#allocation4 + $0x24] sm:$0xf]
        %v4487 = vld [vmem:[#allocation4 + $0x2c] sm:$0xf]
        %v4488 = vld [vmem:[#allocation4 + $0x34] sm:$0xf]
        %v4489 = vld [vmem:[#allocation4 + $0x3c] sm:$0xf]
        %v4490 = vld [vmem:[#allocation4 + $0x44] sm:$0xf]
        %v4491 = vld [vmem:[#allocation4 + $0x4c] sm:$0xf]
        %v4492 = vld [vmem:[#allocation4 + $0x54] sm:$0xf]
        %v4493 = vld [vmem:[#allocation4 + $0x5c] sm:$0xf]
        %v4494 = vld [vmem:[#allocation4 + $0x64] sm:$0xf]
        %v4495 = vld [vmem:[#allocation4 + $0x6c] sm:$0xf]
        %v4496 = vld [vmem:[#allocation4 + $0x74] sm:$0xf]
        %v4497 = vld [vmem:[#allocation4 + $0x7c] sm:$0xf]
        %v4514 = vunpack.c.l.b16 %v4450
        %v4515 = vunpack.c.l.b16 %v4451
        %v4516 = vunpack.c.l.b16 %v4452
        %v4517 = vunpack.c.l.b16 %v4453
        %v4518 = vunpack.c.l.b16 %v4454
        %v4519 = vunpack.c.l.b16 %v4455
        %v4520 = vunpack.c.l.b16 %v4456
        %v4521 = vunpack.c.l.b16 %v4457
        %v4522 = vunpack.c.l.b16 %v4458
        %v4523 = vunpack.c.l.b16 %v4459
        %v4524 = vunpack.c.l.b16 %v4460
        %v4525 = vunpack.c.l.b16 %v4461
        %v4526 = vunpack.c.l.b16 %v4462
        %v4527 = vunpack.c.l.b16 %v4463
        %v4528 = vunpack.c.l.b16 %v4464
        %v4529 = vunpack.c.l.b16 %v4465
        %v4530 = vpack.c.b16 %v4515, %v4514
        %v4531 = vpack.c.b16 %v4517, %v4516
        %v4532 = vpack.c.b16 %v4519, %v4518
        %v4533 = vpack.c.b16 %v4521, %v4520
        %v4534 = vpack.c.b16 %v4523, %v4522
        %v4535 = vpack.c.b16 %v4525, %v4524
        %v4536 = vpack.c.b16 %v4527, %v4526
        %v4537 = vpack.c.b16 %v4529, %v4528
        %v4554 = vunpack.c.l.b16 %v4466
        %v4555 = vunpack.c.l.b16 %v4467
        %v4556 = vunpack.c.l.b16 %v4468
        %v4557 = vunpack.c.l.b16 %v4469
        %v4558 = vunpack.c.l.b16 %v4470
        %v4559 = vunpack.c.l.b16 %v4471
        %v4560 = vunpack.c.l.b16 %v4472
        %v4561 = vunpack.c.l.b16 %v4473
        %v4562 = vunpack.c.l.b16 %v4474
        %v4563 = vunpack.c.l.b16 %v4475
        %v4564 = vunpack.c.l.b16 %v4476
        %v4565 = vunpack.c.l.b16 %v4477
        %v4566 = vunpack.c.l.b16 %v4478
        %v4567 = vunpack.c.l.b16 %v4479
        %v4568 = vunpack.c.l.b16 %v4480
        %v4569 = vunpack.c.l.b16 %v4481
        %v4570 = vpack.c.b16 %v4555, %v4554
        %v4571 = vpack.c.b16 %v4557, %v4556
        %v4572 = vpack.c.b16 %v4559, %v4558
        %v4573 = vpack.c.b16 %v4561, %v4560
        %v4574 = vpack.c.b16 %v4563, %v4562
        %v4575 = vpack.c.b16 %v4565, %v4564
        %v4576 = vpack.c.b16 %v4567, %v4566
        %v4577 = vpack.c.b16 %v4569, %v4568
        %v4579 = vsel %vm2213, %v4530, 0
        %v4582 = vsel %vm2213, %v4531, 0
        %v4585 = vsel %vm2213, %v4532, 0
        %v4588 = vsel %vm2213, %v4533, 0
        %v4591 = vsel %vm2213, %v4534, 0
        %v4594 = vsel %vm2213, %v4535, 0
        %v4597 = vsel %vm2213, %v4536, 0
        %v4600 = vsel %vm2213, %v4537, 0
        %v4603 = vsel %vm2213, %v4570, 0
        %v4606 = vsel %vm2213, %v4571, 0
        %v4609 = vsel %vm2213, %v4572, 0
        %v4612 = vsel %vm2213, %v4573, 0
        %v4615 = vsel %vm2213, %v4574, 0
        %v4618 = vsel %vm2213, %v4575, 0
        %v4621 = vsel %vm2213, %v4576, 0
        %v4624 = vsel %vm2213, %v4577, 0
        %4626 = vmatpush.bf16.xpose.msra.mxu0 %v4624
        %4627 = vmatpush.bf16.xpose.msra.mxu0 %v4621
        %4628 = vmatpush.bf16.xpose.msra.mxu0 %v4618
        %4629 = vmatpush.bf16.xpose.msra.mxu0 %v4615
        %4630 = vmatpush.bf16.xpose.msra.mxu0 %v4612
        %4631 = vmatpush.bf16.xpose.msra.mxu0 %v4609
        %4632 = vmatpush.bf16.xpose.msra.mxu0 %v4606
        %4633 = vmatpush.bf16.xpose.msra.mxu0 %v4603
        %4634 = vmatmul.bf16.gmra.mxu0 %v4579
        %v4635 = vpop.f32.mrf.mxu0
        %v4636 = vadd.f32 %v2131, %v4635
        %v4637 = vpop.f32.mrf.mxu0
        %v4638 = vadd.f32 %v2131, %v4637
        %4639 = vmatmul.bf16.gmra.mxu0 %v4582
        %v4640 = vpop.f32.mrf.mxu0
        %v4641 = vadd.f32 %v2131, %v4640
        %v4642 = vpop.f32.mrf.mxu0
        %v4643 = vadd.f32 %v2131, %v4642
        %4644 = vmatmul.bf16.gmra.mxu0 %v4585
        %v4645 = vpop.f32.mrf.mxu0
        %v4646 = vadd.f32 %v2131, %v4645
        %v4647 = vpop.f32.mrf.mxu0
        %v4648 = vadd.f32 %v2131, %v4647
        %4649 = vmatmul.bf16.gmra.mxu0 %v4588
        %v4650 = vpop.f32.mrf.mxu0
        %v4651 = vadd.f32 %v2131, %v4650
        %v4652 = vpop.f32.mrf.mxu0
        %v4653 = vadd.f32 %v2131, %v4652
        %4654 = vmatmul.bf16.gmra.mxu0 %v4591
        %v4655 = vpop.f32.mrf.mxu0
        %v4656 = vadd.f32 %v2131, %v4655
        %v4657 = vpop.f32.mrf.mxu0
        %v4658 = vadd.f32 %v2131, %v4657
        %4659 = vmatmul.bf16.gmra.mxu0 %v4594
        %v4660 = vpop.f32.mrf.mxu0
        %v4661 = vadd.f32 %v2131, %v4660
        %v4662 = vpop.f32.mrf.mxu0
        %v4663 = vadd.f32 %v2131, %v4662
        %4664 = vmatmul.bf16.gmra.mxu0 %v4597
        %v4665 = vpop.f32.mrf.mxu0
        %v4666 = vadd.f32 %v2131, %v4665
        %v4667 = vpop.f32.mrf.mxu0
        %v4668 = vadd.f32 %v2131, %v4667
        %4669 = vmatmul.bf16.gmra.mxu0 %v4600
        %v4670 = vpop.f32.mrf.mxu0
        %v4671 = vadd.f32 %v2131, %v4670
        %v4672 = vpop.f32.mrf.mxu0
        %v4673 = vadd.f32 %v2131, %v4672
        %4674 = vdwg.mxu0
        %4675 = vmax.xlane.f32.xlu0 %v4636
        %v4676 = vpop.xlane.xlu0 %4675
        %4677 = vmax.xlane.f32.xlu0 %v4638
        %v4678 = vpop.xlane.xlu0 %4677
        %4679 = vmax.xlane.f32.xlu0 %v4641
        %v4680 = vpop.xlane.xlu0 %4679
        %4681 = vmax.xlane.f32.xlu0 %v4643
        %v4682 = vpop.xlane.xlu0 %4681
        %4683 = vmax.xlane.f32.xlu0 %v4646
        %v4684 = vpop.xlane.xlu0 %4683
        %4685 = vmax.xlane.f32.xlu0 %v4648
        %v4686 = vpop.xlane.xlu0 %4685
        %4687 = vmax.xlane.f32.xlu0 %v4651
        %v4688 = vpop.xlane.xlu0 %4687
        %4689 = vmax.xlane.f32.xlu0 %v4653
        %v4690 = vpop.xlane.xlu0 %4689
        %4691 = vmax.xlane.f32.xlu0 %v4656
        %v4692 = vpop.xlane.xlu0 %4691
        %4693 = vmax.xlane.f32.xlu0 %v4658
        %v4694 = vpop.xlane.xlu0 %4693
        %4695 = vmax.xlane.f32.xlu0 %v4661
        %v4696 = vpop.xlane.xlu0 %4695
        %4697 = vmax.xlane.f32.xlu0 %v4663
        %v4698 = vpop.xlane.xlu0 %4697
        %4699 = vmax.xlane.f32.xlu0 %v4666
        %v4700 = vpop.xlane.xlu0 %4699
        %4701 = vmax.xlane.f32.xlu0 %v4668
        %v4702 = vpop.xlane.xlu0 %4701
        %4703 = vmax.xlane.f32.xlu0 %v4671
        %v4704 = vpop.xlane.xlu0 %4703
        %4705 = vmax.xlane.f32.xlu0 %v4673
        %v4706 = vpop.xlane.xlu0 %4705
        %v4707 = vsub.f32 %v4636, %v4676
        %v4708 = vsub.f32 %v4638, %v4678
        %v4709 = vsub.f32 %v4641, %v4680
        %v4710 = vsub.f32 %v4643, %v4682
        %v4711 = vsub.f32 %v4646, %v4684
        %v4712 = vsub.f32 %v4648, %v4686
        %v4713 = vsub.f32 %v4651, %v4688
        %v4714 = vsub.f32 %v4653, %v4690
        %v4715 = vsub.f32 %v4656, %v4692
        %v4716 = vsub.f32 %v4658, %v4694
        %v4717 = vsub.f32 %v4661, %v4696
        %v4718 = vsub.f32 %v4663, %v4698
        %v4719 = vsub.f32 %v4666, %v4700
        %v4720 = vsub.f32 %v4668, %v4702
        %v4721 = vsub.f32 %v4671, %v4704
        %v4722 = vsub.f32 %v4673, %v4706
        %v4723 = vmul.f32 %v4707, 1.442695
        %v4724 = vpow.pop %v4723
        %v4725 = vmul.f32 %v4708, 1.442695
        %v4726 = vpow.pop %v4725
        %v4727 = vmul.f32 %v4709, 1.442695
        %v4728 = vpow.pop %v4727
        %v4729 = vmul.f32 %v4710, 1.442695
        %v4730 = vpow.pop %v4729
        %v4731 = vmul.f32 %v4711, 1.442695
        %v4732 = vpow.pop %v4731
        %v4733 = vmul.f32 %v4712, 1.442695
        %v4734 = vpow.pop %v4733
        %v4735 = vmul.f32 %v4713, 1.442695
        %v4736 = vpow.pop %v4735
        %v4737 = vmul.f32 %v4714, 1.442695
        %v4738 = vpow.pop %v4737
        %v4739 = vmul.f32 %v4715, 1.442695
        %v4740 = vpow.pop %v4739
        %v4741 = vmul.f32 %v4716, 1.442695
        %v4742 = vpow.pop %v4741
        %v4743 = vmul.f32 %v4717, 1.442695
        %v4744 = vpow.pop %v4743
        %v4745 = vmul.f32 %v4718, 1.442695
        %v4746 = vpow.pop %v4745
        %v4747 = vmul.f32 %v4719, 1.442695
        %v4748 = vpow.pop %v4747
        %v4749 = vmul.f32 %v4720, 1.442695
        %v4750 = vpow.pop %v4749
        %v4751 = vmul.f32 %v4721, 1.442695
        %v4752 = vpow.pop %v4751
        %v4753 = vmul.f32 %v4722, 1.442695
        %v4754 = vpow.pop %v4753
        %4755 = vadd.xlane.f32.xlu0 %v4724
        %v4756 = vpop.xlane.xlu0 %4755
        %4757 = vadd.xlane.f32.xlu0 %v4726
        %v4758 = vpop.xlane.xlu0 %4757
        %4759 = vadd.xlane.f32.xlu0 %v4728
        %v4760 = vpop.xlane.xlu0 %4759
        %4761 = vadd.xlane.f32.xlu0 %v4730
        %v4762 = vpop.xlane.xlu0 %4761
        %4763 = vadd.xlane.f32.xlu0 %v4732
        %v4764 = vpop.xlane.xlu0 %4763
        %4765 = vadd.xlane.f32.xlu0 %v4734
        %v4766 = vpop.xlane.xlu0 %4765
        %4767 = vadd.xlane.f32.xlu0 %v4736
        %v4768 = vpop.xlane.xlu0 %4767
        %4769 = vadd.xlane.f32.xlu0 %v4738
        %v4770 = vpop.xlane.xlu0 %4769
        %4771 = vadd.xlane.f32.xlu0 %v4740
        %v4772 = vpop.xlane.xlu0 %4771
        %4773 = vadd.xlane.f32.xlu0 %v4742
        %v4774 = vpop.xlane.xlu0 %4773
        %4775 = vadd.xlane.f32.xlu0 %v4744
        %v4776 = vpop.xlane.xlu0 %4775
        %4777 = vadd.xlane.f32.xlu0 %v4746
        %v4778 = vpop.xlane.xlu0 %4777
        %4779 = vadd.xlane.f32.xlu0 %v4748
        %v4780 = vpop.xlane.xlu0 %4779
        %4781 = vadd.xlane.f32.xlu0 %v4750
        %v4782 = vpop.xlane.xlu0 %4781
        %4783 = vadd.xlane.f32.xlu0 %v4752
        %v4784 = vpop.xlane.xlu0 %4783
        %4785 = vadd.xlane.f32.xlu0 %v4754
        %v4786 = vpop.xlane.xlu0 %4785
        %v4787 = vrcp.pop %v4756
        %v4788 = vrcp.pop %v4758
        %v4789 = vrcp.pop %v4760
        %v4790 = vrcp.pop %v4762
        %v4791 = vrcp.pop %v4764
        %v4792 = vrcp.pop %v4766
        %v4793 = vrcp.pop %v4768
        %v4794 = vrcp.pop %v4770
        %v4795 = vrcp.pop %v4772
        %v4796 = vrcp.pop %v4774
        %v4797 = vrcp.pop %v4776
        %v4798 = vrcp.pop %v4778
        %v4799 = vrcp.pop %v4780
        %v4800 = vrcp.pop %v4782
        %v4801 = vrcp.pop %v4784
        %v4802 = vrcp.pop %v4786
        %v4803 = vpack.c.bf16 %v4726, %v4724
        %v4804 = vpack.c.bf16 %v4730, %v4728
        %v4805 = vpack.c.bf16 %v4734, %v4732
        %v4806 = vpack.c.bf16 %v4738, %v4736
        %v4807 = vpack.c.bf16 %v4742, %v4740
        %v4808 = vpack.c.bf16 %v4746, %v4744
        %v4809 = vpack.c.bf16 %v4750, %v4748
        %v4810 = vpack.c.bf16 %v4754, %v4752
        %v4827 = vunpack.c.l.b16 %v4482
        %v4828 = vunpack.c.l.b16 %v4483
        %v4829 = vunpack.c.l.b16 %v4484
        %v4830 = vunpack.c.l.b16 %v4485
        %v4831 = vunpack.c.l.b16 %v4486
        %v4832 = vunpack.c.l.b16 %v4487
        %v4833 = vunpack.c.l.b16 %v4488
        %v4834 = vunpack.c.l.b16 %v4489
        %v4835 = vunpack.c.l.b16 %v4490
        %v4836 = vunpack.c.l.b16 %v4491
        %v4837 = vunpack.c.l.b16 %v4492
        %v4838 = vunpack.c.l.b16 %v4493
        %v4839 = vunpack.c.l.b16 %v4494
        %v4840 = vunpack.c.l.b16 %v4495
        %v4841 = vunpack.c.l.b16 %v4496
        %v4842 = vunpack.c.l.b16 %v4497
        %v4843 = vpack.c.b16 %v4828, %v4827
        %v4844 = vpack.c.b16 %v4830, %v4829
        %v4845 = vpack.c.b16 %v4832, %v4831
        %v4846 = vpack.c.b16 %v4834, %v4833
        %v4847 = vpack.c.b16 %v4836, %v4835
        %v4848 = vpack.c.b16 %v4838, %v4837
        %v4849 = vpack.c.b16 %v4840, %v4839
        %v4850 = vpack.c.b16 %v4842, %v4841
        %4859 = vmatpush.bf16.msra.mxu0 %v4850
        %4860 = vmatpush.bf16.msra.mxu0 %v4849
        %4861 = vmatpush.bf16.msra.mxu0 %v4848
        %4862 = vmatpush.bf16.msra.mxu0 %v4847
        %4863 = vmatpush.bf16.msra.mxu0 %v4846
        %4864 = vmatpush.bf16.msra.mxu0 %v4845
        %4865 = vmatpush.bf16.msra.mxu0 %v4844
        %4866 = vmatpush.bf16.msra.mxu0 %v4843
        %4867 = vmatmul.bf16.gmra.mxu0 %v4803
        %v4868 = vpop.f32.mrf.mxu0
        %v4869 = vadd.f32 0.0, %v4868
        %v4870 = vpop.f32.mrf.mxu0
        %v4871 = vadd.f32 0.0, %v4870
        %4872 = vmatmul.bf16.gmra.mxu0 %v4804
        %v4873 = vpop.f32.mrf.mxu0
        %v4874 = vadd.f32 0.0, %v4873
        %v4875 = vpop.f32.mrf.mxu0
        %v4876 = vadd.f32 0.0, %v4875
        %4877 = vmatmul.bf16.gmra.mxu0 %v4805
        %v4878 = vpop.f32.mrf.mxu0
        %v4879 = vadd.f32 0.0, %v4878
        %v4880 = vpop.f32.mrf.mxu0
        %v4881 = vadd.f32 0.0, %v4880
        %4882 = vmatmul.bf16.gmra.mxu0 %v4806
        %v4883 = vpop.f32.mrf.mxu0
        %v4884 = vadd.f32 0.0, %v4883
        %v4885 = vpop.f32.mrf.mxu0
        %v4886 = vadd.f32 0.0, %v4885
        %4887 = vmatmul.bf16.gmra.mxu0 %v4807
        %v4888 = vpop.f32.mrf.mxu0
        %v4889 = vadd.f32 0.0, %v4888
        %v4890 = vpop.f32.mrf.mxu0
        %v4891 = vadd.f32 0.0, %v4890
        %4892 = vmatmul.bf16.gmra.mxu0 %v4808
        %v4893 = vpop.f32.mrf.mxu0
        %v4894 = vadd.f32 0.0, %v4893
        %v4895 = vpop.f32.mrf.mxu0
        %v4896 = vadd.f32 0.0, %v4895
        %4897 = vmatmul.bf16.gmra.mxu0 %v4809
        %v4898 = vpop.f32.mrf.mxu0
        %v4899 = vadd.f32 0.0, %v4898
        %v4900 = vpop.f32.mrf.mxu0
        %v4901 = vadd.f32 0.0, %v4900
        %4902 = vmatmul.bf16.gmra.mxu0 %v4810
        %v4903 = vpop.f32.mrf.mxu0
        %v4904 = vadd.f32 0.0, %v4903
        %v4905 = vpop.f32.mrf.mxu0
        %v4906 = vadd.f32 0.0, %v4905
        %4907 = vdwg.mxu0
        %v4908 = vmul.f32 %v4869, %v4787
        %v4909 = vmul.f32 %v4871, %v4788
        %v4910 = vmul.f32 %v4874, %v4789
        %v4911 = vmul.f32 %v4876, %v4790
        %v4912 = vmul.f32 %v4879, %v4791
        %v4913 = vmul.f32 %v4881, %v4792
        %v4914 = vmul.f32 %v4884, %v4793
        %v4915 = vmul.f32 %v4886, %v4794
        %v4916 = vmul.f32 %v4889, %v4795
        %v4917 = vmul.f32 %v4891, %v4796
        %v4918 = vmul.f32 %v4894, %v4797
        %v4919 = vmul.f32 %v4896, %v4798
        %v4920 = vmul.f32 %v4899, %v4799
        %v4921 = vmul.f32 %v4901, %v4800
        %v4922 = vmul.f32 %v4904, %v4801
        %v4923 = vmul.f32 %v4906, %v4802
        %v4924 = vpack.c.bf16 %v4908, %v4908
        %v4925 = vpack.c.bf16 %v4909, %v4909
        %v4926 = vpack.c.bf16 %v4910, %v4910
        %v4927 = vpack.c.bf16 %v4911, %v4911
        %v4928 = vpack.c.bf16 %v4912, %v4912
        %v4929 = vpack.c.bf16 %v4913, %v4913
        %v4930 = vpack.c.bf16 %v4914, %v4914
        %v4931 = vpack.c.bf16 %v4915, %v4915
        %v4932 = vpack.c.bf16 %v4916, %v4916
        %v4933 = vpack.c.bf16 %v4917, %v4917
        %v4934 = vpack.c.bf16 %v4918, %v4918
        %v4935 = vpack.c.bf16 %v4919, %v4919
        %v4936 = vpack.c.bf16 %v4920, %v4920
        %v4937 = vpack.c.bf16 %v4921, %v4921
        %v4938 = vpack.c.bf16 %v4922, %v4922
        %v4939 = vpack.c.bf16 %v4923, %v4923
        %4940 = vst.msk [vmem:[#allocation5 + $0x4] sm:$0xf] %vm2576, %v4924
        %4941 = vst.msk [vmem:[#allocation5 + $0xc] sm:$0xf] %vm2576, %v4925
        %4942 = vst.msk [vmem:[#allocation5 + $0x14] sm:$0xf] %vm2576, %v4926
        %4943 = vst.msk [vmem:[#allocation5 + $0x1c] sm:$0xf] %vm2576, %v4927
        %4944 = vst.msk [vmem:[#allocation5 + $0x24] sm:$0xf] %vm2576, %v4928
        %4945 = vst.msk [vmem:[#allocation5 + $0x2c] sm:$0xf] %vm2576, %v4929
        %4946 = vst.msk [vmem:[#allocation5 + $0x34] sm:$0xf] %vm2576, %v4930
        %4947 = vst.msk [vmem:[#allocation5 + $0x3c] sm:$0xf] %vm2576, %v4931
        %4948 = vst.msk [vmem:[#allocation5 + $0x44] sm:$0xf] %vm2576, %v4932
        %4949 = vst.msk [vmem:[#allocation5 + $0x4c] sm:$0xf] %vm2576, %v4933
        %4950 = vst.msk [vmem:[#allocation5 + $0x54] sm:$0xf] %vm2576, %v4934
        %4951 = vst.msk [vmem:[#allocation5 + $0x5c] sm:$0xf] %vm2576, %v4935
        %4952 = vst.msk [vmem:[#allocation5 + $0x64] sm:$0xf] %vm2576, %v4936
        %4953 = vst.msk [vmem:[#allocation5 + $0x6c] sm:$0xf] %vm2576, %v4937
        %4954 = vst.msk [vmem:[#allocation5 + $0x74] sm:$0xf] %vm2576, %v4938
        %4955 = vst.msk [vmem:[#allocation5 + $0x7c] sm:$0xf] %vm2576, %v4939
        %v4956 = vld [vmem:[#allocation2 + $0x4] sm:$0xf]
        %v4957 = vld [vmem:[#allocation2 + $0xc] sm:$0xf]
        %v4958 = vld [vmem:[#allocation2 + $0x14] sm:$0xf]
        %v4959 = vld [vmem:[#allocation2 + $0x1c] sm:$0xf]
        %v4960 = vld [vmem:[#allocation2 + $0x24] sm:$0xf]
        %v4961 = vld [vmem:[#allocation2 + $0x2c] sm:$0xf]
        %v4962 = vld [vmem:[#allocation2 + $0x34] sm:$0xf]
        %v4963 = vld [vmem:[#allocation2 + $0x3c] sm:$0xf]
        %v4964 = vld [vmem:[#allocation2 + $0x44] sm:$0xf]
        %v4965 = vld [vmem:[#allocation2 + $0x4c] sm:$0xf]
        %v4966 = vld [vmem:[#allocation2 + $0x54] sm:$0xf]
        %v4967 = vld [vmem:[#allocation2 + $0x5c] sm:$0xf]
        %v4968 = vld [vmem:[#allocation2 + $0x64] sm:$0xf]
        %v4969 = vld [vmem:[#allocation2 + $0x6c] sm:$0xf]
        %v4970 = vld [vmem:[#allocation2 + $0x74] sm:$0xf]
        %v4971 = vld [vmem:[#allocation2 + $0x7c] sm:$0xf]
        %v4972 = vld [vmem:[#allocation3 + $0x4] sm:$0xf]
        %v4973 = vld [vmem:[#allocation3 + $0xc] sm:$0xf]
        %v4974 = vld [vmem:[#allocation3 + $0x14] sm:$0xf]
        %v4975 = vld [vmem:[#allocation3 + $0x1c] sm:$0xf]
        %v4976 = vld [vmem:[#allocation3 + $0x24] sm:$0xf]
        %v4977 = vld [vmem:[#allocation3 + $0x2c] sm:$0xf]
        %v4978 = vld [vmem:[#allocation3 + $0x34] sm:$0xf]
        %v4979 = vld [vmem:[#allocation3 + $0x3c] sm:$0xf]
        %v4980 = vld [vmem:[#allocation3 + $0x44] sm:$0xf]
        %v4981 = vld [vmem:[#allocation3 + $0x4c] sm:$0xf]
        %v4982 = vld [vmem:[#allocation3 + $0x54] sm:$0xf]
        %v4983 = vld [vmem:[#allocation3 + $0x5c] sm:$0xf]
        %v4984 = vld [vmem:[#allocation3 + $0x64] sm:$0xf]
        %v4985 = vld [vmem:[#allocation3 + $0x6c] sm:$0xf]
        %v4986 = vld [vmem:[#allocation3 + $0x74] sm:$0xf]
        %v4987 = vld [vmem:[#allocation3 + $0x7c] sm:$0xf]
        %v4988 = vld [vmem:[#allocation4 + $0x4] sm:$0xf]
        %v4989 = vld [vmem:[#allocation4 + $0xc] sm:$0xf]
        %v4990 = vld [vmem:[#allocation4 + $0x14] sm:$0xf]
        %v4991 = vld [vmem:[#allocation4 + $0x1c] sm:$0xf]
        %v4992 = vld [vmem:[#allocation4 + $0x24] sm:$0xf]
        %v4993 = vld [vmem:[#allocation4 + $0x2c] sm:$0xf]
        %v4994 = vld [vmem:[#allocation4 + $0x34] sm:$0xf]
        %v4995 = vld [vmem:[#allocation4 + $0x3c] sm:$0xf]
        %v4996 = vld [vmem:[#allocation4 + $0x44] sm:$0xf]
        %v4997 = vld [vmem:[#allocation4 + $0x4c] sm:$0xf]
        %v4998 = vld [vmem:[#allocation4 + $0x54] sm:$0xf]
        %v4999 = vld [vmem:[#allocation4 + $0x5c] sm:$0xf]
        %v5000 = vld [vmem:[#allocation4 + $0x64] sm:$0xf]
        %v5001 = vld [vmem:[#allocation4 + $0x6c] sm:$0xf]
        %v5002 = vld [vmem:[#allocation4 + $0x74] sm:$0xf]
        %v5003 = vld [vmem:[#allocation4 + $0x7c] sm:$0xf]
        %v5020 = vunpack.c.l.b16 %v4956
        %v5021 = vunpack.c.l.b16 %v4957
        %v5022 = vunpack.c.l.b16 %v4958
        %v5023 = vunpack.c.l.b16 %v4959
        %v5024 = vunpack.c.l.b16 %v4960
        %v5025 = vunpack.c.l.b16 %v4961
        %v5026 = vunpack.c.l.b16 %v4962
        %v5027 = vunpack.c.l.b16 %v4963
        %v5028 = vunpack.c.l.b16 %v4964
        %v5029 = vunpack.c.l.b16 %v4965
        %v5030 = vunpack.c.l.b16 %v4966
        %v5031 = vunpack.c.l.b16 %v4967
        %v5032 = vunpack.c.l.b16 %v4968
        %v5033 = vunpack.c.l.b16 %v4969
        %v5034 = vunpack.c.l.b16 %v4970
        %v5035 = vunpack.c.l.b16 %v4971
        %v5036 = vpack.c.b16 %v5021, %v5020
        %v5037 = vpack.c.b16 %v5023, %v5022
        %v5038 = vpack.c.b16 %v5025, %v5024
        %v5039 = vpack.c.b16 %v5027, %v5026
        %v5040 = vpack.c.b16 %v5029, %v5028
        %v5041 = vpack.c.b16 %v5031, %v5030
        %v5042 = vpack.c.b16 %v5033, %v5032
        %v5043 = vpack.c.b16 %v5035, %v5034
        %5044 = vrot.lane.b32.xlu0 %v5036, 96
        %v5045 = vpop.permute.xlu0 %5044
        %5046 = vrot.lane.b32.xlu0 %v5037, 96
        %v5047 = vpop.permute.xlu0 %5046
        %5048 = vrot.lane.b32.xlu0 %v5038, 96
        %v5049 = vpop.permute.xlu0 %5048
        %5050 = vrot.lane.b32.xlu0 %v5039, 96
        %v5051 = vpop.permute.xlu0 %5050
        %5052 = vrot.lane.b32.xlu0 %v5040, 96
        %v5053 = vpop.permute.xlu0 %5052
        %5054 = vrot.lane.b32.xlu0 %v5041, 96
        %v5055 = vpop.permute.xlu0 %5054
        %5056 = vrot.lane.b32.xlu0 %v5042, 96
        %v5057 = vpop.permute.xlu0 %5056
        %5058 = vrot.lane.b32.xlu0 %v5043, 96
        %v5059 = vpop.permute.xlu0 %5058
        %v5076 = vunpack.c.l.b16 %v4972
        %v5077 = vunpack.c.l.b16 %v4973
        %v5078 = vunpack.c.l.b16 %v4974
        %v5079 = vunpack.c.l.b16 %v4975
        %v5080 = vunpack.c.l.b16 %v4976
        %v5081 = vunpack.c.l.b16 %v4977
        %v5082 = vunpack.c.l.b16 %v4978
        %v5083 = vunpack.c.l.b16 %v4979
        %v5084 = vunpack.c.l.b16 %v4980
        %v5085 = vunpack.c.l.b16 %v4981
        %v5086 = vunpack.c.l.b16 %v4982
        %v5087 = vunpack.c.l.b16 %v4983
        %v5088 = vunpack.c.l.b16 %v4984
        %v5089 = vunpack.c.l.b16 %v4985
        %v5090 = vunpack.c.l.b16 %v4986
        %v5091 = vunpack.c.l.b16 %v4987
        %v5092 = vpack.c.b16 %v5077, %v5076
        %v5093 = vpack.c.b16 %v5079, %v5078
        %v5094 = vpack.c.b16 %v5081, %v5080
        %v5095 = vpack.c.b16 %v5083, %v5082
        %v5096 = vpack.c.b16 %v5085, %v5084
        %v5097 = vpack.c.b16 %v5087, %v5086
        %v5098 = vpack.c.b16 %v5089, %v5088
        %v5099 = vpack.c.b16 %v5091, %v5090
        %5100 = vrot.lane.b32.xlu0 %v5092, 96
        %v5101 = vpop.permute.xlu0 %5100
        %5102 = vrot.lane.b32.xlu0 %v5093, 96
        %v5103 = vpop.permute.xlu0 %5102
        %5104 = vrot.lane.b32.xlu0 %v5094, 96
        %v5105 = vpop.permute.xlu0 %5104
        %5106 = vrot.lane.b32.xlu0 %v5095, 96
        %v5107 = vpop.permute.xlu0 %5106
        %5108 = vrot.lane.b32.xlu0 %v5096, 96
        %v5109 = vpop.permute.xlu0 %5108
        %5110 = vrot.lane.b32.xlu0 %v5097, 96
        %v5111 = vpop.permute.xlu0 %5110
        %5112 = vrot.lane.b32.xlu0 %v5098, 96
        %v5113 = vpop.permute.xlu0 %5112
        %5114 = vrot.lane.b32.xlu0 %v5099, 96
        %v5115 = vpop.permute.xlu0 %5114
        %v5117 = vsel %vm2213, %v5045, 0
        %v5120 = vsel %vm2213, %v5047, 0
        %v5123 = vsel %vm2213, %v5049, 0
        %v5126 = vsel %vm2213, %v5051, 0
        %v5129 = vsel %vm2213, %v5053, 0
        %v5132 = vsel %vm2213, %v5055, 0
        %v5135 = vsel %vm2213, %v5057, 0
        %v5138 = vsel %vm2213, %v5059, 0
        %v5141 = vsel %vm2213, %v5101, 0
        %v5144 = vsel %vm2213, %v5103, 0
        %v5147 = vsel %vm2213, %v5105, 0
        %v5150 = vsel %vm2213, %v5107, 0
        %v5153 = vsel %vm2213, %v5109, 0
        %v5156 = vsel %vm2213, %v5111, 0
        %v5159 = vsel %vm2213, %v5113, 0
        %v5162 = vsel %vm2213, %v5115, 0
        %5164 = vmatpush.bf16.xpose.msra.mxu0 %v5162
        %5165 = vmatpush.bf16.xpose.msra.mxu0 %v5159
        %5166 = vmatpush.bf16.xpose.msra.mxu0 %v5156
        %5167 = vmatpush.bf16.xpose.msra.mxu0 %v5153
        %5168 = vmatpush.bf16.xpose.msra.mxu0 %v5150
        %5169 = vmatpush.bf16.xpose.msra.mxu0 %v5147
        %5170 = vmatpush.bf16.xpose.msra.mxu0 %v5144
        %5171 = vmatpush.bf16.xpose.msra.mxu0 %v5141
        %5172 = vmatmul.bf16.gmra.mxu0 %v5117
        %v5173 = vpop.f32.mrf.mxu0
        %v5174 = vadd.f32 %v2131, %v5173
        %v5175 = vpop.f32.mrf.mxu0
        %v5176 = vadd.f32 %v2131, %v5175
        %5177 = vmatmul.bf16.gmra.mxu0 %v5120
        %v5178 = vpop.f32.mrf.mxu0
        %v5179 = vadd.f32 %v2131, %v5178
        %v5180 = vpop.f32.mrf.mxu0
        %v5181 = vadd.f32 %v2131, %v5180
        %5182 = vmatmul.bf16.gmra.mxu0 %v5123
        %v5183 = vpop.f32.mrf.mxu0
        %v5184 = vadd.f32 %v2131, %v5183
        %v5185 = vpop.f32.mrf.mxu0
        %v5186 = vadd.f32 %v2131, %v5185
        %5187 = vmatmul.bf16.gmra.mxu0 %v5126
        %v5188 = vpop.f32.mrf.mxu0
        %v5189 = vadd.f32 %v2131, %v5188
        %v5190 = vpop.f32.mrf.mxu0
        %v5191 = vadd.f32 %v2131, %v5190
        %5192 = vmatmul.bf16.gmra.mxu0 %v5129
        %v5193 = vpop.f32.mrf.mxu0
        %v5194 = vadd.f32 %v2131, %v5193
        %v5195 = vpop.f32.mrf.mxu0
        %v5196 = vadd.f32 %v2131, %v5195
        %5197 = vmatmul.bf16.gmra.mxu0 %v5132
        %v5198 = vpop.f32.mrf.mxu0
        %v5199 = vadd.f32 %v2131, %v5198
        %v5200 = vpop.f32.mrf.mxu0
        %v5201 = vadd.f32 %v2131, %v5200
        %5202 = vmatmul.bf16.gmra.mxu0 %v5135
        %v5203 = vpop.f32.mrf.mxu0
        %v5204 = vadd.f32 %v2131, %v5203
        %v5205 = vpop.f32.mrf.mxu0
        %v5206 = vadd.f32 %v2131, %v5205
        %5207 = vmatmul.bf16.gmra.mxu0 %v5138
        %v5208 = vpop.f32.mrf.mxu0
        %v5209 = vadd.f32 %v2131, %v5208
        %v5210 = vpop.f32.mrf.mxu0
        %v5211 = vadd.f32 %v2131, %v5210
        %5212 = vdwg.mxu0
        %5213 = vmax.xlane.f32.xlu0 %v5174
        %v5214 = vpop.xlane.xlu0 %5213
        %5215 = vmax.xlane.f32.xlu0 %v5176
        %v5216 = vpop.xlane.xlu0 %5215
        %5217 = vmax.xlane.f32.xlu0 %v5179
        %v5218 = vpop.xlane.xlu0 %5217
        %5219 = vmax.xlane.f32.xlu0 %v5181
        %v5220 = vpop.xlane.xlu0 %5219
        %5221 = vmax.xlane.f32.xlu0 %v5184
        %v5222 = vpop.xlane.xlu0 %5221
        %5223 = vmax.xlane.f32.xlu0 %v5186
        %v5224 = vpop.xlane.xlu0 %5223
        %5225 = vmax.xlane.f32.xlu0 %v5189
        %v5226 = vpop.xlane.xlu0 %5225
        %5227 = vmax.xlane.f32.xlu0 %v5191
        %v5228 = vpop.xlane.xlu0 %5227
        %5229 = vmax.xlane.f32.xlu0 %v5194
        %v5230 = vpop.xlane.xlu0 %5229
        %5231 = vmax.xlane.f32.xlu0 %v5196
        %v5232 = vpop.xlane.xlu0 %5231
        %5233 = vmax.xlane.f32.xlu0 %v5199
        %v5234 = vpop.xlane.xlu0 %5233
        %5235 = vmax.xlane.f32.xlu0 %v5201
        %v5236 = vpop.xlane.xlu0 %5235
        %5237 = vmax.xlane.f32.xlu0 %v5204
        %v5238 = vpop.xlane.xlu0 %5237
        %5239 = vmax.xlane.f32.xlu0 %v5206
        %v5240 = vpop.xlane.xlu0 %5239
        %5241 = vmax.xlane.f32.xlu0 %v5209
        %v5242 = vpop.xlane.xlu0 %5241
        %5243 = vmax.xlane.f32.xlu0 %v5211
        %v5244 = vpop.xlane.xlu0 %5243
        %v5245 = vsub.f32 %v5174, %v5214
        %v5246 = vsub.f32 %v5176, %v5216
        %v5247 = vsub.f32 %v5179, %v5218
        %v5248 = vsub.f32 %v5181, %v5220
        %v5249 = vsub.f32 %v5184, %v5222
        %v5250 = vsub.f32 %v5186, %v5224
        %v5251 = vsub.f32 %v5189, %v5226
        %v5252 = vsub.f32 %v5191, %v5228
        %v5253 = vsub.f32 %v5194, %v5230
        %v5254 = vsub.f32 %v5196, %v5232
        %v5255 = vsub.f32 %v5199, %v5234
        %v5256 = vsub.f32 %v5201, %v5236
        %v5257 = vsub.f32 %v5204, %v5238
        %v5258 = vsub.f32 %v5206, %v5240
        %v5259 = vsub.f32 %v5209, %v5242
        %v5260 = vsub.f32 %v5211, %v5244
        %v5261 = vmul.f32 %v5245, 1.442695
        %v5262 = vpow.pop %v5261
        %v5263 = vmul.f32 %v5246, 1.442695
        %v5264 = vpow.pop %v5263
        %v5265 = vmul.f32 %v5247, 1.442695
        %v5266 = vpow.pop %v5265
        %v5267 = vmul.f32 %v5248, 1.442695
        %v5268 = vpow.pop %v5267
        %v5269 = vmul.f32 %v5249, 1.442695
        %v5270 = vpow.pop %v5269
        %v5271 = vmul.f32 %v5250, 1.442695
        %v5272 = vpow.pop %v5271
        %v5273 = vmul.f32 %v5251, 1.442695
        %v5274 = vpow.pop %v5273
        %v5275 = vmul.f32 %v5252, 1.442695
        %v5276 = vpow.pop %v5275
        %v5277 = vmul.f32 %v5253, 1.442695
        %v5278 = vpow.pop %v5277
        %v5279 = vmul.f32 %v5254, 1.442695
        %v5280 = vpow.pop %v5279
        %v5281 = vmul.f32 %v5255, 1.442695
        %v5282 = vpow.pop %v5281
        %v5283 = vmul.f32 %v5256, 1.442695
        %v5284 = vpow.pop %v5283
        %v5285 = vmul.f32 %v5257, 1.442695
        %v5286 = vpow.pop %v5285
        %v5287 = vmul.f32 %v5258, 1.442695
        %v5288 = vpow.pop %v5287
        %v5289 = vmul.f32 %v5259, 1.442695
        %v5290 = vpow.pop %v5289
        %v5291 = vmul.f32 %v5260, 1.442695
        %v5292 = vpow.pop %v5291
        %5293 = vadd.xlane.f32.xlu0 %v5262
        %v5294 = vpop.xlane.xlu0 %5293
        %5295 = vadd.xlane.f32.xlu0 %v5264
        %v5296 = vpop.xlane.xlu0 %5295
        %5297 = vadd.xlane.f32.xlu0 %v5266
        %v5298 = vpop.xlane.xlu0 %5297
        %5299 = vadd.xlane.f32.xlu0 %v5268
        %v5300 = vpop.xlane.xlu0 %5299
        %5301 = vadd.xlane.f32.xlu0 %v5270
        %v5302 = vpop.xlane.xlu0 %5301
        %5303 = vadd.xlane.f32.xlu0 %v5272
        %v5304 = vpop.xlane.xlu0 %5303
        %5305 = vadd.xlane.f32.xlu0 %v5274
        %v5306 = vpop.xlane.xlu0 %5305
        %5307 = vadd.xlane.f32.xlu0 %v5276
        %v5308 = vpop.xlane.xlu0 %5307
        %5309 = vadd.xlane.f32.xlu0 %v5278
        %v5310 = vpop.xlane.xlu0 %5309
        %5311 = vadd.xlane.f32.xlu0 %v5280
        %v5312 = vpop.xlane.xlu0 %5311
        %5313 = vadd.xlane.f32.xlu0 %v5282
        %v5314 = vpop.xlane.xlu0 %5313
        %5315 = vadd.xlane.f32.xlu0 %v5284
        %v5316 = vpop.xlane.xlu0 %5315
        %5317 = vadd.xlane.f32.xlu0 %v5286
        %v5318 = vpop.xlane.xlu0 %5317
        %5319 = vadd.xlane.f32.xlu0 %v5288
        %v5320 = vpop.xlane.xlu0 %5319
        %5321 = vadd.xlane.f32.xlu0 %v5290
        %v5322 = vpop.xlane.xlu0 %5321
        %5323 = vadd.xlane.f32.xlu0 %v5292
        %v5324 = vpop.xlane.xlu0 %5323
        %v5325 = vrcp.pop %v5294
        %v5326 = vrcp.pop %v5296
        %v5327 = vrcp.pop %v5298
        %v5328 = vrcp.pop %v5300
        %v5329 = vrcp.pop %v5302
        %v5330 = vrcp.pop %v5304
        %v5331 = vrcp.pop %v5306
        %v5332 = vrcp.pop %v5308
        %v5333 = vrcp.pop %v5310
        %v5334 = vrcp.pop %v5312
        %v5335 = vrcp.pop %v5314
        %v5336 = vrcp.pop %v5316
        %v5337 = vrcp.pop %v5318
        %v5338 = vrcp.pop %v5320
        %v5339 = vrcp.pop %v5322
        %v5340 = vrcp.pop %v5324
        %v5341 = vpack.c.bf16 %v5264, %v5262
        %v5342 = vpack.c.bf16 %v5268, %v5266
        %v5343 = vpack.c.bf16 %v5272, %v5270
        %v5344 = vpack.c.bf16 %v5276, %v5274
        %v5345 = vpack.c.bf16 %v5280, %v5278
        %v5346 = vpack.c.bf16 %v5284, %v5282
        %v5347 = vpack.c.bf16 %v5288, %v5286
        %v5348 = vpack.c.bf16 %v5292, %v5290
        %v5365 = vunpack.c.l.b16 %v4988
        %v5366 = vunpack.c.l.b16 %v4989
        %v5367 = vunpack.c.l.b16 %v4990
        %v5368 = vunpack.c.l.b16 %v4991
        %v5369 = vunpack.c.l.b16 %v4992
        %v5370 = vunpack.c.l.b16 %v4993
        %v5371 = vunpack.c.l.b16 %v4994
        %v5372 = vunpack.c.l.b16 %v4995
        %v5373 = vunpack.c.l.b16 %v4996
        %v5374 = vunpack.c.l.b16 %v4997
        %v5375 = vunpack.c.l.b16 %v4998
        %v5376 = vunpack.c.l.b16 %v4999
        %v5377 = vunpack.c.l.b16 %v5000
        %v5378 = vunpack.c.l.b16 %v5001
        %v5379 = vunpack.c.l.b16 %v5002
        %v5380 = vunpack.c.l.b16 %v5003
        %v5381 = vpack.c.b16 %v5366, %v5365
        %v5382 = vpack.c.b16 %v5368, %v5367
        %v5383 = vpack.c.b16 %v5370, %v5369
        %v5384 = vpack.c.b16 %v5372, %v5371
        %v5385 = vpack.c.b16 %v5374, %v5373
        %v5386 = vpack.c.b16 %v5376, %v5375
        %v5387 = vpack.c.b16 %v5378, %v5377
        %v5388 = vpack.c.b16 %v5380, %v5379
        %5389 = vrot.lane.b32.xlu0 %v5381, 96
        %v5390 = vpop.permute.xlu0 %5389
        %5391 = vrot.lane.b32.xlu0 %v5382, 96
        %v5392 = vpop.permute.xlu0 %5391
        %5393 = vrot.lane.b32.xlu0 %v5383, 96
        %v5394 = vpop.permute.xlu0 %5393
        %5395 = vrot.lane.b32.xlu0 %v5384, 96
        %v5396 = vpop.permute.xlu0 %5395
        %5397 = vrot.lane.b32.xlu0 %v5385, 96
        %v5398 = vpop.permute.xlu0 %5397
        %5399 = vrot.lane.b32.xlu0 %v5386, 96
        %v5400 = vpop.permute.xlu0 %5399
        %5401 = vrot.lane.b32.xlu0 %v5387, 96
        %v5402 = vpop.permute.xlu0 %5401
        %5403 = vrot.lane.b32.xlu0 %v5388, 96
        %v5404 = vpop.permute.xlu0 %5403
        %5413 = vmatpush.bf16.msra.mxu0 %v5404
        %5414 = vmatpush.bf16.msra.mxu0 %v5402
        %5415 = vmatpush.bf16.msra.mxu0 %v5400
        %5416 = vmatpush.bf16.msra.mxu0 %v5398
        %5417 = vmatpush.bf16.msra.mxu0 %v5396
        %5418 = vmatpush.bf16.msra.mxu0 %v5394
        %5419 = vmatpush.bf16.msra.mxu0 %v5392
        %5420 = vmatpush.bf16.msra.mxu0 %v5390
        %5421 = vmatmul.bf16.gmra.mxu0 %v5341
        %v5422 = vpop.f32.mrf.mxu0
        %v5423 = vadd.f32 0.0, %v5422
        %v5424 = vpop.f32.mrf.mxu0
        %v5425 = vadd.f32 0.0, %v5424
        %5426 = vmatmul.bf16.gmra.mxu0 %v5342
        %v5427 = vpop.f32.mrf.mxu0
        %v5428 = vadd.f32 0.0, %v5427
        %v5429 = vpop.f32.mrf.mxu0
        %v5430 = vadd.f32 0.0, %v5429
        %5431 = vmatmul.bf16.gmra.mxu0 %v5343
        %v5432 = vpop.f32.mrf.mxu0
        %v5433 = vadd.f32 0.0, %v5432
        %v5434 = vpop.f32.mrf.mxu0
        %v5435 = vadd.f32 0.0, %v5434
        %5436 = vmatmul.bf16.gmra.mxu0 %v5344
        %v5437 = vpop.f32.mrf.mxu0
        %v5438 = vadd.f32 0.0, %v5437
        %v5439 = vpop.f32.mrf.mxu0
        %v5440 = vadd.f32 0.0, %v5439
        %5441 = vmatmul.bf16.gmra.mxu0 %v5345
        %v5442 = vpop.f32.mrf.mxu0
        %v5443 = vadd.f32 0.0, %v5442
        %v5444 = vpop.f32.mrf.mxu0
        %v5445 = vadd.f32 0.0, %v5444
        %5446 = vmatmul.bf16.gmra.mxu0 %v5346
        %v5447 = vpop.f32.mrf.mxu0
        %v5448 = vadd.f32 0.0, %v5447
        %v5449 = vpop.f32.mrf.mxu0
        %v5450 = vadd.f32 0.0, %v5449
        %5451 = vmatmul.bf16.gmra.mxu0 %v5347
        %v5452 = vpop.f32.mrf.mxu0
        %v5453 = vadd.f32 0.0, %v5452
        %v5454 = vpop.f32.mrf.mxu0
        %v5455 = vadd.f32 0.0, %v5454
        %5456 = vmatmul.bf16.gmra.mxu0 %v5348
        %v5457 = vpop.f32.mrf.mxu0
        %v5458 = vadd.f32 0.0, %v5457
        %v5459 = vpop.f32.mrf.mxu0
        %v5460 = vadd.f32 0.0, %v5459
        %5461 = vdwg.mxu0
        %v5462 = vmul.f32 %v5423, %v5325
        %v5463 = vmul.f32 %v5425, %v5326
        %v5464 = vmul.f32 %v5428, %v5327
        %v5465 = vmul.f32 %v5430, %v5328
        %v5466 = vmul.f32 %v5433, %v5329
        %v5467 = vmul.f32 %v5435, %v5330
        %v5468 = vmul.f32 %v5438, %v5331
        %v5469 = vmul.f32 %v5440, %v5332
        %v5470 = vmul.f32 %v5443, %v5333
        %v5471 = vmul.f32 %v5445, %v5334
        %v5472 = vmul.f32 %v5448, %v5335
        %v5473 = vmul.f32 %v5450, %v5336
        %v5474 = vmul.f32 %v5453, %v5337
        %v5475 = vmul.f32 %v5455, %v5338
        %v5476 = vmul.f32 %v5458, %v5339
        %v5477 = vmul.f32 %v5460, %v5340
        %v5478 = vpack.c.bf16 %v5462, %v5462
        %v5479 = vpack.c.bf16 %v5463, %v5463
        %v5480 = vpack.c.bf16 %v5464, %v5464
        %v5481 = vpack.c.bf16 %v5465, %v5465
        %v5482 = vpack.c.bf16 %v5466, %v5466
        %v5483 = vpack.c.bf16 %v5467, %v5467
        %v5484 = vpack.c.bf16 %v5468, %v5468
        %v5485 = vpack.c.bf16 %v5469, %v5469
        %v5486 = vpack.c.bf16 %v5470, %v5470
        %v5487 = vpack.c.bf16 %v5471, %v5471
        %v5488 = vpack.c.bf16 %v5472, %v5472
        %v5489 = vpack.c.bf16 %v5473, %v5473
        %v5490 = vpack.c.bf16 %v5474, %v5474
        %v5491 = vpack.c.bf16 %v5475, %v5475
        %v5492 = vpack.c.bf16 %v5476, %v5476
        %v5493 = vpack.c.bf16 %v5477, %v5477
        %5510 = vrot.lane.b32.xlu0 %v5478, 32
        %v5511 = vpop.permute.xlu0 %5510
        %5512 = vrot.lane.b32.xlu0 %v5479, 32
        %v5513 = vpop.permute.xlu0 %5512
        %5514 = vrot.lane.b32.xlu0 %v5480, 32
        %v5515 = vpop.permute.xlu0 %5514
        %5516 = vrot.lane.b32.xlu0 %v5481, 32
        %v5517 = vpop.permute.xlu0 %5516
        %5518 = vrot.lane.b32.xlu0 %v5482, 32
        %v5519 = vpop.permute.xlu0 %5518
        %5520 = vrot.lane.b32.xlu0 %v5483, 32
        %v5521 = vpop.permute.xlu0 %5520
        %5522 = vrot.lane.b32.xlu0 %v5484, 32
        %v5523 = vpop.permute.xlu0 %5522
        %5524 = vrot.lane.b32.xlu0 %v5485, 32
        %v5525 = vpop.permute.xlu0 %5524
        %5526 = vrot.lane.b32.xlu0 %v5486, 32
        %v5527 = vpop.permute.xlu0 %5526
        %5528 = vrot.lane.b32.xlu0 %v5487, 32
        %v5529 = vpop.permute.xlu0 %5528
        %5530 = vrot.lane.b32.xlu0 %v5488, 32
        %v5531 = vpop.permute.xlu0 %5530
        %5532 = vrot.lane.b32.xlu0 %v5489, 32
        %v5533 = vpop.permute.xlu0 %5532
        %5534 = vrot.lane.b32.xlu0 %v5490, 32
        %v5535 = vpop.permute.xlu0 %5534
        %5536 = vrot.lane.b32.xlu0 %v5491, 32
        %v5537 = vpop.permute.xlu0 %5536
        %5538 = vrot.lane.b32.xlu0 %v5492, 32
        %v5539 = vpop.permute.xlu0 %5538
        %5540 = vrot.lane.b32.xlu0 %v5493, 32
        %v5541 = vpop.permute.xlu0 %5540
        %5558 = vst.msk [vmem:[#allocation5 + $0x4] sm:$0xf] %vm3195, %v5511
        %5559 = vst.msk [vmem:[#allocation5 + $0xc] sm:$0xf] %vm3195, %v5513
        %5560 = vst.msk [vmem:[#allocation5 + $0x14] sm:$0xf] %vm3195, %v5515
        %5561 = vst.msk [vmem:[#allocation5 + $0x1c] sm:$0xf] %vm3195, %v5517
        %5562 = vst.msk [vmem:[#allocation5 + $0x24] sm:$0xf] %vm3195, %v5519
        %5563 = vst.msk [vmem:[#allocation5 + $0x2c] sm:$0xf] %vm3195, %v5521
        %5564 = vst.msk [vmem:[#allocation5 + $0x34] sm:$0xf] %vm3195, %v5523
        %5565 = vst.msk [vmem:[#allocation5 + $0x3c] sm:$0xf] %vm3195, %v5525
        %5566 = vst.msk [vmem:[#allocation5 + $0x44] sm:$0xf] %vm3195, %v5527
        %5567 = vst.msk [vmem:[#allocation5 + $0x4c] sm:$0xf] %vm3195, %v5529
        %5568 = vst.msk [vmem:[#allocation5 + $0x54] sm:$0xf] %vm3195, %v5531
        %5569 = vst.msk [vmem:[#allocation5 + $0x5c] sm:$0xf] %vm3195, %v5533
        %5570 = vst.msk [vmem:[#allocation5 + $0x64] sm:$0xf] %vm3195, %v5535
        %5571 = vst.msk [vmem:[#allocation5 + $0x6c] sm:$0xf] %vm3195, %v5537
        %5572 = vst.msk [vmem:[#allocation5 + $0x74] sm:$0xf] %vm3195, %v5539
        %5573 = vst.msk [vmem:[#allocation5 + $0x7c] sm:$0xf] %vm3195, %v5541
        %v5574 = vld [vmem:[#allocation2 + $0x4] sm:$0xf]
        %v5575 = vld [vmem:[#allocation2 + $0xc] sm:$0xf]
        %v5576 = vld [vmem:[#allocation2 + $0x14] sm:$0xf]
        %v5577 = vld [vmem:[#allocation2 + $0x1c] sm:$0xf]
        %v5578 = vld [vmem:[#allocation2 + $0x24] sm:$0xf]
        %v5579 = vld [vmem:[#allocation2 + $0x2c] sm:$0xf]
        %v5580 = vld [vmem:[#allocation2 + $0x34] sm:$0xf]
        %v5581 = vld [vmem:[#allocation2 + $0x3c] sm:$0xf]
        %v5582 = vld [vmem:[#allocation2 + $0x44] sm:$0xf]
        %v5583 = vld [vmem:[#allocation2 + $0x4c] sm:$0xf]
        %v5584 = vld [vmem:[#allocation2 + $0x54] sm:$0xf]
        %v5585 = vld [vmem:[#allocation2 + $0x5c] sm:$0xf]
        %v5586 = vld [vmem:[#allocation2 + $0x64] sm:$0xf]
        %v5587 = vld [vmem:[#allocation2 + $0x6c] sm:$0xf]
        %v5588 = vld [vmem:[#allocation2 + $0x74] sm:$0xf]
        %v5589 = vld [vmem:[#allocation2 + $0x7c] sm:$0xf]
        %v5590 = vld [vmem:[#allocation3 + $0x4] sm:$0xf]
        %v5591 = vld [vmem:[#allocation3 + $0xc] sm:$0xf]
        %v5592 = vld [vmem:[#allocation3 + $0x14] sm:$0xf]
        %v5593 = vld [vmem:[#allocation3 + $0x1c] sm:$0xf]
        %v5594 = vld [vmem:[#allocation3 + $0x24] sm:$0xf]
        %v5595 = vld [vmem:[#allocation3 + $0x2c] sm:$0xf]
        %v5596 = vld [vmem:[#allocation3 + $0x34] sm:$0xf]
        %v5597 = vld [vmem:[#allocation3 + $0x3c] sm:$0xf]
        %v5598 = vld [vmem:[#allocation3 + $0x44] sm:$0xf]
        %v5599 = vld [vmem:[#allocation3 + $0x4c] sm:$0xf]
        %v5600 = vld [vmem:[#allocation3 + $0x54] sm:$0xf]
        %v5601 = vld [vmem:[#allocation3 + $0x5c] sm:$0xf]
        %v5602 = vld [vmem:[#allocation3 + $0x64] sm:$0xf]
        %v5603 = vld [vmem:[#allocation3 + $0x6c] sm:$0xf]
        %v5604 = vld [vmem:[#allocation3 + $0x74] sm:$0xf]
        %v5605 = vld [vmem:[#allocation3 + $0x7c] sm:$0xf]
        %v5606 = vld [vmem:[#allocation4 + $0x4] sm:$0xf]
        %v5607 = vld [vmem:[#allocation4 + $0xc] sm:$0xf]
        %v5608 = vld [vmem:[#allocation4 + $0x14] sm:$0xf]
        %v5609 = vld [vmem:[#allocation4 + $0x1c] sm:$0xf]
        %v5610 = vld [vmem:[#allocation4 + $0x24] sm:$0xf]
        %v5611 = vld [vmem:[#allocation4 + $0x2c] sm:$0xf]
        %v5612 = vld [vmem:[#allocation4 + $0x34] sm:$0xf]
        %v5613 = vld [vmem:[#allocation4 + $0x3c] sm:$0xf]
        %v5614 = vld [vmem:[#allocation4 + $0x44] sm:$0xf]
        %v5615 = vld [vmem:[#allocation4 + $0x4c] sm:$0xf]
        %v5616 = vld [vmem:[#allocation4 + $0x54] sm:$0xf]
        %v5617 = vld [vmem:[#allocation4 + $0x5c] sm:$0xf]
        %v5618 = vld [vmem:[#allocation4 + $0x64] sm:$0xf]
        %v5619 = vld [vmem:[#allocation4 + $0x6c] sm:$0xf]
        %v5620 = vld [vmem:[#allocation4 + $0x74] sm:$0xf]
        %v5621 = vld [vmem:[#allocation4 + $0x7c] sm:$0xf]
        %v5638 = vunpack.c.l.b16 %v5574
        %v5639 = vunpack.c.l.b16 %v5575
        %v5640 = vunpack.c.l.b16 %v5576
        %v5641 = vunpack.c.l.b16 %v5577
        %v5642 = vunpack.c.l.b16 %v5578
        %v5643 = vunpack.c.l.b16 %v5579
        %v5644 = vunpack.c.l.b16 %v5580
        %v5645 = vunpack.c.l.b16 %v5581
        %v5646 = vunpack.c.l.b16 %v5582
        %v5647 = vunpack.c.l.b16 %v5583
        %v5648 = vunpack.c.l.b16 %v5584
        %v5649 = vunpack.c.l.b16 %v5585
        %v5650 = vunpack.c.l.b16 %v5586
        %v5651 = vunpack.c.l.b16 %v5587
        %v5652 = vunpack.c.l.b16 %v5588
        %v5653 = vunpack.c.l.b16 %v5589
        %v5654 = vpack.c.b16 %v5639, %v5638
        %v5655 = vpack.c.b16 %v5641, %v5640
        %v5656 = vpack.c.b16 %v5643, %v5642
        %v5657 = vpack.c.b16 %v5645, %v5644
        %v5658 = vpack.c.b16 %v5647, %v5646
        %v5659 = vpack.c.b16 %v5649, %v5648
        %v5660 = vpack.c.b16 %v5651, %v5650
        %v5661 = vpack.c.b16 %v5653, %v5652
        %5662 = vrot.lane.b32.xlu0 %v5654, 64
        %v5663 = vpop.permute.xlu0 %5662
        %5664 = vrot.lane.b32.xlu0 %v5655, 64
        %v5665 = vpop.permute.xlu0 %5664
        %5666 = vrot.lane.b32.xlu0 %v5656, 64
        %v5667 = vpop.permute.xlu0 %5666
        %5668 = vrot.lane.b32.xlu0 %v5657, 64
        %v5669 = vpop.permute.xlu0 %5668
        %5670 = vrot.lane.b32.xlu0 %v5658, 64
        %v5671 = vpop.permute.xlu0 %5670
        %5672 = vrot.lane.b32.xlu0 %v5659, 64
        %v5673 = vpop.permute.xlu0 %5672
        %5674 = vrot.lane.b32.xlu0 %v5660, 64
        %v5675 = vpop.permute.xlu0 %5674
        %5676 = vrot.lane.b32.xlu0 %v5661, 64
        %v5677 = vpop.permute.xlu0 %5676
        %v5694 = vunpack.c.l.b16 %v5590
        %v5695 = vunpack.c.l.b16 %v5591
        %v5696 = vunpack.c.l.b16 %v5592
        %v5697 = vunpack.c.l.b16 %v5593
        %v5698 = vunpack.c.l.b16 %v5594
        %v5699 = vunpack.c.l.b16 %v5595
        %v5700 = vunpack.c.l.b16 %v5596
        %v5701 = vunpack.c.l.b16 %v5597
        %v5702 = vunpack.c.l.b16 %v5598
        %v5703 = vunpack.c.l.b16 %v5599
        %v5704 = vunpack.c.l.b16 %v5600
        %v5705 = vunpack.c.l.b16 %v5601
        %v5706 = vunpack.c.l.b16 %v5602
        %v5707 = vunpack.c.l.b16 %v5603
        %v5708 = vunpack.c.l.b16 %v5604
        %v5709 = vunpack.c.l.b16 %v5605
        %v5710 = vpack.c.b16 %v5695, %v5694
        %v5711 = vpack.c.b16 %v5697, %v5696
        %v5712 = vpack.c.b16 %v5699, %v5698
        %v5713 = vpack.c.b16 %v5701, %v5700
        %v5714 = vpack.c.b16 %v5703, %v5702
        %v5715 = vpack.c.b16 %v5705, %v5704
        %v5716 = vpack.c.b16 %v5707, %v5706
        %v5717 = vpack.c.b16 %v5709, %v5708
        %5718 = vrot.lane.b32.xlu0 %v5710, 64
        %v5719 = vpop.permute.xlu0 %5718
        %5720 = vrot.lane.b32.xlu0 %v5711, 64
        %v5721 = vpop.permute.xlu0 %5720
        %5722 = vrot.lane.b32.xlu0 %v5712, 64
        %v5723 = vpop.permute.xlu0 %5722
        %5724 = vrot.lane.b32.xlu0 %v5713, 64
        %v5725 = vpop.permute.xlu0 %5724
        %5726 = vrot.lane.b32.xlu0 %v5714, 64
        %v5727 = vpop.permute.xlu0 %5726
        %5728 = vrot.lane.b32.xlu0 %v5715, 64
        %v5729 = vpop.permute.xlu0 %5728
        %5730 = vrot.lane.b32.xlu0 %v5716, 64
        %v5731 = vpop.permute.xlu0 %5730
        %5732 = vrot.lane.b32.xlu0 %v5717, 64
        %v5733 = vpop.permute.xlu0 %5732
        %v5735 = vsel %vm2213, %v5663, 0
        %v5738 = vsel %vm2213, %v5665, 0
        %v5741 = vsel %vm2213, %v5667, 0
        %v5744 = vsel %vm2213, %v5669, 0
        %v5747 = vsel %vm2213, %v5671, 0
        %v5750 = vsel %vm2213, %v5673, 0
        %v5753 = vsel %vm2213, %v5675, 0
        %v5756 = vsel %vm2213, %v5677, 0
        %v5759 = vsel %vm2213, %v5719, 0
        %v5762 = vsel %vm2213, %v5721, 0
        %v5765 = vsel %vm2213, %v5723, 0
        %v5768 = vsel %vm2213, %v5725, 0
        %v5771 = vsel %vm2213, %v5727, 0
        %v5774 = vsel %vm2213, %v5729, 0
        %v5777 = vsel %vm2213, %v5731, 0
        %v5780 = vsel %vm2213, %v5733, 0
        %5782 = vmatpush.bf16.xpose.msra.mxu0 %v5780
        %5783 = vmatpush.bf16.xpose.msra.mxu0 %v5777
        %5784 = vmatpush.bf16.xpose.msra.mxu0 %v5774
        %5785 = vmatpush.bf16.xpose.msra.mxu0 %v5771
        %5786 = vmatpush.bf16.xpose.msra.mxu0 %v5768
        %5787 = vmatpush.bf16.xpose.msra.mxu0 %v5765
        %5788 = vmatpush.bf16.xpose.msra.mxu0 %v5762
        %5789 = vmatpush.bf16.xpose.msra.mxu0 %v5759
        %5790 = vmatmul.bf16.gmra.mxu0 %v5735
        %v5791 = vpop.f32.mrf.mxu0
        %v5792 = vadd.f32 %v2131, %v5791
        %v5793 = vpop.f32.mrf.mxu0
        %v5794 = vadd.f32 %v2131, %v5793
        %5795 = vmatmul.bf16.gmra.mxu0 %v5738
        %v5796 = vpop.f32.mrf.mxu0
        %v5797 = vadd.f32 %v2131, %v5796
        %v5798 = vpop.f32.mrf.mxu0
        %v5799 = vadd.f32 %v2131, %v5798
        %5800 = vmatmul.bf16.gmra.mxu0 %v5741
        %v5801 = vpop.f32.mrf.mxu0
        %v5802 = vadd.f32 %v2131, %v5801
        %v5803 = vpop.f32.mrf.mxu0
        %v5804 = vadd.f32 %v2131, %v5803
        %5805 = vmatmul.bf16.gmra.mxu0 %v5744
        %v5806 = vpop.f32.mrf.mxu0
        %v5807 = vadd.f32 %v2131, %v5806
        %v5808 = vpop.f32.mrf.mxu0
        %v5809 = vadd.f32 %v2131, %v5808
        %5810 = vmatmul.bf16.gmra.mxu0 %v5747
        %v5811 = vpop.f32.mrf.mxu0
        %v5812 = vadd.f32 %v2131, %v5811
        %v5813 = vpop.f32.mrf.mxu0
        %v5814 = vadd.f32 %v2131, %v5813
        %5815 = vmatmul.bf16.gmra.mxu0 %v5750
        %v5816 = vpop.f32.mrf.mxu0
        %v5817 = vadd.f32 %v2131, %v5816
        %v5818 = vpop.f32.mrf.mxu0
        %v5819 = vadd.f32 %v2131, %v5818
        %5820 = vmatmul.bf16.gmra.mxu0 %v5753
        %v5821 = vpop.f32.mrf.mxu0
        %v5822 = vadd.f32 %v2131, %v5821
        %v5823 = vpop.f32.mrf.mxu0
        %v5824 = vadd.f32 %v2131, %v5823
        %5825 = vmatmul.bf16.gmra.mxu0 %v5756
        %v5826 = vpop.f32.mrf.mxu0
        %v5827 = vadd.f32 %v2131, %v5826
        %v5828 = vpop.f32.mrf.mxu0
        %v5829 = vadd.f32 %v2131, %v5828
        %5830 = vdwg.mxu0
        %5831 = vmax.xlane.f32.xlu0 %v5792
        %v5832 = vpop.xlane.xlu0 %5831
        %5833 = vmax.xlane.f32.xlu0 %v5794
        %v5834 = vpop.xlane.xlu0 %5833
        %5835 = vmax.xlane.f32.xlu0 %v5797
        %v5836 = vpop.xlane.xlu0 %5835
        %5837 = vmax.xlane.f32.xlu0 %v5799
        %v5838 = vpop.xlane.xlu0 %5837
        %5839 = vmax.xlane.f32.xlu0 %v5802
        %v5840 = vpop.xlane.xlu0 %5839
        %5841 = vmax.xlane.f32.xlu0 %v5804
        %v5842 = vpop.xlane.xlu0 %5841
        %5843 = vmax.xlane.f32.xlu0 %v5807
        %v5844 = vpop.xlane.xlu0 %5843
        %5845 = vmax.xlane.f32.xlu0 %v5809
        %v5846 = vpop.xlane.xlu0 %5845
        %5847 = vmax.xlane.f32.xlu0 %v5812
        %v5848 = vpop.xlane.xlu0 %5847
        %5849 = vmax.xlane.f32.xlu0 %v5814
        %v5850 = vpop.xlane.xlu0 %5849
        %5851 = vmax.xlane.f32.xlu0 %v5817
        %v5852 = vpop.xlane.xlu0 %5851
        %5853 = vmax.xlane.f32.xlu0 %v5819
        %v5854 = vpop.xlane.xlu0 %5853
        %5855 = vmax.xlane.f32.xlu0 %v5822
        %v5856 = vpop.xlane.xlu0 %5855
        %5857 = vmax.xlane.f32.xlu0 %v5824
        %v5858 = vpop.xlane.xlu0 %5857
        %5859 = vmax.xlane.f32.xlu0 %v5827
        %v5860 = vpop.xlane.xlu0 %5859
        %5861 = vmax.xlane.f32.xlu0 %v5829
        %v5862 = vpop.xlane.xlu0 %5861
        %v5863 = vsub.f32 %v5792, %v5832
        %v5864 = vsub.f32 %v5794, %v5834
        %v5865 = vsub.f32 %v5797, %v5836
        %v5866 = vsub.f32 %v5799, %v5838
        %v5867 = vsub.f32 %v5802, %v5840
        %v5868 = vsub.f32 %v5804, %v5842
        %v5869 = vsub.f32 %v5807, %v5844
        %v5870 = vsub.f32 %v5809, %v5846
        %v5871 = vsub.f32 %v5812, %v5848
        %v5872 = vsub.f32 %v5814, %v5850
        %v5873 = vsub.f32 %v5817, %v5852
        %v5874 = vsub.f32 %v5819, %v5854
        %v5875 = vsub.f32 %v5822, %v5856
        %v5876 = vsub.f32 %v5824, %v5858
        %v5877 = vsub.f32 %v5827, %v5860
        %v5878 = vsub.f32 %v5829, %v5862
        %v5879 = vmul.f32 %v5863, 1.442695
        %v5880 = vpow.pop %v5879
        %v5881 = vmul.f32 %v5864, 1.442695
        %v5882 = vpow.pop %v5881
        %v5883 = vmul.f32 %v5865, 1.442695
        %v5884 = vpow.pop %v5883
        %v5885 = vmul.f32 %v5866, 1.442695
        %v5886 = vpow.pop %v5885
        %v5887 = vmul.f32 %v5867, 1.442695
        %v5888 = vpow.pop %v5887
        %v5889 = vmul.f32 %v5868, 1.442695
        %v5890 = vpow.pop %v5889
        %v5891 = vmul.f32 %v5869, 1.442695
        %v5892 = vpow.pop %v5891
        %v5893 = vmul.f32 %v5870, 1.442695
        %v5894 = vpow.pop %v5893
        %v5895 = vmul.f32 %v5871, 1.442695
        %v5896 = vpow.pop %v5895
        %v5897 = vmul.f32 %v5872, 1.442695
        %v5898 = vpow.pop %v5897
        %v5899 = vmul.f32 %v5873, 1.442695
        %v5900 = vpow.pop %v5899
        %v5901 = vmul.f32 %v5874, 1.442695
        %v5902 = vpow.pop %v5901
        %v5903 = vmul.f32 %v5875, 1.442695
        %v5904 = vpow.pop %v5903
        %v5905 = vmul.f32 %v5876, 1.442695
        %v5906 = vpow.pop %v5905
        %v5907 = vmul.f32 %v5877, 1.442695
        %v5908 = vpow.pop %v5907
        %v5909 = vmul.f32 %v5878, 1.442695
        %v5910 = vpow.pop %v5909
        %5911 = vadd.xlane.f32.xlu0 %v5880
        %v5912 = vpop.xlane.xlu0 %5911
        %5913 = vadd.xlane.f32.xlu0 %v5882
        %v5914 = vpop.xlane.xlu0 %5913
        %5915 = vadd.xlane.f32.xlu0 %v5884
        %v5916 = vpop.xlane.xlu0 %5915
        %5917 = vadd.xlane.f32.xlu0 %v5886
        %v5918 = vpop.xlane.xlu0 %5917
        %5919 = vadd.xlane.f32.xlu0 %v5888
        %v5920 = vpop.xlane.xlu0 %5919
        %5921 = vadd.xlane.f32.xlu0 %v5890
        %v5922 = vpop.xlane.xlu0 %5921
        %5923 = vadd.xlane.f32.xlu0 %v5892
        %v5924 = vpop.xlane.xlu0 %5923
        %5925 = vadd.xlane.f32.xlu0 %v5894
        %v5926 = vpop.xlane.xlu0 %5925
        %5927 = vadd.xlane.f32.xlu0 %v5896
        %v5928 = vpop.xlane.xlu0 %5927
        %5929 = vadd.xlane.f32.xlu0 %v5898
        %v5930 = vpop.xlane.xlu0 %5929
        %5931 = vadd.xlane.f32.xlu0 %v5900
        %v5932 = vpop.xlane.xlu0 %5931
        %5933 = vadd.xlane.f32.xlu0 %v5902
        %v5934 = vpop.xlane.xlu0 %5933
        %5935 = vadd.xlane.f32.xlu0 %v5904
        %v5936 = vpop.xlane.xlu0 %5935
        %5937 = vadd.xlane.f32.xlu0 %v5906
        %v5938 = vpop.xlane.xlu0 %5937
        %5939 = vadd.xlane.f32.xlu0 %v5908
        %v5940 = vpop.xlane.xlu0 %5939
        %5941 = vadd.xlane.f32.xlu0 %v5910
        %v5942 = vpop.xlane.xlu0 %5941
        %v5943 = vrcp.pop %v5912
        %v5944 = vrcp.pop %v5914
        %v5945 = vrcp.pop %v5916
        %v5946 = vrcp.pop %v5918
        %v5947 = vrcp.pop %v5920
        %v5948 = vrcp.pop %v5922
        %v5949 = vrcp.pop %v5924
        %v5950 = vrcp.pop %v5926
        %v5951 = vrcp.pop %v5928
        %v5952 = vrcp.pop %v5930
        %v5953 = vrcp.pop %v5932
        %v5954 = vrcp.pop %v5934
        %v5955 = vrcp.pop %v5936
        %v5956 = vrcp.pop %v5938
        %v5957 = vrcp.pop %v5940
        %v5958 = vrcp.pop %v5942
        %v5959 = vpack.c.bf16 %v5882, %v5880
        %v5960 = vpack.c.bf16 %v5886, %v5884
        %v5961 = vpack.c.bf16 %v5890, %v5888
        %v5962 = vpack.c.bf16 %v5894, %v5892
        %v5963 = vpack.c.bf16 %v5898, %v5896
        %v5964 = vpack.c.bf16 %v5902, %v5900
        %v5965 = vpack.c.bf16 %v5906, %v5904
        %v5966 = vpack.c.bf16 %v5910, %v5908
        %v5983 = vunpack.c.l.b16 %v5606
        %v5984 = vunpack.c.l.b16 %v5607
        %v5985 = vunpack.c.l.b16 %v5608
        %v5986 = vunpack.c.l.b16 %v5609
        %v5987 = vunpack.c.l.b16 %v5610
        %v5988 = vunpack.c.l.b16 %v5611
        %v5989 = vunpack.c.l.b16 %v5612
        %v5990 = vunpack.c.l.b16 %v5613
        %v5991 = vunpack.c.l.b16 %v5614
        %v5992 = vunpack.c.l.b16 %v5615
        %v5993 = vunpack.c.l.b16 %v5616
        %v5994 = vunpack.c.l.b16 %v5617
        %v5995 = vunpack.c.l.b16 %v5618
        %v5996 = vunpack.c.l.b16 %v5619
        %v5997 = vunpack.c.l.b16 %v5620
        %v5998 = vunpack.c.l.b16 %v5621
        %v5999 = vpack.c.b16 %v5984, %v5983
        %v6000 = vpack.c.b16 %v5986, %v5985
        %v6001 = vpack.c.b16 %v5988, %v5987
        %v6002 = vpack.c.b16 %v5990, %v5989
        %v6003 = vpack.c.b16 %v5992, %v5991
        %v6004 = vpack.c.b16 %v5994, %v5993
        %v6005 = vpack.c.b16 %v5996, %v5995
        %v6006 = vpack.c.b16 %v5998, %v5997
        %6007 = vrot.lane.b32.xlu0 %v5999, 64
        %v6008 = vpop.permute.xlu0 %6007
        %6009 = vrot.lane.b32.xlu0 %v6000, 64
        %v6010 = vpop.permute.xlu0 %6009
        %6011 = vrot.lane.b32.xlu0 %v6001, 64
        %v6012 = vpop.permute.xlu0 %6011
        %6013 = vrot.lane.b32.xlu0 %v6002, 64
        %v6014 = vpop.permute.xlu0 %6013
        %6015 = vrot.lane.b32.xlu0 %v6003, 64
        %v6016 = vpop.permute.xlu0 %6015
        %6017 = vrot.lane.b32.xlu0 %v6004, 64
        %v6018 = vpop.permute.xlu0 %6017
        %6019 = vrot.lane.b32.xlu0 %v6005, 64
        %v6020 = vpop.permute.xlu0 %6019
        %6021 = vrot.lane.b32.xlu0 %v6006, 64
        %v6022 = vpop.permute.xlu0 %6021
        %6031 = vmatpush.bf16.msra.mxu0 %v6022
        %6032 = vmatpush.bf16.msra.mxu0 %v6020
        %6033 = vmatpush.bf16.msra.mxu0 %v6018
        %6034 = vmatpush.bf16.msra.mxu0 %v6016
        %6035 = vmatpush.bf16.msra.mxu0 %v6014
        %6036 = vmatpush.bf16.msra.mxu0 %v6012
        %6037 = vmatpush.bf16.msra.mxu0 %v6010
        %6038 = vmatpush.bf16.msra.mxu0 %v6008
        %6039 = vmatmul.bf16.gmra.mxu0 %v5959
        %v6040 = vpop.f32.mrf.mxu0
        %v6041 = vadd.f32 0.0, %v6040
        %v6042 = vpop.f32.mrf.mxu0
        %v6043 = vadd.f32 0.0, %v6042
        %6044 = vmatmul.bf16.gmra.mxu0 %v5960
        %v6045 = vpop.f32.mrf.mxu0
        %v6046 = vadd.f32 0.0, %v6045
        %v6047 = vpop.f32.mrf.mxu0
        %v6048 = vadd.f32 0.0, %v6047
        %6049 = vmatmul.bf16.gmra.mxu0 %v5961
        %v6050 = vpop.f32.mrf.mxu0
        %v6051 = vadd.f32 0.0, %v6050
        %v6052 = vpop.f32.mrf.mxu0
        %v6053 = vadd.f32 0.0, %v6052
        %6054 = vmatmul.bf16.gmra.mxu0 %v5962
        %v6055 = vpop.f32.mrf.mxu0
        %v6056 = vadd.f32 0.0, %v6055
        %v6057 = vpop.f32.mrf.mxu0
        %v6058 = vadd.f32 0.0, %v6057
        %6059 = vmatmul.bf16.gmra.mxu0 %v5963
        %v6060 = vpop.f32.mrf.mxu0
        %v6061 = vadd.f32 0.0, %v6060
        %v6062 = vpop.f32.mrf.mxu0
        %v6063 = vadd.f32 0.0, %v6062
        %6064 = vmatmul.bf16.gmra.mxu0 %v5964
        %v6065 = vpop.f32.mrf.mxu0
        %v6066 = vadd.f32 0.0, %v6065
        %v6067 = vpop.f32.mrf.mxu0
        %v6068 = vadd.f32 0.0, %v6067
        %6069 = vmatmul.bf16.gmra.mxu0 %v5965
        %v6070 = vpop.f32.mrf.mxu0
        %v6071 = vadd.f32 0.0, %v6070
        %v6072 = vpop.f32.mrf.mxu0
        %v6073 = vadd.f32 0.0, %v6072
        %6074 = vmatmul.bf16.gmra.mxu0 %v5966
        %v6075 = vpop.f32.mrf.mxu0
        %v6076 = vadd.f32 0.0, %v6075
        %v6077 = vpop.f32.mrf.mxu0
        %v6078 = vadd.f32 0.0, %v6077
        %6079 = vdwg.mxu0
        %v6080 = vmul.f32 %v6041, %v5943
        %v6081 = vmul.f32 %v6043, %v5944
        %v6082 = vmul.f32 %v6046, %v5945
        %v6083 = vmul.f32 %v6048, %v5946
        %v6084 = vmul.f32 %v6051, %v5947
        %v6085 = vmul.f32 %v6053, %v5948
        %v6086 = vmul.f32 %v6056, %v5949
        %v6087 = vmul.f32 %v6058, %v5950
        %v6088 = vmul.f32 %v6061, %v5951
        %v6089 = vmul.f32 %v6063, %v5952
        %v6090 = vmul.f32 %v6066, %v5953
        %v6091 = vmul.f32 %v6068, %v5954
        %v6092 = vmul.f32 %v6071, %v5955
        %v6093 = vmul.f32 %v6073, %v5956
        %v6094 = vmul.f32 %v6076, %v5957
        %v6095 = vmul.f32 %v6078, %v5958
        %v6096 = vpack.c.bf16 %v6080, %v6080
        %v6097 = vpack.c.bf16 %v6081, %v6081
        %v6098 = vpack.c.bf16 %v6082, %v6082
        %v6099 = vpack.c.bf16 %v6083, %v6083
        %v6100 = vpack.c.bf16 %v6084, %v6084
        %v6101 = vpack.c.bf16 %v6085, %v6085
        %v6102 = vpack.c.bf16 %v6086, %v6086
        %v6103 = vpack.c.bf16 %v6087, %v6087
        %v6104 = vpack.c.bf16 %v6088, %v6088
        %v6105 = vpack.c.bf16 %v6089, %v6089
        %v6106 = vpack.c.bf16 %v6090, %v6090
        %v6107 = vpack.c.bf16 %v6091, %v6091
        %v6108 = vpack.c.bf16 %v6092, %v6092
        %v6109 = vpack.c.bf16 %v6093, %v6093
        %v6110 = vpack.c.bf16 %v6094, %v6094
        %v6111 = vpack.c.bf16 %v6095, %v6095
        %6128 = vrot.lane.b32.xlu0 %v6096, 64
        %v6129 = vpop.permute.xlu0 %6128
        %6130 = vrot.lane.b32.xlu0 %v6097, 64
        %v6131 = vpop.permute.xlu0 %6130
        %6132 = vrot.lane.b32.xlu0 %v6098, 64
        %v6133 = vpop.permute.xlu0 %6132
        %6134 = vrot.lane.b32.xlu0 %v6099, 64
        %v6135 = vpop.permute.xlu0 %6134
        %6136 = vrot.lane.b32.xlu0 %v6100, 64
        %v6137 = vpop.permute.xlu0 %6136
        %6138 = vrot.lane.b32.xlu0 %v6101, 64
        %v6139 = vpop.permute.xlu0 %6138
        %6140 = vrot.lane.b32.xlu0 %v6102, 64
        %v6141 = vpop.permute.xlu0 %6140
        %6142 = vrot.lane.b32.xlu0 %v6103, 64
        %v6143 = vpop.permute.xlu0 %6142
        %6144 = vrot.lane.b32.xlu0 %v6104, 64
        %v6145 = vpop.permute.xlu0 %6144
        %6146 = vrot.lane.b32.xlu0 %v6105, 64
        %v6147 = vpop.permute.xlu0 %6146
        %6148 = vrot.lane.b32.xlu0 %v6106, 64
        %v6149 = vpop.permute.xlu0 %6148
        %6150 = vrot.lane.b32.xlu0 %v6107, 64
        %v6151 = vpop.permute.xlu0 %6150
        %6152 = vrot.lane.b32.xlu0 %v6108, 64
        %v6153 = vpop.permute.xlu0 %6152
        %6154 = vrot.lane.b32.xlu0 %v6109, 64
        %v6155 = vpop.permute.xlu0 %6154
        %6156 = vrot.lane.b32.xlu0 %v6110, 64
        %v6157 = vpop.permute.xlu0 %6156
        %6158 = vrot.lane.b32.xlu0 %v6111, 64
        %v6159 = vpop.permute.xlu0 %6158
        %6176 = vst.msk [vmem:[#allocation5 + $0x4] sm:$0xf] %vm3814, %v6129
        %6177 = vst.msk [vmem:[#allocation5 + $0xc] sm:$0xf] %vm3814, %v6131
        %6178 = vst.msk [vmem:[#allocation5 + $0x14] sm:$0xf] %vm3814, %v6133
        %6179 = vst.msk [vmem:[#allocation5 + $0x1c] sm:$0xf] %vm3814, %v6135
        %6180 = vst.msk [vmem:[#allocation5 + $0x24] sm:$0xf] %vm3814, %v6137
        %6181 = vst.msk [vmem:[#allocation5 + $0x2c] sm:$0xf] %vm3814, %v6139
        %6182 = vst.msk [vmem:[#allocation5 + $0x34] sm:$0xf] %vm3814, %v6141
        %6183 = vst.msk [vmem:[#allocation5 + $0x3c] sm:$0xf] %vm3814, %v6143
        %6184 = vst.msk [vmem:[#allocation5 + $0x44] sm:$0xf] %vm3814, %v6145
        %6185 = vst.msk [vmem:[#allocation5 + $0x4c] sm:$0xf] %vm3814, %v6147
        %6186 = vst.msk [vmem:[#allocation5 + $0x54] sm:$0xf] %vm3814, %v6149
        %6187 = vst.msk [vmem:[#allocation5 + $0x5c] sm:$0xf] %vm3814, %v6151
        %6188 = vst.msk [vmem:[#allocation5 + $0x64] sm:$0xf] %vm3814, %v6153
        %6189 = vst.msk [vmem:[#allocation5 + $0x6c] sm:$0xf] %vm3814, %v6155
        %6190 = vst.msk [vmem:[#allocation5 + $0x74] sm:$0xf] %vm3814, %v6157
        %6191 = vst.msk [vmem:[#allocation5 + $0x7c] sm:$0xf] %vm3814, %v6159
        %v6192 = vld [vmem:[#allocation2 + $0x4] sm:$0xf]
        %v6193 = vld [vmem:[#allocation2 + $0xc] sm:$0xf]
        %v6194 = vld [vmem:[#allocation2 + $0x14] sm:$0xf]
        %v6195 = vld [vmem:[#allocation2 + $0x1c] sm:$0xf]
        %v6196 = vld [vmem:[#allocation2 + $0x24] sm:$0xf]
        %v6197 = vld [vmem:[#allocation2 + $0x2c] sm:$0xf]
        %v6198 = vld [vmem:[#allocation2 + $0x34] sm:$0xf]
        %v6199 = vld [vmem:[#allocation2 + $0x3c] sm:$0xf]
        %v6200 = vld [vmem:[#allocation2 + $0x44] sm:$0xf]
        %v6201 = vld [vmem:[#allocation2 + $0x4c] sm:$0xf]
        %v6202 = vld [vmem:[#allocation2 + $0x54] sm:$0xf]
        %v6203 = vld [vmem:[#allocation2 + $0x5c] sm:$0xf]
        %v6204 = vld [vmem:[#allocation2 + $0x64] sm:$0xf]
        %v6205 = vld [vmem:[#allocation2 + $0x6c] sm:$0xf]
        %v6206 = vld [vmem:[#allocation2 + $0x74] sm:$0xf]
        %v6207 = vld [vmem:[#allocation2 + $0x7c] sm:$0xf]
        %v6208 = vld [vmem:[#allocation3 + $0x4] sm:$0xf]
        %v6209 = vld [vmem:[#allocation3 + $0xc] sm:$0xf]
        %v6210 = vld [vmem:[#allocation3 + $0x14] sm:$0xf]
        %v6211 = vld [vmem:[#allocation3 + $0x1c] sm:$0xf]
        %v6212 = vld [vmem:[#allocation3 + $0x24] sm:$0xf]
        %v6213 = vld [vmem:[#allocation3 + $0x2c] sm:$0xf]
        %v6214 = vld [vmem:[#allocation3 + $0x34] sm:$0xf]
        %v6215 = vld [vmem:[#allocation3 + $0x3c] sm:$0xf]
        %v6216 = vld [vmem:[#allocation3 + $0x44] sm:$0xf]
        %v6217 = vld [vmem:[#allocation3 + $0x4c] sm:$0xf]
        %v6218 = vld [vmem:[#allocation3 + $0x54] sm:$0xf]
        %v6219 = vld [vmem:[#allocation3 + $0x5c] sm:$0xf]
        %v6220 = vld [vmem:[#allocation3 + $0x64] sm:$0xf]
        %v6221 = vld [vmem:[#allocation3 + $0x6c] sm:$0xf]
        %v6222 = vld [vmem:[#allocation3 + $0x74] sm:$0xf]
        %v6223 = vld [vmem:[#allocation3 + $0x7c] sm:$0xf]
        %v6224 = vld [vmem:[#allocation4 + $0x4] sm:$0xf]
        %v6225 = vld [vmem:[#allocation4 + $0xc] sm:$0xf]
        %v6226 = vld [vmem:[#allocation4 + $0x14] sm:$0xf]
        %v6227 = vld [vmem:[#allocation4 + $0x1c] sm:$0xf]
        %v6228 = vld [vmem:[#allocation4 + $0x24] sm:$0xf]
        %v6229 = vld [vmem:[#allocation4 + $0x2c] sm:$0xf]
        %v6230 = vld [vmem:[#allocation4 + $0x34] sm:$0xf]
        %v6231 = vld [vmem:[#allocation4 + $0x3c] sm:$0xf]
        %v6232 = vld [vmem:[#allocation4 + $0x44] sm:$0xf]
        %v6233 = vld [vmem:[#allocation4 + $0x4c] sm:$0xf]
        %v6234 = vld [vmem:[#allocation4 + $0x54] sm:$0xf]
        %v6235 = vld [vmem:[#allocation4 + $0x5c] sm:$0xf]
        %v6236 = vld [vmem:[#allocation4 + $0x64] sm:$0xf]
        %v6237 = vld [vmem:[#allocation4 + $0x6c] sm:$0xf]
        %v6238 = vld [vmem:[#allocation4 + $0x74] sm:$0xf]
        %v6239 = vld [vmem:[#allocation4 + $0x7c] sm:$0xf]
        %v6256 = vunpack.c.l.b16 %v6192
        %v6257 = vunpack.c.l.b16 %v6193
        %v6258 = vunpack.c.l.b16 %v6194
        %v6259 = vunpack.c.l.b16 %v6195
        %v6260 = vunpack.c.l.b16 %v6196
        %v6261 = vunpack.c.l.b16 %v6197
        %v6262 = vunpack.c.l.b16 %v6198
        %v6263 = vunpack.c.l.b16 %v6199
        %v6264 = vunpack.c.l.b16 %v6200
        %v6265 = vunpack.c.l.b16 %v6201
        %v6266 = vunpack.c.l.b16 %v6202
        %v6267 = vunpack.c.l.b16 %v6203
        %v6268 = vunpack.c.l.b16 %v6204
        %v6269 = vunpack.c.l.b16 %v6205
        %v6270 = vunpack.c.l.b16 %v6206
        %v6271 = vunpack.c.l.b16 %v6207
        %v6272 = vpack.c.b16 %v6257, %v6256
        %v6273 = vpack.c.b16 %v6259, %v6258
        %v6274 = vpack.c.b16 %v6261, %v6260
        %v6275 = vpack.c.b16 %v6263, %v6262
        %v6276 = vpack.c.b16 %v6265, %v6264
        %v6277 = vpack.c.b16 %v6267, %v6266
        %v6278 = vpack.c.b16 %v6269, %v6268
        %v6279 = vpack.c.b16 %v6271, %v6270
        %6280 = vrot.lane.b32.xlu0 %v6272, 32
        %v6281 = vpop.permute.xlu0 %6280
        %6282 = vrot.lane.b32.xlu0 %v6273, 32
        %v6283 = vpop.permute.xlu0 %6282
        %6284 = vrot.lane.b32.xlu0 %v6274, 32
        %v6285 = vpop.permute.xlu0 %6284
        %6286 = vrot.lane.b32.xlu0 %v6275, 32
        %v6287 = vpop.permute.xlu0 %6286
        %6288 = vrot.lane.b32.xlu0 %v6276, 32
        %v6289 = vpop.permute.xlu0 %6288
        %6290 = vrot.lane.b32.xlu0 %v6277, 32
        %v6291 = vpop.permute.xlu0 %6290
        %6292 = vrot.lane.b32.xlu0 %v6278, 32
        %v6293 = vpop.permute.xlu0 %6292
        %6294 = vrot.lane.b32.xlu0 %v6279, 32
        %v6295 = vpop.permute.xlu0 %6294
        %v6312 = vunpack.c.l.b16 %v6208
        %v6313 = vunpack.c.l.b16 %v6209
        %v6314 = vunpack.c.l.b16 %v6210
        %v6315 = vunpack.c.l.b16 %v6211
        %v6316 = vunpack.c.l.b16 %v6212
        %v6317 = vunpack.c.l.b16 %v6213
        %v6318 = vunpack.c.l.b16 %v6214
        %v6319 = vunpack.c.l.b16 %v6215
        %v6320 = vunpack.c.l.b16 %v6216
        %v6321 = vunpack.c.l.b16 %v6217
        %v6322 = vunpack.c.l.b16 %v6218
        %v6323 = vunpack.c.l.b16 %v6219
        %v6324 = vunpack.c.l.b16 %v6220
        %v6325 = vunpack.c.l.b16 %v6221
        %v6326 = vunpack.c.l.b16 %v6222
        %v6327 = vunpack.c.l.b16 %v6223
        %v6328 = vpack.c.b16 %v6313, %v6312
        %v6329 = vpack.c.b16 %v6315, %v6314
        %v6330 = vpack.c.b16 %v6317, %v6316
        %v6331 = vpack.c.b16 %v6319, %v6318
        %v6332 = vpack.c.b16 %v6321, %v6320
        %v6333 = vpack.c.b16 %v6323, %v6322
        %v6334 = vpack.c.b16 %v6325, %v6324
        %v6335 = vpack.c.b16 %v6327, %v6326
        %6336 = vrot.lane.b32.xlu0 %v6328, 32
        %v6337 = vpop.permute.xlu0 %6336
        %6338 = vrot.lane.b32.xlu0 %v6329, 32
        %v6339 = vpop.permute.xlu0 %6338
        %6340 = vrot.lane.b32.xlu0 %v6330, 32
        %v6341 = vpop.permute.xlu0 %6340
        %6342 = vrot.lane.b32.xlu0 %v6331, 32
        %v6343 = vpop.permute.xlu0 %6342
        %6344 = vrot.lane.b32.xlu0 %v6332, 32
        %v6345 = vpop.permute.xlu0 %6344
        %6346 = vrot.lane.b32.xlu0 %v6333, 32
        %v6347 = vpop.permute.xlu0 %6346
        %6348 = vrot.lane.b32.xlu0 %v6334, 32
        %v6349 = vpop.permute.xlu0 %6348
        %6350 = vrot.lane.b32.xlu0 %v6335, 32
        %v6351 = vpop.permute.xlu0 %6350
        %v6353 = vsel %vm2213, %v6281, 0
        %v6356 = vsel %vm2213, %v6283, 0
        %v6359 = vsel %vm2213, %v6285, 0
        %v6362 = vsel %vm2213, %v6287, 0
        %v6365 = vsel %vm2213, %v6289, 0
        %v6368 = vsel %vm2213, %v6291, 0
        %v6371 = vsel %vm2213, %v6293, 0
        %v6374 = vsel %vm2213, %v6295, 0
        %v6377 = vsel %vm2213, %v6337, 0
        %v6380 = vsel %vm2213, %v6339, 0
        %v6383 = vsel %vm2213, %v6341, 0
        %v6386 = vsel %vm2213, %v6343, 0
        %v6389 = vsel %vm2213, %v6345, 0
        %v6392 = vsel %vm2213, %v6347, 0
        %v6395 = vsel %vm2213, %v6349, 0
        %v6398 = vsel %vm2213, %v6351, 0
        %6400 = vmatpush.bf16.xpose.msra.mxu0 %v6398
        %6401 = vmatpush.bf16.xpose.msra.mxu0 %v6395
        %6402 = vmatpush.bf16.xpose.msra.mxu0 %v6392
        %6403 = vmatpush.bf16.xpose.msra.mxu0 %v6389
        %6404 = vmatpush.bf16.xpose.msra.mxu0 %v6386
        %6405 = vmatpush.bf16.xpose.msra.mxu0 %v6383
        %6406 = vmatpush.bf16.xpose.msra.mxu0 %v6380
        %6407 = vmatpush.bf16.xpose.msra.mxu0 %v6377
        %6408 = vmatmul.bf16.gmra.mxu0 %v6353
        %v6409 = vpop.f32.mrf.mxu0
        %v6410 = vadd.f32 %v2131, %v6409
        %v6411 = vpop.f32.mrf.mxu0
        %v6412 = vadd.f32 %v2131, %v6411
        %6413 = vmatmul.bf16.gmra.mxu0 %v6356
        %v6414 = vpop.f32.mrf.mxu0
        %v6415 = vadd.f32 %v2131, %v6414
        %v6416 = vpop.f32.mrf.mxu0
        %v6417 = vadd.f32 %v2131, %v6416
        %6418 = vmatmul.bf16.gmra.mxu0 %v6359
        %v6419 = vpop.f32.mrf.mxu0
        %v6420 = vadd.f32 %v2131, %v6419
        %v6421 = vpop.f32.mrf.mxu0
        %v6422 = vadd.f32 %v2131, %v6421
        %6423 = vmatmul.bf16.gmra.mxu0 %v6362
        %v6424 = vpop.f32.mrf.mxu0
        %v6425 = vadd.f32 %v2131, %v6424
        %v6426 = vpop.f32.mrf.mxu0
        %v6427 = vadd.f32 %v2131, %v6426
        %6428 = vmatmul.bf16.gmra.mxu0 %v6365
        %v6429 = vpop.f32.mrf.mxu0
        %v6430 = vadd.f32 %v2131, %v6429
        %v6431 = vpop.f32.mrf.mxu0
        %v6432 = vadd.f32 %v2131, %v6431
        %6433 = vmatmul.bf16.gmra.mxu0 %v6368
        %v6434 = vpop.f32.mrf.mxu0
        %v6435 = vadd.f32 %v2131, %v6434
        %v6436 = vpop.f32.mrf.mxu0
        %v6437 = vadd.f32 %v2131, %v6436
        %6438 = vmatmul.bf16.gmra.mxu0 %v6371
        %v6439 = vpop.f32.mrf.mxu0
        %v6440 = vadd.f32 %v2131, %v6439
        %v6441 = vpop.f32.mrf.mxu0
        %v6442 = vadd.f32 %v2131, %v6441
        %6443 = vmatmul.bf16.gmra.mxu0 %v6374
        %v6444 = vpop.f32.mrf.mxu0
        %v6445 = vadd.f32 %v2131, %v6444
        %v6446 = vpop.f32.mrf.mxu0
        %v6447 = vadd.f32 %v2131, %v6446
        %6448 = vdwg.mxu0
        %6449 = vmax.xlane.f32.xlu0 %v6410
        %v6450 = vpop.xlane.xlu0 %6449
        %6451 = vmax.xlane.f32.xlu0 %v6412
        %v6452 = vpop.xlane.xlu0 %6451
        %6453 = vmax.xlane.f32.xlu0 %v6415
        %v6454 = vpop.xlane.xlu0 %6453
        %6455 = vmax.xlane.f32.xlu0 %v6417
        %v6456 = vpop.xlane.xlu0 %6455
        %6457 = vmax.xlane.f32.xlu0 %v6420
        %v6458 = vpop.xlane.xlu0 %6457
        %6459 = vmax.xlane.f32.xlu0 %v6422
        %v6460 = vpop.xlane.xlu0 %6459
        %6461 = vmax.xlane.f32.xlu0 %v6425
        %v6462 = vpop.xlane.xlu0 %6461
        %6463 = vmax.xlane.f32.xlu0 %v6427
        %v6464 = vpop.xlane.xlu0 %6463
        %6465 = vmax.xlane.f32.xlu0 %v6430
        %v6466 = vpop.xlane.xlu0 %6465
        %6467 = vmax.xlane.f32.xlu0 %v6432
        %v6468 = vpop.xlane.xlu0 %6467
        %6469 = vmax.xlane.f32.xlu0 %v6435
        %v6470 = vpop.xlane.xlu0 %6469
        %6471 = vmax.xlane.f32.xlu0 %v6437
        %v6472 = vpop.xlane.xlu0 %6471
        %6473 = vmax.xlane.f32.xlu0 %v6440
        %v6474 = vpop.xlane.xlu0 %6473
        %6475 = vmax.xlane.f32.xlu0 %v6442
        %v6476 = vpop.xlane.xlu0 %6475
        %6477 = vmax.xlane.f32.xlu0 %v6445
        %v6478 = vpop.xlane.xlu0 %6477
        %6479 = vmax.xlane.f32.xlu0 %v6447
        %v6480 = vpop.xlane.xlu0 %6479
        %v6481 = vsub.f32 %v6410, %v6450
        %v6482 = vsub.f32 %v6412, %v6452
        %v6483 = vsub.f32 %v6415, %v6454
        %v6484 = vsub.f32 %v6417, %v6456
        %v6485 = vsub.f32 %v6420, %v6458
        %v6486 = vsub.f32 %v6422, %v6460
        %v6487 = vsub.f32 %v6425, %v6462
        %v6488 = vsub.f32 %v6427, %v6464
        %v6489 = vsub.f32 %v6430, %v6466
        %v6490 = vsub.f32 %v6432, %v6468
        %v6491 = vsub.f32 %v6435, %v6470
        %v6492 = vsub.f32 %v6437, %v6472
        %v6493 = vsub.f32 %v6440, %v6474
        %v6494 = vsub.f32 %v6442, %v6476
        %v6495 = vsub.f32 %v6445, %v6478
        %v6496 = vsub.f32 %v6447, %v6480
        %v6497 = vmul.f32 %v6481, 1.442695
        %v6498 = vpow.pop %v6497
        %v6499 = vmul.f32 %v6482, 1.442695
        %v6500 = vpow.pop %v6499
        %v6501 = vmul.f32 %v6483, 1.442695
        %v6502 = vpow.pop %v6501
        %v6503 = vmul.f32 %v6484, 1.442695
        %v6504 = vpow.pop %v6503
        %v6505 = vmul.f32 %v6485, 1.442695
        %v6506 = vpow.pop %v6505
        %v6507 = vmul.f32 %v6486, 1.442695
        %v6508 = vpow.pop %v6507
        %v6509 = vmul.f32 %v6487, 1.442695
        %v6510 = vpow.pop %v6509
        %v6511 = vmul.f32 %v6488, 1.442695
        %v6512 = vpow.pop %v6511
        %v6513 = vmul.f32 %v6489, 1.442695
        %v6514 = vpow.pop %v6513
        %v6515 = vmul.f32 %v6490, 1.442695
        %v6516 = vpow.pop %v6515
        %v6517 = vmul.f32 %v6491, 1.442695
        %v6518 = vpow.pop %v6517
        %v6519 = vmul.f32 %v6492, 1.442695
        %v6520 = vpow.pop %v6519
        %v6521 = vmul.f32 %v6493, 1.442695
        %v6522 = vpow.pop %v6521
        %v6523 = vmul.f32 %v6494, 1.442695
        %v6524 = vpow.pop %v6523
        %v6525 = vmul.f32 %v6495, 1.442695
        %v6526 = vpow.pop %v6525
        %v6527 = vmul.f32 %v6496, 1.442695
        %v6528 = vpow.pop %v6527
        %6529 = vadd.xlane.f32.xlu0 %v6498
        %v6530 = vpop.xlane.xlu0 %6529
        %6531 = vadd.xlane.f32.xlu0 %v6500
        %v6532 = vpop.xlane.xlu0 %6531
        %6533 = vadd.xlane.f32.xlu0 %v6502
        %v6534 = vpop.xlane.xlu0 %6533
        %6535 = vadd.xlane.f32.xlu0 %v6504
        %v6536 = vpop.xlane.xlu0 %6535
        %6537 = vadd.xlane.f32.xlu0 %v6506
        %v6538 = vpop.xlane.xlu0 %6537
        %6539 = vadd.xlane.f32.xlu0 %v6508
        %v6540 = vpop.xlane.xlu0 %6539
        %6541 = vadd.xlane.f32.xlu0 %v6510
        %v6542 = vpop.xlane.xlu0 %6541
        %6543 = vadd.xlane.f32.xlu0 %v6512
        %v6544 = vpop.xlane.xlu0 %6543
        %6545 = vadd.xlane.f32.xlu0 %v6514
        %v6546 = vpop.xlane.xlu0 %6545
        %6547 = vadd.xlane.f32.xlu0 %v6516
        %v6548 = vpop.xlane.xlu0 %6547
        %6549 = vadd.xlane.f32.xlu0 %v6518
        %v6550 = vpop.xlane.xlu0 %6549
        %6551 = vadd.xlane.f32.xlu0 %v6520
        %v6552 = vpop.xlane.xlu0 %6551
        %6553 = vadd.xlane.f32.xlu0 %v6522
        %v6554 = vpop.xlane.xlu0 %6553
        %6555 = vadd.xlane.f32.xlu0 %v6524
        %v6556 = vpop.xlane.xlu0 %6555
        %6557 = vadd.xlane.f32.xlu0 %v6526
        %v6558 = vpop.xlane.xlu0 %6557
        %6559 = vadd.xlane.f32.xlu0 %v6528
        %v6560 = vpop.xlane.xlu0 %6559
        %v6561 = vrcp.pop %v6530
        %v6562 = vrcp.pop %v6532
        %v6563 = vrcp.pop %v6534
        %v6564 = vrcp.pop %v6536
        %v6565 = vrcp.pop %v6538
        %v6566 = vrcp.pop %v6540
        %v6567 = vrcp.pop %v6542
        %v6568 = vrcp.pop %v6544
        %v6569 = vrcp.pop %v6546
        %v6570 = vrcp.pop %v6548
        %v6571 = vrcp.pop %v6550
        %v6572 = vrcp.pop %v6552
        %v6573 = vrcp.pop %v6554
        %v6574 = vrcp.pop %v6556
        %v6575 = vrcp.pop %v6558
        %v6576 = vrcp.pop %v6560
        %v6577 = vpack.c.bf16 %v6500, %v6498
        %v6578 = vpack.c.bf16 %v6504, %v6502
        %v6579 = vpack.c.bf16 %v6508, %v6506
        %v6580 = vpack.c.bf16 %v6512, %v6510
        %v6581 = vpack.c.bf16 %v6516, %v6514
        %v6582 = vpack.c.bf16 %v6520, %v6518
        %v6583 = vpack.c.bf16 %v6524, %v6522
        %v6584 = vpack.c.bf16 %v6528, %v6526
        %v6601 = vunpack.c.l.b16 %v6224
        %v6602 = vunpack.c.l.b16 %v6225
        %v6603 = vunpack.c.l.b16 %v6226
        %v6604 = vunpack.c.l.b16 %v6227
        %v6605 = vunpack.c.l.b16 %v6228
        %v6606 = vunpack.c.l.b16 %v6229
        %v6607 = vunpack.c.l.b16 %v6230
        %v6608 = vunpack.c.l.b16 %v6231
        %v6609 = vunpack.c.l.b16 %v6232
        %v6610 = vunpack.c.l.b16 %v6233
        %v6611 = vunpack.c.l.b16 %v6234
        %v6612 = vunpack.c.l.b16 %v6235
        %v6613 = vunpack.c.l.b16 %v6236
        %v6614 = vunpack.c.l.b16 %v6237
        %v6615 = vunpack.c.l.b16 %v6238
        %v6616 = vunpack.c.l.b16 %v6239
        %v6617 = vpack.c.b16 %v6602, %v6601
        %v6618 = vpack.c.b16 %v6604, %v6603
        %v6619 = vpack.c.b16 %v6606, %v6605
        %v6620 = vpack.c.b16 %v6608, %v6607
        %v6621 = vpack.c.b16 %v6610, %v6609
        %v6622 = vpack.c.b16 %v6612, %v6611
        %v6623 = vpack.c.b16 %v6614, %v6613
        %v6624 = vpack.c.b16 %v6616, %v6615
        %6625 = vrot.lane.b32.xlu0 %v6617, 32
        %v6626 = vpop.permute.xlu0 %6625
        %6627 = vrot.lane.b32.xlu0 %v6618, 32
        %v6628 = vpop.permute.xlu0 %6627
        %6629 = vrot.lane.b32.xlu0 %v6619, 32
        %v6630 = vpop.permute.xlu0 %6629
        %6631 = vrot.lane.b32.xlu0 %v6620, 32
        %v6632 = vpop.permute.xlu0 %6631
        %6633 = vrot.lane.b32.xlu0 %v6621, 32
        %v6634 = vpop.permute.xlu0 %6633
        %6635 = vrot.lane.b32.xlu0 %v6622, 32
        %v6636 = vpop.permute.xlu0 %6635
        %6637 = vrot.lane.b32.xlu0 %v6623, 32
        %v6638 = vpop.permute.xlu0 %6637
        %6639 = vrot.lane.b32.xlu0 %v6624, 32
        %v6640 = vpop.permute.xlu0 %6639
        %6649 = vmatpush.bf16.msra.mxu0 %v6640
        %6650 = vmatpush.bf16.msra.mxu0 %v6638
        %6651 = vmatpush.bf16.msra.mxu0 %v6636
        %6652 = vmatpush.bf16.msra.mxu0 %v6634
        %6653 = vmatpush.bf16.msra.mxu0 %v6632
        %6654 = vmatpush.bf16.msra.mxu0 %v6630
        %6655 = vmatpush.bf16.msra.mxu0 %v6628
        %6656 = vmatpush.bf16.msra.mxu0 %v6626
        %6657 = vmatmul.bf16.gmra.mxu0 %v6577
        %v6658 = vpop.f32.mrf.mxu0
        %v6659 = vadd.f32 0.0, %v6658
        %v6660 = vpop.f32.mrf.mxu0
        %v6661 = vadd.f32 0.0, %v6660
        %6662 = vmatmul.bf16.gmra.mxu0 %v6578
        %v6663 = vpop.f32.mrf.mxu0
        %v6664 = vadd.f32 0.0, %v6663
        %v6665 = vpop.f32.mrf.mxu0
        %v6666 = vadd.f32 0.0, %v6665
        %6667 = vmatmul.bf16.gmra.mxu0 %v6579
        %v6668 = vpop.f32.mrf.mxu0
        %v6669 = vadd.f32 0.0, %v6668
        %v6670 = vpop.f32.mrf.mxu0
        %v6671 = vadd.f32 0.0, %v6670
        %6672 = vmatmul.bf16.gmra.mxu0 %v6580
        %v6673 = vpop.f32.mrf.mxu0
        %v6674 = vadd.f32 0.0, %v6673
        %v6675 = vpop.f32.mrf.mxu0
        %v6676 = vadd.f32 0.0, %v6675
        %6677 = vmatmul.bf16.gmra.mxu0 %v6581
        %v6678 = vpop.f32.mrf.mxu0
        %v6679 = vadd.f32 0.0, %v6678
        %v6680 = vpop.f32.mrf.mxu0
        %v6681 = vadd.f32 0.0, %v6680
        %6682 = vmatmul.bf16.gmra.mxu0 %v6582
        %v6683 = vpop.f32.mrf.mxu0
        %v6684 = vadd.f32 0.0, %v6683
        %v6685 = vpop.f32.mrf.mxu0
        %v6686 = vadd.f32 0.0, %v6685
        %6687 = vmatmul.bf16.gmra.mxu0 %v6583
        %v6688 = vpop.f32.mrf.mxu0
        %v6689 = vadd.f32 0.0, %v6688
        %v6690 = vpop.f32.mrf.mxu0
        %v6691 = vadd.f32 0.0, %v6690
        %6692 = vmatmul.bf16.gmra.mxu0 %v6584
        %v6693 = vpop.f32.mrf.mxu0
        %v6694 = vadd.f32 0.0, %v6693
        %v6695 = vpop.f32.mrf.mxu0
        %v6696 = vadd.f32 0.0, %v6695
        %6697 = vdwg.mxu0
        %v6698 = vmul.f32 %v6659, %v6561
        %v6699 = vmul.f32 %v6661, %v6562
        %v6700 = vmul.f32 %v6664, %v6563
        %v6701 = vmul.f32 %v6666, %v6564
        %v6702 = vmul.f32 %v6669, %v6565
        %v6703 = vmul.f32 %v6671, %v6566
        %v6704 = vmul.f32 %v6674, %v6567
        %v6705 = vmul.f32 %v6676, %v6568
        %v6706 = vmul.f32 %v6679, %v6569
        %v6707 = vmul.f32 %v6681, %v6570
        %v6708 = vmul.f32 %v6684, %v6571
        %v6709 = vmul.f32 %v6686, %v6572
        %v6710 = vmul.f32 %v6689, %v6573
        %v6711 = vmul.f32 %v6691, %v6574
        %v6712 = vmul.f32 %v6694, %v6575
        %v6713 = vmul.f32 %v6696, %v6576
        %v6714 = vpack.c.bf16 %v6698, %v6698
        %v6715 = vpack.c.bf16 %v6699, %v6699
        %v6716 = vpack.c.bf16 %v6700, %v6700
        %v6717 = vpack.c.bf16 %v6701, %v6701
        %v6718 = vpack.c.bf16 %v6702, %v6702
        %v6719 = vpack.c.bf16 %v6703, %v6703
        %v6720 = vpack.c.bf16 %v6704, %v6704
        %v6721 = vpack.c.bf16 %v6705, %v6705
        %v6722 = vpack.c.bf16 %v6706, %v6706
        %v6723 = vpack.c.bf16 %v6707, %v6707
        %v6724 = vpack.c.bf16 %v6708, %v6708
        %v6725 = vpack.c.bf16 %v6709, %v6709
        %v6726 = vpack.c.bf16 %v6710, %v6710
        %v6727 = vpack.c.bf16 %v6711, %v6711
        %v6728 = vpack.c.bf16 %v6712, %v6712
        %v6729 = vpack.c.bf16 %v6713, %v6713
        %6746 = vrot.lane.b32.xlu0 %v6714, 96
        %v6747 = vpop.permute.xlu0 %6746
        %6748 = vrot.lane.b32.xlu0 %v6715, 96
        %v6749 = vpop.permute.xlu0 %6748
        %6750 = vrot.lane.b32.xlu0 %v6716, 96
        %v6751 = vpop.permute.xlu0 %6750
        %6752 = vrot.lane.b32.xlu0 %v6717, 96
        %v6753 = vpop.permute.xlu0 %6752
        %6754 = vrot.lane.b32.xlu0 %v6718, 96
        %v6755 = vpop.permute.xlu0 %6754
        %6756 = vrot.lane.b32.xlu0 %v6719, 96
        %v6757 = vpop.permute.xlu0 %6756
        %6758 = vrot.lane.b32.xlu0 %v6720, 96
        %v6759 = vpop.permute.xlu0 %6758
        %6760 = vrot.lane.b32.xlu0 %v6721, 96
        %v6761 = vpop.permute.xlu0 %6760
        %6762 = vrot.lane.b32.xlu0 %v6722, 96
        %v6763 = vpop.permute.xlu0 %6762
        %6764 = vrot.lane.b32.xlu0 %v6723, 96
        %v6765 = vpop.permute.xlu0 %6764
        %6766 = vrot.lane.b32.xlu0 %v6724, 96
        %v6767 = vpop.permute.xlu0 %6766
        %6768 = vrot.lane.b32.xlu0 %v6725, 96
        %v6769 = vpop.permute.xlu0 %6768
        %6770 = vrot.lane.b32.xlu0 %v6726, 96
        %v6771 = vpop.permute.xlu0 %6770
        %6772 = vrot.lane.b32.xlu0 %v6727, 96
        %v6773 = vpop.permute.xlu0 %6772
        %6774 = vrot.lane.b32.xlu0 %v6728, 96
        %v6775 = vpop.permute.xlu0 %6774
        %6776 = vrot.lane.b32.xlu0 %v6729, 96
        %v6777 = vpop.permute.xlu0 %6776
        %6794 = vst.msk [vmem:[#allocation5 + $0x4] sm:$0xf] %vm4433, %v6747
        %6795 = vst.msk [vmem:[#allocation5 + $0xc] sm:$0xf] %vm4433, %v6749
        %6796 = vst.msk [vmem:[#allocation5 + $0x14] sm:$0xf] %vm4433, %v6751
        %6797 = vst.msk [vmem:[#allocation5 + $0x1c] sm:$0xf] %vm4433, %v6753
        %6798 = vst.msk [vmem:[#allocation5 + $0x24] sm:$0xf] %vm4433, %v6755
        %6799 = vst.msk [vmem:[#allocation5 + $0x2c] sm:$0xf] %vm4433, %v6757
        %6800 = vst.msk [vmem:[#allocation5 + $0x34] sm:$0xf] %vm4433, %v6759
        %6801 = vst.msk [vmem:[#allocation5 + $0x3c] sm:$0xf] %vm4433, %v6761
        %6802 = vst.msk [vmem:[#allocation5 + $0x44] sm:$0xf] %vm4433, %v6763
        %6803 = vst.msk [vmem:[#allocation5 + $0x4c] sm:$0xf] %vm4433, %v6765
        %6804 = vst.msk [vmem:[#allocation5 + $0x54] sm:$0xf] %vm4433, %v6767
        %6805 = vst.msk [vmem:[#allocation5 + $0x5c] sm:$0xf] %vm4433, %v6769
        %6806 = vst.msk [vmem:[#allocation5 + $0x64] sm:$0xf] %vm4433, %v6771
        %6807 = vst.msk [vmem:[#allocation5 + $0x6c] sm:$0xf] %vm4433, %v6773
        %6808 = vst.msk [vmem:[#allocation5 + $0x74] sm:$0xf] %vm4433, %v6775
        %6809 = vst.msk [vmem:[#allocation5 + $0x7c] sm:$0xf] %vm4433, %v6777
        %v6810 = vld [vmem:[#allocation5] sm:$0xff]
        %v6811 = vld [vmem:[#allocation5 + $0x8] sm:$0xff]
        %v6812 = vld [vmem:[#allocation5 + $0x10] sm:$0xff]
        %v6813 = vld [vmem:[#allocation5 + $0x18] sm:$0xff]
        %v6814 = vld [vmem:[#allocation5 + $0x20] sm:$0xff]
        %v6815 = vld [vmem:[#allocation5 + $0x28] sm:$0xff]
        %v6816 = vld [vmem:[#allocation5 + $0x30] sm:$0xff]
        %v6817 = vld [vmem:[#allocation5 + $0x38] sm:$0xff]
        %v6818 = vld [vmem:[#allocation5 + $0x40] sm:$0xff]
        %v6819 = vld [vmem:[#allocation5 + $0x48] sm:$0xff]
        %v6820 = vld [vmem:[#allocation5 + $0x50] sm:$0xff]
        %v6821 = vld [vmem:[#allocation5 + $0x58] sm:$0xff]
        %v6822 = vld [vmem:[#allocation5 + $0x60] sm:$0xff]
        %v6823 = vld [vmem:[#allocation5 + $0x68] sm:$0xff]
        %v6824 = vld [vmem:[#allocation5 + $0x70] sm:$0xff]
        %v6825 = vld [vmem:[#allocation5 + $0x78] sm:$0xff]
        %v6826 = vld [vmem:[#allocation18] sm:$0xff]
        %v6827 = vld [vmem:[#allocation18 + $0x8] sm:$0xff]
        %v6828 = vld [vmem:[#allocation18 + $0x10] sm:$0xff]
        %v6829 = vld [vmem:[#allocation18 + $0x18] sm:$0xff]
        %v6830 = vld [vmem:[#allocation18 + $0x20] sm:$0xff]
        %v6831 = vld [vmem:[#allocation18 + $0x28] sm:$0xff]
        %v6832 = vld [vmem:[#allocation18 + $0x30] sm:$0xff]
        %v6833 = vld [vmem:[#allocation18 + $0x38] sm:$0xff]
        %v6834 = vld [vmem:[#allocation18 + $0x40] sm:$0xff]
        %v6835 = vld [vmem:[#allocation18 + $0x48] sm:$0xff]
        %v6836 = vld [vmem:[#allocation18 + $0x50] sm:$0xff]
        %v6837 = vld [vmem:[#allocation18 + $0x58] sm:$0xff]
        %v6838 = vld [vmem:[#allocation18 + $0x60] sm:$0xff]
        %v6839 = vld [vmem:[#allocation18 + $0x68] sm:$0xff]
        %v6840 = vld [vmem:[#allocation18 + $0x70] sm:$0xff]
        %v6841 = vld [vmem:[#allocation18 + $0x78] sm:$0xff]
        %v6842 = vld [vmem:[#allocation18 + $0x80] sm:$0xff]
        %v6843 = vld [vmem:[#allocation18 + $0x88] sm:$0xff]
        %v6844 = vld [vmem:[#allocation18 + $0x90] sm:$0xff]
        %v6845 = vld [vmem:[#allocation18 + $0x98] sm:$0xff]
        %v6846 = vld [vmem:[#allocation18 + $0xa0] sm:$0xff]
        %v6847 = vld [vmem:[#allocation18 + $0xa8] sm:$0xff]
        %v6848 = vld [vmem:[#allocation18 + $0xb0] sm:$0xff]
        %v6849 = vld [vmem:[#allocation18 + $0xb8] sm:$0xff]
        %v6850 = vld [vmem:[#allocation18 + $0xc0] sm:$0xff]
        %v6851 = vld [vmem:[#allocation18 + $0xc8] sm:$0xff]
        %v6852 = vld [vmem:[#allocation18 + $0xd0] sm:$0xff]
        %v6853 = vld [vmem:[#allocation18 + $0xd8] sm:$0xff]
        %v6854 = vld [vmem:[#allocation18 + $0xe0] sm:$0xff]
        %v6855 = vld [vmem:[#allocation18 + $0xe8] sm:$0xff]
        %v6856 = vld [vmem:[#allocation18 + $0xf0] sm:$0xff]
        %v6857 = vld [vmem:[#allocation18 + $0xf8] sm:$0xff]
        %v6874 = vunpack.c.l.b16 %v6810
        %v6875 = vunpack.c.h.b16 %v6810
        %v6876 = vunpack.c.l.b16 %v6811
        %v6877 = vunpack.c.h.b16 %v6811
        %v6878 = vunpack.c.l.b16 %v6812
        %v6879 = vunpack.c.h.b16 %v6812
        %v6880 = vunpack.c.l.b16 %v6813
        %v6881 = vunpack.c.h.b16 %v6813
        %v6882 = vunpack.c.l.b16 %v6814
        %v6883 = vunpack.c.h.b16 %v6814
        %v6884 = vunpack.c.l.b16 %v6815
        %v6885 = vunpack.c.h.b16 %v6815
        %v6886 = vunpack.c.l.b16 %v6816
        %v6887 = vunpack.c.h.b16 %v6816
        %v6888 = vunpack.c.l.b16 %v6817
        %v6889 = vunpack.c.h.b16 %v6817
        %v6890 = vunpack.c.l.b16 %v6818
        %v6891 = vunpack.c.h.b16 %v6818
        %v6892 = vunpack.c.l.b16 %v6819
        %v6893 = vunpack.c.h.b16 %v6819
        %v6894 = vunpack.c.l.b16 %v6820
        %v6895 = vunpack.c.h.b16 %v6820
        %v6896 = vunpack.c.l.b16 %v6821
        %v6897 = vunpack.c.h.b16 %v6821
        %v6898 = vunpack.c.l.b16 %v6822
        %v6899 = vunpack.c.h.b16 %v6822
        %v6900 = vunpack.c.l.b16 %v6823
        %v6901 = vunpack.c.h.b16 %v6823
        %v6902 = vunpack.c.l.b16 %v6824
        %v6903 = vunpack.c.h.b16 %v6824
        %v6904 = vunpack.c.l.b16 %v6825
        %v6905 = vunpack.c.h.b16 %v6825
        %v6906 = vpack.c.b16 %v6876, %v6874
        %v6907 = vpack.c.b16 %v6877, %v6875
        %v6908 = vpack.c.b16 %v6880, %v6878
        %v6909 = vpack.c.b16 %v6881, %v6879
        %v6910 = vpack.c.b16 %v6884, %v6882
        %v6911 = vpack.c.b16 %v6885, %v6883
        %v6912 = vpack.c.b16 %v6888, %v6886
        %v6913 = vpack.c.b16 %v6889, %v6887
        %v6914 = vpack.c.b16 %v6892, %v6890
        %v6915 = vpack.c.b16 %v6893, %v6891
        %v6916 = vpack.c.b16 %v6896, %v6894
        %v6917 = vpack.c.b16 %v6897, %v6895
        %v6918 = vpack.c.b16 %v6900, %v6898
        %v6919 = vpack.c.b16 %v6901, %v6899
        %v6920 = vpack.c.b16 %v6904, %v6902
        %v6921 = vpack.c.b16 %v6905, %v6903
        %v6970 = vunpack.c.l.b16 %v6826
        %v6971 = vunpack.c.h.b16 %v6826
        %v6972 = vunpack.c.l.b16 %v6827
        %v6973 = vunpack.c.h.b16 %v6827
        %v6974 = vunpack.c.l.b16 %v6828
        %v6975 = vunpack.c.h.b16 %v6828
        %v6976 = vunpack.c.l.b16 %v6829
        %v6977 = vunpack.c.h.b16 %v6829
        %v6978 = vunpack.c.l.b16 %v6830
        %v6979 = vunpack.c.h.b16 %v6830
        %v6980 = vunpack.c.l.b16 %v6831
        %v6981 = vunpack.c.h.b16 %v6831
        %v6982 = vunpack.c.l.b16 %v6832
        %v6983 = vunpack.c.h.b16 %v6832
        %v6984 = vunpack.c.l.b16 %v6833
        %v6985 = vunpack.c.h.b16 %v6833
        %v6986 = vunpack.c.l.b16 %v6834
        %v6987 = vunpack.c.h.b16 %v6834
        %v6988 = vunpack.c.l.b16 %v6835
        %v6989 = vunpack.c.h.b16 %v6835
        %v6990 = vunpack.c.l.b16 %v6836
        %v6991 = vunpack.c.h.b16 %v6836
        %v6992 = vunpack.c.l.b16 %v6837
        %v6993 = vunpack.c.h.b16 %v6837
        %v6994 = vunpack.c.l.b16 %v6838
        %v6995 = vunpack.c.h.b16 %v6838
        %v6996 = vunpack.c.l.b16 %v6839
        %v6997 = vunpack.c.h.b16 %v6839
        %v6998 = vunpack.c.l.b16 %v6840
        %v6999 = vunpack.c.h.b16 %v6840
        %v7000 = vunpack.c.l.b16 %v6841
        %v7001 = vunpack.c.h.b16 %v6841
        %v7002 = vunpack.c.l.b16 %v6842
        %v7003 = vunpack.c.h.b16 %v6842
        %v7004 = vunpack.c.l.b16 %v6843
        %v7005 = vunpack.c.h.b16 %v6843
        %v7006 = vunpack.c.l.b16 %v6844
        %v7007 = vunpack.c.h.b16 %v6844
        %v7008 = vunpack.c.l.b16 %v6845
        %v7009 = vunpack.c.h.b16 %v6845
        %v7010 = vunpack.c.l.b16 %v6846
        %v7011 = vunpack.c.h.b16 %v6846
        %v7012 = vunpack.c.l.b16 %v6847
        %v7013 = vunpack.c.h.b16 %v6847
        %v7014 = vunpack.c.l.b16 %v6848
        %v7015 = vunpack.c.h.b16 %v6848
        %v7016 = vunpack.c.l.b16 %v6849
        %v7017 = vunpack.c.h.b16 %v6849
        %v7018 = vunpack.c.l.b16 %v6850
        %v7019 = vunpack.c.h.b16 %v6850
        %v7020 = vunpack.c.l.b16 %v6851
        %v7021 = vunpack.c.h.b16 %v6851
        %v7022 = vunpack.c.l.b16 %v6852
        %v7023 = vunpack.c.h.b16 %v6852
        %v7024 = vunpack.c.l.b16 %v6853
        %v7025 = vunpack.c.h.b16 %v6853
        %v7026 = vunpack.c.l.b16 %v6854
        %v7027 = vunpack.c.h.b16 %v6854
        %v7028 = vunpack.c.l.b16 %v6855
        %v7029 = vunpack.c.h.b16 %v6855
        %v7030 = vunpack.c.l.b16 %v6856
        %v7031 = vunpack.c.h.b16 %v6856
        %v7032 = vunpack.c.l.b16 %v6857
        %v7033 = vunpack.c.h.b16 %v6857
        %v7034 = vpack.c.b16 %v6972, %v6970
        %v7035 = vpack.c.b16 %v6973, %v6971
        %v7036 = vpack.c.b16 %v6976, %v6974
        %v7037 = vpack.c.b16 %v6977, %v6975
        %v7038 = vpack.c.b16 %v6980, %v6978
        %v7039 = vpack.c.b16 %v6981, %v6979
        %v7040 = vpack.c.b16 %v6984, %v6982
        %v7041 = vpack.c.b16 %v6985, %v6983
        %v7042 = vpack.c.b16 %v6988, %v6986
        %v7043 = vpack.c.b16 %v6989, %v6987
        %v7044 = vpack.c.b16 %v6992, %v6990
        %v7045 = vpack.c.b16 %v6993, %v6991
        %v7046 = vpack.c.b16 %v6996, %v6994
        %v7047 = vpack.c.b16 %v6997, %v6995
        %v7048 = vpack.c.b16 %v7000, %v6998
        %v7049 = vpack.c.b16 %v7001, %v6999
        %v7050 = vpack.c.b16 %v7004, %v7002
        %v7051 = vpack.c.b16 %v7005, %v7003
        %v7052 = vpack.c.b16 %v7008, %v7006
        %v7053 = vpack.c.b16 %v7009, %v7007
        %v7054 = vpack.c.b16 %v7012, %v7010
        %v7055 = vpack.c.b16 %v7013, %v7011
        %v7056 = vpack.c.b16 %v7016, %v7014
        %v7057 = vpack.c.b16 %v7017, %v7015
        %v7058 = vpack.c.b16 %v7020, %v7018
        %v7059 = vpack.c.b16 %v7021, %v7019
        %v7060 = vpack.c.b16 %v7024, %v7022
        %v7061 = vpack.c.b16 %v7025, %v7023
        %v7062 = vpack.c.b16 %v7028, %v7026
        %v7063 = vpack.c.b16 %v7029, %v7027
        %v7064 = vpack.c.b16 %v7032, %v7030
        %v7065 = vpack.c.b16 %v7033, %v7031
        %7098 = vmatpush.bf16.msra.mxu0 %v7048
        %7099 = vmatpush.bf16.msra.mxu0 %v7046
        %7100 = vmatpush.bf16.msra.mxu0 %v7044
        %7101 = vmatpush.bf16.msra.mxu0 %v7042
        %7102 = vmatpush.bf16.msra.mxu0 %v7040
        %7103 = vmatpush.bf16.msra.mxu0 %v7038
        %7104 = vmatpush.bf16.msra.mxu0 %v7036
        %7105 = vmatpush.bf16.msra.mxu0 %v7034
        %7106 = vmatmul.bf16.gmra.mxu0 %v6906
        %v7107 = vpop.f32.mrf.mxu0
        %v7108 = vadd.f32 0.0, %v7107
        %v7109 = vpop.f32.mrf.mxu0
        %v7110 = vadd.f32 0.0, %v7109
        %7111 = vmatmul.bf16.gmra.mxu0 %v6908
        %v7112 = vpop.f32.mrf.mxu0
        %v7113 = vadd.f32 0.0, %v7112
        %v7114 = vpop.f32.mrf.mxu0
        %v7115 = vadd.f32 0.0, %v7114
        %7116 = vmatmul.bf16.gmra.mxu0 %v6910
        %v7117 = vpop.f32.mrf.mxu0
        %v7118 = vadd.f32 0.0, %v7117
        %v7119 = vpop.f32.mrf.mxu0
        %v7120 = vadd.f32 0.0, %v7119
        %7121 = vmatmul.bf16.gmra.mxu0 %v6912
        %v7122 = vpop.f32.mrf.mxu0
        %v7123 = vadd.f32 0.0, %v7122
        %v7124 = vpop.f32.mrf.mxu0
        %v7125 = vadd.f32 0.0, %v7124
        %7126 = vmatmul.bf16.gmra.mxu0 %v6914
        %v7127 = vpop.f32.mrf.mxu0
        %v7128 = vadd.f32 0.0, %v7127
        %v7129 = vpop.f32.mrf.mxu0
        %v7130 = vadd.f32 0.0, %v7129
        %7131 = vmatmul.bf16.gmra.mxu0 %v6916
        %v7132 = vpop.f32.mrf.mxu0
        %v7133 = vadd.f32 0.0, %v7132
        %v7134 = vpop.f32.mrf.mxu0
        %v7135 = vadd.f32 0.0, %v7134
        %7136 = vmatmul.bf16.gmra.mxu0 %v6918
        %v7137 = vpop.f32.mrf.mxu0
        %v7138 = vadd.f32 0.0, %v7137
        %v7139 = vpop.f32.mrf.mxu0
        %v7140 = vadd.f32 0.0, %v7139
        %7141 = vmatmul.bf16.gmra.mxu0 %v6920
        %v7142 = vpop.f32.mrf.mxu0
        %v7143 = vadd.f32 0.0, %v7142
        %v7144 = vpop.f32.mrf.mxu0
        %v7145 = vadd.f32 0.0, %v7144
        %7146 = vdwg.mxu0
        %7147 = vmatpush.bf16.msra.mxu0 %v7064
        %7148 = vmatpush.bf16.msra.mxu0 %v7062
        %7149 = vmatpush.bf16.msra.mxu0 %v7060
        %7150 = vmatpush.bf16.msra.mxu0 %v7058
        %7151 = vmatpush.bf16.msra.mxu0 %v7056
        %7152 = vmatpush.bf16.msra.mxu0 %v7054
        %7153 = vmatpush.bf16.msra.mxu0 %v7052
        %7154 = vmatpush.bf16.msra.mxu0 %v7050
        %7155 = vmatmul.bf16.gmra.mxu0 %v6907
        %v7156 = vpop.f32.mrf.mxu0
        %v7157 = vadd.f32 %v7108, %v7156
        %v7158 = vpop.f32.mrf.mxu0
        %v7159 = vadd.f32 %v7110, %v7158
        %7160 = vmatmul.bf16.gmra.mxu0 %v6909
        %v7161 = vpop.f32.mrf.mxu0
        %v7162 = vadd.f32 %v7113, %v7161
        %v7163 = vpop.f32.mrf.mxu0
        %v7164 = vadd.f32 %v7115, %v7163
        %7165 = vmatmul.bf16.gmra.mxu0 %v6911
        %v7166 = vpop.f32.mrf.mxu0
        %v7167 = vadd.f32 %v7118, %v7166
        %v7168 = vpop.f32.mrf.mxu0
        %v7169 = vadd.f32 %v7120, %v7168
        %7170 = vmatmul.bf16.gmra.mxu0 %v6913
        %v7171 = vpop.f32.mrf.mxu0
        %v7172 = vadd.f32 %v7123, %v7171
        %v7173 = vpop.f32.mrf.mxu0
        %v7174 = vadd.f32 %v7125, %v7173
        %7175 = vmatmul.bf16.gmra.mxu0 %v6915
        %v7176 = vpop.f32.mrf.mxu0
        %v7177 = vadd.f32 %v7128, %v7176
        %v7178 = vpop.f32.mrf.mxu0
        %v7179 = vadd.f32 %v7130, %v7178
        %7180 = vmatmul.bf16.gmra.mxu0 %v6917
        %v7181 = vpop.f32.mrf.mxu0
        %v7182 = vadd.f32 %v7133, %v7181
        %v7183 = vpop.f32.mrf.mxu0
        %v7184 = vadd.f32 %v7135, %v7183
        %7185 = vmatmul.bf16.gmra.mxu0 %v6919
        %v7186 = vpop.f32.mrf.mxu0
        %v7187 = vadd.f32 %v7138, %v7186
        %v7188 = vpop.f32.mrf.mxu0
        %v7189 = vadd.f32 %v7140, %v7188
        %7190 = vmatmul.bf16.gmra.mxu0 %v6921
        %v7191 = vpop.f32.mrf.mxu0
        %v7192 = vadd.f32 %v7143, %v7191
        %v7193 = vpop.f32.mrf.mxu0
        %v7194 = vadd.f32 %v7145, %v7193
        %7195 = vdwg.mxu0
        %7196 = vmatpush.bf16.msra.mxu0 %v7049
        %7197 = vmatpush.bf16.msra.mxu0 %v7047
        %7198 = vmatpush.bf16.msra.mxu0 %v7045
        %7199 = vmatpush.bf16.msra.mxu0 %v7043
        %7200 = vmatpush.bf16.msra.mxu0 %v7041
        %7201 = vmatpush.bf16.msra.mxu0 %v7039
        %7202 = vmatpush.bf16.msra.mxu0 %v7037
        %7203 = vmatpush.bf16.msra.mxu0 %v7035
        %7204 = vmatmul.bf16.gmra.mxu0 %v6906
        %v7205 = vpop.f32.mrf.mxu0
        %v7206 = vadd.f32 0.0, %v7205
        %v7207 = vpop.f32.mrf.mxu0
        %v7208 = vadd.f32 0.0, %v7207
        %7209 = vmatmul.bf16.gmra.mxu0 %v6908
        %v7210 = vpop.f32.mrf.mxu0
        %v7211 = vadd.f32 0.0, %v7210
        %v7212 = vpop.f32.mrf.mxu0
        %v7213 = vadd.f32 0.0, %v7212
        %7214 = vmatmul.bf16.gmra.mxu0 %v6910
        %v7215 = vpop.f32.mrf.mxu0
        %v7216 = vadd.f32 0.0, %v7215
        %v7217 = vpop.f32.mrf.mxu0
        %v7218 = vadd.f32 0.0, %v7217
        %7219 = vmatmul.bf16.gmra.mxu0 %v6912
        %v7220 = vpop.f32.mrf.mxu0
        %v7221 = vadd.f32 0.0, %v7220
        %v7222 = vpop.f32.mrf.mxu0
        %v7223 = vadd.f32 0.0, %v7222
        %7224 = vmatmul.bf16.gmra.mxu0 %v6914
        %v7225 = vpop.f32.mrf.mxu0
        %v7226 = vadd.f32 0.0, %v7225
        %v7227 = vpop.f32.mrf.mxu0
        %v7228 = vadd.f32 0.0, %v7227
        %7229 = vmatmul.bf16.gmra.mxu0 %v6916
        %v7230 = vpop.f32.mrf.mxu0
        %v7231 = vadd.f32 0.0, %v7230
        %v7232 = vpop.f32.mrf.mxu0
        %v7233 = vadd.f32 0.0, %v7232
        %7234 = vmatmul.bf16.gmra.mxu0 %v6918
        %v7235 = vpop.f32.mrf.mxu0
        %v7236 = vadd.f32 0.0, %v7235
        %v7237 = vpop.f32.mrf.mxu0
        %v7238 = vadd.f32 0.0, %v7237
        %7239 = vmatmul.bf16.gmra.mxu0 %v6920
        %v7240 = vpop.f32.mrf.mxu0
        %v7241 = vadd.f32 0.0, %v7240
        %v7242 = vpop.f32.mrf.mxu0
        %v7243 = vadd.f32 0.0, %v7242
        %7244 = vdwg.mxu0
        %7245 = vmatpush.bf16.msra.mxu0 %v7065
        %7246 = vmatpush.bf16.msra.mxu0 %v7063
        %7247 = vmatpush.bf16.msra.mxu0 %v7061
        %7248 = vmatpush.bf16.msra.mxu0 %v7059
        %7249 = vmatpush.bf16.msra.mxu0 %v7057
        %7250 = vmatpush.bf16.msra.mxu0 %v7055
        %7251 = vmatpush.bf16.msra.mxu0 %v7053
        %7252 = vmatpush.bf16.msra.mxu0 %v7051
        %7253 = vmatmul.bf16.gmra.mxu0 %v6907
        %v7254 = vpop.f32.mrf.mxu0
        %v7255 = vadd.f32 %v7206, %v7254
        %v7256 = vpop.f32.mrf.mxu0
        %v7257 = vadd.f32 %v7208, %v7256
        %7258 = vmatmul.bf16.gmra.mxu0 %v6909
        %v7259 = vpop.f32.mrf.mxu0
        %v7260 = vadd.f32 %v7211, %v7259
        %v7261 = vpop.f32.mrf.mxu0
        %v7262 = vadd.f32 %v7213, %v7261
        %7263 = vmatmul.bf16.gmra.mxu0 %v6911
        %v7264 = vpop.f32.mrf.mxu0
        %v7265 = vadd.f32 %v7216, %v7264
        %v7266 = vpop.f32.mrf.mxu0
        %v7267 = vadd.f32 %v7218, %v7266
        %7268 = vmatmul.bf16.gmra.mxu0 %v6913
        %v7269 = vpop.f32.mrf.mxu0
        %v7270 = vadd.f32 %v7221, %v7269
        %v7271 = vpop.f32.mrf.mxu0
        %v7272 = vadd.f32 %v7223, %v7271
        %7273 = vmatmul.bf16.gmra.mxu0 %v6915
        %v7274 = vpop.f32.mrf.mxu0
        %v7275 = vadd.f32 %v7226, %v7274
        %v7276 = vpop.f32.mrf.mxu0
        %v7277 = vadd.f32 %v7228, %v7276
        %7278 = vmatmul.bf16.gmra.mxu0 %v6917
        %v7279 = vpop.f32.mrf.mxu0
        %v7280 = vadd.f32 %v7231, %v7279
        %v7281 = vpop.f32.mrf.mxu0
        %v7282 = vadd.f32 %v7233, %v7281
        %7283 = vmatmul.bf16.gmra.mxu0 %v6919
        %v7284 = vpop.f32.mrf.mxu0
        %v7285 = vadd.f32 %v7236, %v7284
        %v7286 = vpop.f32.mrf.mxu0
        %v7287 = vadd.f32 %v7238, %v7286
        %7288 = vmatmul.bf16.gmra.mxu0 %v6921
        %v7289 = vpop.f32.mrf.mxu0
        %v7290 = vadd.f32 %v7241, %v7289
        %v7291 = vpop.f32.mrf.mxu0
        %v7292 = vadd.f32 %v7243, %v7291
        %7293 = vdwg.mxu0
        %7294 = vst [vmem:[%s526] sm:$0xff] %v7157
        %7295 = vst [vmem:[%s526 + $0x8] sm:$0xff] %v7255
        %7296 = vst [vmem:[%s526 + $0x10] sm:$0xff] %v7159
        %7297 = vst [vmem:[%s526 + $0x18] sm:$0xff] %v7257
        %7298 = vst [vmem:[%s526 + $0x20] sm:$0xff] %v7162
        %7299 = vst [vmem:[%s526 + $0x28] sm:$0xff] %v7260
        %7300 = vst [vmem:[%s526 + $0x30] sm:$0xff] %v7164
        %7301 = vst [vmem:[%s526 + $0x38] sm:$0xff] %v7262
        %7302 = vst [vmem:[%s526 + $0x40] sm:$0xff] %v7167
        %7303 = vst [vmem:[%s526 + $0x48] sm:$0xff] %v7265
        %7304 = vst [vmem:[%s526 + $0x50] sm:$0xff] %v7169
        %7305 = vst [vmem:[%s526 + $0x58] sm:$0xff] %v7267
        %7306 = vst [vmem:[%s526 + $0x60] sm:$0xff] %v7172
        %7307 = vst [vmem:[%s526 + $0x68] sm:$0xff] %v7270
        %7308 = vst [vmem:[%s526 + $0x70] sm:$0xff] %v7174
        %7309 = vst [vmem:[%s526 + $0x78] sm:$0xff] %v7272
        %7310 = vst [vmem:[%s526 + $0x80] sm:$0xff] %v7177
        %7311 = vst [vmem:[%s526 + $0x88] sm:$0xff] %v7275
        %7312 = vst [vmem:[%s526 + $0x90] sm:$0xff] %v7179
        %7313 = vst [vmem:[%s526 + $0x98] sm:$0xff] %v7277
        %7314 = vst [vmem:[%s526 + $0xa0] sm:$0xff] %v7182
        %7315 = vst [vmem:[%s526 + $0xa8] sm:$0xff] %v7280
        %7316 = vst [vmem:[%s526 + $0xb0] sm:$0xff] %v7184
        %7317 = vst [vmem:[%s526 + $0xb8] sm:$0xff] %v7282
        %7318 = vst [vmem:[%s526 + $0xc0] sm:$0xff] %v7187
        %7319 = vst [vmem:[%s526 + $0xc8] sm:$0xff] %v7285
        %7320 = vst [vmem:[%s526 + $0xd0] sm:$0xff] %v7189
        %7321 = vst [vmem:[%s526 + $0xd8] sm:$0xff] %v7287
        %7322 = vst [vmem:[%s526 + $0xe0] sm:$0xff] %v7192
        %7323 = vst [vmem:[%s526 + $0xe8] sm:$0xff] %v7290
        %7324 = vst [vmem:[%s526 + $0xf0] sm:$0xff] %v7194
        %7325 = vst [vmem:[%s526 + $0xf8] sm:$0xff] %v7292
        %s7326 = sand.u32 %s245, 1
        %s7327 = scalar_lea.sflag [#allocation8], %s7326
        %s7328 = sand.u32 %s245, 1
        %s7329 = smul.addr %s7328, 256
        %s7330 = scalar_lea.vmem [#allocation20], %s7329
        // Predicated region
        $region89: #{tpu_custom_call.1} parent=51 // pred_check
          %p7331 = pneg %p255
        $region90: #{tpu_custom_call.1} parent=51 // pred_check_branch
          %7333 = sbr.rel (%p7331) target = $region92
        $region91: #{tpu_custom_call.1} parent=51 // pred_region
          %s7334 = smul.u32 16, %s38
          %7336 = vsyncadd %s7327, 0
          %s7337 = smul.addr %s7334, 2
          %s7338 = smul.addr %s37, 32
          %s7339 = sadd.s32 %s7337, %s7338
          %s7340 = smul.addr %s7339, 8
          %s7341 = scalar_lea.hbm %s8, %s7340
          %s7342 = sshll.u32 %s7330, 4
          %s7343 = int_to_ptr.vmem [resolvable:$true] %s7342
          %s7344 = sshll.u32 %s7341, 4
          %s7345 = int_to_ptr.hbm [resolvable:$true] %s7344
          %7350 = dma.vmem_to_hbm [thread:$0]  %s7343, 4096, %s7345, %s7327, 256, 256, 16
        $region92: #{tpu_custom_call.1} parent=51 // pred_fallthru
          _
      $region52: #{tpu_custom_call.1} parent=5 // pred_fallthru
        _
      %p7351 = scmp.le.s32.totalorder 2, %s28
      // Predicated region
      $region93: #{tpu_custom_call.1} parent=5 // pred_check
        %p7352 = pneg %p7351
      $region94: #{tpu_custom_call.1} parent=5 // pred_check_branch
        %7354 = sbr.rel (%p7352) target = $region96
      $region95: #{tpu_custom_call.1} parent=5 // pred_region
        %s7355 = ssub.s32 %s28, 2
        // Predicated region
        $region97: #{tpu_custom_call.1} parent=95 // pred_check
          %p7356 = pneg %p261
        $region98: #{tpu_custom_call.1} parent=95 // pred_check_branch
          %7358 = sbr.rel (%p7356) target = $region100
        $region99: #{tpu_custom_call.1} parent=95 // pred_region
          %s7359 = sand.u32 %s246, 1
          %s7360 = scalar_lea.sflag [#allocation8], %s7359
          %s7361 = sand.u32 %s246, 1
          %s7362 = smul.addr %s7361, 256
          %s7363 = scalar_lea.vmem [#allocation20], %s7362
          %7365 = dma.done %s7360, 4096
        $region100: #{tpu_custom_call.1} parent=95 // pred_fallthru
          _
      $region96: #{tpu_custom_call.1} parent=5 // pred_fallthru
        _
    $region6: #{tpu_custom_call.1} parent=1 // loop_footer
      %s32 = sadd.s32 1, %s28
    $region7: #{tpu_custom_call.1} parent=1 // loop_footer_branch
      %27 = sbr.rel target = $region3
    $region8: #{tpu_custom_call.1} parent=1 // loop_exit
      _
    %7366 = vsyncpa [#allocation7], 1
    %s7367 = scalar_lea.sflag [#allocation7], 1
    %7368 = vsyncpa %s7367, 1
    %7369 = vsyncpa [#allocation10], 1
    %s7370 = scalar_lea.sflag [#allocation10], 1
    %7371 = vsyncpa %s7370, 1
    %7372 = vsyncpa [#allocation13], 1
    %s7373 = scalar_lea.sflag [#allocation13], 1
    %7374 = vsyncpa %s7373, 1
    %7375 = vsyncpa [#allocation16], 1
    %7376 = vsyncpa [#allocation19], 1
    %7377 = vsyncpa [#allocation8], 1
    %s7378 = scalar_lea.sflag [#allocation8], 1
    %7379 = vsyncpa %s7378, 1

</llo_original>
